<compile_context>
chip_gen: v7x
topology: tpu7x:2x2x1
jax: 0.10.0
libtpu: 0.0.40
codegen_flags: <defaults>
</compile_context>

<pallas_src>
import functools

import numpy as np
import jax
import jax.numpy as jnp
from jax.experimental import pallas as pl
from jax.experimental.pallas import tpu as pltpu

LANE = 128
SUBLANE = 8
N_GATES = 4                      # packed gate order per direction: i | f | o | g
GATE_W = LANE // 2               # 64 lanes per gate-type per direction
G_COLS = 2 * N_GATES * GATE_W    # 512 fused gate columns (fwd half | bwd half)


def _round_up(x, m):
    return (x + m - 1) // m * m


# ----------------------------------------------------------------------------
# Pallas kernel: one grid step = one model's fused bidirectional LSTM layer
# (encoder: 4 directional cells, H=32 each; decoder: 2 cells, H=36 padded 64).
# ----------------------------------------------------------------------------
def fused_bilstm_kernel(x_ref, wih_ref, whh_ref, b_ref, out_ref, xw_sc, h_sc, c_sc):
    # x_ref   : (T, BM, 128) f32   time-major input block
    # wih_ref : (128, 512)   bf16  fused/scattered input->gate weights
    # whh_ref : (128, 512)   bf16  block-structured hidden->gate weights
    # b_ref   : (1, 512)     f32   fused bias (b_ih + b_hh)
    # out_ref : (T, BM, 128) f32   hidden states: lanes [0:64] fwd, [64:128] bwd
    # xw_sc   : (T, BM, 512) f32   scratch: x @ Wih + b for every timestep
    # h_sc/c_sc: (BM, 128)   f32   scratch: recurrent state (fwd half | bwd half)
    T, BM, D = x_ref.shape
    G = wih_ref.shape[-1]        # 512
    HG = G // 2                  # 256: one direction's fused gates
    HH = HG // N_GATES           # 64:  one direction's hidden lanes

    # Input projection for every timestep: one lane-dense bf16 MXU matmul.
    x_all = x_ref[...].reshape(T * BM, D).astype(jnp.bfloat16)
    xw = jnp.dot(x_all, wih_ref[...], preferred_element_type=jnp.float32)
    xw_sc[...] = (xw + b_ref[...]).reshape(T, BM, G)

    whh = whh_ref[...]                       # hoisted out of the recurrence
    h_sc[...] = jnp.zeros_like(h_sc)
    c_sc[...] = jnp.zeros_like(c_sc)

    # T is static and tiny (8): a Python loop fully unrolls with constant
    # indices, so all ref slicing below is static (no dynamic-slice lowering).
    for s in range(T):
        rs = T - 1 - s
        hw = jnp.dot(h_sc[...].astype(jnp.bfloat16), whh,
                     preferred_element_type=jnp.float32)          # (BM, 512)
        gf = xw_sc[s, :, 0:HG] + hw[:, 0:HG]        # forward cells, time s
        gb = xw_sc[rs, :, HG:G] + hw[:, HG:G]       # backward cells, time T-1-s
        # per-direction gate layout: [i | f | o | g], each HH lanes
        sf = jax.nn.sigmoid(gf[:, 0:3 * HH])        # i|f|o fused (fwd)
        tf = jnp.tanh(gf[:, 3 * HH:4 * HH])         # g           (fwd)
        sb = jax.nn.sigmoid(gb[:, 0:3 * HH])
        tb = jnp.tanh(gb[:, 3 * HH:4 * HH])
        cf = sf[:, HH:2 * HH] * c_sc[:, 0:HH] + sf[:, 0:HH] * tf
        cb = sb[:, HH:2 * HH] * c_sc[:, HH:2 * HH] + sb[:, 0:HH] * tb
        hf = sf[:, 2 * HH:3 * HH] * jnp.tanh(cf)
        hb = sb[:, 2 * HH:3 * HH] * jnp.tanh(cb)
        c_sc[:, 0:HH] = cf
        c_sc[:, HH:2 * HH] = cb
        h_sc[:, 0:HH] = hf
        h_sc[:, HH:2 * HH] = hb
        out_ref[s, :, 0:HH] = hf                    # fwd half at time s
        out_ref[rs, :, HH:2 * HH] = hb              # bwd half at time T-1-s


def run_lstm_stage(x, wih, whh, b, *, shared_input):
    """Run N independent fused-bidirectional-LSTM grid steps (one per model).

    x   : (T, BM, 128) f32 shared input, or (N, T, BM, 128) per-model input
    wih : (N, 128, 512) bf16    whh : (N, 128, 512) bf16    b : (N, 1, 512) f32
    out : (N, T, BM, 128) f32   per-timestep hidden, [fwd 0:64 | bwd 64:128]
    """
    N, D, G = wih.shape
    if shared_input:
        T, BM, _ = x.shape
        x_spec = pl.BlockSpec((T, BM, D), lambda n: (0, 0, 0))   # one DMA, reused
    else:
        _, T, BM, _ = x.shape
        x_spec = pl.BlockSpec((None, T, BM, D), lambda n: (n, 0, 0, 0))
    return pl.pallas_call(
        fused_bilstm_kernel,
        out_shape=jax.ShapeDtypeStruct((N, T, BM, D), jnp.float32),
        grid_spec=pltpu.PrefetchScalarGridSpec(
            num_scalar_prefetch=0,
            grid=(N,),
            in_specs=[
                x_spec,
                pl.BlockSpec((None, D, G), lambda n: (n, 0, 0)),
                pl.BlockSpec((None, D, G), lambda n: (n, 0, 0)),
                pl.BlockSpec((None, 1, G), lambda n: (n, 0, 0)),
            ],
            out_specs=pl.BlockSpec((None, T, BM, D), lambda n: (n, 0, 0, 0)),
            scratch_shapes=[
                pltpu.VMEM((T, BM, G), jnp.float32),   # x @ Wih + b, all steps
                pltpu.VMEM((BM, D), jnp.float32),      # h state
                pltpu.VMEM((BM, D), jnp.float32),      # c state
            ],
        ),
        compiler_params=pltpu.CompilerParams(
            dimension_semantics=("parallel",)),   # independent models (v7x megacore)
    )(x, wih, whh, b)


# ----------------------------------------------------------------------------
# Parameter init / packing (done once, not per forward)
# ----------------------------------------------------------------------------
JOINT_SPLITS = [
    (np.array([3, 4, 5, 6, 11, 12, 13, 14, 20, 21]),
     np.array([0, 1, 2, 7, 8, 9, 10, 15, 16, 17, 18, 19, 22, 23])),
    (np.array([0, 1, 2, 3, 4, 5, 6, 11, 12, 13, 14, 19, 20, 21]),
     np.array([7, 8, 9, 10, 15, 16, 17, 18, 22, 23])),
    (np.array([1, 2, 3, 4, 5, 6, 7, 8, 9, 10, 20, 21, 22, 23]),
     np.array([0, 11, 12, 13, 14, 15, 16, 17, 18, 19])),
    (np.array([1, 2, 3, 4, 5, 6, 7, 8, 9, 10, 19, 20, 21, 22, 23]),
     np.array([0, 11, 12, 13, 14, 15, 16, 17, 18])),
    (np.array([0, 1, 2, 3, 4, 5, 6, 7, 8, 9, 10, 19, 20, 21, 22, 23]),
     np.array([11, 12, 13, 14, 15, 16, 17, 18])),
]


def _expand_idx(joint_idx):
    e = np.concatenate((joint_idx * 3, joint_idx * 3 + 1, joint_idx * 3 + 2))
    e.sort()
    return e


def _cell_params(key, d_in, h):
    """PyTorch-style LSTM init (uniform(-1/sqrt(H), 1/sqrt(H)) everywhere).
    Per-gate arrays in packed order (i, f, o, g); bias = b_ih + b_hh."""
    bound = 1.0 / np.sqrt(h)
    ks = jax.random.split(key, 3)
    wih = np.asarray(jax.random.uniform(ks[0], (N_GATES, d_in, h), jnp.float32, -bound, bound))
    whh = np.asarray(jax.random.uniform(ks[1], (N_GATES, h, h), jnp.float32, -bound, bound))
    b = np.asarray(jax.random.uniform(ks[2], (2, N_GATES, h), jnp.float32, -bound, bound)).sum(0)
    return wih, whh, b


def _pack_cell(big_wih, big_whh, big_b, key, h, in_rows, direction, h_off):
    """Scatter one directional LSTM cell into the fused (128, 512) weights.

    in_rows  : input-feature rows this cell reads (joint gather folded here)
    direction: 0 = forward (cols 0:256, hidden lanes 0:64),
               1 = backward (cols 256:512, hidden lanes 64:128)
    h_off    : offset of this cell's hidden lanes inside its direction half
    """
    wih, whh, b = _cell_params(key, in_rows.size, h)
    col0 = direction * N_GATES * GATE_W
    h_rows = direction * GATE_W + h_off + np.arange(h)
    for g in range(N_GATES):
        cols = col0 + g * GATE_W + h_off + np.arange(h)
        big_wih[np.ix_(in_rows, cols)] = wih[g]
        big_whh[np.ix_(h_rows, cols)] = whh[g]
        big_b[0, cols] = b[g]


def init_autoencoder(key, hidden=32):
    assert 4 * hidden == LANE, "packed layout assumes 4 * encoder hidden == 128 lanes"
    n_models = len(JOINT_SPLITS)
    h_dec = (24 * 3) // 2          # 36 = (input_upper + input_lower) / 2 for every split
    assert h_dec <= GATE_W

    enc_wih = np.zeros((n_models, LANE, G_COLS), np.float32)
    enc_whh = np.zeros((n_models, LANE, G_COLS), np.float32)
    enc_b = np.zeros((n_models, 1, G_COLS), np.float32)
    dec_wih = np.zeros((n_models, LANE, G_COLS), np.float32)
    dec_whh = np.zeros((n_models, LANE, G_COLS), np.float32)
    dec_b = np.zeros((n_models, 1, G_COLS), np.float32)

    dec_in_rows = np.arange(LANE)  # decoder reads all 128 encoder-output lanes
    keys = jax.random.split(key, n_models)
    for m, (u, l) in enumerate(JOINT_SPLITS):
        u_rows, l_rows = _expand_idx(u), _expand_idx(l)
        k = jax.random.split(keys[m], 6)
        # Encoder model m: 4 directional cells fused; joint gather folded into rows.
        _pack_cell(enc_wih[m], enc_whh[m], enc_b[m], k[0], hidden, u_rows, 0, 0)        # upper fwd
        _pack_cell(enc_wih[m], enc_whh[m], enc_b[m], k[1], hidden, l_rows, 0, hidden)   # lower fwd
        _pack_cell(enc_wih[m], enc_whh[m], enc_b[m], k[2], hidden, u_rows, 1, 0)        # upper bwd
        _pack_cell(enc_wih[m], enc_whh[m], enc_b[m], k[3], hidden, l_rows, 1, hidden)   # lower bwd
        # Decoder model m: hidden 36 zero-padded to 64 lanes per direction.
        # (Pretrained torch weights would additionally need the Wih row permutation
        #  [u_fwd,u_bwd,l_fwd,l_bwd] -> kernel layout [u_fwd,l_fwd,u_bwd,l_bwd].)
        _pack_cell(dec_wih[m], dec_whh[m], dec_b[m], k[4], h_dec, dec_in_rows, 0, 0)    # fwd
        _pack_cell(dec_wih[m], dec_whh[m], dec_b[m], k[5], h_dec, dec_in_rows, 1, 0)    # bwd

    weights = {
        "enc_wih": jnp.asarray(enc_wih, jnp.bfloat16),   # (5, 128, 512)
        "enc_whh": jnp.asarray(enc_whh, jnp.bfloat16),   # (5, 128, 512)
        "enc_b": jnp.asarray(enc_b),                     # (5, 1, 512) f32
        "dec_wih": jnp.asarray(dec_wih, jnp.bfloat16),
        "dec_whh": jnp.asarray(dec_whh, jnp.bfloat16),
        "dec_b": jnp.asarray(dec_b),
        "prob": jnp.array([0.2] * n_models, dtype=jnp.float32),
    }
    static = {"h_dec": h_dec, "tau": 0.1}
    return weights, static


# ----------------------------------------------------------------------------
# Forward pass
# ----------------------------------------------------------------------------
def gumbel_softmax_hard(key, logits, tau):
    u = jax.random.uniform(key, logits.shape, minval=1e-10, maxval=1.0)
    g = -jnp.log(-jnp.log(u))
    y_soft = jax.nn.softmax((logits + g) / tau)
    idx = jnp.argmax(y_soft)
    # TODO(synk): torch's hard=True straight-through gradient ((hard - soft).detach() + soft) is not reproduced; forward one-hot only.
    return jax.nn.one_hot(idx, logits.shape[0], dtype=logits.dtype)


def autoencoder_forward(x_btf, weights, key, *, static):
    B, T, F = x_btf.shape
    BM = _round_up(max(B, SUBLANE), SUBLANE)
    # (B,T,F) -> time-major, batch/lane padded (T, BM, 128).  The per-model
    # joint gather lives in the encoder weights, so this ONE block feeds all
    # five encoder grid steps (constant index_map => single DMA).
    xt = jnp.transpose(x_btf, (1, 0, 2))
    x_pad = jnp.pad(xt, ((0, 0), (0, BM - B), (0, LANE - F)))

    # Stage 1: 5 encoder models (4 directional cells each) in one pallas_call.
    enc_out = run_lstm_stage(x_pad, weights["enc_wih"], weights["enc_whh"],
                             weights["enc_b"], shared_input=True)       # (5,T,BM,128)
    # Stage 2: encoder output [u_fwd|l_fwd|u_bwd|l_bwd] is the decoder input
    # directly (PyTorch concat order is baked into dec Wih rows) — no glue ops.
    dec_out = run_lstm_stage(enc_out, weights["dec_wih"], weights["dec_whh"],
                             weights["dec_b"], shared_input=False)      # (5,T,BM,128)

    h_dec = static["h_dec"]
    HH = LANE // 2
    dec = dec_out[:, :, :B, :]                                          # (5, T, B, 128)
    recon = jnp.concatenate([dec[..., :h_dec], dec[..., HH:HH + h_dec]], axis=-1)
    recon = jnp.transpose(recon, (0, 2, 1, 3))                          # (5, B, T, F)
    # torch's per-model .squeeze() is a no-op for B>1, T>1; keep (B, T, F).

    model_prob = gumbel_softmax_hard(key, weights["prob"], static["tau"])
    augmented = jnp.einsum("n,nbtf->btf", model_prob, recon)
    return augmented, weights["prob"]


# ----------------------------------------------------------------------------
if __name__ == "__main__":
    B, T, F = 2, 8, 72        # 24 joints * 3 coords
    HIDDEN = 32               # encoder hidden (module default is 100; kept small)

    root = jax.random.PRNGKey(0)
    k_params, k_input, k_gumbel = jax.random.split(root, 3)

    weights, static = init_autoencoder(k_params, hidden=HIDDEN)
    x = jax.random.normal(k_input, (B, T, F), dtype=jnp.float32)

    forward = jax.jit(functools.partial(autoencoder_forward, static=static))
    augmented_data, prob = forward(x, weights, k_gumbel)
    jax.block_until_ready(augmented_data)
    jax.block_until_ready(prob)

    assert augmented_data.shape == (B, T, F), augmented_data.shape
    assert prob.shape == (5,), prob.shape
    assert bool(jnp.all(jnp.isfinite(augmented_data)))
    print("KERNEL_OK")
</pallas_src>

<mosaic_0001>
module attributes {stable_mosaic.version = 11 : i64} {
  func.func @fused_bilstm_kernel(%arg0: i32, %arg1: memref<1x8x8x128xf32, #tpu.memory_space<vmem>>, %arg2: memref<1x128x512xbf16, #tpu.memory_space<vmem>>, %arg3: memref<1x128x512xbf16, #tpu.memory_space<vmem>>, %arg4: memref<1x1x512xf32, #tpu.memory_space<vmem>>, %arg5: memref<1x8x8x128xf32, #tpu.memory_space<vmem>>, %arg6: memref<8x8x512xf32, #tpu.memory_space<vmem>>, %arg7: memref<8x128xf32, #tpu.memory_space<vmem>>, %arg8: memref<8x128xf32, #tpu.memory_space<vmem>>) attributes {dimension_semantics = [#tpu.dimension_semantics<parallel>], iteration_bounds = array<i64: 5>, scalar_prefetch = 0 : i64, scratch_operands = 3 : i64, tpu.core_type = #tpu.core_type<tc>, window_params = [{transform_indices = @transform_0, window_bounds = array<i64: 1, 8, 8, 128>}, {transform_indices = @transform_1, window_bounds = array<i64: 1, 128, 512>}, {transform_indices = @transform_2, window_bounds = array<i64: 1, 128, 512>}, {transform_indices = @transform_3, window_bounds = array<i64: 1, 1, 512>}, {transform_indices = @transform_4, window_bounds = array<i64: 1, 8, 8, 128>}]} {
    %c0 = arith.constant 0 : index
    %c0_0 = arith.constant 0 : index
    %c0_1 = arith.constant 0 : index
    %c0_2 = arith.constant 0 : index
    %0 = vector.load %arg1[%c0, %c0_0, %c0_1, %c0_2] : memref<1x8x8x128xf32, #tpu.memory_space<vmem>>, vector<1x8x8x128xf32>
    %1 = vector.shape_cast %0 : vector<1x8x8x128xf32> to vector<8x8x128xf32>
    %2 = vector.shape_cast %1 : vector<8x8x128xf32> to vector<64x128xf32>
    %3 = arith.truncf %2 : vector<64x128xf32> to vector<64x128xbf16>
    %c0_3 = arith.constant 0 : index
    %c0_4 = arith.constant 0 : index
    %c0_5 = arith.constant 0 : index
    %4 = vector.load %arg2[%c0_3, %c0_4, %c0_5] : memref<1x128x512xbf16, #tpu.memory_space<vmem>>, vector<1x128x512xbf16>
    %5 = vector.shape_cast %4 : vector<1x128x512xbf16> to vector<128x512xbf16>
    %cst = arith.constant dense<0.000000e+00> : vector<64x512xf32>
    %6 = tpu.matmul %3, %5, %cst {dimension_numbers = #tpu.dot_dimension_numbers<[1], [0], [0], [1], [0, 0, 1, 1], [], []>} : vector<64x128xbf16>, vector<128x512xbf16>, vector<64x512xf32> -> vector<64x512xf32>
    %c0_6 = arith.constant 0 : index
    %c0_7 = arith.constant 0 : index
    %c0_8 = arith.constant 0 : index
    %7 = vector.load %arg4[%c0_6, %c0_7, %c0_8] : memref<1x1x512xf32, #tpu.memory_space<vmem>>, vector<1x1x512xf32>
    %8 = vector.shape_cast %7 : vector<1x1x512xf32> to vector<1x512xf32>
    %9 = vector.broadcast %8 : vector<1x512xf32> to vector<64x512xf32>
    %10 = arith.addf %6, %9 : vector<64x512xf32>
    %11 = vector.shape_cast %10 : vector<64x512xf32> to vector<8x8x512xf32>
    %c0_9 = arith.constant 0 : index
    %c0_10 = arith.constant 0 : index
    %c0_11 = arith.constant 0 : index
    %12 = vector.load %arg6[%c0_9, %c0_10, %c0_11] : memref<8x8x512xf32, #tpu.memory_space<vmem>>, vector<8x8x512xf32>
    tpu.vector_store %arg6[%c0_9, %c0_10, %c0_11], %11 {strides = array<i32>} : memref<8x8x512xf32, #tpu.memory_space<vmem>>, vector<8x8x512xf32>,
    %c0_12 = arith.constant 0 : index
    %c0_13 = arith.constant 0 : index
    %c0_14 = arith.constant 0 : index
    %13 = vector.load %arg3[%c0_12, %c0_13, %c0_14] : memref<1x128x512xbf16, #tpu.memory_space<vmem>>, vector<1x128x512xbf16>
    %14 = vector.shape_cast %13 : vector<1x128x512xbf16> to vector<128x512xbf16>
    %cst_15 = arith.constant 0.000000e+00 : f32
    %15 = vector.broadcast %cst_15 : f32 to vector<8x128xf32>
    %c0_16 = arith.constant 0 : index
    %c0_17 = arith.constant 0 : index
    %16 = vector.load %arg7[%c0_16, %c0_17] : memref<8x128xf32, #tpu.memory_space<vmem>>, vector<8x128xf32>
    tpu.vector_store %arg7[%c0_16, %c0_17], %15 {strides = array<i32>} : memref<8x128xf32, #tpu.memory_space<vmem>>, vector<8x128xf32>,
    %cst_18 = arith.constant 0.000000e+00 : f32
    %17 = vector.broadcast %cst_18 : f32 to vector<8x128xf32>
    %c0_19 = arith.constant 0 : index
    %c0_20 = arith.constant 0 : index
    %18 = vector.load %arg8[%c0_19, %c0_20] : memref<8x128xf32, #tpu.memory_space<vmem>>, vector<8x128xf32>
    tpu.vector_store %arg8[%c0_19, %c0_20], %17 {strides = array<i32>} : memref<8x128xf32, #tpu.memory_space<vmem>>, vector<8x128xf32>,
    %c0_21 = arith.constant 0 : index
    %c0_22 = arith.constant 0 : index
    %19 = vector.load %arg7[%c0_21, %c0_22] : memref<8x128xf32, #tpu.memory_space<vmem>>, vector<8x128xf32>
    %20 = arith.truncf %19 : vector<8x128xf32> to vector<8x128xbf16>
    %cst_23 = arith.constant dense<0.000000e+00> : vector<8x512xf32>
    %21 = tpu.matmul %20, %14, %cst_23 {dimension_numbers = #tpu.dot_dimension_numbers<[1], [0], [0], [1], [0, 0, 1, 1], [], []>} : vector<8x128xbf16>, vector<128x512xbf16>, vector<8x512xf32> -> vector<8x512xf32>
    %c0_24 = arith.constant 0 : index
    %c0_25 = arith.constant 0 : index
    %c0_26 = arith.constant 0 : index
    %22 = vector.load %arg6[%c0_24, %c0_25, %c0_26] : memref<8x8x512xf32, #tpu.memory_space<vmem>>, vector<1x8x256xf32>
    %23 = vector.shape_cast %22 : vector<1x8x256xf32> to vector<8x256xf32>
    %24 = vector.extract_strided_slice %21 {offsets = [0, 0], sizes = [8, 256], strides = [1, 1]} : vector<8x512xf32> to vector<8x256xf32>
    %25 = arith.addf %23, %24 : vector<8x256xf32>
    %c7 = arith.constant 7 : index
    %c0_27 = arith.constant 0 : index
    %c256 = arith.constant 256 : index
    %26 = vector.load %arg6[%c7, %c0_27, %c256] : memref<8x8x512xf32, #tpu.memory_space<vmem>>, vector<1x8x256xf32>
    %27 = vector.shape_cast %26 : vector<1x8x256xf32> to vector<8x256xf32>
    %28 = vector.extract_strided_slice %21 {offsets = [0, 256], sizes = [8, 256], strides = [1, 1]} : vector<8x512xf32> to vector<8x256xf32>
    %29 = arith.addf %27, %28 : vector<8x256xf32>
    %30 = vector.extract_strided_slice %25 {offsets = [0, 0], sizes = [8, 192], strides = [1, 1]} : vector<8x256xf32> to vector<8x192xf32>
    %31 = arith.negf %30 : vector<8x192xf32>
    %32 = math.exp %31 : vector<8x192xf32>
    %cst_28 = arith.constant 1.000000e+00 : f32
    %33 = vector.broadcast %cst_28 : f32 to vector<8x192xf32>
    %34 = arith.addf %33, %32 : vector<8x192xf32>
    %35 = arith.divf %33, %34 : vector<8x192xf32>
    %36 = vector.extract_strided_slice %25 {offsets = [0, 192], sizes = [8, 64], strides = [1, 1]} : vector<8x256xf32> to vector<8x64xf32>
    %37 = math.tanh %36 : vector<8x64xf32>
    %38 = vector.extract_strided_slice %29 {offsets = [0, 0], sizes = [8, 192], strides = [1, 1]} : vector<8x256xf32> to vector<8x192xf32>
    %39 = arith.negf %38 : vector<8x192xf32>
    %40 = math.exp %39 : vector<8x192xf32>
    %cst_29 = arith.constant 1.000000e+00 : f32
    %41 = vector.broadcast %cst_29 : f32 to vector<8x192xf32>
    %42 = arith.addf %41, %40 : vector<8x192xf32>
    %43 = arith.divf %41, %42 : vector<8x192xf32>
    %44 = vector.extract_strided_slice %29 {offsets = [0, 192], sizes = [8, 64], strides = [1, 1]} : vector<8x256xf32> to vector<8x64xf32>
    %45 = math.tanh %44 : vector<8x64xf32>
    %46 = vector.extract_strided_slice %35 {offsets = [0, 64], sizes = [8, 64], strides = [1, 1]} : vector<8x192xf32> to vector<8x64xf32>
    %c0_30 = arith.constant 0 : index
    %c0_31 = arith.constant 0 : index
    %47 = vector.load %arg8[%c0_30, %c0_31] : memref<8x128xf32, #tpu.memory_space<vmem>>, vector<8x64xf32>
    %48 = arith.mulf %46, %47 : vector<8x64xf32>
    %49 = vector.extract_strided_slice %35 {offsets = [0, 0], sizes = [8, 64], strides = [1, 1]} : vector<8x192xf32> to vector<8x64xf32>
    %50 = arith.mulf %49, %37 : vector<8x64xf32>
    %51 = arith.addf %48, %50 : vector<8x64xf32>
    %52 = vector.extract_strided_slice %43 {offsets = [0, 64], sizes = [8, 64], strides = [1, 1]} : vector<8x192xf32> to vector<8x64xf32>
    %c0_32 = arith.constant 0 : index
    %c64 = arith.constant 64 : index
    %53 = vector.load %arg8[%c0_32, %c64] : memref<8x128xf32, #tpu.memory_space<vmem>>, vector<8x64xf32>
    %54 = arith.mulf %52, %53 : vector<8x64xf32>
    %55 = vector.extract_strided_slice %43 {offsets = [0, 0], sizes = [8, 64], strides = [1, 1]} : vector<8x192xf32> to vector<8x64xf32>
    %56 = arith.mulf %55, %45 : vector<8x64xf32>
    %57 = arith.addf %54, %56 : vector<8x64xf32>
    %58 = vector.extract_strided_slice %35 {offsets = [0, 128], sizes = [8, 64], strides = [1, 1]} : vector<8x192xf32> to vector<8x64xf32>
    %59 = math.tanh %51 : vector<8x64xf32>
    %60 = arith.mulf %58, %59 : vector<8x64xf32>
    %61 = vector.extract_strided_slice %43 {offsets = [0, 128], sizes = [8, 64], strides = [1, 1]} : vector<8x192xf32> to vector<8x64xf32>
    %62 = math.tanh %57 : vector<8x64xf32>
    %63 = arith.mulf %61, %62 : vector<8x64xf32>
    %c0_33 = arith.constant 0 : index
    %c0_34 = arith.constant 0 : index
    %64 = vector.load %arg8[%c0_33, %c0_34] : memref<8x128xf32, #tpu.memory_space<vmem>>, vector<8x64xf32>
    tpu.vector_store %arg8[%c0_33, %c0_34], %51 {strides = array<i32>} : memref<8x128xf32, #tpu.memory_space<vmem>>, vector<8x64xf32>,
    %c0_35 = arith.constant 0 : index
    %c64_36 = arith.constant 64 : index
    %65 = vector.load %arg8[%c0_35, %c64_36] : memref<8x128xf32, #tpu.memory_space<vmem>>, vector<8x64xf32>
    tpu.vector_store %arg8[%c0_35, %c64_36], %57 {strides = array<i32>} : memref<8x128xf32, #tpu.memory_space<vmem>>, vector<8x64xf32>,
    %c0_37 = arith.constant 0 : index
    %c0_38 = arith.constant 0 : index
    %66 = vector.load %arg7[%c0_37, %c0_38] : memref<8x128xf32, #tpu.memory_space<vmem>>, vector<8x64xf32>
    tpu.vector_store %arg7[%c0_37, %c0_38], %60 {strides = array<i32>} : memref<8x128xf32, #tpu.memory_space<vmem>>, vector<8x64xf32>,
    %c0_39 = arith.constant 0 : index
    %c64_40 = arith.constant 64 : index
    %67 = vector.load %arg7[%c0_39, %c64_40] : memref<8x128xf32, #tpu.memory_space<vmem>>, vector<8x64xf32>
    tpu.vector_store %arg7[%c0_39, %c64_40], %63 {strides = array<i32>} : memref<8x128xf32, #tpu.memory_space<vmem>>, vector<8x64xf32>,
    %c0_41 = arith.constant 0 : index
    %c0_42 = arith.constant 0 : index
    %c0_43 = arith.constant 0 : index
    %c0_44 = arith.constant 0 : index
    %68 = vector.load %arg5[%c0_41, %c0_42, %c0_43, %c0_44] : memref<1x8x8x128xf32, #tpu.memory_space<vmem>>, vector<1x1x8x64xf32>
    %69 = vector.shape_cast %68 : vector<1x1x8x64xf32> to vector<8x64xf32>
    %70 = vector.shape_cast %60 : vector<8x64xf32> to vector<1x1x8x64xf32>
    tpu.vector_store %arg5[%c0_41, %c0_42, %c0_43, %c0_44], %70 {strides = array<i32>} : memref<1x8x8x128xf32, #tpu.memory_space<vmem>>, vector<1x1x8x64xf32>,
    %c0_45 = arith.constant 0 : index
    %c7_46 = arith.constant 7 : index
    %c0_47 = arith.constant 0 : index
    %c64_48 = arith.constant 64 : index
    %71 = vector.load %arg5[%c0_45, %c7_46, %c0_47, %c64_48] : memref<1x8x8x128xf32, #tpu.memory_space<vmem>>, vector<1x1x8x64xf32>
    %72 = vector.shape_cast %71 : vector<1x1x8x64xf32> to vector<8x64xf32>
    %73 = vector.shape_cast %63 : vector<8x64xf32> to vector<1x1x8x64xf32>
    tpu.vector_store %arg5[%c0_45, %c7_46, %c0_47, %c64_48], %73 {strides = array<i32>} : memref<1x8x8x128xf32, #tpu.memory_space<vmem>>, vector<1x1x8x64xf32>,
    %c0_49 = arith.constant 0 : index
    %c0_50 = arith.constant 0 : index
    %74 = vector.load %arg7[%c0_49, %c0_50] : memref<8x128xf32, #tpu.memory_space<vmem>>, vector<8x128xf32>
    %75 = arith.truncf %74 : vector<8x128xf32> to vector<8x128xbf16>
    %cst_51 = arith.constant dense<0.000000e+00> : vector<8x512xf32>
    %76 = tpu.matmul %75, %14, %cst_51 {dimension_numbers = #tpu.dot_dimension_numbers<[1], [0], [0], [1], [0, 0, 1, 1], [], []>} : vector<8x128xbf16>, vector<128x512xbf16>, vector<8x512xf32> -> vector<8x512xf32>
    %c1 = arith.constant 1 : index
    %c0_52 = arith.constant 0 : index
    %c0_53 = arith.constant 0 : index
    %77 = vector.load %arg6[%c1, %c0_52, %c0_53] : memref<8x8x512xf32, #tpu.memory_space<vmem>>, vector<1x8x256xf32>
    %78 = vector.shape_cast %77 : vector<1x8x256xf32> to vector<8x256xf32>
    %79 = vector.extract_strided_slice %76 {offsets = [0, 0], sizes = [8, 256], strides = [1, 1]} : vector<8x512xf32> to vector<8x256xf32>
    %80 = arith.addf %78, %79 : vector<8x256xf32>
    %c6 = arith.constant 6 : index
    %c0_54 = arith.constant 0 : index
    %c256_55 = arith.constant 256 : index
    %81 = vector.load %arg6[%c6, %c0_54, %c256_55] : memref<8x8x512xf32, #tpu.memory_space<vmem>>, vector<1x8x256xf32>
    %82 = vector.shape_cast %81 : vector<1x8x256xf32> to vector<8x256xf32>
    %83 = vector.extract_strided_slice %76 {offsets = [0, 256], sizes = [8, 256], strides = [1, 1]} : vector<8x512xf32> to vector<8x256xf32>
    %84 = arith.addf %82, %83 : vector<8x256xf32>
    %85 = vector.extract_strided_slice %80 {offsets = [0, 0], sizes = [8, 192], strides = [1, 1]} : vector<8x256xf32> to vector<8x192xf32>
    %86 = arith.negf %85 : vector<8x192xf32>
    %87 = math.exp %86 : vector<8x192xf32>
    %cst_56 = arith.constant 1.000000e+00 : f32
    %88 = vector.broadcast %cst_56 : f32 to vector<8x192xf32>
    %89 = arith.addf %88, %87 : vector<8x192xf32>
    %90 = arith.divf %88, %89 : vector<8x192xf32>
    %91 = vector.extract_strided_slice %80 {offsets = [0, 192], sizes = [8, 64], strides = [1, 1]} : vector<8x256xf32> to vector<8x64xf32>
    %92 = math.tanh %91 : vector<8x64xf32>
    %93 = vector.extract_strided_slice %84 {offsets = [0, 0], sizes = [8, 192], strides = [1, 1]} : vector<8x256xf32> to vector<8x192xf32>
    %94 = arith.negf %93 : vector<8x192xf32>
    %95 = math.exp %94 : vector<8x192xf32>
    %cst_57 = arith.constant 1.000000e+00 : f32
    %96 = vector.broadcast %cst_57 : f32 to vector<8x192xf32>
    %97 = arith.addf %96, %95 : vector<8x192xf32>
    %98 = arith.divf %96, %97 : vector<8x192xf32>
    %99 = vector.extract_strided_slice %84 {offsets = [0, 192], sizes = [8, 64], strides = [1, 1]} : vector<8x256xf32> to vector<8x64xf32>
    %100 = math.tanh %99 : vector<8x64xf32>
    %101 = vector.extract_strided_slice %90 {offsets = [0, 64], sizes = [8, 64], strides = [1, 1]} : vector<8x192xf32> to vector<8x64xf32>
    %c0_58 = arith.constant 0 : index
    %c0_59 = arith.constant 0 : index
    %102 = vector.load %arg8[%c0_58, %c0_59] : memref<8x128xf32, #tpu.memory_space<vmem>>, vector<8x64xf32>
    %103 = arith.mulf %101, %102 : vector<8x64xf32>
    %104 = vector.extract_strided_slice %90 {offsets = [0, 0], sizes = [8, 64], strides = [1, 1]} : vector<8x192xf32> to vector<8x64xf32>
    %105 = arith.mulf %104, %92 : vector<8x64xf32>
    %106 = arith.addf %103, %105 : vector<8x64xf32>
    %107 = vector.extract_strided_slice %98 {offsets = [0, 64], sizes = [8, 64], strides = [1, 1]} : vector<8x192xf32> to vector<8x64xf32>
    %c0_60 = arith.constant 0 : index
    %c64_61 = arith.constant 64 : index
    %108 = vector.load %arg8[%c0_60, %c64_61] : memref<8x128xf32, #tpu.memory_space<vmem>>, vector<8x64xf32>
    %109 = arith.mulf %107, %108 : vector<8x64xf32>
    %110 = vector.extract_strided_slice %98 {offsets = [0, 0], sizes = [8, 64], strides = [1, 1]} : vector<8x192xf32> to vector<8x64xf32>
    %111 = arith.mulf %110, %100 : vector<8x64xf32>
    %112 = arith.addf %109, %111 : vector<8x64xf32>
    %113 = vector.extract_strided_slice %90 {offsets = [0, 128], sizes = [8, 64], strides = [1, 1]} : vector<8x192xf32> to vector<8x64xf32>
    %114 = math.tanh %106 : vector<8x64xf32>
    %115 = arith.mulf %113, %114 : vector<8x64xf32>
    %116 = vector.extract_strided_slice %98 {offsets = [0, 128], sizes = [8, 64], strides = [1, 1]} : vector<8x192xf32> to vector<8x64xf32>
    %117 = math.tanh %112 : vector<8x64xf32>
    %118 = arith.mulf %116, %117 : vector<8x64xf32>
    %c0_62 = arith.constant 0 : index
    %c0_63 = arith.constant 0 : index
    %119 = vector.load %arg8[%c0_62, %c0_63] : memref<8x128xf32, #tpu.memory_space<vmem>>, vector<8x64xf32>
    tpu.vector_store %arg8[%c0_62, %c0_63], %106 {strides = array<i32>} : memref<8x128xf32, #tpu.memory_space<vmem>>, vector<8x64xf32>,
    %c0_64 = arith.constant 0 : index
    %c64_65 = arith.constant 64 : index
    %120 = vector.load %arg8[%c0_64, %c64_65] : memref<8x128xf32, #tpu.memory_space<vmem>>, vector<8x64xf32>
    tpu.vector_store %arg8[%c0_64, %c64_65], %112 {strides = array<i32>} : memref<8x128xf32, #tpu.memory_space<vmem>>, vector<8x64xf32>,
    %c0_66 = arith.constant 0 : index
    %c0_67 = arith.constant 0 : index
    %121 = vector.load %arg7[%c0_66, %c0_67] : memref<8x128xf32, #tpu.memory_space<vmem>>, vector<8x64xf32>
    tpu.vector_store %arg7[%c0_66, %c0_67], %115 {strides = array<i32>} : memref<8x128xf32, #tpu.memory_space<vmem>>, vector<8x64xf32>,
    %c0_68 = arith.constant 0 : index
    %c64_69 = arith.constant 64 : index
    %122 = vector.load %arg7[%c0_68, %c64_69] : memref<8x128xf32, #tpu.memory_space<vmem>>, vector<8x64xf32>
    tpu.vector_store %arg7[%c0_68, %c64_69], %118 {strides = array<i32>} : memref<8x128xf32, #tpu.memory_space<vmem>>, vector<8x64xf32>,
    %c0_70 = arith.constant 0 : index
    %c1_71 = arith.constant 1 : index
    %c0_72 = arith.constant 0 : index
    %c0_73 = arith.constant 0 : index
    %123 = vector.load %arg5[%c0_70, %c1_71, %c0_72, %c0_73] : memref<1x8x8x128xf32, #tpu.memory_space<vmem>>, vector<1x1x8x64xf32>
    %124 = vector.shape_cast %123 : vector<1x1x8x64xf32> to vector<8x64xf32>
    %125 = vector.shape_cast %115 : vector<8x64xf32> to vector<1x1x8x64xf32>
    tpu.vector_store %arg5[%c0_70, %c1_71, %c0_72, %c0_73], %125 {strides = array<i32>} : memref<1x8x8x128xf32, #tpu.memory_space<vmem>>, vector<1x1x8x64xf32>,
    %c0_74 = arith.constant 0 : index
    %c6_75 = arith.constant 6 : index
    %c0_76 = arith.constant 0 : index
    %c64_77 = arith.constant 64 : index
    %126 = vector.load %arg5[%c0_74, %c6_75, %c0_76, %c64_77] : memref<1x8x8x128xf32, #tpu.memory_space<vmem>>, vector<1x1x8x64xf32>
    %127 = vector.shape_cast %126 : vector<1x1x8x64xf32> to vector<8x64xf32>
    %128 = vector.shape_cast %118 : vector<8x64xf32> to vector<1x1x8x64xf32>
    tpu.vector_store %arg5[%c0_74, %c6_75, %c0_76, %c64_77], %128 {strides = array<i32>} : memref<1x8x8x128xf32, #tpu.memory_space<vmem>>, vector<1x1x8x64xf32>,
    %c0_78 = arith.constant 0 : index
    %c0_79 = arith.constant 0 : index
    %129 = vector.load %arg7[%c0_78, %c0_79] : memref<8x128xf32, #tpu.memory_space<vmem>>, vector<8x128xf32>
    %130 = arith.truncf %129 : vector<8x128xf32> to vector<8x128xbf16>
    %cst_80 = arith.constant dense<0.000000e+00> : vector<8x512xf32>
    %131 = tpu.matmul %130, %14, %cst_80 {dimension_numbers = #tpu.dot_dimension_numbers<[1], [0], [0], [1], [0, 0, 1, 1], [], []>} : vector<8x128xbf16>, vector<128x512xbf16>, vector<8x512xf32> -> vector<8x512xf32>
    %c2 = arith.constant 2 : index
    %c0_81 = arith.constant 0 : index
    %c0_82 = arith.constant 0 : index
    %132 = vector.load %arg6[%c2, %c0_81, %c0_82] : memref<8x8x512xf32, #tpu.memory_space<vmem>>, vector<1x8x256xf32>
    %133 = vector.shape_cast %132 : vector<1x8x256xf32> to vector<8x256xf32>
    %134 = vector.extract_strided_slice %131 {offsets = [0, 0], sizes = [8, 256], strides = [1, 1]} : vector<8x512xf32> to vector<8x256xf32>
    %135 = arith.addf %133, %134 : vector<8x256xf32>
    %c5 = arith.constant 5 : index
    %c0_83 = arith.constant 0 : index
    %c256_84 = arith.constant 256 : index
    %136 = vector.load %arg6[%c5, %c0_83, %c256_84] : memref<8x8x512xf32, #tpu.memory_space<vmem>>, vector<1x8x256xf32>
    %137 = vector.shape_cast %136 : vector<1x8x256xf32> to vector<8x256xf32>
    %138 = vector.extract_strided_slice %131 {offsets = [0, 256], sizes = [8, 256], strides = [1, 1]} : vector<8x512xf32> to vector<8x256xf32>
    %139 = arith.addf %137, %138 : vector<8x256xf32>
    %140 = vector.extract_strided_slice %135 {offsets = [0, 0], sizes = [8, 192], strides = [1, 1]} : vector<8x256xf32> to vector<8x192xf32>
    %141 = arith.negf %140 : vector<8x192xf32>
    %142 = math.exp %141 : vector<8x192xf32>
    %cst_85 = arith.constant 1.000000e+00 : f32
    %143 = vector.broadcast %cst_85 : f32 to vector<8x192xf32>
    %144 = arith.addf %143, %142 : vector<8x192xf32>
    %145 = arith.divf %143, %144 : vector<8x192xf32>
    %146 = vector.extract_strided_slice %135 {offsets = [0, 192], sizes = [8, 64], strides = [1, 1]} : vector<8x256xf32> to vector<8x64xf32>
    %147 = math.tanh %146 : vector<8x64xf32>
    %148 = vector.extract_strided_slice %139 {offsets = [0, 0], sizes = [8, 192], strides = [1, 1]} : vector<8x256xf32> to vector<8x192xf32>
    %149 = arith.negf %148 : vector<8x192xf32>
    %150 = math.exp %149 : vector<8x192xf32>
    %cst_86 = arith.constant 1.000000e+00 : f32
    %151 = vector.broadcast %cst_86 : f32 to vector<8x192xf32>
    %152 = arith.addf %151, %150 : vector<8x192xf32>
    %153 = arith.divf %151, %152 : vector<8x192xf32>
    %154 = vector.extract_strided_slice %139 {offsets = [0, 192], sizes = [8, 64], strides = [1, 1]} : vector<8x256xf32> to vector<8x64xf32>
    %155 = math.tanh %154 : vector<8x64xf32>
    %156 = vector.extract_strided_slice %145 {offsets = [0, 64], sizes = [8, 64], strides = [1, 1]} : vector<8x192xf32> to vector<8x64xf32>
    %c0_87 = arith.constant 0 : index
    %c0_88 = arith.constant 0 : index
    %157 = vector.load %arg8[%c0_87, %c0_88] : memref<8x128xf32, #tpu.memory_space<vmem>>, vector<8x64xf32>
    %158 = arith.mulf %156, %157 : vector<8x64xf32>
    %159 = vector.extract_strided_slice %145 {offsets = [0, 0], sizes = [8, 64], strides = [1, 1]} : vector<8x192xf32> to vector<8x64xf32>
    %160 = arith.mulf %159, %147 : vector<8x64xf32>
    %161 = arith.addf %158, %160 : vector<8x64xf32>
    %162 = vector.extract_strided_slice %153 {offsets = [0, 64], sizes = [8, 64], strides = [1, 1]} : vector<8x192xf32> to vector<8x64xf32>
    %c0_89 = arith.constant 0 : index
    %c64_90 = arith.constant 64 : index
    %163 = vector.load %arg8[%c0_89, %c64_90] : memref<8x128xf32, #tpu.memory_space<vmem>>, vector<8x64xf32>
    %164 = arith.mulf %162, %163 : vector<8x64xf32>
    %165 = vector.extract_strided_slice %153 {offsets = [0, 0], sizes = [8, 64], strides = [1, 1]} : vector<8x192xf32> to vector<8x64xf32>
    %166 = arith.mulf %165, %155 : vector<8x64xf32>
    %167 = arith.addf %164, %166 : vector<8x64xf32>
    %168 = vector.extract_strided_slice %145 {offsets = [0, 128], sizes = [8, 64], strides = [1, 1]} : vector<8x192xf32> to vector<8x64xf32>
    %169 = math.tanh %161 : vector<8x64xf32>
    %170 = arith.mulf %168, %169 : vector<8x64xf32>
    %171 = vector.extract_strided_slice %153 {offsets = [0, 128], sizes = [8, 64], strides = [1, 1]} : vector<8x192xf32> to vector<8x64xf32>
    %172 = math.tanh %167 : vector<8x64xf32>
    %173 = arith.mulf %171, %172 : vector<8x64xf32>
    %c0_91 = arith.constant 0 : index
    %c0_92 = arith.constant 0 : index
    %174 = vector.load %arg8[%c0_91, %c0_92] : memref<8x128xf32, #tpu.memory_space<vmem>>, vector<8x64xf32>
    tpu.vector_store %arg8[%c0_91, %c0_92], %161 {strides = array<i32>} : memref<8x128xf32, #tpu.memory_space<vmem>>, vector<8x64xf32>,
    %c0_93 = arith.constant 0 : index
    %c64_94 = arith.constant 64 : index
    %175 = vector.load %arg8[%c0_93, %c64_94] : memref<8x128xf32, #tpu.memory_space<vmem>>, vector<8x64xf32>
    tpu.vector_store %arg8[%c0_93, %c64_94], %167 {strides = array<i32>} : memref<8x128xf32, #tpu.memory_space<vmem>>, vector<8x64xf32>,
    %c0_95 = arith.constant 0 : index
    %c0_96 = arith.constant 0 : index
    %176 = vector.load %arg7[%c0_95, %c0_96] : memref<8x128xf32, #tpu.memory_space<vmem>>, vector<8x64xf32>
    tpu.vector_store %arg7[%c0_95, %c0_96], %170 {strides = array<i32>} : memref<8x128xf32, #tpu.memory_space<vmem>>, vector<8x64xf32>,
    %c0_97 = arith.constant 0 : index
    %c64_98 = arith.constant 64 : index
    %177 = vector.load %arg7[%c0_97, %c64_98] : memref<8x128xf32, #tpu.memory_space<vmem>>, vector<8x64xf32>
    tpu.vector_store %arg7[%c0_97, %c64_98], %173 {strides = array<i32>} : memref<8x128xf32, #tpu.memory_space<vmem>>, vector<8x64xf32>,
    %c0_99 = arith.constant 0 : index
    %c2_100 = arith.constant 2 : index
    %c0_101 = arith.constant 0 : index
    %c0_102 = arith.constant 0 : index
    %178 = vector.load %arg5[%c0_99, %c2_100, %c0_101, %c0_102] : memref<1x8x8x128xf32, #tpu.memory_space<vmem>>, vector<1x1x8x64xf32>
    %179 = vector.shape_cast %178 : vector<1x1x8x64xf32> to vector<8x64xf32>
    %180 = vector.shape_cast %170 : vector<8x64xf32> to vector<1x1x8x64xf32>
    tpu.vector_store %arg5[%c0_99, %c2_100, %c0_101, %c0_102], %180 {strides = array<i32>} : memref<1x8x8x128xf32, #tpu.memory_space<vmem>>, vector<1x1x8x64xf32>,
    %c0_103 = arith.constant 0 : index
    %c5_104 = arith.constant 5 : index
    %c0_105 = arith.constant 0 : index
    %c64_106 = arith.constant 64 : index
    %181 = vector.load %arg5[%c0_103, %c5_104, %c0_105, %c64_106] : memref<1x8x8x128xf32, #tpu.memory_space<vmem>>, vector<1x1x8x64xf32>
    %182 = vector.shape_cast %181 : vector<1x1x8x64xf32> to vector<8x64xf32>
    %183 = vector.shape_cast %173 : vector<8x64xf32> to vector<1x1x8x64xf32>
    tpu.vector_store %arg5[%c0_103, %c5_104, %c0_105, %c64_106], %183 {strides = array<i32>} : memref<1x8x8x128xf32, #tpu.memory_space<vmem>>, vector<1x1x8x64xf32>,
    %c0_107 = arith.constant 0 : index
    %c0_108 = arith.constant 0 : index
    %184 = vector.load %arg7[%c0_107, %c0_108] : memref<8x128xf32, #tpu.memory_space<vmem>>, vector<8x128xf32>
    %185 = arith.truncf %184 : vector<8x128xf32> to vector<8x128xbf16>
    %cst_109 = arith.constant dense<0.000000e+00> : vector<8x512xf32>
    %186 = tpu.matmul %185, %14, %cst_109 {dimension_numbers = #tpu.dot_dimension_numbers<[1], [0], [0], [1], [0, 0, 1, 1], [], []>} : vector<8x128xbf16>, vector<128x512xbf16>, vector<8x512xf32> -> vector<8x512xf32>
    %c3 = arith.constant 3 : index
    %c0_110 = arith.constant 0 : index
    %c0_111 = arith.constant 0 : index
    %187 = vector.load %arg6[%c3, %c0_110, %c0_111] : memref<8x8x512xf32, #tpu.memory_space<vmem>>, vector<1x8x256xf32>
    %188 = vector.shape_cast %187 : vector<1x8x256xf32> to vector<8x256xf32>
    %189 = vector.extract_strided_slice %186 {offsets = [0, 0], sizes = [8, 256], strides = [1, 1]} : vector<8x512xf32> to vector<8x256xf32>
    %190 = arith.addf %188, %189 : vector<8x256xf32>
    %c4 = arith.constant 4 : index
    %c0_112 = arith.constant 0 : index
    %c256_113 = arith.constant 256 : index
    %191 = vector.load %arg6[%c4, %c0_112, %c256_113] : memref<8x8x512xf32, #tpu.memory_space<vmem>>, vector<1x8x256xf32>
    %192 = vector.shape_cast %191 : vector<1x8x256xf32> to vector<8x256xf32>
    %193 = vector.extract_strided_slice %186 {offsets = [0, 256], sizes = [8, 256], strides = [1, 1]} : vector<8x512xf32> to vector<8x256xf32>
    %194 = arith.addf %192, %193 : vector<8x256xf32>
    %195 = vector.extract_strided_slice %190 {offsets = [0, 0], sizes = [8, 192], strides = [1, 1]} : vector<8x256xf32> to vector<8x192xf32>
    %196 = arith.negf %195 : vector<8x192xf32>
    %197 = math.exp %196 : vector<8x192xf32>
    %cst_114 = arith.constant 1.000000e+00 : f32
    %198 = vector.broadcast %cst_114 : f32 to vector<8x192xf32>
    %199 = arith.addf %198, %197 : vector<8x192xf32>
    %200 = arith.divf %198, %199 : vector<8x192xf32>
    %201 = vector.extract_strided_slice %190 {offsets = [0, 192], sizes = [8, 64], strides = [1, 1]} : vector<8x256xf32> to vector<8x64xf32>
    %202 = math.tanh %201 : vector<8x64xf32>
    %203 = vector.extract_strided_slice %194 {offsets = [0, 0], sizes = [8, 192], strides = [1, 1]} : vector<8x256xf32> to vector<8x192xf32>
    %204 = arith.negf %203 : vector<8x192xf32>
    %205 = math.exp %204 : vector<8x192xf32>
    %cst_115 = arith.constant 1.000000e+00 : f32
    %206 = vector.broadcast %cst_115 : f32 to vector<8x192xf32>
    %207 = arith.addf %206, %205 : vector<8x192xf32>
    %208 = arith.divf %206, %207 : vector<8x192xf32>
    %209 = vector.extract_strided_slice %194 {offsets = [0, 192], sizes = [8, 64], strides = [1, 1]} : vector<8x256xf32> to vector<8x64xf32>
    %210 = math.tanh %209 : vector<8x64xf32>
    %211 = vector.extract_strided_slice %200 {offsets = [0, 64], sizes = [8, 64], strides = [1, 1]} : vector<8x192xf32> to vector<8x64xf32>
    %c0_116 = arith.constant 0 : index
    %c0_117 = arith.constant 0 : index
    %212 = vector.load %arg8[%c0_116, %c0_117] : memref<8x128xf32, #tpu.memory_space<vmem>>, vector<8x64xf32>
    %213 = arith.mulf %211, %212 : vector<8x64xf32>
    %214 = vector.extract_strided_slice %200 {offsets = [0, 0], sizes = [8, 64], strides = [1, 1]} : vector<8x192xf32> to vector<8x64xf32>
    %215 = arith.mulf %214, %202 : vector<8x64xf32>
    %216 = arith.addf %213, %215 : vector<8x64xf32>
    %217 = vector.extract_strided_slice %208 {offsets = [0, 64], sizes = [8, 64], strides = [1, 1]} : vector<8x192xf32> to vector<8x64xf32>
    %c0_118 = arith.constant 0 : index
    %c64_119 = arith.constant 64 : index
    %218 = vector.load %arg8[%c0_118, %c64_119] : memref<8x128xf32, #tpu.memory_space<vmem>>, vector<8x64xf32>
    %219 = arith.mulf %217, %218 : vector<8x64xf32>
    %220 = vector.extract_strided_slice %208 {offsets = [0, 0], sizes = [8, 64], strides = [1, 1]} : vector<8x192xf32> to vector<8x64xf32>
    %221 = arith.mulf %220, %210 : vector<8x64xf32>
    %222 = arith.addf %219, %221 : vector<8x64xf32>
    %223 = vector.extract_strided_slice %200 {offsets = [0, 128], sizes = [8, 64], strides = [1, 1]} : vector<8x192xf32> to vector<8x64xf32>
    %224 = math.tanh %216 : vector<8x64xf32>
    %225 = arith.mulf %223, %224 : vector<8x64xf32>
    %226 = vector.extract_strided_slice %208 {offsets = [0, 128], sizes = [8, 64], strides = [1, 1]} : vector<8x192xf32> to vector<8x64xf32>
    %227 = math.tanh %222 : vector<8x64xf32>
    %228 = arith.mulf %226, %227 : vector<8x64xf32>
    %c0_120 = arith.constant 0 : index
    %c0_121 = arith.constant 0 : index
    %229 = vector.load %arg8[%c0_120, %c0_121] : memref<8x128xf32, #tpu.memory_space<vmem>>, vector<8x64xf32>
    tpu.vector_store %arg8[%c0_120, %c0_121], %216 {strides = array<i32>} : memref<8x128xf32, #tpu.memory_space<vmem>>, vector<8x64xf32>,
    %c0_122 = arith.constant 0 : index
    %c64_123 = arith.constant 64 : index
    %230 = vector.load %arg8[%c0_122, %c64_123] : memref<8x128xf32, #tpu.memory_space<vmem>>, vector<8x64xf32>
    tpu.vector_store %arg8[%c0_122, %c64_123], %222 {strides = array<i32>} : memref<8x128xf32, #tpu.memory_space<vmem>>, vector<8x64xf32>,
    %c0_124 = arith.constant 0 : index
    %c0_125 = arith.constant 0 : index
    %231 = vector.load %arg7[%c0_124, %c0_125] : memref<8x128xf32, #tpu.memory_space<vmem>>, vector<8x64xf32>
    tpu.vector_store %arg7[%c0_124, %c0_125], %225 {strides = array<i32>} : memref<8x128xf32, #tpu.memory_space<vmem>>, vector<8x64xf32>,
    %c0_126 = arith.constant 0 : index
    %c64_127 = arith.constant 64 : index
    %232 = vector.load %arg7[%c0_126, %c64_127] : memref<8x128xf32, #tpu.memory_space<vmem>>, vector<8x64xf32>
    tpu.vector_store %arg7[%c0_126, %c64_127], %228 {strides = array<i32>} : memref<8x128xf32, #tpu.memory_space<vmem>>, vector<8x64xf32>,
    %c0_128 = arith.constant 0 : index
    %c3_129 = arith.constant 3 : index
    %c0_130 = arith.constant 0 : index
    %c0_131 = arith.constant 0 : index
    %233 = vector.load %arg5[%c0_128, %c3_129, %c0_130, %c0_131] : memref<1x8x8x128xf32, #tpu.memory_space<vmem>>, vector<1x1x8x64xf32>
    %234 = vector.shape_cast %233 : vector<1x1x8x64xf32> to vector<8x64xf32>
    %235 = vector.shape_cast %225 : vector<8x64xf32> to vector<1x1x8x64xf32>
    tpu.vector_store %arg5[%c0_128, %c3_129, %c0_130, %c0_131], %235 {strides = array<i32>} : memref<1x8x8x128xf32, #tpu.memory_space<vmem>>, vector<1x1x8x64xf32>,
    %c0_132 = arith.constant 0 : index
    %c4_133 = arith.constant 4 : index
    %c0_134 = arith.constant 0 : index
    %c64_135 = arith.constant 64 : index
    %236 = vector.load %arg5[%c0_132, %c4_133, %c0_134, %c64_135] : memref<1x8x8x128xf32, #tpu.memory_space<vmem>>, vector<1x1x8x64xf32>
    %237 = vector.shape_cast %236 : vector<1x1x8x64xf32> to vector<8x64xf32>
    %238 = vector.shape_cast %228 : vector<8x64xf32> to vector<1x1x8x64xf32>
    tpu.vector_store %arg5[%c0_132, %c4_133, %c0_134, %c64_135], %238 {strides = array<i32>} : memref<1x8x8x128xf32, #tpu.memory_space<vmem>>, vector<1x1x8x64xf32>,
    %c0_136 = arith.constant 0 : index
    %c0_137 = arith.constant 0 : index
    %239 = vector.load %arg7[%c0_136, %c0_137] : memref<8x128xf32, #tpu.memory_space<vmem>>, vector<8x128xf32>
    %240 = arith.truncf %239 : vector<8x128xf32> to vector<8x128xbf16>
    %cst_138 = arith.constant dense<0.000000e+00> : vector<8x512xf32>
    %241 = tpu.matmul %240, %14, %cst_138 {dimension_numbers = #tpu.dot_dimension_numbers<[1], [0], [0], [1], [0, 0, 1, 1], [], []>} : vector<8x128xbf16>, vector<128x512xbf16>, vector<8x512xf32> -> vector<8x512xf32>
    %c4_139 = arith.constant 4 : index
    %c0_140 = arith.constant 0 : index
    %c0_141 = arith.constant 0 : index
    %242 = vector.load %arg6[%c4_139, %c0_140, %c0_141] : memref<8x8x512xf32, #tpu.memory_space<vmem>>, vector<1x8x256xf32>
    %243 = vector.shape_cast %242 : vector<1x8x256xf32> to vector<8x256xf32>
    %244 = vector.extract_strided_slice %241 {offsets = [0, 0], sizes = [8, 256], strides = [1, 1]} : vector<8x512xf32> to vector<8x256xf32>
    %245 = arith.addf %243, %244 : vector<8x256xf32>
    %c3_142 = arith.constant 3 : index
    %c0_143 = arith.constant 0 : index
    %c256_144 = arith.constant 256 : index
    %246 = vector.load %arg6[%c3_142, %c0_143, %c256_144] : memref<8x8x512xf32, #tpu.memory_space<vmem>>, vector<1x8x256xf32>
    %247 = vector.shape_cast %246 : vector<1x8x256xf32> to vector<8x256xf32>
    %248 = vector.extract_strided_slice %241 {offsets = [0, 256], sizes = [8, 256], strides = [1, 1]} : vector<8x512xf32> to vector<8x256xf32>
    %249 = arith.addf %247, %248 : vector<8x256xf32>
    %250 = vector.extract_strided_slice %245 {offsets = [0, 0], sizes = [8, 192], strides = [1, 1]} : vector<8x256xf32> to vector<8x192xf32>
    %251 = arith.negf %250 : vector<8x192xf32>
    %252 = math.exp %251 : vector<8x192xf32>
    %cst_145 = arith.constant 1.000000e+00 : f32
    %253 = vector.broadcast %cst_145 : f32 to vector<8x192xf32>
    %254 = arith.addf %253, %252 : vector<8x192xf32>
    %255 = arith.divf %253, %254 : vector<8x192xf32>
    %256 = vector.extract_strided_slice %245 {offsets = [0, 192], sizes = [8, 64], strides = [1, 1]} : vector<8x256xf32> to vector<8x64xf32>
    %257 = math.tanh %256 : vector<8x64xf32>
    %258 = vector.extract_strided_slice %249 {offsets = [0, 0], sizes = [8, 192], strides = [1, 1]} : vector<8x256xf32> to vector<8x192xf32>
    %259 = arith.negf %258 : vector<8x192xf32>
    %260 = math.exp %259 : vector<8x192xf32>
    %cst_146 = arith.constant 1.000000e+00 : f32
    %261 = vector.broadcast %cst_146 : f32 to vector<8x192xf32>
    %262 = arith.addf %261, %260 : vector<8x192xf32>
    %263 = arith.divf %261, %262 : vector<8x192xf32>
    %264 = vector.extract_strided_slice %249 {offsets = [0, 192], sizes = [8, 64], strides = [1, 1]} : vector<8x256xf32> to vector<8x64xf32>
    %265 = math.tanh %264 : vector<8x64xf32>
    %266 = vector.extract_strided_slice %255 {offsets = [0, 64], sizes = [8, 64], strides = [1, 1]} : vector<8x192xf32> to vector<8x64xf32>
    %c0_147 = arith.constant 0 : index
    %c0_148 = arith.constant 0 : index
    %267 = vector.load %arg8[%c0_147, %c0_148] : memref<8x128xf32, #tpu.memory_space<vmem>>, vector<8x64xf32>
    %268 = arith.mulf %266, %267 : vector<8x64xf32>
    %269 = vector.extract_strided_slice %255 {offsets = [0, 0], sizes = [8, 64], strides = [1, 1]} : vector<8x192xf32> to vector<8x64xf32>
    %270 = arith.mulf %269, %257 : vector<8x64xf32>
    %271 = arith.addf %268, %270 : vector<8x64xf32>
    %272 = vector.extract_strided_slice %263 {offsets = [0, 64], sizes = [8, 64], strides = [1, 1]} : vector<8x192xf32> to vector<8x64xf32>
    %c0_149 = arith.constant 0 : index
    %c64_150 = arith.constant 64 : index
    %273 = vector.load %arg8[%c0_149, %c64_150] : memref<8x128xf32, #tpu.memory_space<vmem>>, vector<8x64xf32>
    %274 = arith.mulf %272, %273 : vector<8x64xf32>
    %275 = vector.extract_strided_slice %263 {offsets = [0, 0], sizes = [8, 64], strides = [1, 1]} : vector<8x192xf32> to vector<8x64xf32>
    %276 = arith.mulf %275, %265 : vector<8x64xf32>
    %277 = arith.addf %274, %276 : vector<8x64xf32>
    %278 = vector.extract_strided_slice %255 {offsets = [0, 128], sizes = [8, 64], strides = [1, 1]} : vector<8x192xf32> to vector<8x64xf32>
    %279 = math.tanh %271 : vector<8x64xf32>
    %280 = arith.mulf %278, %279 : vector<8x64xf32>
    %281 = vector.extract_strided_slice %263 {offsets = [0, 128], sizes = [8, 64], strides = [1, 1]} : vector<8x192xf32> to vector<8x64xf32>
    %282 = math.tanh %277 : vector<8x64xf32>
    %283 = arith.mulf %281, %282 : vector<8x64xf32>
    %c0_151 = arith.constant 0 : index
    %c0_152 = arith.constant 0 : index
    %284 = vector.load %arg8[%c0_151, %c0_152] : memref<8x128xf32, #tpu.memory_space<vmem>>, vector<8x64xf32>
    tpu.vector_store %arg8[%c0_151, %c0_152], %271 {strides = array<i32>} : memref<8x128xf32, #tpu.memory_space<vmem>>, vector<8x64xf32>,
    %c0_153 = arith.constant 0 : index
    %c64_154 = arith.constant 64 : index
    %285 = vector.load %arg8[%c0_153, %c64_154] : memref<8x128xf32, #tpu.memory_space<vmem>>, vector<8x64xf32>
    tpu.vector_store %arg8[%c0_153, %c64_154], %277 {strides = array<i32>} : memref<8x128xf32, #tpu.memory_space<vmem>>, vector<8x64xf32>,
    %c0_155 = arith.constant 0 : index
    %c0_156 = arith.constant 0 : index
    %286 = vector.load %arg7[%c0_155, %c0_156] : memref<8x128xf32, #tpu.memory_space<vmem>>, vector<8x64xf32>
    tpu.vector_store %arg7[%c0_155, %c0_156], %280 {strides = array<i32>} : memref<8x128xf32, #tpu.memory_space<vmem>>, vector<8x64xf32>,
    %c0_157 = arith.constant 0 : index
    %c64_158 = arith.constant 64 : index
    %287 = vector.load %arg7[%c0_157, %c64_158] : memref<8x128xf32, #tpu.memory_space<vmem>>, vector<8x64xf32>
    tpu.vector_store %arg7[%c0_157, %c64_158], %283 {strides = array<i32>} : memref<8x128xf32, #tpu.memory_space<vmem>>, vector<8x64xf32>,
    %c0_159 = arith.constant 0 : index
    %c4_160 = arith.constant 4 : index
    %c0_161 = arith.constant 0 : index
    %c0_162 = arith.constant 0 : index
    %288 = vector.load %arg5[%c0_159, %c4_160, %c0_161, %c0_162] : memref<1x8x8x128xf32, #tpu.memory_space<vmem>>, vector<1x1x8x64xf32>
    %289 = vector.shape_cast %288 : vector<1x1x8x64xf32> to vector<8x64xf32>
    %290 = vector.shape_cast %280 : vector<8x64xf32> to vector<1x1x8x64xf32>
    tpu.vector_store %arg5[%c0_159, %c4_160, %c0_161, %c0_162], %290 {strides = array<i32>} : memref<1x8x8x128xf32, #tpu.memory_space<vmem>>, vector<1x1x8x64xf32>,
    %c0_163 = arith.constant 0 : index
    %c3_164 = arith.constant 3 : index
    %c0_165 = arith.constant 0 : index
    %c64_166 = arith.constant 64 : index
    %291 = vector.load %arg5[%c0_163, %c3_164, %c0_165, %c64_166] : memref<1x8x8x128xf32, #tpu.memory_space<vmem>>, vector<1x1x8x64xf32>
    %292 = vector.shape_cast %291 : vector<1x1x8x64xf32> to vector<8x64xf32>
    %293 = vector.shape_cast %283 : vector<8x64xf32> to vector<1x1x8x64xf32>
    tpu.vector_store %arg5[%c0_163, %c3_164, %c0_165, %c64_166], %293 {strides = array<i32>} : memref<1x8x8x128xf32, #tpu.memory_space<vmem>>, vector<1x1x8x64xf32>,
    %c0_167 = arith.constant 0 : index
    %c0_168 = arith.constant 0 : index
    %294 = vector.load %arg7[%c0_167, %c0_168] : memref<8x128xf32, #tpu.memory_space<vmem>>, vector<8x128xf32>
    %295 = arith.truncf %294 : vector<8x128xf32> to vector<8x128xbf16>
    %cst_169 = arith.constant dense<0.000000e+00> : vector<8x512xf32>
    %296 = tpu.matmul %295, %14, %cst_169 {dimension_numbers = #tpu.dot_dimension_numbers<[1], [0], [0], [1], [0, 0, 1, 1], [], []>} : vector<8x128xbf16>, vector<128x512xbf16>, vector<8x512xf32> -> vector<8x512xf32>
    %c5_170 = arith.constant 5 : index
    %c0_171 = arith.constant 0 : index
    %c0_172 = arith.constant 0 : index
    %297 = vector.load %arg6[%c5_170, %c0_171, %c0_172] : memref<8x8x512xf32, #tpu.memory_space<vmem>>, vector<1x8x256xf32>
    %298 = vector.shape_cast %297 : vector<1x8x256xf32> to vector<8x256xf32>
    %299 = vector.extract_strided_slice %296 {offsets = [0, 0], sizes = [8, 256], strides = [1, 1]} : vector<8x512xf32> to vector<8x256xf32>
    %300 = arith.addf %298, %299 : vector<8x256xf32>
    %c2_173 = arith.constant 2 : index
    %c0_174 = arith.constant 0 : index
    %c256_175 = arith.constant 256 : index
    %301 = vector.load %arg6[%c2_173, %c0_174, %c256_175] : memref<8x8x512xf32, #tpu.memory_space<vmem>>, vector<1x8x256xf32>
    %302 = vector.shape_cast %301 : vector<1x8x256xf32> to vector<8x256xf32>
    %303 = vector.extract_strided_slice %296 {offsets = [0, 256], sizes = [8, 256], strides = [1, 1]} : vector<8x512xf32> to vector<8x256xf32>
    %304 = arith.addf %302, %303 : vector<8x256xf32>
    %305 = vector.extract_strided_slice %300 {offsets = [0, 0], sizes = [8, 192], strides = [1, 1]} : vector<8x256xf32> to vector<8x192xf32>
    %306 = arith.negf %305 : vector<8x192xf32>
    %307 = math.exp %306 : vector<8x192xf32>
    %cst_176 = arith.constant 1.000000e+00 : f32
    %308 = vector.broadcast %cst_176 : f32 to vector<8x192xf32>
    %309 = arith.addf %308, %307 : vector<8x192xf32>
    %310 = arith.divf %308, %309 : vector<8x192xf32>
    %311 = vector.extract_strided_slice %300 {offsets = [0, 192], sizes = [8, 64], strides = [1, 1]} : vector<8x256xf32> to vector<8x64xf32>
    %312 = math.tanh %311 : vector<8x64xf32>
    %313 = vector.extract_strided_slice %304 {offsets = [0, 0], sizes = [8, 192], strides = [1, 1]} : vector<8x256xf32> to vector<8x192xf32>
    %314 = arith.negf %313 : vector<8x192xf32>
    %315 = math.exp %314 : vector<8x192xf32>
    %cst_177 = arith.constant 1.000000e+00 : f32
    %316 = vector.broadcast %cst_177 : f32 to vector<8x192xf32>
    %317 = arith.addf %316, %315 : vector<8x192xf32>
    %318 = arith.divf %316, %317 : vector<8x192xf32>
    %319 = vector.extract_strided_slice %304 {offsets = [0, 192], sizes = [8, 64], strides = [1, 1]} : vector<8x256xf32> to vector<8x64xf32>
    %320 = math.tanh %319 : vector<8x64xf32>
    %321 = vector.extract_strided_slice %310 {offsets = [0, 64], sizes = [8, 64], strides = [1, 1]} : vector<8x192xf32> to vector<8x64xf32>
    %c0_178 = arith.constant 0 : index
    %c0_179 = arith.constant 0 : index
    %322 = vector.load %arg8[%c0_178, %c0_179] : memref<8x128xf32, #tpu.memory_space<vmem>>, vector<8x64xf32>
    %323 = arith.mulf %321, %322 : vector<8x64xf32>
    %324 = vector.extract_strided_slice %310 {offsets = [0, 0], sizes = [8, 64], strides = [1, 1]} : vector<8x192xf32> to vector<8x64xf32>
    %325 = arith.mulf %324, %312 : vector<8x64xf32>
    %326 = arith.addf %323, %325 : vector<8x64xf32>
    %327 = vector.extract_strided_slice %318 {offsets = [0, 64], sizes = [8, 64], strides = [1, 1]} : vector<8x192xf32> to vector<8x64xf32>
    %c0_180 = arith.constant 0 : index
    %c64_181 = arith.constant 64 : index
    %328 = vector.load %arg8[%c0_180, %c64_181] : memref<8x128xf32, #tpu.memory_space<vmem>>, vector<8x64xf32>
    %329 = arith.mulf %327, %328 : vector<8x64xf32>
    %330 = vector.extract_strided_slice %318 {offsets = [0, 0], sizes = [8, 64], strides = [1, 1]} : vector<8x192xf32> to vector<8x64xf32>
    %331 = arith.mulf %330, %320 : vector<8x64xf32>
    %332 = arith.addf %329, %331 : vector<8x64xf32>
    %333 = vector.extract_strided_slice %310 {offsets = [0, 128], sizes = [8, 64], strides = [1, 1]} : vector<8x192xf32> to vector<8x64xf32>
    %334 = math.tanh %326 : vector<8x64xf32>
    %335 = arith.mulf %333, %334 : vector<8x64xf32>
    %336 = vector.extract_strided_slice %318 {offsets = [0, 128], sizes = [8, 64], strides = [1, 1]} : vector<8x192xf32> to vector<8x64xf32>
    %337 = math.tanh %332 : vector<8x64xf32>
    %338 = arith.mulf %336, %337 : vector<8x64xf32>
    %c0_182 = arith.constant 0 : index
    %c0_183 = arith.constant 0 : index
    %339 = vector.load %arg8[%c0_182, %c0_183] : memref<8x128xf32, #tpu.memory_space<vmem>>, vector<8x64xf32>
    tpu.vector_store %arg8[%c0_182, %c0_183], %326 {strides = array<i32>} : memref<8x128xf32, #tpu.memory_space<vmem>>, vector<8x64xf32>,
    %c0_184 = arith.constant 0 : index
    %c64_185 = arith.constant 64 : index
    %340 = vector.load %arg8[%c0_184, %c64_185] : memref<8x128xf32, #tpu.memory_space<vmem>>, vector<8x64xf32>
    tpu.vector_store %arg8[%c0_184, %c64_185], %332 {strides = array<i32>} : memref<8x128xf32, #tpu.memory_space<vmem>>, vector<8x64xf32>,
    %c0_186 = arith.constant 0 : index
    %c0_187 = arith.constant 0 : index
    %341 = vector.load %arg7[%c0_186, %c0_187] : memref<8x128xf32, #tpu.memory_space<vmem>>, vector<8x64xf32>
    tpu.vector_store %arg7[%c0_186, %c0_187], %335 {strides = array<i32>} : memref<8x128xf32, #tpu.memory_space<vmem>>, vector<8x64xf32>,
    %c0_188 = arith.constant 0 : index
    %c64_189 = arith.constant 64 : index
    %342 = vector.load %arg7[%c0_188, %c64_189] : memref<8x128xf32, #tpu.memory_space<vmem>>, vector<8x64xf32>
    tpu.vector_store %arg7[%c0_188, %c64_189], %338 {strides = array<i32>} : memref<8x128xf32, #tpu.memory_space<vmem>>, vector<8x64xf32>,
    %c0_190 = arith.constant 0 : index
    %c5_191 = arith.constant 5 : index
    %c0_192 = arith.constant 0 : index
    %c0_193 = arith.constant 0 : index
    %343 = vector.load %arg5[%c0_190, %c5_191, %c0_192, %c0_193] : memref<1x8x8x128xf32, #tpu.memory_space<vmem>>, vector<1x1x8x64xf32>
    %344 = vector.shape_cast %343 : vector<1x1x8x64xf32> to vector<8x64xf32>
    %345 = vector.shape_cast %335 : vector<8x64xf32> to vector<1x1x8x64xf32>
    tpu.vector_store %arg5[%c0_190, %c5_191, %c0_192, %c0_193], %345 {strides = array<i32>} : memref<1x8x8x128xf32, #tpu.memory_space<vmem>>, vector<1x1x8x64xf32>,
    %c0_194 = arith.constant 0 : index
    %c2_195 = arith.constant 2 : index
    %c0_196 = arith.constant 0 : index
    %c64_197 = arith.constant 64 : index
    %346 = vector.load %arg5[%c0_194, %c2_195, %c0_196, %c64_197] : memref<1x8x8x128xf32, #tpu.memory_space<vmem>>, vector<1x1x8x64xf32>
    %347 = vector.shape_cast %346 : vector<1x1x8x64xf32> to vector<8x64xf32>
    %348 = vector.shape_cast %338 : vector<8x64xf32> to vector<1x1x8x64xf32>
    tpu.vector_store %arg5[%c0_194, %c2_195, %c0_196, %c64_197], %348 {strides = array<i32>} : memref<1x8x8x128xf32, #tpu.memory_space<vmem>>, vector<1x1x8x64xf32>,
    %c0_198 = arith.constant 0 : index
    %c0_199 = arith.constant 0 : index
    %349 = vector.load %arg7[%c0_198, %c0_199] : memref<8x128xf32, #tpu.memory_space<vmem>>, vector<8x128xf32>
    %350 = arith.truncf %349 : vector<8x128xf32> to vector<8x128xbf16>
    %cst_200 = arith.constant dense<0.000000e+00> : vector<8x512xf32>
    %351 = tpu.matmul %350, %14, %cst_200 {dimension_numbers = #tpu.dot_dimension_numbers<[1], [0], [0], [1], [0, 0, 1, 1], [], []>} : vector<8x128xbf16>, vector<128x512xbf16>, vector<8x512xf32> -> vector<8x512xf32>
    %c6_201 = arith.constant 6 : index
    %c0_202 = arith.constant 0 : index
    %c0_203 = arith.constant 0 : index
    %352 = vector.load %arg6[%c6_201, %c0_202, %c0_203] : memref<8x8x512xf32, #tpu.memory_space<vmem>>, vector<1x8x256xf32>
    %353 = vector.shape_cast %352 : vector<1x8x256xf32> to vector<8x256xf32>
    %354 = vector.extract_strided_slice %351 {offsets = [0, 0], sizes = [8, 256], strides = [1, 1]} : vector<8x512xf32> to vector<8x256xf32>
    %355 = arith.addf %353, %354 : vector<8x256xf32>
    %c1_204 = arith.constant 1 : index
    %c0_205 = arith.constant 0 : index
    %c256_206 = arith.constant 256 : index
    %356 = vector.load %arg6[%c1_204, %c0_205, %c256_206] : memref<8x8x512xf32, #tpu.memory_space<vmem>>, vector<1x8x256xf32>
    %357 = vector.shape_cast %356 : vector<1x8x256xf32> to vector<8x256xf32>
    %358 = vector.extract_strided_slice %351 {offsets = [0, 256], sizes = [8, 256], strides = [1, 1]} : vector<8x512xf32> to vector<8x256xf32>
    %359 = arith.addf %357, %358 : vector<8x256xf32>
    %360 = vector.extract_strided_slice %355 {offsets = [0, 0], sizes = [8, 192], strides = [1, 1]} : vector<8x256xf32> to vector<8x192xf32>
    %361 = arith.negf %360 : vector<8x192xf32>
    %362 = math.exp %361 : vector<8x192xf32>
    %cst_207 = arith.constant 1.000000e+00 : f32
    %363 = vector.broadcast %cst_207 : f32 to vector<8x192xf32>
    %364 = arith.addf %363, %362 : vector<8x192xf32>
    %365 = arith.divf %363, %364 : vector<8x192xf32>
    %366 = vector.extract_strided_slice %355 {offsets = [0, 192], sizes = [8, 64], strides = [1, 1]} : vector<8x256xf32> to vector<8x64xf32>
    %367 = math.tanh %366 : vector<8x64xf32>
    %368 = vector.extract_strided_slice %359 {offsets = [0, 0], sizes = [8, 192], strides = [1, 1]} : vector<8x256xf32> to vector<8x192xf32>
    %369 = arith.negf %368 : vector<8x192xf32>
    %370 = math.exp %369 : vector<8x192xf32>
    %cst_208 = arith.constant 1.000000e+00 : f32
    %371 = vector.broadcast %cst_208 : f32 to vector<8x192xf32>
    %372 = arith.addf %371, %370 : vector<8x192xf32>
    %373 = arith.divf %371, %372 : vector<8x192xf32>
    %374 = vector.extract_strided_slice %359 {offsets = [0, 192], sizes = [8, 64], strides = [1, 1]} : vector<8x256xf32> to vector<8x64xf32>
    %375 = math.tanh %374 : vector<8x64xf32>
    %376 = vector.extract_strided_slice %365 {offsets = [0, 64], sizes = [8, 64], strides = [1, 1]} : vector<8x192xf32> to vector<8x64xf32>
    %c0_209 = arith.constant 0 : index
    %c0_210 = arith.constant 0 : index
    %377 = vector.load %arg8[%c0_209, %c0_210] : memref<8x128xf32, #tpu.memory_space<vmem>>, vector<8x64xf32>
    %378 = arith.mulf %376, %377 : vector<8x64xf32>
    %379 = vector.extract_strided_slice %365 {offsets = [0, 0], sizes = [8, 64], strides = [1, 1]} : vector<8x192xf32> to vector<8x64xf32>
    %380 = arith.mulf %379, %367 : vector<8x64xf32>
    %381 = arith.addf %378, %380 : vector<8x64xf32>
    %382 = vector.extract_strided_slice %373 {offsets = [0, 64], sizes = [8, 64], strides = [1, 1]} : vector<8x192xf32> to vector<8x64xf32>
    %c0_211 = arith.constant 0 : index
    %c64_212 = arith.constant 64 : index
    %383 = vector.load %arg8[%c0_211, %c64_212] : memref<8x128xf32, #tpu.memory_space<vmem>>, vector<8x64xf32>
    %384 = arith.mulf %382, %383 : vector<8x64xf32>
    %385 = vector.extract_strided_slice %373 {offsets = [0, 0], sizes = [8, 64], strides = [1, 1]} : vector<8x192xf32> to vector<8x64xf32>
    %386 = arith.mulf %385, %375 : vector<8x64xf32>
    %387 = arith.addf %384, %386 : vector<8x64xf32>
    %388 = vector.extract_strided_slice %365 {offsets = [0, 128], sizes = [8, 64], strides = [1, 1]} : vector<8x192xf32> to vector<8x64xf32>
    %389 = math.tanh %381 : vector<8x64xf32>
    %390 = arith.mulf %388, %389 : vector<8x64xf32>
    %391 = vector.extract_strided_slice %373 {offsets = [0, 128], sizes = [8, 64], strides = [1, 1]} : vector<8x192xf32> to vector<8x64xf32>
    %392 = math.tanh %387 : vector<8x64xf32>
    %393 = arith.mulf %391, %392 : vector<8x64xf32>
    %c0_213 = arith.constant 0 : index
    %c0_214 = arith.constant 0 : index
    %394 = vector.load %arg8[%c0_213, %c0_214] : memref<8x128xf32, #tpu.memory_space<vmem>>, vector<8x64xf32>
    tpu.vector_store %arg8[%c0_213, %c0_214], %381 {strides = array<i32>} : memref<8x128xf32, #tpu.memory_space<vmem>>, vector<8x64xf32>,
    %c0_215 = arith.constant 0 : index
    %c64_216 = arith.constant 64 : index
    %395 = vector.load %arg8[%c0_215, %c64_216] : memref<8x128xf32, #tpu.memory_space<vmem>>, vector<8x64xf32>
    tpu.vector_store %arg8[%c0_215, %c64_216], %387 {strides = array<i32>} : memref<8x128xf32, #tpu.memory_space<vmem>>, vector<8x64xf32>,
    %c0_217 = arith.constant 0 : index
    %c0_218 = arith.constant 0 : index
    %396 = vector.load %arg7[%c0_217, %c0_218] : memref<8x128xf32, #tpu.memory_space<vmem>>, vector<8x64xf32>
    tpu.vector_store %arg7[%c0_217, %c0_218], %390 {strides = array<i32>} : memref<8x128xf32, #tpu.memory_space<vmem>>, vector<8x64xf32>,
    %c0_219 = arith.constant 0 : index
    %c64_220 = arith.constant 64 : index
    %397 = vector.load %arg7[%c0_219, %c64_220] : memref<8x128xf32, #tpu.memory_space<vmem>>, vector<8x64xf32>
    tpu.vector_store %arg7[%c0_219, %c64_220], %393 {strides = array<i32>} : memref<8x128xf32, #tpu.memory_space<vmem>>, vector<8x64xf32>,
    %c0_221 = arith.constant 0 : index
    %c6_222 = arith.constant 6 : index
    %c0_223 = arith.constant 0 : index
    %c0_224 = arith.constant 0 : index
    %398 = vector.load %arg5[%c0_221, %c6_222, %c0_223, %c0_224] : memref<1x8x8x128xf32, #tpu.memory_space<vmem>>, vector<1x1x8x64xf32>
    %399 = vector.shape_cast %398 : vector<1x1x8x64xf32> to vector<8x64xf32>
    %400 = vector.shape_cast %390 : vector<8x64xf32> to vector<1x1x8x64xf32>
    tpu.vector_store %arg5[%c0_221, %c6_222, %c0_223, %c0_224], %400 {strides = array<i32>} : memref<1x8x8x128xf32, #tpu.memory_space<vmem>>, vector<1x1x8x64xf32>,
    %c0_225 = arith.constant 0 : index
    %c1_226 = arith.constant 1 : index
    %c0_227 = arith.constant 0 : index
    %c64_228 = arith.constant 64 : index
    %401 = vector.load %arg5[%c0_225, %c1_226, %c0_227, %c64_228] : memref<1x8x8x128xf32, #tpu.memory_space<vmem>>, vector<1x1x8x64xf32>
    %402 = vector.shape_cast %401 : vector<1x1x8x64xf32> to vector<8x64xf32>
    %403 = vector.shape_cast %393 : vector<8x64xf32> to vector<1x1x8x64xf32>
    tpu.vector_store %arg5[%c0_225, %c1_226, %c0_227, %c64_228], %403 {strides = array<i32>} : memref<1x8x8x128xf32, #tpu.memory_space<vmem>>, vector<1x1x8x64xf32>,
    %c0_229 = arith.constant 0 : index
    %c0_230 = arith.constant 0 : index
    %404 = vector.load %arg7[%c0_229, %c0_230] : memref<8x128xf32, #tpu.memory_space<vmem>>, vector<8x128xf32>
    %405 = arith.truncf %404 : vector<8x128xf32> to vector<8x128xbf16>
    %cst_231 = arith.constant dense<0.000000e+00> : vector<8x512xf32>
    %406 = tpu.matmul %405, %14, %cst_231 {dimension_numbers = #tpu.dot_dimension_numbers<[1], [0], [0], [1], [0, 0, 1, 1], [], []>} : vector<8x128xbf16>, vector<128x512xbf16>, vector<8x512xf32> -> vector<8x512xf32>
    %c7_232 = arith.constant 7 : index
    %c0_233 = arith.constant 0 : index
    %c0_234 = arith.constant 0 : index
    %407 = vector.load %arg6[%c7_232, %c0_233, %c0_234] : memref<8x8x512xf32, #tpu.memory_space<vmem>>, vector<1x8x256xf32>
    %408 = vector.shape_cast %407 : vector<1x8x256xf32> to vector<8x256xf32>
    %409 = vector.extract_strided_slice %406 {offsets = [0, 0], sizes = [8, 256], strides = [1, 1]} : vector<8x512xf32> to vector<8x256xf32>
    %410 = arith.addf %408, %409 : vector<8x256xf32>
    %c0_235 = arith.constant 0 : index
    %c0_236 = arith.constant 0 : index
    %c256_237 = arith.constant 256 : index
    %411 = vector.load %arg6[%c0_235, %c0_236, %c256_237] : memref<8x8x512xf32, #tpu.memory_space<vmem>>, vector<1x8x256xf32>
    %412 = vector.shape_cast %411 : vector<1x8x256xf32> to vector<8x256xf32>
    %413 = vector.extract_strided_slice %406 {offsets = [0, 256], sizes = [8, 256], strides = [1, 1]} : vector<8x512xf32> to vector<8x256xf32>
    %414 = arith.addf %412, %413 : vector<8x256xf32>
    %415 = vector.extract_strided_slice %410 {offsets = [0, 0], sizes = [8, 192], strides = [1, 1]} : vector<8x256xf32> to vector<8x192xf32>
    %416 = arith.negf %415 : vector<8x192xf32>
    %417 = math.exp %416 : vector<8x192xf32>
    %cst_238 = arith.constant 1.000000e+00 : f32
    %418 = vector.broadcast %cst_238 : f32 to vector<8x192xf32>
    %419 = arith.addf %418, %417 : vector<8x192xf32>
    %420 = arith.divf %418, %419 : vector<8x192xf32>
    %421 = vector.extract_strided_slice %410 {offsets = [0, 192], sizes = [8, 64], strides = [1, 1]} : vector<8x256xf32> to vector<8x64xf32>
    %422 = math.tanh %421 : vector<8x64xf32>
    %423 = vector.extract_strided_slice %414 {offsets = [0, 0], sizes = [8, 192], strides = [1, 1]} : vector<8x256xf32> to vector<8x192xf32>
    %424 = arith.negf %423 : vector<8x192xf32>
    %425 = math.exp %424 : vector<8x192xf32>
    %cst_239 = arith.constant 1.000000e+00 : f32
    %426 = vector.broadcast %cst_239 : f32 to vector<8x192xf32>
    %427 = arith.addf %426, %425 : vector<8x192xf32>
    %428 = arith.divf %426, %427 : vector<8x192xf32>
    %429 = vector.extract_strided_slice %414 {offsets = [0, 192], sizes = [8, 64], strides = [1, 1]} : vector<8x256xf32> to vector<8x64xf32>
    %430 = math.tanh %429 : vector<8x64xf32>
    %431 = vector.extract_strided_slice %420 {offsets = [0, 64], sizes = [8, 64], strides = [1, 1]} : vector<8x192xf32> to vector<8x64xf32>
    %c0_240 = arith.constant 0 : index
    %c0_241 = arith.constant 0 : index
    %432 = vector.load %arg8[%c0_240, %c0_241] : memref<8x128xf32, #tpu.memory_space<vmem>>, vector<8x64xf32>
    %433 = arith.mulf %431, %432 : vector<8x64xf32>
    %434 = vector.extract_strided_slice %420 {offsets = [0, 0], sizes = [8, 64], strides = [1, 1]} : vector<8x192xf32> to vector<8x64xf32>
    %435 = arith.mulf %434, %422 : vector<8x64xf32>
    %436 = arith.addf %433, %435 : vector<8x64xf32>
    %437 = vector.extract_strided_slice %428 {offsets = [0, 64], sizes = [8, 64], strides = [1, 1]} : vector<8x192xf32> to vector<8x64xf32>
    %c0_242 = arith.constant 0 : index
    %c64_243 = arith.constant 64 : index
    %438 = vector.load %arg8[%c0_242, %c64_243] : memref<8x128xf32, #tpu.memory_space<vmem>>, vector<8x64xf32>
    %439 = arith.mulf %437, %438 : vector<8x64xf32>
    %440 = vector.extract_strided_slice %428 {offsets = [0, 0], sizes = [8, 64], strides = [1, 1]} : vector<8x192xf32> to vector<8x64xf32>
    %441 = arith.mulf %440, %430 : vector<8x64xf32>
    %442 = arith.addf %439, %441 : vector<8x64xf32>
    %443 = vector.extract_strided_slice %420 {offsets = [0, 128], sizes = [8, 64], strides = [1, 1]} : vector<8x192xf32> to vector<8x64xf32>
    %444 = math.tanh %436 : vector<8x64xf32>
    %445 = arith.mulf %443, %444 : vector<8x64xf32>
    %446 = vector.extract_strided_slice %428 {offsets = [0, 128], sizes = [8, 64], strides = [1, 1]} : vector<8x192xf32> to vector<8x64xf32>
    %447 = math.tanh %442 : vector<8x64xf32>
    %448 = arith.mulf %446, %447 : vector<8x64xf32>
    %c0_244 = arith.constant 0 : index
    %c0_245 = arith.constant 0 : index
    %449 = vector.load %arg8[%c0_244, %c0_245] : memref<8x128xf32, #tpu.memory_space<vmem>>, vector<8x64xf32>
    tpu.vector_store %arg8[%c0_244, %c0_245], %436 {strides = array<i32>} : memref<8x128xf32, #tpu.memory_space<vmem>>, vector<8x64xf32>,
    %c0_246 = arith.constant 0 : index
    %c64_247 = arith.constant 64 : index
    %450 = vector.load %arg8[%c0_246, %c64_247] : memref<8x128xf32, #tpu.memory_space<vmem>>, vector<8x64xf32>
    tpu.vector_store %arg8[%c0_246, %c64_247], %442 {strides = array<i32>} : memref<8x128xf32, #tpu.memory_space<vmem>>, vector<8x64xf32>,
    %c0_248 = arith.constant 0 : index
    %c0_249 = arith.constant 0 : index
    %451 = vector.load %arg7[%c0_248, %c0_249] : memref<8x128xf32, #tpu.memory_space<vmem>>, vector<8x64xf32>
    tpu.vector_store %arg7[%c0_248, %c0_249], %445 {strides = array<i32>} : memref<8x128xf32, #tpu.memory_space<vmem>>, vector<8x64xf32>,
    %c0_250 = arith.constant 0 : index
    %c64_251 = arith.constant 64 : index
    %452 = vector.load %arg7[%c0_250, %c64_251] : memref<8x128xf32, #tpu.memory_space<vmem>>, vector<8x64xf32>
    tpu.vector_store %arg7[%c0_250, %c64_251], %448 {strides = array<i32>} : memref<8x128xf32, #tpu.memory_space<vmem>>, vector<8x64xf32>,
    %c0_252 = arith.constant 0 : index
    %c7_253 = arith.constant 7 : index
    %c0_254 = arith.constant 0 : index
    %c0_255 = arith.constant 0 : index
    %453 = vector.load %arg5[%c0_252, %c7_253, %c0_254, %c0_255] : memref<1x8x8x128xf32, #tpu.memory_space<vmem>>, vector<1x1x8x64xf32>
    %454 = vector.shape_cast %453 : vector<1x1x8x64xf32> to vector<8x64xf32>
    %455 = vector.shape_cast %445 : vector<8x64xf32> to vector<1x1x8x64xf32>
    tpu.vector_store %arg5[%c0_252, %c7_253, %c0_254, %c0_255], %455 {strides = array<i32>} : memref<1x8x8x128xf32, #tpu.memory_space<vmem>>, vector<1x1x8x64xf32>,
    %c0_256 = arith.constant 0 : index
    %c0_257 = arith.constant 0 : index
    %c0_258 = arith.constant 0 : index
    %c64_259 = arith.constant 64 : index
    %456 = vector.load %arg5[%c0_256, %c0_257, %c0_258, %c64_259] : memref<1x8x8x128xf32, #tpu.memory_space<vmem>>, vector<1x1x8x64xf32>
    %457 = vector.shape_cast %456 : vector<1x1x8x64xf32> to vector<8x64xf32>
    %458 = vector.shape_cast %448 : vector<8x64xf32> to vector<1x1x8x64xf32>
    tpu.vector_store %arg5[%c0_256, %c0_257, %c0_258, %c64_259], %458 {strides = array<i32>} : memref<1x8x8x128xf32, #tpu.memory_space<vmem>>, vector<1x1x8x64xf32>,
    return
  }
  func.func @transform_0(%arg0: i32) -> (i32, i32, i32, i32) {
    %c0_i32 = arith.constant 0 : i32
    %c0_i32_0 = arith.constant 0 : i32
    %c0_i32_1 = arith.constant 0 : i32
    %c0_i32_2 = arith.constant 0 : i32
    return %arg0, %c0_i32, %c0_i32_0, %c0_i32_1 : i32, i32, i32, i32
  }
  func.func @transform_1(%arg0: i32) -> (i32, i32, i32) {
    %c0_i32 = arith.constant 0 : i32
    %c0_i32_0 = arith.constant 0 : i32
    %c0_i32_1 = arith.constant 0 : i32
    return %arg0, %c0_i32, %c0_i32_0 : i32, i32, i32
  }
  func.func @transform_2(%arg0: i32) -> (i32, i32, i32) {
    %c0_i32 = arith.constant 0 : i32
    %c0_i32_0 = arith.constant 0 : i32
    %c0_i32_1 = arith.constant 0 : i32
    return %arg0, %c0_i32, %c0_i32_0 : i32, i32, i32
  }
  func.func @transform_3(%arg0: i32) -> (i32, i32, i32) {
    %c0_i32 = arith.constant 0 : i32
    %c0_i32_0 = arith.constant 0 : i32
    %c0_i32_1 = arith.constant 0 : i32
    return %arg0, %c0_i32, %c0_i32_0 : i32, i32, i32
  }
  func.func @transform_4(%arg0: i32) -> (i32, i32, i32, i32) {
    %c0_i32 = arith.constant 0 : i32
    %c0_i32_0 = arith.constant 0 : i32
    %c0_i32_1 = arith.constant 0 : i32
    %c0_i32_2 = arith.constant 0 : i32
    return %arg0, %c0_i32, %c0_i32_0, %c0_i32_1 : i32, i32, i32, i32
  }
}

module attributes {stable_mosaic.version = 11 : i64} {
  func.func @fused_bilstm_kernel(%arg0: i32, %arg1: memref<8x8x128xf32, #tpu.memory_space<vmem>>, %arg2: memref<1x128x512xbf16, #tpu.memory_space<vmem>>, %arg3: memref<1x128x512xbf16, #tpu.memory_space<vmem>>, %arg4: memref<1x1x512xf32, #tpu.memory_space<vmem>>, %arg5: memref<1x8x8x128xf32, #tpu.memory_space<vmem>>, %arg6: memref<8x8x512xf32, #tpu.memory_space<vmem>>, %arg7: memref<8x128xf32, #tpu.memory_space<vmem>>, %arg8: memref<8x128xf32, #tpu.memory_space<vmem>>) attributes {dimension_semantics = [#tpu.dimension_semantics<parallel>], iteration_bounds = array<i64: 5>, scalar_prefetch = 0 : i64, scratch_operands = 3 : i64, tpu.core_type = #tpu.core_type<tc>, window_params = [{pipeline_mode = #tpu.pipeline_mode<synchronous>, transform_indices = @transform_0, window_bounds = array<i64: 8, 8, 128>}, {transform_indices = @transform_1, window_bounds = array<i64: 1, 128, 512>}, {transform_indices = @transform_2, window_bounds = array<i64: 1, 128, 512>}, {transform_indices = @transform_3, window_bounds = array<i64: 1, 1, 512>}, {transform_indices = @transform_4, window_bounds = array<i64: 1, 8, 8, 128>}]} {
    %c0 = arith.constant 0 : index
    %c0_0 = arith.constant 0 : index
    %c0_1 = arith.constant 0 : index
    %0 = vector.load %arg1[%c0, %c0_0, %c0_1] : memref<8x8x128xf32, #tpu.memory_space<vmem>>, vector<8x8x128xf32>
    %1 = vector.shape_cast %0 : vector<8x8x128xf32> to vector<64x128xf32>
    %2 = arith.truncf %1 : vector<64x128xf32> to vector<64x128xbf16>
    %c0_2 = arith.constant 0 : index
    %c0_3 = arith.constant 0 : index
    %c0_4 = arith.constant 0 : index
    %3 = vector.load %arg2[%c0_2, %c0_3, %c0_4] : memref<1x128x512xbf16, #tpu.memory_space<vmem>>, vector<1x128x512xbf16>
    %4 = vector.shape_cast %3 : vector<1x128x512xbf16> to vector<128x512xbf16>
    %cst = arith.constant dense<0.000000e+00> : vector<64x512xf32>
    %5 = tpu.matmul %2, %4, %cst {dimension_numbers = #tpu.dot_dimension_numbers<[1], [0], [0], [1], [0, 0, 1, 1], [], []>} : vector<64x128xbf16>, vector<128x512xbf16>, vector<64x512xf32> -> vector<64x512xf32>
    %c0_5 = arith.constant 0 : index
    %c0_6 = arith.constant 0 : index
    %c0_7 = arith.constant 0 : index
    %6 = vector.load %arg4[%c0_5, %c0_6, %c0_7] : memref<1x1x512xf32, #tpu.memory_space<vmem>>, vector<1x1x512xf32>
    %7 = vector.shape_cast %6 : vector<1x1x512xf32> to vector<1x512xf32>
    %8 = vector.broadcast %7 : vector<1x512xf32> to vector<64x512xf32>
    %9 = arith.addf %5, %8 : vector<64x512xf32>
    %10 = vector.shape_cast %9 : vector<64x512xf32> to vector<8x8x512xf32>
    %c0_8 = arith.constant 0 : index
    %c0_9 = arith.constant 0 : index
    %c0_10 = arith.constant 0 : index
    %11 = vector.load %arg6[%c0_8, %c0_9, %c0_10] : memref<8x8x512xf32, #tpu.memory_space<vmem>>, vector<8x8x512xf32>
    tpu.vector_store %arg6[%c0_8, %c0_9, %c0_10], %10 {strides = array<i32>} : memref<8x8x512xf32, #tpu.memory_space<vmem>>, vector<8x8x512xf32>,
    %c0_11 = arith.constant 0 : index
    %c0_12 = arith.constant 0 : index
    %c0_13 = arith.constant 0 : index
    %12 = vector.load %arg3[%c0_11, %c0_12, %c0_13] : memref<1x128x512xbf16, #tpu.memory_space<vmem>>, vector<1x128x512xbf16>
    %13 = vector.shape_cast %12 : vector<1x128x512xbf16> to vector<128x512xbf16>
    %cst_14 = arith.constant 0.000000e+00 : f32
    %14 = vector.broadcast %cst_14 : f32 to vector<8x128xf32>
    %c0_15 = arith.constant 0 : index
    %c0_16 = arith.constant 0 : index
    %15 = vector.load %arg7[%c0_15, %c0_16] : memref<8x128xf32, #tpu.memory_space<vmem>>, vector<8x128xf32>
    tpu.vector_store %arg7[%c0_15, %c0_16], %14 {strides = array<i32>} : memref<8x128xf32, #tpu.memory_space<vmem>>, vector<8x128xf32>,
    %cst_17 = arith.constant 0.000000e+00 : f32
    %16 = vector.broadcast %cst_17 : f32 to vector<8x128xf32>
    %c0_18 = arith.constant 0 : index
    %c0_19 = arith.constant 0 : index
    %17 = vector.load %arg8[%c0_18, %c0_19] : memref<8x128xf32, #tpu.memory_space<vmem>>, vector<8x128xf32>
    tpu.vector_store %arg8[%c0_18, %c0_19], %16 {strides = array<i32>} : memref<8x128xf32, #tpu.memory_space<vmem>>, vector<8x128xf32>,
    %c0_20 = arith.constant 0 : index
    %c0_21 = arith.constant 0 : index
    %18 = vector.load %arg7[%c0_20, %c0_21] : memref<8x128xf32, #tpu.memory_space<vmem>>, vector<8x128xf32>
    %19 = arith.truncf %18 : vector<8x128xf32> to vector<8x128xbf16>
    %cst_22 = arith.constant dense<0.000000e+00> : vector<8x512xf32>
    %20 = tpu.matmul %19, %13, %cst_22 {dimension_numbers = #tpu.dot_dimension_numbers<[1], [0], [0], [1], [0, 0, 1, 1], [], []>} : vector<8x128xbf16>, vector<128x512xbf16>, vector<8x512xf32> -> vector<8x512xf32>
    %c0_23 = arith.constant 0 : index
    %c0_24 = arith.constant 0 : index
    %c0_25 = arith.constant 0 : index
    %21 = vector.load %arg6[%c0_23, %c0_24, %c0_25] : memref<8x8x512xf32, #tpu.memory_space<vmem>>, vector<1x8x256xf32>
    %22 = vector.shape_cast %21 : vector<1x8x256xf32> to vector<8x256xf32>
    %23 = vector.extract_strided_slice %20 {offsets = [0, 0], sizes = [8, 256], strides = [1, 1]} : vector<8x512xf32> to vector<8x256xf32>
    %24 = arith.addf %22, %23 : vector<8x256xf32>
    %c7 = arith.constant 7 : index
    %c0_26 = arith.constant 0 : index
    %c256 = arith.constant 256 : index
    %25 = vector.load %arg6[%c7, %c0_26, %c256] : memref<8x8x512xf32, #tpu.memory_space<vmem>>, vector<1x8x256xf32>
    %26 = vector.shape_cast %25 : vector<1x8x256xf32> to vector<8x256xf32>
    %27 = vector.extract_strided_slice %20 {offsets = [0, 256], sizes = [8, 256], strides = [1, 1]} : vector<8x512xf32> to vector<8x256xf32>
    %28 = arith.addf %26, %27 : vector<8x256xf32>
    %29 = vector.extract_strided_slice %24 {offsets = [0, 0], sizes = [8, 192], strides = [1, 1]} : vector<8x256xf32> to vector<8x192xf32>
    %30 = arith.negf %29 : vector<8x192xf32>
    %31 = math.exp %30 : vector<8x192xf32>
    %cst_27 = arith.constant 1.000000e+00 : f32
    %32 = vector.broadcast %cst_27 : f32 to vector<8x192xf32>
    %33 = arith.addf %32, %31 : vector<8x192xf32>
    %34 = arith.divf %32, %33 : vector<8x192xf32>
    %35 = vector.extract_strided_slice %24 {offsets = [0, 192], sizes = [8, 64], strides = [1, 1]} : vector<8x256xf32> to vector<8x64xf32>
    %36 = math.tanh %35 : vector<8x64xf32>
    %37 = vector.extract_strided_slice %28 {offsets = [0, 0], sizes = [8, 192], strides = [1, 1]} : vector<8x256xf32> to vector<8x192xf32>
    %38 = arith.negf %37 : vector<8x192xf32>
    %39 = math.exp %38 : vector<8x192xf32>
    %cst_28 = arith.constant 1.000000e+00 : f32
    %40 = vector.broadcast %cst_28 : f32 to vector<8x192xf32>
    %41 = arith.addf %40, %39 : vector<8x192xf32>
    %42 = arith.divf %40, %41 : vector<8x192xf32>
    %43 = vector.extract_strided_slice %28 {offsets = [0, 192], sizes = [8, 64], strides = [1, 1]} : vector<8x256xf32> to vector<8x64xf32>
    %44 = math.tanh %43 : vector<8x64xf32>
    %45 = vector.extract_strided_slice %34 {offsets = [0, 64], sizes = [8, 64], strides = [1, 1]} : vector<8x192xf32> to vector<8x64xf32>
    %c0_29 = arith.constant 0 : index
    %c0_30 = arith.constant 0 : index
    %46 = vector.load %arg8[%c0_29, %c0_30] : memref<8x128xf32, #tpu.memory_space<vmem>>, vector<8x64xf32>
    %47 = arith.mulf %45, %46 : vector<8x64xf32>
    %48 = vector.extract_strided_slice %34 {offsets = [0, 0], sizes = [8, 64], strides = [1, 1]} : vector<8x192xf32> to vector<8x64xf32>
    %49 = arith.mulf %48, %36 : vector<8x64xf32>
    %50 = arith.addf %47, %49 : vector<8x64xf32>
    %51 = vector.extract_strided_slice %42 {offsets = [0, 64], sizes = [8, 64], strides = [1, 1]} : vector<8x192xf32> to vector<8x64xf32>
    %c0_31 = arith.constant 0 : index
    %c64 = arith.constant 64 : index
    %52 = vector.load %arg8[%c0_31, %c64] : memref<8x128xf32, #tpu.memory_space<vmem>>, vector<8x64xf32>
    %53 = arith.mulf %51, %52 : vector<8x64xf32>
    %54 = vector.extract_strided_slice %42 {offsets = [0, 0], sizes = [8, 64], strides = [1, 1]} : vector<8x192xf32> to vector<8x64xf32>
    %55 = arith.mulf %54, %44 : vector<8x64xf32>
    %56 = arith.addf %53, %55 : vector<8x64xf32>
    %57 = vector.extract_strided_slice %34 {offsets = [0, 128], sizes = [8, 64], strides = [1, 1]} : vector<8x192xf32> to vector<8x64xf32>
    %58 = math.tanh %50 : vector<8x64xf32>
    %59 = arith.mulf %57, %58 : vector<8x64xf32>
    %60 = vector.extract_strided_slice %42 {offsets = [0, 128], sizes = [8, 64], strides = [1, 1]} : vector<8x192xf32> to vector<8x64xf32>
    %61 = math.tanh %56 : vector<8x64xf32>
    %62 = arith.mulf %60, %61 : vector<8x64xf32>
    %c0_32 = arith.constant 0 : index
    %c0_33 = arith.constant 0 : index
    %63 = vector.load %arg8[%c0_32, %c0_33] : memref<8x128xf32, #tpu.memory_space<vmem>>, vector<8x64xf32>
    tpu.vector_store %arg8[%c0_32, %c0_33], %50 {strides = array<i32>} : memref<8x128xf32, #tpu.memory_space<vmem>>, vector<8x64xf32>,
    %c0_34 = arith.constant 0 : index
    %c64_35 = arith.constant 64 : index
    %64 = vector.load %arg8[%c0_34, %c64_35] : memref<8x128xf32, #tpu.memory_space<vmem>>, vector<8x64xf32>
    tpu.vector_store %arg8[%c0_34, %c64_35], %56 {strides = array<i32>} : memref<8x128xf32, #tpu.memory_space<vmem>>, vector<8x64xf32>,
    %c0_36 = arith.constant 0 : index
    %c0_37 = arith.constant 0 : index
    %65 = vector.load %arg7[%c0_36, %c0_37] : memref<8x128xf32, #tpu.memory_space<vmem>>, vector<8x64xf32>
    tpu.vector_store %arg7[%c0_36, %c0_37], %59 {strides = array<i32>} : memref<8x128xf32, #tpu.memory_space<vmem>>, vector<8x64xf32>,
    %c0_38 = arith.constant 0 : index
    %c64_39 = arith.constant 64 : index
    %66 = vector.load %arg7[%c0_38, %c64_39] : memref<8x128xf32, #tpu.memory_space<vmem>>, vector<8x64xf32>
    tpu.vector_store %arg7[%c0_38, %c64_39], %62 {strides = array<i32>} : memref<8x128xf32, #tpu.memory_space<vmem>>, vector<8x64xf32>,
    %c0_40 = arith.constant 0 : index
    %c0_41 = arith.constant 0 : index
    %c0_42 = arith.constant 0 : index
    %c0_43 = arith.constant 0 : index
    %67 = vector.load %arg5[%c0_40, %c0_41, %c0_42, %c0_43] : memref<1x8x8x128xf32, #tpu.memory_space<vmem>>, vector<1x1x8x64xf32>
    %68 = vector.shape_cast %67 : vector<1x1x8x64xf32> to vector<8x64xf32>
    %69 = vector.shape_cast %59 : vector<8x64xf32> to vector<1x1x8x64xf32>
    tpu.vector_store %arg5[%c0_40, %c0_41, %c0_42, %c0_43], %69 {strides = array<i32>} : memref<1x8x8x128xf32, #tpu.memory_space<vmem>>, vector<1x1x8x64xf32>,
    %c0_44 = arith.constant 0 : index
    %c7_45 = arith.constant 7 : index
    %c0_46 = arith.constant 0 : index
    %c64_47 = arith.constant 64 : index
    %70 = vector.load %arg5[%c0_44, %c7_45, %c0_46, %c64_47] : memref<1x8x8x128xf32, #tpu.memory_space<vmem>>, vector<1x1x8x64xf32>
    %71 = vector.shape_cast %70 : vector<1x1x8x64xf32> to vector<8x64xf32>
    %72 = vector.shape_cast %62 : vector<8x64xf32> to vector<1x1x8x64xf32>
    tpu.vector_store %arg5[%c0_44, %c7_45, %c0_46, %c64_47], %72 {strides = array<i32>} : memref<1x8x8x128xf32, #tpu.memory_space<vmem>>, vector<1x1x8x64xf32>,
    %c0_48 = arith.constant 0 : index
    %c0_49 = arith.constant 0 : index
    %73 = vector.load %arg7[%c0_48, %c0_49] : memref<8x128xf32, #tpu.memory_space<vmem>>, vector<8x128xf32>
    %74 = arith.truncf %73 : vector<8x128xf32> to vector<8x128xbf16>
    %cst_50 = arith.constant dense<0.000000e+00> : vector<8x512xf32>
    %75 = tpu.matmul %74, %13, %cst_50 {dimension_numbers = #tpu.dot_dimension_numbers<[1], [0], [0], [1], [0, 0, 1, 1], [], []>} : vector<8x128xbf16>, vector<128x512xbf16>, vector<8x512xf32> -> vector<8x512xf32>
    %c1 = arith.constant 1 : index
    %c0_51 = arith.constant 0 : index
    %c0_52 = arith.constant 0 : index
    %76 = vector.load %arg6[%c1, %c0_51, %c0_52] : memref<8x8x512xf32, #tpu.memory_space<vmem>>, vector<1x8x256xf32>
    %77 = vector.shape_cast %76 : vector<1x8x256xf32> to vector<8x256xf32>
    %78 = vector.extract_strided_slice %75 {offsets = [0, 0], sizes = [8, 256], strides = [1, 1]} : vector<8x512xf32> to vector<8x256xf32>
    %79 = arith.addf %77, %78 : vector<8x256xf32>
    %c6 = arith.constant 6 : index
    %c0_53 = arith.constant 0 : index
    %c256_54 = arith.constant 256 : index
    %80 = vector.load %arg6[%c6, %c0_53, %c256_54] : memref<8x8x512xf32, #tpu.memory_space<vmem>>, vector<1x8x256xf32>
    %81 = vector.shape_cast %80 : vector<1x8x256xf32> to vector<8x256xf32>
    %82 = vector.extract_strided_slice %75 {offsets = [0, 256], sizes = [8, 256], strides = [1, 1]} : vector<8x512xf32> to vector<8x256xf32>
    %83 = arith.addf %81, %82 : vector<8x256xf32>
    %84 = vector.extract_strided_slice %79 {offsets = [0, 0], sizes = [8, 192], strides = [1, 1]} : vector<8x256xf32> to vector<8x192xf32>
    %85 = arith.negf %84 : vector<8x192xf32>
    %86 = math.exp %85 : vector<8x192xf32>
    %cst_55 = arith.constant 1.000000e+00 : f32
    %87 = vector.broadcast %cst_55 : f32 to vector<8x192xf32>
    %88 = arith.addf %87, %86 : vector<8x192xf32>
    %89 = arith.divf %87, %88 : vector<8x192xf32>
    %90 = vector.extract_strided_slice %79 {offsets = [0, 192], sizes = [8, 64], strides = [1, 1]} : vector<8x256xf32> to vector<8x64xf32>
    %91 = math.tanh %90 : vector<8x64xf32>
    %92 = vector.extract_strided_slice %83 {offsets = [0, 0], sizes = [8, 192], strides = [1, 1]} : vector<8x256xf32> to vector<8x192xf32>
    %93 = arith.negf %92 : vector<8x192xf32>
    %94 = math.exp %93 : vector<8x192xf32>
    %cst_56 = arith.constant 1.000000e+00 : f32
    %95 = vector.broadcast %cst_56 : f32 to vector<8x192xf32>
    %96 = arith.addf %95, %94 : vector<8x192xf32>
    %97 = arith.divf %95, %96 : vector<8x192xf32>
    %98 = vector.extract_strided_slice %83 {offsets = [0, 192], sizes = [8, 64], strides = [1, 1]} : vector<8x256xf32> to vector<8x64xf32>
    %99 = math.tanh %98 : vector<8x64xf32>
    %100 = vector.extract_strided_slice %89 {offsets = [0, 64], sizes = [8, 64], strides = [1, 1]} : vector<8x192xf32> to vector<8x64xf32>
    %c0_57 = arith.constant 0 : index
    %c0_58 = arith.constant 0 : index
    %101 = vector.load %arg8[%c0_57, %c0_58] : memref<8x128xf32, #tpu.memory_space<vmem>>, vector<8x64xf32>
    %102 = arith.mulf %100, %101 : vector<8x64xf32>
    %103 = vector.extract_strided_slice %89 {offsets = [0, 0], sizes = [8, 64], strides = [1, 1]} : vector<8x192xf32> to vector<8x64xf32>
    %104 = arith.mulf %103, %91 : vector<8x64xf32>
    %105 = arith.addf %102, %104 : vector<8x64xf32>
    %106 = vector.extract_strided_slice %97 {offsets = [0, 64], sizes = [8, 64], strides = [1, 1]} : vector<8x192xf32> to vector<8x64xf32>
    %c0_59 = arith.constant 0 : index
    %c64_60 = arith.constant 64 : index
    %107 = vector.load %arg8[%c0_59, %c64_60] : memref<8x128xf32, #tpu.memory_space<vmem>>, vector<8x64xf32>
    %108 = arith.mulf %106, %107 : vector<8x64xf32>
    %109 = vector.extract_strided_slice %97 {offsets = [0, 0], sizes = [8, 64], strides = [1, 1]} : vector<8x192xf32> to vector<8x64xf32>
    %110 = arith.mulf %109, %99 : vector<8x64xf32>
    %111 = arith.addf %108, %110 : vector<8x64xf32>
    %112 = vector.extract_strided_slice %89 {offsets = [0, 128], sizes = [8, 64], strides = [1, 1]} : vector<8x192xf32> to vector<8x64xf32>
    %113 = math.tanh %105 : vector<8x64xf32>
    %114 = arith.mulf %112, %113 : vector<8x64xf32>
    %115 = vector.extract_strided_slice %97 {offsets = [0, 128], sizes = [8, 64], strides = [1, 1]} : vector<8x192xf32> to vector<8x64xf32>
    %116 = math.tanh %111 : vector<8x64xf32>
    %117 = arith.mulf %115, %116 : vector<8x64xf32>
    %c0_61 = arith.constant 0 : index
    %c0_62 = arith.constant 0 : index
    %118 = vector.load %arg8[%c0_61, %c0_62] : memref<8x128xf32, #tpu.memory_space<vmem>>, vector<8x64xf32>
    tpu.vector_store %arg8[%c0_61, %c0_62], %105 {strides = array<i32>} : memref<8x128xf32, #tpu.memory_space<vmem>>, vector<8x64xf32>,
    %c0_63 = arith.constant 0 : index
    %c64_64 = arith.constant 64 : index
    %119 = vector.load %arg8[%c0_63, %c64_64] : memref<8x128xf32, #tpu.memory_space<vmem>>, vector<8x64xf32>
    tpu.vector_store %arg8[%c0_63, %c64_64], %111 {strides = array<i32>} : memref<8x128xf32, #tpu.memory_space<vmem>>, vector<8x64xf32>,
    %c0_65 = arith.constant 0 : index
    %c0_66 = arith.constant 0 : index
    %120 = vector.load %arg7[%c0_65, %c0_66] : memref<8x128xf32, #tpu.memory_space<vmem>>, vector<8x64xf32>
    tpu.vector_store %arg7[%c0_65, %c0_66], %114 {strides = array<i32>} : memref<8x128xf32, #tpu.memory_space<vmem>>, vector<8x64xf32>,
    %c0_67 = arith.constant 0 : index
    %c64_68 = arith.constant 64 : index
    %121 = vector.load %arg7[%c0_67, %c64_68] : memref<8x128xf32, #tpu.memory_space<vmem>>, vector<8x64xf32>
    tpu.vector_store %arg7[%c0_67, %c64_68], %117 {strides = array<i32>} : memref<8x128xf32, #tpu.memory_space<vmem>>, vector<8x64xf32>,
    %c0_69 = arith.constant 0 : index
    %c1_70 = arith.constant 1 : index
    %c0_71 = arith.constant 0 : index
    %c0_72 = arith.constant 0 : index
    %122 = vector.load %arg5[%c0_69, %c1_70, %c0_71, %c0_72] : memref<1x8x8x128xf32, #tpu.memory_space<vmem>>, vector<1x1x8x64xf32>
    %123 = vector.shape_cast %122 : vector<1x1x8x64xf32> to vector<8x64xf32>
    %124 = vector.shape_cast %114 : vector<8x64xf32> to vector<1x1x8x64xf32>
    tpu.vector_store %arg5[%c0_69, %c1_70, %c0_71, %c0_72], %124 {strides = array<i32>} : memref<1x8x8x128xf32, #tpu.memory_space<vmem>>, vector<1x1x8x64xf32>,
    %c0_73 = arith.constant 0 : index
    %c6_74 = arith.constant 6 : index
    %c0_75 = arith.constant 0 : index
    %c64_76 = arith.constant 64 : index
    %125 = vector.load %arg5[%c0_73, %c6_74, %c0_75, %c64_76] : memref<1x8x8x128xf32, #tpu.memory_space<vmem>>, vector<1x1x8x64xf32>
    %126 = vector.shape_cast %125 : vector<1x1x8x64xf32> to vector<8x64xf32>
    %127 = vector.shape_cast %117 : vector<8x64xf32> to vector<1x1x8x64xf32>
    tpu.vector_store %arg5[%c0_73, %c6_74, %c0_75, %c64_76], %127 {strides = array<i32>} : memref<1x8x8x128xf32, #tpu.memory_space<vmem>>, vector<1x1x8x64xf32>,
    %c0_77 = arith.constant 0 : index
    %c0_78 = arith.constant 0 : index
    %128 = vector.load %arg7[%c0_77, %c0_78] : memref<8x128xf32, #tpu.memory_space<vmem>>, vector<8x128xf32>
    %129 = arith.truncf %128 : vector<8x128xf32> to vector<8x128xbf16>
    %cst_79 = arith.constant dense<0.000000e+00> : vector<8x512xf32>
    %130 = tpu.matmul %129, %13, %cst_79 {dimension_numbers = #tpu.dot_dimension_numbers<[1], [0], [0], [1], [0, 0, 1, 1], [], []>} : vector<8x128xbf16>, vector<128x512xbf16>, vector<8x512xf32> -> vector<8x512xf32>
    %c2 = arith.constant 2 : index
    %c0_80 = arith.constant 0 : index
    %c0_81 = arith.constant 0 : index
    %131 = vector.load %arg6[%c2, %c0_80, %c0_81] : memref<8x8x512xf32, #tpu.memory_space<vmem>>, vector<1x8x256xf32>
    %132 = vector.shape_cast %131 : vector<1x8x256xf32> to vector<8x256xf32>
    %133 = vector.extract_strided_slice %130 {offsets = [0, 0], sizes = [8, 256], strides = [1, 1]} : vector<8x512xf32> to vector<8x256xf32>
    %134 = arith.addf %132, %133 : vector<8x256xf32>
    %c5 = arith.constant 5 : index
    %c0_82 = arith.constant 0 : index
    %c256_83 = arith.constant 256 : index
    %135 = vector.load %arg6[%c5, %c0_82, %c256_83] : memref<8x8x512xf32, #tpu.memory_space<vmem>>, vector<1x8x256xf32>
    %136 = vector.shape_cast %135 : vector<1x8x256xf32> to vector<8x256xf32>
    %137 = vector.extract_strided_slice %130 {offsets = [0, 256], sizes = [8, 256], strides = [1, 1]} : vector<8x512xf32> to vector<8x256xf32>
    %138 = arith.addf %136, %137 : vector<8x256xf32>
    %139 = vector.extract_strided_slice %134 {offsets = [0, 0], sizes = [8, 192], strides = [1, 1]} : vector<8x256xf32> to vector<8x192xf32>
    %140 = arith.negf %139 : vector<8x192xf32>
    %141 = math.exp %140 : vector<8x192xf32>
    %cst_84 = arith.constant 1.000000e+00 : f32
    %142 = vector.broadcast %cst_84 : f32 to vector<8x192xf32>
    %143 = arith.addf %142, %141 : vector<8x192xf32>
    %144 = arith.divf %142, %143 : vector<8x192xf32>
    %145 = vector.extract_strided_slice %134 {offsets = [0, 192], sizes = [8, 64], strides = [1, 1]} : vector<8x256xf32> to vector<8x64xf32>
    %146 = math.tanh %145 : vector<8x64xf32>
    %147 = vector.extract_strided_slice %138 {offsets = [0, 0], sizes = [8, 192], strides = [1, 1]} : vector<8x256xf32> to vector<8x192xf32>
    %148 = arith.negf %147 : vector<8x192xf32>
    %149 = math.exp %148 : vector<8x192xf32>
    %cst_85 = arith.constant 1.000000e+00 : f32
    %150 = vector.broadcast %cst_85 : f32 to vector<8x192xf32>
    %151 = arith.addf %150, %149 : vector<8x192xf32>
    %152 = arith.divf %150, %151 : vector<8x192xf32>
    %153 = vector.extract_strided_slice %138 {offsets = [0, 192], sizes = [8, 64], strides = [1, 1]} : vector<8x256xf32> to vector<8x64xf32>
    %154 = math.tanh %153 : vector<8x64xf32>
    %155 = vector.extract_strided_slice %144 {offsets = [0, 64], sizes = [8, 64], strides = [1, 1]} : vector<8x192xf32> to vector<8x64xf32>
    %c0_86 = arith.constant 0 : index
    %c0_87 = arith.constant 0 : index
    %156 = vector.load %arg8[%c0_86, %c0_87] : memref<8x128xf32, #tpu.memory_space<vmem>>, vector<8x64xf32>
    %157 = arith.mulf %155, %156 : vector<8x64xf32>
    %158 = vector.extract_strided_slice %144 {offsets = [0, 0], sizes = [8, 64], strides = [1, 1]} : vector<8x192xf32> to vector<8x64xf32>
    %159 = arith.mulf %158, %146 : vector<8x64xf32>
    %160 = arith.addf %157, %159 : vector<8x64xf32>
    %161 = vector.extract_strided_slice %152 {offsets = [0, 64], sizes = [8, 64], strides = [1, 1]} : vector<8x192xf32> to vector<8x64xf32>
    %c0_88 = arith.constant 0 : index
    %c64_89 = arith.constant 64 : index
    %162 = vector.load %arg8[%c0_88, %c64_89] : memref<8x128xf32, #tpu.memory_space<vmem>>, vector<8x64xf32>
    %163 = arith.mulf %161, %162 : vector<8x64xf32>
    %164 = vector.extract_strided_slice %152 {offsets = [0, 0], sizes = [8, 64], strides = [1, 1]} : vector<8x192xf32> to vector<8x64xf32>
    %165 = arith.mulf %164, %154 : vector<8x64xf32>
    %166 = arith.addf %163, %165 : vector<8x64xf32>
    %167 = vector.extract_strided_slice %144 {offsets = [0, 128], sizes = [8, 64], strides = [1, 1]} : vector<8x192xf32> to vector<8x64xf32>
    %168 = math.tanh %160 : vector<8x64xf32>
    %169 = arith.mulf %167, %168 : vector<8x64xf32>
    %170 = vector.extract_strided_slice %152 {offsets = [0, 128], sizes = [8, 64], strides = [1, 1]} : vector<8x192xf32> to vector<8x64xf32>
    %171 = math.tanh %166 : vector<8x64xf32>
    %172 = arith.mulf %170, %171 : vector<8x64xf32>
    %c0_90 = arith.constant 0 : index
    %c0_91 = arith.constant 0 : index
    %173 = vector.load %arg8[%c0_90, %c0_91] : memref<8x128xf32, #tpu.memory_space<vmem>>, vector<8x64xf32>
    tpu.vector_store %arg8[%c0_90, %c0_91], %160 {strides = array<i32>} : memref<8x128xf32, #tpu.memory_space<vmem>>, vector<8x64xf32>,
    %c0_92 = arith.constant 0 : index
    %c64_93 = arith.constant 64 : index
    %174 = vector.load %arg8[%c0_92, %c64_93] : memref<8x128xf32, #tpu.memory_space<vmem>>, vector<8x64xf32>
    tpu.vector_store %arg8[%c0_92, %c64_93], %166 {strides = array<i32>} : memref<8x128xf32, #tpu.memory_space<vmem>>, vector<8x64xf32>,
    %c0_94 = arith.constant 0 : index
    %c0_95 = arith.constant 0 : index
    %175 = vector.load %arg7[%c0_94, %c0_95] : memref<8x128xf32, #tpu.memory_space<vmem>>, vector<8x64xf32>
    tpu.vector_store %arg7[%c0_94, %c0_95], %169 {strides = array<i32>} : memref<8x128xf32, #tpu.memory_space<vmem>>, vector<8x64xf32>,
    %c0_96 = arith.constant 0 : index
    %c64_97 = arith.constant 64 : index
    %176 = vector.load %arg7[%c0_96, %c64_97] : memref<8x128xf32, #tpu.memory_space<vmem>>, vector<8x64xf32>
    tpu.vector_store %arg7[%c0_96, %c64_97], %172 {strides = array<i32>} : memref<8x128xf32, #tpu.memory_space<vmem>>, vector<8x64xf32>,
    %c0_98 = arith.constant 0 : index
    %c2_99 = arith.constant 2 : index
    %c0_100 = arith.constant 0 : index
    %c0_101 = arith.constant 0 : index
    %177 = vector.load %arg5[%c0_98, %c2_99, %c0_100, %c0_101] : memref<1x8x8x128xf32, #tpu.memory_space<vmem>>, vector<1x1x8x64xf32>
    %178 = vector.shape_cast %177 : vector<1x1x8x64xf32> to vector<8x64xf32>
    %179 = vector.shape_cast %169 : vector<8x64xf32> to vector<1x1x8x64xf32>
    tpu.vector_store %arg5[%c0_98, %c2_99, %c0_100, %c0_101], %179 {strides = array<i32>} : memref<1x8x8x128xf32, #tpu.memory_space<vmem>>, vector<1x1x8x64xf32>,
    %c0_102 = arith.constant 0 : index
    %c5_103 = arith.constant 5 : index
    %c0_104 = arith.constant 0 : index
    %c64_105 = arith.constant 64 : index
    %180 = vector.load %arg5[%c0_102, %c5_103, %c0_104, %c64_105] : memref<1x8x8x128xf32, #tpu.memory_space<vmem>>, vector<1x1x8x64xf32>
    %181 = vector.shape_cast %180 : vector<1x1x8x64xf32> to vector<8x64xf32>
    %182 = vector.shape_cast %172 : vector<8x64xf32> to vector<1x1x8x64xf32>
    tpu.vector_store %arg5[%c0_102, %c5_103, %c0_104, %c64_105], %182 {strides = array<i32>} : memref<1x8x8x128xf32, #tpu.memory_space<vmem>>, vector<1x1x8x64xf32>,
    %c0_106 = arith.constant 0 : index
    %c0_107 = arith.constant 0 : index
    %183 = vector.load %arg7[%c0_106, %c0_107] : memref<8x128xf32, #tpu.memory_space<vmem>>, vector<8x128xf32>
    %184 = arith.truncf %183 : vector<8x128xf32> to vector<8x128xbf16>
    %cst_108 = arith.constant dense<0.000000e+00> : vector<8x512xf32>
    %185 = tpu.matmul %184, %13, %cst_108 {dimension_numbers = #tpu.dot_dimension_numbers<[1], [0], [0], [1], [0, 0, 1, 1], [], []>} : vector<8x128xbf16>, vector<128x512xbf16>, vector<8x512xf32> -> vector<8x512xf32>
    %c3 = arith.constant 3 : index
    %c0_109 = arith.constant 0 : index
    %c0_110 = arith.constant 0 : index
    %186 = vector.load %arg6[%c3, %c0_109, %c0_110] : memref<8x8x512xf32, #tpu.memory_space<vmem>>, vector<1x8x256xf32>
    %187 = vector.shape_cast %186 : vector<1x8x256xf32> to vector<8x256xf32>
    %188 = vector.extract_strided_slice %185 {offsets = [0, 0], sizes = [8, 256], strides = [1, 1]} : vector<8x512xf32> to vector<8x256xf32>
    %189 = arith.addf %187, %188 : vector<8x256xf32>
    %c4 = arith.constant 4 : index
    %c0_111 = arith.constant 0 : index
    %c256_112 = arith.constant 256 : index
    %190 = vector.load %arg6[%c4, %c0_111, %c256_112] : memref<8x8x512xf32, #tpu.memory_space<vmem>>, vector<1x8x256xf32>
    %191 = vector.shape_cast %190 : vector<1x8x256xf32> to vector<8x256xf32>
    %192 = vector.extract_strided_slice %185 {offsets = [0, 256], sizes = [8, 256], strides = [1, 1]} : vector<8x512xf32> to vector<8x256xf32>
    %193 = arith.addf %191, %192 : vector<8x256xf32>
    %194 = vector.extract_strided_slice %189 {offsets = [0, 0], sizes = [8, 192], strides = [1, 1]} : vector<8x256xf32> to vector<8x192xf32>
    %195 = arith.negf %194 : vector<8x192xf32>
    %196 = math.exp %195 : vector<8x192xf32>
    %cst_113 = arith.constant 1.000000e+00 : f32
    %197 = vector.broadcast %cst_113 : f32 to vector<8x192xf32>
    %198 = arith.addf %197, %196 : vector<8x192xf32>
    %199 = arith.divf %197, %198 : vector<8x192xf32>
    %200 = vector.extract_strided_slice %189 {offsets = [0, 192], sizes = [8, 64], strides = [1, 1]} : vector<8x256xf32> to vector<8x64xf32>
    %201 = math.tanh %200 : vector<8x64xf32>
    %202 = vector.extract_strided_slice %193 {offsets = [0, 0], sizes = [8, 192], strides = [1, 1]} : vector<8x256xf32> to vector<8x192xf32>
    %203 = arith.negf %202 : vector<8x192xf32>
    %204 = math.exp %203 : vector<8x192xf32>
    %cst_114 = arith.constant 1.000000e+00 : f32
    %205 = vector.broadcast %cst_114 : f32 to vector<8x192xf32>
    %206 = arith.addf %205, %204 : vector<8x192xf32>
    %207 = arith.divf %205, %206 : vector<8x192xf32>
    %208 = vector.extract_strided_slice %193 {offsets = [0, 192], sizes = [8, 64], strides = [1, 1]} : vector<8x256xf32> to vector<8x64xf32>
    %209 = math.tanh %208 : vector<8x64xf32>
    %210 = vector.extract_strided_slice %199 {offsets = [0, 64], sizes = [8, 64], strides = [1, 1]} : vector<8x192xf32> to vector<8x64xf32>
    %c0_115 = arith.constant 0 : index
    %c0_116 = arith.constant 0 : index
    %211 = vector.load %arg8[%c0_115, %c0_116] : memref<8x128xf32, #tpu.memory_space<vmem>>, vector<8x64xf32>
    %212 = arith.mulf %210, %211 : vector<8x64xf32>
    %213 = vector.extract_strided_slice %199 {offsets = [0, 0], sizes = [8, 64], strides = [1, 1]} : vector<8x192xf32> to vector<8x64xf32>
    %214 = arith.mulf %213, %201 : vector<8x64xf32>
    %215 = arith.addf %212, %214 : vector<8x64xf32>
    %216 = vector.extract_strided_slice %207 {offsets = [0, 64], sizes = [8, 64], strides = [1, 1]} : vector<8x192xf32> to vector<8x64xf32>
    %c0_117 = arith.constant 0 : index
    %c64_118 = arith.constant 64 : index
    %217 = vector.load %arg8[%c0_117, %c64_118] : memref<8x128xf32, #tpu.memory_space<vmem>>, vector<8x64xf32>
    %218 = arith.mulf %216, %217 : vector<8x64xf32>
    %219 = vector.extract_strided_slice %207 {offsets = [0, 0], sizes = [8, 64], strides = [1, 1]} : vector<8x192xf32> to vector<8x64xf32>
    %220 = arith.mulf %219, %209 : vector<8x64xf32>
    %221 = arith.addf %218, %220 : vector<8x64xf32>
    %222 = vector.extract_strided_slice %199 {offsets = [0, 128], sizes = [8, 64], strides = [1, 1]} : vector<8x192xf32> to vector<8x64xf32>
    %223 = math.tanh %215 : vector<8x64xf32>
    %224 = arith.mulf %222, %223 : vector<8x64xf32>
    %225 = vector.extract_strided_slice %207 {offsets = [0, 128], sizes = [8, 64], strides = [1, 1]} : vector<8x192xf32> to vector<8x64xf32>
    %226 = math.tanh %221 : vector<8x64xf32>
    %227 = arith.mulf %225, %226 : vector<8x64xf32>
    %c0_119 = arith.constant 0 : index
    %c0_120 = arith.constant 0 : index
    %228 = vector.load %arg8[%c0_119, %c0_120] : memref<8x128xf32, #tpu.memory_space<vmem>>, vector<8x64xf32>
    tpu.vector_store %arg8[%c0_119, %c0_120], %215 {strides = array<i32>} : memref<8x128xf32, #tpu.memory_space<vmem>>, vector<8x64xf32>,
    %c0_121 = arith.constant 0 : index
    %c64_122 = arith.constant 64 : index
    %229 = vector.load %arg8[%c0_121, %c64_122] : memref<8x128xf32, #tpu.memory_space<vmem>>, vector<8x64xf32>
    tpu.vector_store %arg8[%c0_121, %c64_122], %221 {strides = array<i32>} : memref<8x128xf32, #tpu.memory_space<vmem>>, vector<8x64xf32>,
    %c0_123 = arith.constant 0 : index
    %c0_124 = arith.constant 0 : index
    %230 = vector.load %arg7[%c0_123, %c0_124] : memref<8x128xf32, #tpu.memory_space<vmem>>, vector<8x64xf32>
    tpu.vector_store %arg7[%c0_123, %c0_124], %224 {strides = array<i32>} : memref<8x128xf32, #tpu.memory_space<vmem>>, vector<8x64xf32>,
    %c0_125 = arith.constant 0 : index
    %c64_126 = arith.constant 64 : index
    %231 = vector.load %arg7[%c0_125, %c64_126] : memref<8x128xf32, #tpu.memory_space<vmem>>, vector<8x64xf32>
    tpu.vector_store %arg7[%c0_125, %c64_126], %227 {strides = array<i32>} : memref<8x128xf32, #tpu.memory_space<vmem>>, vector<8x64xf32>,
    %c0_127 = arith.constant 0 : index
    %c3_128 = arith.constant 3 : index
    %c0_129 = arith.constant 0 : index
    %c0_130 = arith.constant 0 : index
    %232 = vector.load %arg5[%c0_127, %c3_128, %c0_129, %c0_130] : memref<1x8x8x128xf32, #tpu.memory_space<vmem>>, vector<1x1x8x64xf32>
    %233 = vector.shape_cast %232 : vector<1x1x8x64xf32> to vector<8x64xf32>
    %234 = vector.shape_cast %224 : vector<8x64xf32> to vector<1x1x8x64xf32>
    tpu.vector_store %arg5[%c0_127, %c3_128, %c0_129, %c0_130], %234 {strides = array<i32>} : memref<1x8x8x128xf32, #tpu.memory_space<vmem>>, vector<1x1x8x64xf32>,
    %c0_131 = arith.constant 0 : index
    %c4_132 = arith.constant 4 : index
    %c0_133 = arith.constant 0 : index
    %c64_134 = arith.constant 64 : index
    %235 = vector.load %arg5[%c0_131, %c4_132, %c0_133, %c64_134] : memref<1x8x8x128xf32, #tpu.memory_space<vmem>>, vector<1x1x8x64xf32>
    %236 = vector.shape_cast %235 : vector<1x1x8x64xf32> to vector<8x64xf32>
    %237 = vector.shape_cast %227 : vector<8x64xf32> to vector<1x1x8x64xf32>
    tpu.vector_store %arg5[%c0_131, %c4_132, %c0_133, %c64_134], %237 {strides = array<i32>} : memref<1x8x8x128xf32, #tpu.memory_space<vmem>>, vector<1x1x8x64xf32>,
    %c0_135 = arith.constant 0 : index
    %c0_136 = arith.constant 0 : index
    %238 = vector.load %arg7[%c0_135, %c0_136] : memref<8x128xf32, #tpu.memory_space<vmem>>, vector<8x128xf32>
    %239 = arith.truncf %238 : vector<8x128xf32> to vector<8x128xbf16>
    %cst_137 = arith.constant dense<0.000000e+00> : vector<8x512xf32>
    %240 = tpu.matmul %239, %13, %cst_137 {dimension_numbers = #tpu.dot_dimension_numbers<[1], [0], [0], [1], [0, 0, 1, 1], [], []>} : vector<8x128xbf16>, vector<128x512xbf16>, vector<8x512xf32> -> vector<8x512xf32>
    %c4_138 = arith.constant 4 : index
    %c0_139 = arith.constant 0 : index
    %c0_140 = arith.constant 0 : index
    %241 = vector.load %arg6[%c4_138, %c0_139, %c0_140] : memref<8x8x512xf32, #tpu.memory_space<vmem>>, vector<1x8x256xf32>
    %242 = vector.shape_cast %241 : vector<1x8x256xf32> to vector<8x256xf32>
    %243 = vector.extract_strided_slice %240 {offsets = [0, 0], sizes = [8, 256], strides = [1, 1]} : vector<8x512xf32> to vector<8x256xf32>
    %244 = arith.addf %242, %243 : vector<8x256xf32>
    %c3_141 = arith.constant 3 : index
    %c0_142 = arith.constant 0 : index
    %c256_143 = arith.constant 256 : index
    %245 = vector.load %arg6[%c3_141, %c0_142, %c256_143] : memref<8x8x512xf32, #tpu.memory_space<vmem>>, vector<1x8x256xf32>
    %246 = vector.shape_cast %245 : vector<1x8x256xf32> to vector<8x256xf32>
    %247 = vector.extract_strided_slice %240 {offsets = [0, 256], sizes = [8, 256], strides = [1, 1]} : vector<8x512xf32> to vector<8x256xf32>
    %248 = arith.addf %246, %247 : vector<8x256xf32>
    %249 = vector.extract_strided_slice %244 {offsets = [0, 0], sizes = [8, 192], strides = [1, 1]} : vector<8x256xf32> to vector<8x192xf32>
    %250 = arith.negf %249 : vector<8x192xf32>
    %251 = math.exp %250 : vector<8x192xf32>
    %cst_144 = arith.constant 1.000000e+00 : f32
    %252 = vector.broadcast %cst_144 : f32 to vector<8x192xf32>
    %253 = arith.addf %252, %251 : vector<8x192xf32>
    %254 = arith.divf %252, %253 : vector<8x192xf32>
    %255 = vector.extract_strided_slice %244 {offsets = [0, 192], sizes = [8, 64], strides = [1, 1]} : vector<8x256xf32> to vector<8x64xf32>
    %256 = math.tanh %255 : vector<8x64xf32>
    %257 = vector.extract_strided_slice %248 {offsets = [0, 0], sizes = [8, 192], strides = [1, 1]} : vector<8x256xf32> to vector<8x192xf32>
    %258 = arith.negf %257 : vector<8x192xf32>
    %259 = math.exp %258 : vector<8x192xf32>
    %cst_145 = arith.constant 1.000000e+00 : f32
    %260 = vector.broadcast %cst_145 : f32 to vector<8x192xf32>
    %261 = arith.addf %260, %259 : vector<8x192xf32>
    %262 = arith.divf %260, %261 : vector<8x192xf32>
    %263 = vector.extract_strided_slice %248 {offsets = [0, 192], sizes = [8, 64], strides = [1, 1]} : vector<8x256xf32> to vector<8x64xf32>
    %264 = math.tanh %263 : vector<8x64xf32>
    %265 = vector.extract_strided_slice %254 {offsets = [0, 64], sizes = [8, 64], strides = [1, 1]} : vector<8x192xf32> to vector<8x64xf32>
    %c0_146 = arith.constant 0 : index
    %c0_147 = arith.constant 0 : index
    %266 = vector.load %arg8[%c0_146, %c0_147] : memref<8x128xf32, #tpu.memory_space<vmem>>, vector<8x64xf32>
    %267 = arith.mulf %265, %266 : vector<8x64xf32>
    %268 = vector.extract_strided_slice %254 {offsets = [0, 0], sizes = [8, 64], strides = [1, 1]} : vector<8x192xf32> to vector<8x64xf32>
    %269 = arith.mulf %268, %256 : vector<8x64xf32>
    %270 = arith.addf %267, %269 : vector<8x64xf32>
    %271 = vector.extract_strided_slice %262 {offsets = [0, 64], sizes = [8, 64], strides = [1, 1]} : vector<8x192xf32> to vector<8x64xf32>
    %c0_148 = arith.constant 0 : index
    %c64_149 = arith.constant 64 : index
    %272 = vector.load %arg8[%c0_148, %c64_149] : memref<8x128xf32, #tpu.memory_space<vmem>>, vector<8x64xf32>
    %273 = arith.mulf %271, %272 : vector<8x64xf32>
    %274 = vector.extract_strided_slice %262 {offsets = [0, 0], sizes = [8, 64], strides = [1, 1]} : vector<8x192xf32> to vector<8x64xf32>
    %275 = arith.mulf %274, %264 : vector<8x64xf32>
    %276 = arith.addf %273, %275 : vector<8x64xf32>
    %277 = vector.extract_strided_slice %254 {offsets = [0, 128], sizes = [8, 64], strides = [1, 1]} : vector<8x192xf32> to vector<8x64xf32>
    %278 = math.tanh %270 : vector<8x64xf32>
    %279 = arith.mulf %277, %278 : vector<8x64xf32>
    %280 = vector.extract_strided_slice %262 {offsets = [0, 128], sizes = [8, 64], strides = [1, 1]} : vector<8x192xf32> to vector<8x64xf32>
    %281 = math.tanh %276 : vector<8x64xf32>
    %282 = arith.mulf %280, %281 : vector<8x64xf32>
    %c0_150 = arith.constant 0 : index
    %c0_151 = arith.constant 0 : index
    %283 = vector.load %arg8[%c0_150, %c0_151] : memref<8x128xf32, #tpu.memory_space<vmem>>, vector<8x64xf32>
    tpu.vector_store %arg8[%c0_150, %c0_151], %270 {strides = array<i32>} : memref<8x128xf32, #tpu.memory_space<vmem>>, vector<8x64xf32>,
    %c0_152 = arith.constant 0 : index
    %c64_153 = arith.constant 64 : index
    %284 = vector.load %arg8[%c0_152, %c64_153] : memref<8x128xf32, #tpu.memory_space<vmem>>, vector<8x64xf32>
    tpu.vector_store %arg8[%c0_152, %c64_153], %276 {strides = array<i32>} : memref<8x128xf32, #tpu.memory_space<vmem>>, vector<8x64xf32>,
    %c0_154 = arith.constant 0 : index
    %c0_155 = arith.constant 0 : index
    %285 = vector.load %arg7[%c0_154, %c0_155] : memref<8x128xf32, #tpu.memory_space<vmem>>, vector<8x64xf32>
    tpu.vector_store %arg7[%c0_154, %c0_155], %279 {strides = array<i32>} : memref<8x128xf32, #tpu.memory_space<vmem>>, vector<8x64xf32>,
    %c0_156 = arith.constant 0 : index
    %c64_157 = arith.constant 64 : index
    %286 = vector.load %arg7[%c0_156, %c64_157] : memref<8x128xf32, #tpu.memory_space<vmem>>, vector<8x64xf32>
    tpu.vector_store %arg7[%c0_156, %c64_157], %282 {strides = array<i32>} : memref<8x128xf32, #tpu.memory_space<vmem>>, vector<8x64xf32>,
    %c0_158 = arith.constant 0 : index
    %c4_159 = arith.constant 4 : index
    %c0_160 = arith.constant 0 : index
    %c0_161 = arith.constant 0 : index
    %287 = vector.load %arg5[%c0_158, %c4_159, %c0_160, %c0_161] : memref<1x8x8x128xf32, #tpu.memory_space<vmem>>, vector<1x1x8x64xf32>
    %288 = vector.shape_cast %287 : vector<1x1x8x64xf32> to vector<8x64xf32>
    %289 = vector.shape_cast %279 : vector<8x64xf32> to vector<1x1x8x64xf32>
    tpu.vector_store %arg5[%c0_158, %c4_159, %c0_160, %c0_161], %289 {strides = array<i32>} : memref<1x8x8x128xf32, #tpu.memory_space<vmem>>, vector<1x1x8x64xf32>,
    %c0_162 = arith.constant 0 : index
    %c3_163 = arith.constant 3 : index
    %c0_164 = arith.constant 0 : index
    %c64_165 = arith.constant 64 : index
    %290 = vector.load %arg5[%c0_162, %c3_163, %c0_164, %c64_165] : memref<1x8x8x128xf32, #tpu.memory_space<vmem>>, vector<1x1x8x64xf32>
    %291 = vector.shape_cast %290 : vector<1x1x8x64xf32> to vector<8x64xf32>
    %292 = vector.shape_cast %282 : vector<8x64xf32> to vector<1x1x8x64xf32>
    tpu.vector_store %arg5[%c0_162, %c3_163, %c0_164, %c64_165], %292 {strides = array<i32>} : memref<1x8x8x128xf32, #tpu.memory_space<vmem>>, vector<1x1x8x64xf32>,
    %c0_166 = arith.constant 0 : index
    %c0_167 = arith.constant 0 : index
    %293 = vector.load %arg7[%c0_166, %c0_167] : memref<8x128xf32, #tpu.memory_space<vmem>>, vector<8x128xf32>
    %294 = arith.truncf %293 : vector<8x128xf32> to vector<8x128xbf16>
    %cst_168 = arith.constant dense<0.000000e+00> : vector<8x512xf32>
    %295 = tpu.matmul %294, %13, %cst_168 {dimension_numbers = #tpu.dot_dimension_numbers<[1], [0], [0], [1], [0, 0, 1, 1], [], []>} : vector<8x128xbf16>, vector<128x512xbf16>, vector<8x512xf32> -> vector<8x512xf32>
    %c5_169 = arith.constant 5 : index
    %c0_170 = arith.constant 0 : index
    %c0_171 = arith.constant 0 : index
    %296 = vector.load %arg6[%c5_169, %c0_170, %c0_171] : memref<8x8x512xf32, #tpu.memory_space<vmem>>, vector<1x8x256xf32>
    %297 = vector.shape_cast %296 : vector<1x8x256xf32> to vector<8x256xf32>
    %298 = vector.extract_strided_slice %295 {offsets = [0, 0], sizes = [8, 256], strides = [1, 1]} : vector<8x512xf32> to vector<8x256xf32>
    %299 = arith.addf %297, %298 : vector<8x256xf32>
    %c2_172 = arith.constant 2 : index
    %c0_173 = arith.constant 0 : index
    %c256_174 = arith.constant 256 : index
    %300 = vector.load %arg6[%c2_172, %c0_173, %c256_174] : memref<8x8x512xf32, #tpu.memory_space<vmem>>, vector<1x8x256xf32>
    %301 = vector.shape_cast %300 : vector<1x8x256xf32> to vector<8x256xf32>
    %302 = vector.extract_strided_slice %295 {offsets = [0, 256], sizes = [8, 256], strides = [1, 1]} : vector<8x512xf32> to vector<8x256xf32>
    %303 = arith.addf %301, %302 : vector<8x256xf32>
    %304 = vector.extract_strided_slice %299 {offsets = [0, 0], sizes = [8, 192], strides = [1, 1]} : vector<8x256xf32> to vector<8x192xf32>
    %305 = arith.negf %304 : vector<8x192xf32>
    %306 = math.exp %305 : vector<8x192xf32>
    %cst_175 = arith.constant 1.000000e+00 : f32
    %307 = vector.broadcast %cst_175 : f32 to vector<8x192xf32>
    %308 = arith.addf %307, %306 : vector<8x192xf32>
    %309 = arith.divf %307, %308 : vector<8x192xf32>
    %310 = vector.extract_strided_slice %299 {offsets = [0, 192], sizes = [8, 64], strides = [1, 1]} : vector<8x256xf32> to vector<8x64xf32>
    %311 = math.tanh %310 : vector<8x64xf32>
    %312 = vector.extract_strided_slice %303 {offsets = [0, 0], sizes = [8, 192], strides = [1, 1]} : vector<8x256xf32> to vector<8x192xf32>
    %313 = arith.negf %312 : vector<8x192xf32>
    %314 = math.exp %313 : vector<8x192xf32>
    %cst_176 = arith.constant 1.000000e+00 : f32
    %315 = vector.broadcast %cst_176 : f32 to vector<8x192xf32>
    %316 = arith.addf %315, %314 : vector<8x192xf32>
    %317 = arith.divf %315, %316 : vector<8x192xf32>
    %318 = vector.extract_strided_slice %303 {offsets = [0, 192], sizes = [8, 64], strides = [1, 1]} : vector<8x256xf32> to vector<8x64xf32>
    %319 = math.tanh %318 : vector<8x64xf32>
    %320 = vector.extract_strided_slice %309 {offsets = [0, 64], sizes = [8, 64], strides = [1, 1]} : vector<8x192xf32> to vector<8x64xf32>
    %c0_177 = arith.constant 0 : index
    %c0_178 = arith.constant 0 : index
    %321 = vector.load %arg8[%c0_177, %c0_178] : memref<8x128xf32, #tpu.memory_space<vmem>>, vector<8x64xf32>
    %322 = arith.mulf %320, %321 : vector<8x64xf32>
    %323 = vector.extract_strided_slice %309 {offsets = [0, 0], sizes = [8, 64], strides = [1, 1]} : vector<8x192xf32> to vector<8x64xf32>
    %324 = arith.mulf %323, %311 : vector<8x64xf32>
    %325 = arith.addf %322, %324 : vector<8x64xf32>
    %326 = vector.extract_strided_slice %317 {offsets = [0, 64], sizes = [8, 64], strides = [1, 1]} : vector<8x192xf32> to vector<8x64xf32>
    %c0_179 = arith.constant 0 : index
    %c64_180 = arith.constant 64 : index
    %327 = vector.load %arg8[%c0_179, %c64_180] : memref<8x128xf32, #tpu.memory_space<vmem>>, vector<8x64xf32>
    %328 = arith.mulf %326, %327 : vector<8x64xf32>
    %329 = vector.extract_strided_slice %317 {offsets = [0, 0], sizes = [8, 64], strides = [1, 1]} : vector<8x192xf32> to vector<8x64xf32>
    %330 = arith.mulf %329, %319 : vector<8x64xf32>
    %331 = arith.addf %328, %330 : vector<8x64xf32>
    %332 = vector.extract_strided_slice %309 {offsets = [0, 128], sizes = [8, 64], strides = [1, 1]} : vector<8x192xf32> to vector<8x64xf32>
    %333 = math.tanh %325 : vector<8x64xf32>
    %334 = arith.mulf %332, %333 : vector<8x64xf32>
    %335 = vector.extract_strided_slice %317 {offsets = [0, 128], sizes = [8, 64], strides = [1, 1]} : vector<8x192xf32> to vector<8x64xf32>
    %336 = math.tanh %331 : vector<8x64xf32>
    %337 = arith.mulf %335, %336 : vector<8x64xf32>
    %c0_181 = arith.constant 0 : index
    %c0_182 = arith.constant 0 : index
    %338 = vector.load %arg8[%c0_181, %c0_182] : memref<8x128xf32, #tpu.memory_space<vmem>>, vector<8x64xf32>
    tpu.vector_store %arg8[%c0_181, %c0_182], %325 {strides = array<i32>} : memref<8x128xf32, #tpu.memory_space<vmem>>, vector<8x64xf32>,
    %c0_183 = arith.constant 0 : index
    %c64_184 = arith.constant 64 : index
    %339 = vector.load %arg8[%c0_183, %c64_184] : memref<8x128xf32, #tpu.memory_space<vmem>>, vector<8x64xf32>
    tpu.vector_store %arg8[%c0_183, %c64_184], %331 {strides = array<i32>} : memref<8x128xf32, #tpu.memory_space<vmem>>, vector<8x64xf32>,
    %c0_185 = arith.constant 0 : index
    %c0_186 = arith.constant 0 : index
    %340 = vector.load %arg7[%c0_185, %c0_186] : memref<8x128xf32, #tpu.memory_space<vmem>>, vector<8x64xf32>
    tpu.vector_store %arg7[%c0_185, %c0_186], %334 {strides = array<i32>} : memref<8x128xf32, #tpu.memory_space<vmem>>, vector<8x64xf32>,
    %c0_187 = arith.constant 0 : index
    %c64_188 = arith.constant 64 : index
    %341 = vector.load %arg7[%c0_187, %c64_188] : memref<8x128xf32, #tpu.memory_space<vmem>>, vector<8x64xf32>
    tpu.vector_store %arg7[%c0_187, %c64_188], %337 {strides = array<i32>} : memref<8x128xf32, #tpu.memory_space<vmem>>, vector<8x64xf32>,
    %c0_189 = arith.constant 0 : index
    %c5_190 = arith.constant 5 : index
    %c0_191 = arith.constant 0 : index
    %c0_192 = arith.constant 0 : index
    %342 = vector.load %arg5[%c0_189, %c5_190, %c0_191, %c0_192] : memref<1x8x8x128xf32, #tpu.memory_space<vmem>>, vector<1x1x8x64xf32>
    %343 = vector.shape_cast %342 : vector<1x1x8x64xf32> to vector<8x64xf32>
    %344 = vector.shape_cast %334 : vector<8x64xf32> to vector<1x1x8x64xf32>
    tpu.vector_store %arg5[%c0_189, %c5_190, %c0_191, %c0_192], %344 {strides = array<i32>} : memref<1x8x8x128xf32, #tpu.memory_space<vmem>>, vector<1x1x8x64xf32>,
    %c0_193 = arith.constant 0 : index
    %c2_194 = arith.constant 2 : index
    %c0_195 = arith.constant 0 : index
    %c64_196 = arith.constant 64 : index
    %345 = vector.load %arg5[%c0_193, %c2_194, %c0_195, %c64_196] : memref<1x8x8x128xf32, #tpu.memory_space<vmem>>, vector<1x1x8x64xf32>
    %346 = vector.shape_cast %345 : vector<1x1x8x64xf32> to vector<8x64xf32>
    %347 = vector.shape_cast %337 : vector<8x64xf32> to vector<1x1x8x64xf32>
    tpu.vector_store %arg5[%c0_193, %c2_194, %c0_195, %c64_196], %347 {strides = array<i32>} : memref<1x8x8x128xf32, #tpu.memory_space<vmem>>, vector<1x1x8x64xf32>,
    %c0_197 = arith.constant 0 : index
    %c0_198 = arith.constant 0 : index
    %348 = vector.load %arg7[%c0_197, %c0_198] : memref<8x128xf32, #tpu.memory_space<vmem>>, vector<8x128xf32>
    %349 = arith.truncf %348 : vector<8x128xf32> to vector<8x128xbf16>
    %cst_199 = arith.constant dense<0.000000e+00> : vector<8x512xf32>
    %350 = tpu.matmul %349, %13, %cst_199 {dimension_numbers = #tpu.dot_dimension_numbers<[1], [0], [0], [1], [0, 0, 1, 1], [], []>} : vector<8x128xbf16>, vector<128x512xbf16>, vector<8x512xf32> -> vector<8x512xf32>
    %c6_200 = arith.constant 6 : index
    %c0_201 = arith.constant 0 : index
    %c0_202 = arith.constant 0 : index
    %351 = vector.load %arg6[%c6_200, %c0_201, %c0_202] : memref<8x8x512xf32, #tpu.memory_space<vmem>>, vector<1x8x256xf32>
    %352 = vector.shape_cast %351 : vector<1x8x256xf32> to vector<8x256xf32>
    %353 = vector.extract_strided_slice %350 {offsets = [0, 0], sizes = [8, 256], strides = [1, 1]} : vector<8x512xf32> to vector<8x256xf32>
    %354 = arith.addf %352, %353 : vector<8x256xf32>
    %c1_203 = arith.constant 1 : index
    %c0_204 = arith.constant 0 : index
    %c256_205 = arith.constant 256 : index
    %355 = vector.load %arg6[%c1_203, %c0_204, %c256_205] : memref<8x8x512xf32, #tpu.memory_space<vmem>>, vector<1x8x256xf32>
    %356 = vector.shape_cast %355 : vector<1x8x256xf32> to vector<8x256xf32>
    %357 = vector.extract_strided_slice %350 {offsets = [0, 256], sizes = [8, 256], strides = [1, 1]} : vector<8x512xf32> to vector<8x256xf32>
    %358 = arith.addf %356, %357 : vector<8x256xf32>
    %359 = vector.extract_strided_slice %354 {offsets = [0, 0], sizes = [8, 192], strides = [1, 1]} : vector<8x256xf32> to vector<8x192xf32>
    %360 = arith.negf %359 : vector<8x192xf32>
    %361 = math.exp %360 : vector<8x192xf32>
    %cst_206 = arith.constant 1.000000e+00 : f32
    %362 = vector.broadcast %cst_206 : f32 to vector<8x192xf32>
    %363 = arith.addf %362, %361 : vector<8x192xf32>
    %364 = arith.divf %362, %363 : vector<8x192xf32>
    %365 = vector.extract_strided_slice %354 {offsets = [0, 192], sizes = [8, 64], strides = [1, 1]} : vector<8x256xf32> to vector<8x64xf32>
    %366 = math.tanh %365 : vector<8x64xf32>
    %367 = vector.extract_strided_slice %358 {offsets = [0, 0], sizes = [8, 192], strides = [1, 1]} : vector<8x256xf32> to vector<8x192xf32>
    %368 = arith.negf %367 : vector<8x192xf32>
    %369 = math.exp %368 : vector<8x192xf32>
    %cst_207 = arith.constant 1.000000e+00 : f32
    %370 = vector.broadcast %cst_207 : f32 to vector<8x192xf32>
    %371 = arith.addf %370, %369 : vector<8x192xf32>
    %372 = arith.divf %370, %371 : vector<8x192xf32>
    %373 = vector.extract_strided_slice %358 {offsets = [0, 192], sizes = [8, 64], strides = [1, 1]} : vector<8x256xf32> to vector<8x64xf32>
    %374 = math.tanh %373 : vector<8x64xf32>
    %375 = vector.extract_strided_slice %364 {offsets = [0, 64], sizes = [8, 64], strides = [1, 1]} : vector<8x192xf32> to vector<8x64xf32>
    %c0_208 = arith.constant 0 : index
    %c0_209 = arith.constant 0 : index
    %376 = vector.load %arg8[%c0_208, %c0_209] : memref<8x128xf32, #tpu.memory_space<vmem>>, vector<8x64xf32>
    %377 = arith.mulf %375, %376 : vector<8x64xf32>
    %378 = vector.extract_strided_slice %364 {offsets = [0, 0], sizes = [8, 64], strides = [1, 1]} : vector<8x192xf32> to vector<8x64xf32>
    %379 = arith.mulf %378, %366 : vector<8x64xf32>
    %380 = arith.addf %377, %379 : vector<8x64xf32>
    %381 = vector.extract_strided_slice %372 {offsets = [0, 64], sizes = [8, 64], strides = [1, 1]} : vector<8x192xf32> to vector<8x64xf32>
    %c0_210 = arith.constant 0 : index
    %c64_211 = arith.constant 64 : index
    %382 = vector.load %arg8[%c0_210, %c64_211] : memref<8x128xf32, #tpu.memory_space<vmem>>, vector<8x64xf32>
    %383 = arith.mulf %381, %382 : vector<8x64xf32>
    %384 = vector.extract_strided_slice %372 {offsets = [0, 0], sizes = [8, 64], strides = [1, 1]} : vector<8x192xf32> to vector<8x64xf32>
    %385 = arith.mulf %384, %374 : vector<8x64xf32>
    %386 = arith.addf %383, %385 : vector<8x64xf32>
    %387 = vector.extract_strided_slice %364 {offsets = [0, 128], sizes = [8, 64], strides = [1, 1]} : vector<8x192xf32> to vector<8x64xf32>
    %388 = math.tanh %380 : vector<8x64xf32>
    %389 = arith.mulf %387, %388 : vector<8x64xf32>
    %390 = vector.extract_strided_slice %372 {offsets = [0, 128], sizes = [8, 64], strides = [1, 1]} : vector<8x192xf32> to vector<8x64xf32>
    %391 = math.tanh %386 : vector<8x64xf32>
    %392 = arith.mulf %390, %391 : vector<8x64xf32>
    %c0_212 = arith.constant 0 : index
    %c0_213 = arith.constant 0 : index
    %393 = vector.load %arg8[%c0_212, %c0_213] : memref<8x128xf32, #tpu.memory_space<vmem>>, vector<8x64xf32>
    tpu.vector_store %arg8[%c0_212, %c0_213], %380 {strides = array<i32>} : memref<8x128xf32, #tpu.memory_space<vmem>>, vector<8x64xf32>,
    %c0_214 = arith.constant 0 : index
    %c64_215 = arith.constant 64 : index
    %394 = vector.load %arg8[%c0_214, %c64_215] : memref<8x128xf32, #tpu.memory_space<vmem>>, vector<8x64xf32>
    tpu.vector_store %arg8[%c0_214, %c64_215], %386 {strides = array<i32>} : memref<8x128xf32, #tpu.memory_space<vmem>>, vector<8x64xf32>,
    %c0_216 = arith.constant 0 : index
    %c0_217 = arith.constant 0 : index
    %395 = vector.load %arg7[%c0_216, %c0_217] : memref<8x128xf32, #tpu.memory_space<vmem>>, vector<8x64xf32>
    tpu.vector_store %arg7[%c0_216, %c0_217], %389 {strides = array<i32>} : memref<8x128xf32, #tpu.memory_space<vmem>>, vector<8x64xf32>,
    %c0_218 = arith.constant 0 : index
    %c64_219 = arith.constant 64 : index
    %396 = vector.load %arg7[%c0_218, %c64_219] : memref<8x128xf32, #tpu.memory_space<vmem>>, vector<8x64xf32>
    tpu.vector_store %arg7[%c0_218, %c64_219], %392 {strides = array<i32>} : memref<8x128xf32, #tpu.memory_space<vmem>>, vector<8x64xf32>,
    %c0_220 = arith.constant 0 : index
    %c6_221 = arith.constant 6 : index
    %c0_222 = arith.constant 0 : index
    %c0_223 = arith.constant 0 : index
    %397 = vector.load %arg5[%c0_220, %c6_221, %c0_222, %c0_223] : memref<1x8x8x128xf32, #tpu.memory_space<vmem>>, vector<1x1x8x64xf32>
    %398 = vector.shape_cast %397 : vector<1x1x8x64xf32> to vector<8x64xf32>
    %399 = vector.shape_cast %389 : vector<8x64xf32> to vector<1x1x8x64xf32>
    tpu.vector_store %arg5[%c0_220, %c6_221, %c0_222, %c0_223], %399 {strides = array<i32>} : memref<1x8x8x128xf32, #tpu.memory_space<vmem>>, vector<1x1x8x64xf32>,
    %c0_224 = arith.constant 0 : index
    %c1_225 = arith.constant 1 : index
    %c0_226 = arith.constant 0 : index
    %c64_227 = arith.constant 64 : index
    %400 = vector.load %arg5[%c0_224, %c1_225, %c0_226, %c64_227] : memref<1x8x8x128xf32, #tpu.memory_space<vmem>>, vector<1x1x8x64xf32>
    %401 = vector.shape_cast %400 : vector<1x1x8x64xf32> to vector<8x64xf32>
    %402 = vector.shape_cast %392 : vector<8x64xf32> to vector<1x1x8x64xf32>
    tpu.vector_store %arg5[%c0_224, %c1_225, %c0_226, %c64_227], %402 {strides = array<i32>} : memref<1x8x8x128xf32, #tpu.memory_space<vmem>>, vector<1x1x8x64xf32>,
    %c0_228 = arith.constant 0 : index
    %c0_229 = arith.constant 0 : index
    %403 = vector.load %arg7[%c0_228, %c0_229] : memref<8x128xf32, #tpu.memory_space<vmem>>, vector<8x128xf32>
    %404 = arith.truncf %403 : vector<8x128xf32> to vector<8x128xbf16>
    %cst_230 = arith.constant dense<0.000000e+00> : vector<8x512xf32>
    %405 = tpu.matmul %404, %13, %cst_230 {dimension_numbers = #tpu.dot_dimension_numbers<[1], [0], [0], [1], [0, 0, 1, 1], [], []>} : vector<8x128xbf16>, vector<128x512xbf16>, vector<8x512xf32> -> vector<8x512xf32>
    %c7_231 = arith.constant 7 : index
    %c0_232 = arith.constant 0 : index
    %c0_233 = arith.constant 0 : index
    %406 = vector.load %arg6[%c7_231, %c0_232, %c0_233] : memref<8x8x512xf32, #tpu.memory_space<vmem>>, vector<1x8x256xf32>
    %407 = vector.shape_cast %406 : vector<1x8x256xf32> to vector<8x256xf32>
    %408 = vector.extract_strided_slice %405 {offsets = [0, 0], sizes = [8, 256], strides = [1, 1]} : vector<8x512xf32> to vector<8x256xf32>
    %409 = arith.addf %407, %408 : vector<8x256xf32>
    %c0_234 = arith.constant 0 : index
    %c0_235 = arith.constant 0 : index
    %c256_236 = arith.constant 256 : index
    %410 = vector.load %arg6[%c0_234, %c0_235, %c256_236] : memref<8x8x512xf32, #tpu.memory_space<vmem>>, vector<1x8x256xf32>
    %411 = vector.shape_cast %410 : vector<1x8x256xf32> to vector<8x256xf32>
    %412 = vector.extract_strided_slice %405 {offsets = [0, 256], sizes = [8, 256], strides = [1, 1]} : vector<8x512xf32> to vector<8x256xf32>
    %413 = arith.addf %411, %412 : vector<8x256xf32>
    %414 = vector.extract_strided_slice %409 {offsets = [0, 0], sizes = [8, 192], strides = [1, 1]} : vector<8x256xf32> to vector<8x192xf32>
    %415 = arith.negf %414 : vector<8x192xf32>
    %416 = math.exp %415 : vector<8x192xf32>
    %cst_237 = arith.constant 1.000000e+00 : f32
    %417 = vector.broadcast %cst_237 : f32 to vector<8x192xf32>
    %418 = arith.addf %417, %416 : vector<8x192xf32>
    %419 = arith.divf %417, %418 : vector<8x192xf32>
    %420 = vector.extract_strided_slice %409 {offsets = [0, 192], sizes = [8, 64], strides = [1, 1]} : vector<8x256xf32> to vector<8x64xf32>
    %421 = math.tanh %420 : vector<8x64xf32>
    %422 = vector.extract_strided_slice %413 {offsets = [0, 0], sizes = [8, 192], strides = [1, 1]} : vector<8x256xf32> to vector<8x192xf32>
    %423 = arith.negf %422 : vector<8x192xf32>
    %424 = math.exp %423 : vector<8x192xf32>
    %cst_238 = arith.constant 1.000000e+00 : f32
    %425 = vector.broadcast %cst_238 : f32 to vector<8x192xf32>
    %426 = arith.addf %425, %424 : vector<8x192xf32>
    %427 = arith.divf %425, %426 : vector<8x192xf32>
    %428 = vector.extract_strided_slice %413 {offsets = [0, 192], sizes = [8, 64], strides = [1, 1]} : vector<8x256xf32> to vector<8x64xf32>
    %429 = math.tanh %428 : vector<8x64xf32>
    %430 = vector.extract_strided_slice %419 {offsets = [0, 64], sizes = [8, 64], strides = [1, 1]} : vector<8x192xf32> to vector<8x64xf32>
    %c0_239 = arith.constant 0 : index
    %c0_240 = arith.constant 0 : index
    %431 = vector.load %arg8[%c0_239, %c0_240] : memref<8x128xf32, #tpu.memory_space<vmem>>, vector<8x64xf32>
    %432 = arith.mulf %430, %431 : vector<8x64xf32>
    %433 = vector.extract_strided_slice %419 {offsets = [0, 0], sizes = [8, 64], strides = [1, 1]} : vector<8x192xf32> to vector<8x64xf32>
    %434 = arith.mulf %433, %421 : vector<8x64xf32>
    %435 = arith.addf %432, %434 : vector<8x64xf32>
    %436 = vector.extract_strided_slice %427 {offsets = [0, 64], sizes = [8, 64], strides = [1, 1]} : vector<8x192xf32> to vector<8x64xf32>
    %c0_241 = arith.constant 0 : index
    %c64_242 = arith.constant 64 : index
    %437 = vector.load %arg8[%c0_241, %c64_242] : memref<8x128xf32, #tpu.memory_space<vmem>>, vector<8x64xf32>
    %438 = arith.mulf %436, %437 : vector<8x64xf32>
    %439 = vector.extract_strided_slice %427 {offsets = [0, 0], sizes = [8, 64], strides = [1, 1]} : vector<8x192xf32> to vector<8x64xf32>
    %440 = arith.mulf %439, %429 : vector<8x64xf32>
    %441 = arith.addf %438, %440 : vector<8x64xf32>
    %442 = vector.extract_strided_slice %419 {offsets = [0, 128], sizes = [8, 64], strides = [1, 1]} : vector<8x192xf32> to vector<8x64xf32>
    %443 = math.tanh %435 : vector<8x64xf32>
    %444 = arith.mulf %442, %443 : vector<8x64xf32>
    %445 = vector.extract_strided_slice %427 {offsets = [0, 128], sizes = [8, 64], strides = [1, 1]} : vector<8x192xf32> to vector<8x64xf32>
    %446 = math.tanh %441 : vector<8x64xf32>
    %447 = arith.mulf %445, %446 : vector<8x64xf32>
    %c0_243 = arith.constant 0 : index
    %c0_244 = arith.constant 0 : index
    %448 = vector.load %arg8[%c0_243, %c0_244] : memref<8x128xf32, #tpu.memory_space<vmem>>, vector<8x64xf32>
    tpu.vector_store %arg8[%c0_243, %c0_244], %435 {strides = array<i32>} : memref<8x128xf32, #tpu.memory_space<vmem>>, vector<8x64xf32>,
    %c0_245 = arith.constant 0 : index
    %c64_246 = arith.constant 64 : index
    %449 = vector.load %arg8[%c0_245, %c64_246] : memref<8x128xf32, #tpu.memory_space<vmem>>, vector<8x64xf32>
    tpu.vector_store %arg8[%c0_245, %c64_246], %441 {strides = array<i32>} : memref<8x128xf32, #tpu.memory_space<vmem>>, vector<8x64xf32>,
    %c0_247 = arith.constant 0 : index
    %c0_248 = arith.constant 0 : index
    %450 = vector.load %arg7[%c0_247, %c0_248] : memref<8x128xf32, #tpu.memory_space<vmem>>, vector<8x64xf32>
    tpu.vector_store %arg7[%c0_247, %c0_248], %444 {strides = array<i32>} : memref<8x128xf32, #tpu.memory_space<vmem>>, vector<8x64xf32>,
    %c0_249 = arith.constant 0 : index
    %c64_250 = arith.constant 64 : index
    %451 = vector.load %arg7[%c0_249, %c64_250] : memref<8x128xf32, #tpu.memory_space<vmem>>, vector<8x64xf32>
    tpu.vector_store %arg7[%c0_249, %c64_250], %447 {strides = array<i32>} : memref<8x128xf32, #tpu.memory_space<vmem>>, vector<8x64xf32>,
    %c0_251 = arith.constant 0 : index
    %c7_252 = arith.constant 7 : index
    %c0_253 = arith.constant 0 : index
    %c0_254 = arith.constant 0 : index
    %452 = vector.load %arg5[%c0_251, %c7_252, %c0_253, %c0_254] : memref<1x8x8x128xf32, #tpu.memory_space<vmem>>, vector<1x1x8x64xf32>
    %453 = vector.shape_cast %452 : vector<1x1x8x64xf32> to vector<8x64xf32>
    %454 = vector.shape_cast %444 : vector<8x64xf32> to vector<1x1x8x64xf32>
    tpu.vector_store %arg5[%c0_251, %c7_252, %c0_253, %c0_254], %454 {strides = array<i32>} : memref<1x8x8x128xf32, #tpu.memory_space<vmem>>, vector<1x1x8x64xf32>,
    %c0_255 = arith.constant 0 : index
    %c0_256 = arith.constant 0 : index
    %c0_257 = arith.constant 0 : index
    %c64_258 = arith.constant 64 : index
    %455 = vector.load %arg5[%c0_255, %c0_256, %c0_257, %c64_258] : memref<1x8x8x128xf32, #tpu.memory_space<vmem>>, vector<1x1x8x64xf32>
    %456 = vector.shape_cast %455 : vector<1x1x8x64xf32> to vector<8x64xf32>
    %457 = vector.shape_cast %447 : vector<8x64xf32> to vector<1x1x8x64xf32>
    tpu.vector_store %arg5[%c0_255, %c0_256, %c0_257, %c64_258], %457 {strides = array<i32>} : memref<1x8x8x128xf32, #tpu.memory_space<vmem>>, vector<1x1x8x64xf32>,
    return
  }
  func.func @transform_0(%arg0: i32) -> (i32, i32, i32) {
    %c0_i32 = arith.constant 0 : i32
    %c0_i32_0 = arith.constant 0 : i32
    %c0_i32_1 = arith.constant 0 : i32
    %c0_i32_2 = arith.constant 0 : i32
    return %c0_i32, %c0_i32_0, %c0_i32_1 : i32, i32, i32
  }
  func.func @transform_1(%arg0: i32) -> (i32, i32, i32) {
    %c0_i32 = arith.constant 0 : i32
    %c0_i32_0 = arith.constant 0 : i32
    %c0_i32_1 = arith.constant 0 : i32
    return %arg0, %c0_i32, %c0_i32_0 : i32, i32, i32
  }
  func.func @transform_2(%arg0: i32) -> (i32, i32, i32) {
    %c0_i32 = arith.constant 0 : i32
    %c0_i32_0 = arith.constant 0 : i32
    %c0_i32_1 = arith.constant 0 : i32
    return %arg0, %c0_i32, %c0_i32_0 : i32, i32, i32
  }
  func.func @transform_3(%arg0: i32) -> (i32, i32, i32) {
    %c0_i32 = arith.constant 0 : i32
    %c0_i32_0 = arith.constant 0 : i32
    %c0_i32_1 = arith.constant 0 : i32
    return %arg0, %c0_i32, %c0_i32_0 : i32, i32, i32
  }
  func.func @transform_4(%arg0: i32) -> (i32, i32, i32, i32) {
    %c0_i32 = arith.constant 0 : i32
    %c0_i32_0 = arith.constant 0 : i32
    %c0_i32_1 = arith.constant 0 : i32
    %c0_i32_2 = arith.constant 0 : i32
    return %arg0, %c0_i32, %c0_i32_0, %c0_i32_1 : i32, i32, i32, i32
  }
}

</mosaic_0001>

<llo_original>
// kernel: autoencoder_forward.3
$region0: #{autoencoder_forward.3}
  #allocation0 [shape = 'u32[]', space=smem, size = 0x4, offset = 0x4, fixed_abs, tag = 'smem constant byte address 0x4 - core index']
  #allocation1 [shape = 'u32[144,128]{1,0:T(1,128)}', space=vmem, size = 0x12000, scoped, tag = 'internal scratch']
  #allocation2 [shape = 'f32[8,8,512]{2,1,0:T(8,128)}', space=vmem, size = 0x20000, scoped, tag = 'scratch operand']
  #allocation3 [shape = 'f32[8,128]{1,0:T(8,128)}', space=vmem, size = 0x1000, scoped, tag = 'scratch operand']
  #allocation4 [shape = 'f32[8,128]{1,0:T(8,128)}', space=vmem, size = 0x1000, scoped, tag = 'scratch operand']
  %s0 = inlined_call_operand.vmem [shape: f32[5,8,8,128], index: 0, kind: input, shape index: {}]
  %s1 = inlined_call_operand.vmem [shape: bf16[5,128,512], index: 1, kind: input, shape index: {}]
  %s2 = inlined_call_operand.vmem [shape: bf16[5,128,512], index: 2, kind: input, shape index: {}]
  %s3 = inlined_call_operand.vmem [shape: f32[5,1,512], index: 3, kind: input, shape index: {}]
  %s4 = inlined_call_operand.vmem [shape: f32[5,8,8,128], index: 4, kind: output, shape index: {}]
  %s5 = sld [smem:[#allocation0]]
  $region49: #{autoencoder_forward.3} parent=0
    _
  %s7 = ssub.s32 1, %s5
  %s8 = scalar_select 0, %s7, %s5
  loop: start=0, step=1, limit=7
  $region2: #{autoencoder_forward.3} parent=0 // loop_pre_header
    _
  $region3: #{autoencoder_forward.3} parent=0 // loop_header
    %s10 = sphi 0, %s14
    %p11 = scmp.ge.s32.totalorder %s10, 7
    %s20 = sphi 0, %s22
    %s23 = sphi 0, %s20
    %s24 = sphi 0, %s23
    %s40 = sphi 0, %s24
    %s46 = sphi 0, %s48
    %s49 = sphi 0, %s46
    %s50 = sphi 0, %s49
    %s66 = sphi 0, %s50
    %s72 = sphi 0, %s74
    %s75 = sphi 0, %s72
    %s76 = sphi 0, %s75
    %s92 = sphi 0, %s76
    %s98 = sphi 0, %s100
    %s101 = sphi 0, %s98
    %s102 = sphi 0, %s101
    %s118 = sphi 0, %s102
    %s124 = sphi 0, %s126
    %s127 = sphi 0, %s124
    %s128 = sphi 0, %s127
    %s144 = sphi 0, %s128
  $region4: #{autoencoder_forward.3} parent=0 // loop_header_branch
    %13 = sbr.rel (%p11) target = $region8
  $region5: #{autoencoder_forward.3} parent=0 // loop_body
    %s15 = ssub.s32 %s10, 1
    %s16 = ssub.s32 %s10, 2
    %s17 = sadd.s32 %s10, 1
    %s18 = ssub.s32 %s10, %s17
    %p19 = scmp.eq.s32.totalorder %s18, 0
    %s21 = sadd.s32 %s20, 1
    %s22 = scalar_select %p19, %s20, %s21
    %p25 = pneg %p19
    %p26 = scmp.eq.s32.totalorder %s10, 4
    %p27 = por %p25, %p26
    %p28 = scmp.ne.s32.totalorder %s20, %s23
    %p29 = scmp.eq.s32.totalorder %s10, 0
    %p30 = por %p28, %p29
    %p31 = scmp.ne.s32.totalorder %s20, %s23
    %p32 = scmp.eq.s32.totalorder %s15, 4
    %p33 = por %p31, %p32
    %p34 = scmp.ne.s32.totalorder %s23, %s24
    %p35 = scmp.eq.s32.totalorder %s15, 0
    %p36 = por %p34, %p35
    %p37 = scmp.ne.s32.totalorder %s23, %s24
    %p38 = scmp.eq.s32.totalorder %s16, 4
    %p39 = por %p37, %p38
    %p41 = scmp.ne.s32.totalorder %s24, %s40
    %p42 = scmp.eq.s32.totalorder %s16, 0
    %p43 = por %p41, %p42
    %s44 = ssub.s32 %s10, %s17
    %p45 = scmp.eq.s32.totalorder %s44, 0
    %s47 = sadd.s32 %s46, 1
    %s48 = scalar_select %p45, %s46, %s47
    %p51 = pneg %p45
    %p52 = scmp.eq.s32.totalorder %s10, 4
    %p53 = por %p51, %p52
    %p54 = scmp.ne.s32.totalorder %s46, %s49
    %p55 = scmp.eq.s32.totalorder %s10, 0
    %p56 = por %p54, %p55
    %p57 = scmp.ne.s32.totalorder %s46, %s49
    %p58 = scmp.eq.s32.totalorder %s15, 4
    %p59 = por %p57, %p58
    %p60 = scmp.ne.s32.totalorder %s49, %s50
    %p61 = scmp.eq.s32.totalorder %s15, 0
    %p62 = por %p60, %p61
    %p63 = scmp.ne.s32.totalorder %s49, %s50
    %p64 = scmp.eq.s32.totalorder %s16, 4
    %p65 = por %p63, %p64
    %p67 = scmp.ne.s32.totalorder %s50, %s66
    %p68 = scmp.eq.s32.totalorder %s16, 0
    %p69 = por %p67, %p68
    %s70 = ssub.s32 %s10, %s17
    %p71 = scmp.eq.s32.totalorder %s70, 0
    %s73 = sadd.s32 %s72, 1
    %s74 = scalar_select %p71, %s72, %s73
    %p77 = pneg %p71
    %p78 = scmp.eq.s32.totalorder %s10, 4
    %p79 = por %p77, %p78
    %p80 = scmp.ne.s32.totalorder %s72, %s75
    %p81 = scmp.eq.s32.totalorder %s10, 0
    %p82 = por %p80, %p81
    %p83 = scmp.ne.s32.totalorder %s72, %s75
    %p84 = scmp.eq.s32.totalorder %s15, 4
    %p85 = por %p83, %p84
    %p86 = scmp.ne.s32.totalorder %s75, %s76
    %p87 = scmp.eq.s32.totalorder %s15, 0
    %p88 = por %p86, %p87
    %p89 = scmp.ne.s32.totalorder %s75, %s76
    %p90 = scmp.eq.s32.totalorder %s16, 4
    %p91 = por %p89, %p90
    %p93 = scmp.ne.s32.totalorder %s76, %s92
    %p94 = scmp.eq.s32.totalorder %s16, 0
    %p95 = por %p93, %p94
    %s96 = ssub.s32 %s10, %s17
    %p97 = scmp.eq.s32.totalorder %s96, 0
    %s99 = sadd.s32 %s98, 1
    %s100 = scalar_select %p97, %s98, %s99
    %p103 = pneg %p97
    %p104 = scmp.eq.s32.totalorder %s10, 4
    %p105 = por %p103, %p104
    %p106 = scmp.ne.s32.totalorder %s98, %s101
    %p107 = scmp.eq.s32.totalorder %s10, 0
    %p108 = por %p106, %p107
    %p109 = scmp.ne.s32.totalorder %s98, %s101
    %p110 = scmp.eq.s32.totalorder %s15, 4
    %p111 = por %p109, %p110
    %p112 = scmp.ne.s32.totalorder %s101, %s102
    %p113 = scmp.eq.s32.totalorder %s15, 0
    %p114 = por %p112, %p113
    %p115 = scmp.ne.s32.totalorder %s101, %s102
    %p116 = scmp.eq.s32.totalorder %s16, 4
    %p117 = por %p115, %p116
    %p119 = scmp.ne.s32.totalorder %s102, %s118
    %p120 = scmp.eq.s32.totalorder %s16, 0
    %p121 = por %p119, %p120
    %s122 = ssub.s32 %s10, %s17
    %p123 = scmp.eq.s32.totalorder %s122, 0
    %s125 = sadd.s32 %s124, 1
    %s126 = scalar_select %p123, %s124, %s125
    %p129 = pneg %p123
    %p130 = scmp.eq.s32.totalorder %s10, 4
    %p131 = por %p129, %p130
    %p132 = scmp.ne.s32.totalorder %s124, %s127
    %p133 = scmp.eq.s32.totalorder %s10, 0
    %p134 = por %p132, %p133
    %p135 = scmp.ne.s32.totalorder %s124, %s127
    %p136 = scmp.eq.s32.totalorder %s15, 4
    %p137 = por %p135, %p136
    %p138 = scmp.ne.s32.totalorder %s127, %s128
    %p139 = scmp.eq.s32.totalorder %s15, 0
    %p140 = por %p138, %p139
    %p141 = scmp.ne.s32.totalorder %s127, %s128
    %p142 = scmp.eq.s32.totalorder %s16, 4
    %p143 = por %p141, %p142
    %p145 = scmp.ne.s32.totalorder %s128, %s144
    %p146 = scmp.eq.s32.totalorder %s16, 0
    %p147 = por %p145, %p146
    %p148 = scmp.le.s32.totalorder 1, %s10
    %p149 = scmp.lt.s32.totalorder %s10, 6
    %p150 = pnand %p148, %p149
    %p151 = pneg %p150
    // Predicated region
    $region9: #{autoencoder_forward.3} parent=5 // pred_check
      _
    $region10: #{autoencoder_forward.3} parent=5 // pred_check_branch
      %153 = sbr.rel (%p150) target = $region12
    $region11: #{autoencoder_forward.3} parent=5 // pred_region
      %s154 = ssub.s32 %s10, 1
    $region12: #{autoencoder_forward.3} parent=5 // pred_fallthru
      _
    %p155 = scmp.lt.s32.totalorder %s10, 5
    // Predicated region
    $region13: #{autoencoder_forward.3} parent=5 // pred_check
      %p156 = pneg %p155
    $region14: #{autoencoder_forward.3} parent=5 // pred_check_branch
      %158 = sbr.rel (%p156) target = $region16
    $region15: #{autoencoder_forward.3} parent=5 // pred_region
      // Predicated region
      $region17: #{autoencoder_forward.3} parent=15 // pred_check
        %p159 = pneg %p30
      $region18: #{autoencoder_forward.3} parent=15 // pred_check_branch
        %161 = sbr.rel (%p159) target = $region20
      $region19: #{autoencoder_forward.3} parent=15 // pred_region
        %p162 = scmp.lt.s32.totalorder %s10, 4
        %s163 = scalar_select %p162, %s10, 4
        %s164 = smul.addr %s163, 8
        %s165 = smul.addr %s164, 8
        %s166 = scalar_lea.vmem %s0, %s165
      $region20: #{autoencoder_forward.3} parent=15 // pred_fallthru
        _
      // Predicated region
      $region21: #{autoencoder_forward.3} parent=15 // pred_check
        %p167 = pneg %p56
      $region22: #{autoencoder_forward.3} parent=15 // pred_check_branch
        %169 = sbr.rel (%p167) target = $region24
      $region23: #{autoencoder_forward.3} parent=15 // pred_region
        %p170 = scmp.lt.s32.totalorder %s10, 4
        %s171 = scalar_select %p170, %s10, 4
        %s172 = smul.addr %s171, 64
        %s173 = smul.addr %s172, 4
        %s174 = scalar_lea.vmem %s1, %s173
      $region24: #{autoencoder_forward.3} parent=15 // pred_fallthru
        _
      // Predicated region
      $region25: #{autoencoder_forward.3} parent=15 // pred_check
        %p175 = pneg %p82
      $region26: #{autoencoder_forward.3} parent=15 // pred_check_branch
        %177 = sbr.rel (%p175) target = $region28
      $region27: #{autoencoder_forward.3} parent=15 // pred_region
        %p178 = scmp.lt.s32.totalorder %s10, 4
        %s179 = scalar_select %p178, %s10, 4
        %s180 = smul.addr %s179, 64
        %s181 = smul.addr %s180, 4
        %s182 = scalar_lea.vmem %s2, %s181
      $region28: #{autoencoder_forward.3} parent=15 // pred_fallthru
        _
      // Predicated region
      $region29: #{autoencoder_forward.3} parent=15 // pred_check
        %p183 = pneg %p108
      $region30: #{autoencoder_forward.3} parent=15 // pred_check_branch
        %185 = sbr.rel (%p183) target = $region32
      $region31: #{autoencoder_forward.3} parent=15 // pred_region
        %p186 = scmp.lt.s32.totalorder %s10, 4
        %s187 = scalar_select %p186, %s10, 4
        %s188 = smul.addr %s187, 4
        %s189 = scalar_lea.vmem %s3, %s188
      $region32: #{autoencoder_forward.3} parent=15 // pred_fallthru
        _
    $region16: #{autoencoder_forward.3} parent=5 // pred_fallthru
      _
    %p190 = scmp.le.s32.totalorder 1, %s10
    %p191 = scmp.lt.s32.totalorder %s10, 6
    %p192 = pnand %p190, %p191
    %p193 = pneg %p192
    // Predicated region
    $region33: #{autoencoder_forward.3} parent=5 // pred_check
      _
    $region34: #{autoencoder_forward.3} parent=5 // pred_check_branch
      %195 = sbr.rel (%p192) target = $region36
    $region35: #{autoencoder_forward.3} parent=5 // pred_region
      %s196 = ssub.s32 %s10, 1
      %p197 = scmp.lt.s32.totalorder %s15, 4
      %s198 = scalar_select %p197, %s15, 4
      %s199 = smul.addr %s198, 8
      %s200 = smul.addr %s199, 8
      %s201 = scalar_lea.vmem %s0, %s200
      %p202 = pneg %p36
      %p203 = pneg %p33
      %p204 = scmp.lt.s32.totalorder %s15, 4
      %s205 = scalar_select %p204, %s15, 4
      %s206 = smul.addr %s205, 64
      %s207 = smul.addr %s206, 4
      %s208 = scalar_lea.vmem %s1, %s207
      %p209 = pneg %p62
      %p210 = pneg %p59
      %p211 = scmp.lt.s32.totalorder %s15, 4
      %s212 = scalar_select %p211, %s15, 4
      %s213 = smul.addr %s212, 64
      %s214 = smul.addr %s213, 4
      %s215 = scalar_lea.vmem %s2, %s214
      %p216 = pneg %p88
      %p217 = pneg %p85
      %p218 = scmp.lt.s32.totalorder %s15, 4
      %s219 = scalar_select %p218, %s15, 4
      %s220 = smul.addr %s219, 4
      %s221 = scalar_lea.vmem %s3, %s220
      %p222 = pneg %p114
      %p223 = pneg %p111
      %p224 = pneg %p140
      %p225 = pneg %p137
      %p226 = scmp.lt.s32.totalorder %s15, 4
      %s227 = scalar_select %p226, %s15, 4
      %s228 = smul.addr %s227, 8
      %s229 = smul.addr %s228, 8
      %s230 = scalar_lea.vmem %s4, %s229
      %p231 = scmp.lt.s32.totalorder %s15, 4
      %s232 = scalar_select %p231, %s15, 4
      %s233 = smul.addr %s232, 8
      %s234 = smul.addr %s233, 8
      %s235 = scalar_lea.vmem %s0, %s234
      %p236 = scmp.lt.s32.totalorder %s15, 4
      %s237 = scalar_select %p236, %s15, 4
      %s238 = smul.addr %s237, 64
      %s239 = smul.addr %s238, 4
      %s240 = scalar_lea.vmem %s1, %s239
      %p241 = scmp.lt.s32.totalorder %s15, 4
      %s242 = scalar_select %p241, %s15, 4
      %s243 = smul.addr %s242, 64
      %s244 = smul.addr %s243, 4
      %s245 = scalar_lea.vmem %s2, %s244
      %p246 = scmp.lt.s32.totalorder %s15, 4
      %s247 = scalar_select %p246, %s15, 4
      %s248 = smul.addr %s247, 4
      %s249 = scalar_lea.vmem %s3, %s248
      %p250 = scmp.lt.s32.totalorder %s15, 4
      %s251 = scalar_select %p250, %s15, 4
      %s252 = smul.addr %s251, 8
      %s253 = smul.addr %s252, 8
      %s254 = scalar_lea.vmem %s4, %s253
      %v256 = vld [vmem:[%s235] sm:$0xff]
      %v257 = vld [vmem:[%s235 + $0x8] sm:$0xff]
      %v258 = vld [vmem:[%s235 + $0x10] sm:$0xff]
      %v259 = vld [vmem:[%s235 + $0x18] sm:$0xff]
      %v260 = vld [vmem:[%s235 + $0x20] sm:$0xff]
      %v261 = vld [vmem:[%s235 + $0x28] sm:$0xff]
      %v262 = vld [vmem:[%s235 + $0x30] sm:$0xff]
      %v263 = vld [vmem:[%s235 + $0x38] sm:$0xff]
      %v264 = vpack.c.bf16 %v257, %v256
      %v265 = vpack.c.bf16 %v259, %v258
      %v266 = vpack.c.bf16 %v261, %v260
      %v267 = vpack.c.bf16 %v263, %v262
      %v268 = vld [vmem:[%s240] sm:$0xff]
      %v269 = vld [vmem:[%s240 + $0x8] sm:$0xff]
      %v270 = vld [vmem:[%s240 + $0x10] sm:$0xff]
      %v271 = vld [vmem:[%s240 + $0x18] sm:$0xff]
      %v272 = vld [vmem:[%s240 + $0x20] sm:$0xff]
      %v273 = vld [vmem:[%s240 + $0x28] sm:$0xff]
      %v274 = vld [vmem:[%s240 + $0x30] sm:$0xff]
      %v275 = vld [vmem:[%s240 + $0x38] sm:$0xff]
      %v276 = vld [vmem:[%s240 + $0x40] sm:$0xff]
      %v277 = vld [vmem:[%s240 + $0x48] sm:$0xff]
      %v278 = vld [vmem:[%s240 + $0x50] sm:$0xff]
      %v279 = vld [vmem:[%s240 + $0x58] sm:$0xff]
      %v280 = vld [vmem:[%s240 + $0x60] sm:$0xff]
      %v281 = vld [vmem:[%s240 + $0x68] sm:$0xff]
      %v282 = vld [vmem:[%s240 + $0x70] sm:$0xff]
      %v283 = vld [vmem:[%s240 + $0x78] sm:$0xff]
      %v284 = vld [vmem:[%s240 + $0x80] sm:$0xff]
      %v285 = vld [vmem:[%s240 + $0x88] sm:$0xff]
      %v286 = vld [vmem:[%s240 + $0x90] sm:$0xff]
      %v287 = vld [vmem:[%s240 + $0x98] sm:$0xff]
      %v288 = vld [vmem:[%s240 + $0xa0] sm:$0xff]
      %v289 = vld [vmem:[%s240 + $0xa8] sm:$0xff]
      %v290 = vld [vmem:[%s240 + $0xb0] sm:$0xff]
      %v291 = vld [vmem:[%s240 + $0xb8] sm:$0xff]
      %v292 = vld [vmem:[%s240 + $0xc0] sm:$0xff]
      %v293 = vld [vmem:[%s240 + $0xc8] sm:$0xff]
      %v294 = vld [vmem:[%s240 + $0xd0] sm:$0xff]
      %v295 = vld [vmem:[%s240 + $0xd8] sm:$0xff]
      %v296 = vld [vmem:[%s240 + $0xe0] sm:$0xff]
      %v297 = vld [vmem:[%s240 + $0xe8] sm:$0xff]
      %v298 = vld [vmem:[%s240 + $0xf0] sm:$0xff]
      %v299 = vld [vmem:[%s240 + $0xf8] sm:$0xff]
      %v300 = vld [vmem:[%s249] sm:$0xf]
      %v302 = vlaneseq
      %v303 = vshrl.u32 %v302, 7
      %v304 = vsub.s32 0, %v303
      %v305 = vrot.slane %v300, %v304
      %v306 = vlaneseq
      %v307 = vshrl.u32 %v306, 7
      %v308 = vsub.s32 1, %v307
      %v309 = vrot.slane %v300, %v308
      %v310 = vlaneseq
      %v311 = vshrl.u32 %v310, 7
      %v312 = vsub.s32 2, %v311
      %v313 = vrot.slane %v300, %v312
      %v314 = vlaneseq
      %v315 = vshrl.u32 %v314, 7
      %v316 = vsub.s32 3, %v315
      %v317 = vrot.slane %v300, %v316
      %v354 = vunpack.c.l.b16 %v268
      %v355 = vunpack.c.h.b16 %v268
      %v356 = vunpack.c.l.b16 %v269
      %v357 = vunpack.c.h.b16 %v269
      %v358 = vunpack.c.l.b16 %v270
      %v359 = vunpack.c.h.b16 %v270
      %v360 = vunpack.c.l.b16 %v271
      %v361 = vunpack.c.h.b16 %v271
      %v362 = vunpack.c.l.b16 %v272
      %v363 = vunpack.c.h.b16 %v272
      %v364 = vunpack.c.l.b16 %v273
      %v365 = vunpack.c.h.b16 %v273
      %v366 = vunpack.c.l.b16 %v274
      %v367 = vunpack.c.h.b16 %v274
      %v368 = vunpack.c.l.b16 %v275
      %v369 = vunpack.c.h.b16 %v275
      %v370 = vunpack.c.l.b16 %v276
      %v371 = vunpack.c.h.b16 %v276
      %v372 = vunpack.c.l.b16 %v277
      %v373 = vunpack.c.h.b16 %v277
      %v374 = vunpack.c.l.b16 %v278
      %v375 = vunpack.c.h.b16 %v278
      %v376 = vunpack.c.l.b16 %v279
      %v377 = vunpack.c.h.b16 %v279
      %v378 = vunpack.c.l.b16 %v280
      %v379 = vunpack.c.h.b16 %v280
      %v380 = vunpack.c.l.b16 %v281
      %v381 = vunpack.c.h.b16 %v281
      %v382 = vunpack.c.l.b16 %v282
      %v383 = vunpack.c.h.b16 %v282
      %v384 = vunpack.c.l.b16 %v283
      %v385 = vunpack.c.h.b16 %v283
      %v386 = vunpack.c.l.b16 %v284
      %v387 = vunpack.c.h.b16 %v284
      %v388 = vunpack.c.l.b16 %v285
      %v389 = vunpack.c.h.b16 %v285
      %v390 = vunpack.c.l.b16 %v286
      %v391 = vunpack.c.h.b16 %v286
      %v392 = vunpack.c.l.b16 %v287
      %v393 = vunpack.c.h.b16 %v287
      %v394 = vunpack.c.l.b16 %v288
      %v395 = vunpack.c.h.b16 %v288
      %v396 = vunpack.c.l.b16 %v289
      %v397 = vunpack.c.h.b16 %v289
      %v398 = vunpack.c.l.b16 %v290
      %v399 = vunpack.c.h.b16 %v290
      %v400 = vunpack.c.l.b16 %v291
      %v401 = vunpack.c.h.b16 %v291
      %v402 = vunpack.c.l.b16 %v292
      %v403 = vunpack.c.h.b16 %v292
      %v404 = vunpack.c.l.b16 %v293
      %v405 = vunpack.c.h.b16 %v293
      %v406 = vunpack.c.l.b16 %v294
      %v407 = vunpack.c.h.b16 %v294
      %v408 = vunpack.c.l.b16 %v295
      %v409 = vunpack.c.h.b16 %v295
      %v410 = vunpack.c.l.b16 %v296
      %v411 = vunpack.c.h.b16 %v296
      %v412 = vunpack.c.l.b16 %v297
      %v413 = vunpack.c.h.b16 %v297
      %v414 = vunpack.c.l.b16 %v298
      %v415 = vunpack.c.h.b16 %v298
      %v416 = vunpack.c.l.b16 %v299
      %v417 = vunpack.c.h.b16 %v299
      %v418 = vpack.c.b16 %v358, %v354
      %v419 = vpack.c.b16 %v359, %v355
      %v420 = vpack.c.b16 %v360, %v356
      %v421 = vpack.c.b16 %v361, %v357
      %v422 = vpack.c.b16 %v366, %v362
      %v423 = vpack.c.b16 %v367, %v363
      %v424 = vpack.c.b16 %v368, %v364
      %v425 = vpack.c.b16 %v369, %v365
      %v426 = vpack.c.b16 %v374, %v370
      %v427 = vpack.c.b16 %v375, %v371
      %v428 = vpack.c.b16 %v376, %v372
      %v429 = vpack.c.b16 %v377, %v373
      %v430 = vpack.c.b16 %v382, %v378
      %v431 = vpack.c.b16 %v383, %v379
      %v432 = vpack.c.b16 %v384, %v380
      %v433 = vpack.c.b16 %v385, %v381
      %v434 = vpack.c.b16 %v390, %v386
      %v435 = vpack.c.b16 %v391, %v387
      %v436 = vpack.c.b16 %v392, %v388
      %v437 = vpack.c.b16 %v393, %v389
      %v438 = vpack.c.b16 %v398, %v394
      %v439 = vpack.c.b16 %v399, %v395
      %v440 = vpack.c.b16 %v400, %v396
      %v441 = vpack.c.b16 %v401, %v397
      %v442 = vpack.c.b16 %v406, %v402
      %v443 = vpack.c.b16 %v407, %v403
      %v444 = vpack.c.b16 %v408, %v404
      %v445 = vpack.c.b16 %v409, %v405
      %v446 = vpack.c.b16 %v414, %v410
      %v447 = vpack.c.b16 %v415, %v411
      %v448 = vpack.c.b16 %v416, %v412
      %v449 = vpack.c.b16 %v417, %v413
      %482 = vmatprep.subr.bf16.mxu0 %v419
      %483 = vmatpush1.bf16.msra.mxu0 %v418
      %484 = vmatprep.subr.bf16.mxu0 %v423
      %485 = vmatpush1.bf16.msra.mxu0 %v422
      %486 = vmatprep.subr.bf16.mxu0 %v427
      %487 = vmatpush1.bf16.msra.mxu0 %v426
      %488 = vmatprep.subr.bf16.mxu0 %v431
      %489 = vmatpush1.bf16.msra.mxu0 %v430
      %490 = vmatprep.subr.bf16.mxu0 %v435
      %491 = vmatpush1.bf16.msra.mxu0 %v434
      %492 = vmatprep.subr.bf16.mxu0 %v439
      %493 = vmatpush1.bf16.msra.mxu0 %v438
      %494 = vmatprep.subr.bf16.mxu0 %v443
      %495 = vmatpush1.bf16.msra.mxu0 %v442
      %496 = vmatprep.subr.bf16.mxu0 %v447
      %497 = vmatpush1.bf16.msra.mxu0 %v446
      %498 = vmatprep.subr.bf16.mxu0 0
      %499 = vmatpush1.bf16.msra.mxu0 0
      %500 = vmatprep.subr.bf16.mxu0 0
      %501 = vmatpush1.bf16.msra.mxu0 0
      %502 = vmatprep.subr.bf16.mxu0 0
      %503 = vmatpush1.bf16.msra.mxu0 0
      %504 = vmatprep.subr.bf16.mxu0 0
      %505 = vmatpush1.bf16.msra.mxu0 0
      %506 = vmatprep.subr.bf16.mxu0 0
      %507 = vmatpush1.bf16.msra.mxu0 0
      %508 = vmatprep.subr.bf16.mxu0 0
      %509 = vmatpush1.bf16.msra.mxu0 0
      %510 = vmatprep.subr.bf16.mxu0 0
      %511 = vmatpush1.bf16.msra.mxu0 0
      %512 = vmatprep.subr.bf16.mxu0 0
      %513 = vmatpush1.bf16.msra.mxu0 0
      %514 = vmatprep.mubr.bf16.mxu0 0
      %515 = vmatmul.mubr.bf16.gmra.mrb[0].mxu0 %v264
      %v516 = vpop.f32.mrb[0].mxu0
      %v517 = vadd.f32 %v305, %v516
      %v518 = vpop.f32.mrb[0].mxu0
      %v519 = vadd.f32 %v309, %v518
      %v520 = vpop.f32.mrb[0].mxu0
      %v521 = vadd.f32 %v305, %v520
      %v522 = vpop.f32.mrb[0].mxu0
      %v523 = vadd.f32 %v309, %v522
      %524 = vmatprep.mubr.bf16.mxu0 0
      %525 = vmatmul.mubr.bf16.gmra.mrb[0].mxu0 %v265
      %v526 = vpop.f32.mrb[0].mxu0
      %v527 = vadd.f32 %v305, %v526
      %v528 = vpop.f32.mrb[0].mxu0
      %v529 = vadd.f32 %v309, %v528
      %v530 = vpop.f32.mrb[0].mxu0
      %v531 = vadd.f32 %v305, %v530
      %v532 = vpop.f32.mrb[0].mxu0
      %v533 = vadd.f32 %v309, %v532
      %534 = vmatprep.mubr.bf16.mxu0 0
      %535 = vmatmul.mubr.bf16.gmra.mrb[0].mxu0 %v266
      %v536 = vpop.f32.mrb[0].mxu0
      %v537 = vadd.f32 %v305, %v536
      %v538 = vpop.f32.mrb[0].mxu0
      %v539 = vadd.f32 %v309, %v538
      %v540 = vpop.f32.mrb[0].mxu0
      %v541 = vadd.f32 %v305, %v540
      %v542 = vpop.f32.mrb[0].mxu0
      %v543 = vadd.f32 %v309, %v542
      %544 = vmatprep.mubr.bf16.mxu0 0
      %545 = vmatmul.mubr.bf16.gmra.mrb[0].mxu0 %v267
      %v546 = vpop.f32.mrb[0].mxu0
      %v547 = vadd.f32 %v305, %v546
      %v548 = vpop.f32.mrb[0].mxu0
      %v549 = vadd.f32 %v309, %v548
      %v550 = vpop.f32.mrb[0].mxu0
      %v551 = vadd.f32 %v305, %v550
      %v552 = vpop.f32.mrb[0].mxu0
      %v553 = vadd.f32 %v309, %v552
      %554 = vdwg.mxu0
      %555 = vmatprep.subr.bf16.mxu0 %v421
      %556 = vmatpush1.bf16.msra.mxu0 %v420
      %557 = vmatprep.subr.bf16.mxu0 %v425
      %558 = vmatpush1.bf16.msra.mxu0 %v424
      %559 = vmatprep.subr.bf16.mxu0 %v429
      %560 = vmatpush1.bf16.msra.mxu0 %v428
      %561 = vmatprep.subr.bf16.mxu0 %v433
      %562 = vmatpush1.bf16.msra.mxu0 %v432
      %563 = vmatprep.subr.bf16.mxu0 %v437
      %564 = vmatpush1.bf16.msra.mxu0 %v436
      %565 = vmatprep.subr.bf16.mxu0 %v441
      %566 = vmatpush1.bf16.msra.mxu0 %v440
      %567 = vmatprep.subr.bf16.mxu0 %v445
      %568 = vmatpush1.bf16.msra.mxu0 %v444
      %569 = vmatprep.subr.bf16.mxu0 %v449
      %570 = vmatpush1.bf16.msra.mxu0 %v448
      %571 = vmatprep.subr.bf16.mxu0 0
      %572 = vmatpush1.bf16.msra.mxu0 0
      %573 = vmatprep.subr.bf16.mxu0 0
      %574 = vmatpush1.bf16.msra.mxu0 0
      %575 = vmatprep.subr.bf16.mxu0 0
      %576 = vmatpush1.bf16.msra.mxu0 0
      %577 = vmatprep.subr.bf16.mxu0 0
      %578 = vmatpush1.bf16.msra.mxu0 0
      %579 = vmatprep.subr.bf16.mxu0 0
      %580 = vmatpush1.bf16.msra.mxu0 0
      %581 = vmatprep.subr.bf16.mxu0 0
      %582 = vmatpush1.bf16.msra.mxu0 0
      %583 = vmatprep.subr.bf16.mxu0 0
      %584 = vmatpush1.bf16.msra.mxu0 0
      %585 = vmatprep.subr.bf16.mxu0 0
      %586 = vmatpush1.bf16.msra.mxu0 0
      %587 = vmatprep.mubr.bf16.mxu0 0
      %588 = vmatmul.mubr.bf16.gmra.mrb[0].mxu0 %v264
      %v589 = vpop.f32.mrb[0].mxu0
      %v590 = vadd.f32 %v313, %v589
      %v591 = vpop.f32.mrb[0].mxu0
      %v592 = vadd.f32 %v317, %v591
      %v593 = vpop.f32.mrb[0].mxu0
      %v594 = vadd.f32 %v313, %v593
      %v595 = vpop.f32.mrb[0].mxu0
      %v596 = vadd.f32 %v317, %v595
      %597 = vmatprep.mubr.bf16.mxu0 0
      %598 = vmatmul.mubr.bf16.gmra.mrb[0].mxu0 %v265
      %v599 = vpop.f32.mrb[0].mxu0
      %v600 = vadd.f32 %v313, %v599
      %v601 = vpop.f32.mrb[0].mxu0
      %v602 = vadd.f32 %v317, %v601
      %v603 = vpop.f32.mrb[0].mxu0
      %v604 = vadd.f32 %v313, %v603
      %v605 = vpop.f32.mrb[0].mxu0
      %v606 = vadd.f32 %v317, %v605
      %607 = vmatprep.mubr.bf16.mxu0 0
      %608 = vmatmul.mubr.bf16.gmra.mrb[0].mxu0 %v266
      %v609 = vpop.f32.mrb[0].mxu0
      %v610 = vadd.f32 %v313, %v609
      %v611 = vpop.f32.mrb[0].mxu0
      %v612 = vadd.f32 %v317, %v611
      %v613 = vpop.f32.mrb[0].mxu0
      %v614 = vadd.f32 %v313, %v613
      %v615 = vpop.f32.mrb[0].mxu0
      %v616 = vadd.f32 %v317, %v615
      %617 = vmatprep.mubr.bf16.mxu0 0
      %618 = vmatmul.mubr.bf16.gmra.mrb[0].mxu0 %v267
      %v619 = vpop.f32.mrb[0].mxu0
      %v620 = vadd.f32 %v313, %v619
      %v621 = vpop.f32.mrb[0].mxu0
      %v622 = vadd.f32 %v317, %v621
      %v623 = vpop.f32.mrb[0].mxu0
      %v624 = vadd.f32 %v313, %v623
      %v625 = vpop.f32.mrb[0].mxu0
      %v626 = vadd.f32 %v317, %v625
      %627 = vdwg.mxu0
      %628 = vst [vmem:[#allocation2] sm:$0xff] %v517
      %629 = vst [vmem:[#allocation2 + $0x8] sm:$0xff] %v519
      %630 = vst [vmem:[#allocation2 + $0x10] sm:$0xff] %v590
      %631 = vst [vmem:[#allocation2 + $0x18] sm:$0xff] %v592
      %632 = vst [vmem:[#allocation2 + $0x20] sm:$0xff] %v521
      %633 = vst [vmem:[#allocation2 + $0x28] sm:$0xff] %v523
      %634 = vst [vmem:[#allocation2 + $0x30] sm:$0xff] %v594
      %635 = vst [vmem:[#allocation2 + $0x38] sm:$0xff] %v596
      %636 = vst [vmem:[#allocation2 + $0x40] sm:$0xff] %v527
      %637 = vst [vmem:[#allocation2 + $0x48] sm:$0xff] %v529
      %638 = vst [vmem:[#allocation2 + $0x50] sm:$0xff] %v600
      %639 = vst [vmem:[#allocation2 + $0x58] sm:$0xff] %v602
      %640 = vst [vmem:[#allocation2 + $0x60] sm:$0xff] %v531
      %641 = vst [vmem:[#allocation2 + $0x68] sm:$0xff] %v533
      %642 = vst [vmem:[#allocation2 + $0x70] sm:$0xff] %v604
      %643 = vst [vmem:[#allocation2 + $0x78] sm:$0xff] %v606
      %644 = vst [vmem:[#allocation2 + $0x80] sm:$0xff] %v537
      %645 = vst [vmem:[#allocation2 + $0x88] sm:$0xff] %v539
      %646 = vst [vmem:[#allocation2 + $0x90] sm:$0xff] %v610
      %647 = vst [vmem:[#allocation2 + $0x98] sm:$0xff] %v612
      %648 = vst [vmem:[#allocation2 + $0xa0] sm:$0xff] %v541
      %649 = vst [vmem:[#allocation2 + $0xa8] sm:$0xff] %v543
      %650 = vst [vmem:[#allocation2 + $0xb0] sm:$0xff] %v614
      %651 = vst [vmem:[#allocation2 + $0xb8] sm:$0xff] %v616
      %652 = vst [vmem:[#allocation2 + $0xc0] sm:$0xff] %v547
      %653 = vst [vmem:[#allocation2 + $0xc8] sm:$0xff] %v549
      %654 = vst [vmem:[#allocation2 + $0xd0] sm:$0xff] %v620
      %655 = vst [vmem:[#allocation2 + $0xd8] sm:$0xff] %v622
      %656 = vst [vmem:[#allocation2 + $0xe0] sm:$0xff] %v551
      %657 = vst [vmem:[#allocation2 + $0xe8] sm:$0xff] %v553
      %658 = vst [vmem:[#allocation2 + $0xf0] sm:$0xff] %v624
      %659 = vst [vmem:[#allocation2 + $0xf8] sm:$0xff] %v626
      %v660 = vld [vmem:[%s245] sm:$0xff]
      %v661 = vld [vmem:[%s245 + $0x8] sm:$0xff]
      %v662 = vld [vmem:[%s245 + $0x10] sm:$0xff]
      %v663 = vld [vmem:[%s245 + $0x18] sm:$0xff]
      %v664 = vld [vmem:[%s245 + $0x20] sm:$0xff]
      %v665 = vld [vmem:[%s245 + $0x28] sm:$0xff]
      %v666 = vld [vmem:[%s245 + $0x30] sm:$0xff]
      %v667 = vld [vmem:[%s245 + $0x38] sm:$0xff]
      %v668 = vld [vmem:[%s245 + $0x40] sm:$0xff]
      %v669 = vld [vmem:[%s245 + $0x48] sm:$0xff]
      %v670 = vld [vmem:[%s245 + $0x50] sm:$0xff]
      %v671 = vld [vmem:[%s245 + $0x58] sm:$0xff]
      %v672 = vld [vmem:[%s245 + $0x60] sm:$0xff]
      %v673 = vld [vmem:[%s245 + $0x68] sm:$0xff]
      %v674 = vld [vmem:[%s245 + $0x70] sm:$0xff]
      %v675 = vld [vmem:[%s245 + $0x78] sm:$0xff]
      %v676 = vld [vmem:[%s245 + $0x80] sm:$0xff]
      %v677 = vld [vmem:[%s245 + $0x88] sm:$0xff]
      %v678 = vld [vmem:[%s245 + $0x90] sm:$0xff]
      %v679 = vld [vmem:[%s245 + $0x98] sm:$0xff]
      %v680 = vld [vmem:[%s245 + $0xa0] sm:$0xff]
      %v681 = vld [vmem:[%s245 + $0xa8] sm:$0xff]
      %v682 = vld [vmem:[%s245 + $0xb0] sm:$0xff]
      %v683 = vld [vmem:[%s245 + $0xb8] sm:$0xff]
      %v684 = vld [vmem:[%s245 + $0xc0] sm:$0xff]
      %v685 = vld [vmem:[%s245 + $0xc8] sm:$0xff]
      %v686 = vld [vmem:[%s245 + $0xd0] sm:$0xff]
      %v687 = vld [vmem:[%s245 + $0xd8] sm:$0xff]
      %v688 = vld [vmem:[%s245 + $0xe0] sm:$0xff]
      %v689 = vld [vmem:[%s245 + $0xe8] sm:$0xff]
      %v690 = vld [vmem:[%s245 + $0xf0] sm:$0xff]
      %v691 = vld [vmem:[%s245 + $0xf8] sm:$0xff]
      %692 = vst [vmem:[#allocation3] sm:$0xff] 0.0
      %693 = vst [vmem:[#allocation4] sm:$0xff] 0.0
      %v694 = vld [vmem:[#allocation3] sm:$0xff]
      %v695 = vpack.c.bf16 %v694, %v694
      %v728 = vunpack.c.l.b16 %v660
      %v729 = vunpack.c.h.b16 %v660
      %v730 = vunpack.c.l.b16 %v661
      %v731 = vunpack.c.h.b16 %v661
      %v732 = vunpack.c.l.b16 %v662
      %v733 = vunpack.c.h.b16 %v662
      %v734 = vunpack.c.l.b16 %v663
      %v735 = vunpack.c.h.b16 %v663
      %v736 = vunpack.c.l.b16 %v664
      %v737 = vunpack.c.h.b16 %v664
      %v738 = vunpack.c.l.b16 %v665
      %v739 = vunpack.c.h.b16 %v665
      %v740 = vunpack.c.l.b16 %v666
      %v741 = vunpack.c.h.b16 %v666
      %v742 = vunpack.c.l.b16 %v667
      %v743 = vunpack.c.h.b16 %v667
      %v744 = vunpack.c.l.b16 %v668
      %v745 = vunpack.c.h.b16 %v668
      %v746 = vunpack.c.l.b16 %v669
      %v747 = vunpack.c.h.b16 %v669
      %v748 = vunpack.c.l.b16 %v670
      %v749 = vunpack.c.h.b16 %v670
      %v750 = vunpack.c.l.b16 %v671
      %v751 = vunpack.c.h.b16 %v671
      %v752 = vunpack.c.l.b16 %v672
      %v753 = vunpack.c.h.b16 %v672
      %v754 = vunpack.c.l.b16 %v673
      %v755 = vunpack.c.h.b16 %v673
      %v756 = vunpack.c.l.b16 %v674
      %v757 = vunpack.c.h.b16 %v674
      %v758 = vunpack.c.l.b16 %v675
      %v759 = vunpack.c.h.b16 %v675
      %v760 = vunpack.c.l.b16 %v676
      %v761 = vunpack.c.h.b16 %v676
      %v762 = vunpack.c.l.b16 %v677
      %v763 = vunpack.c.h.b16 %v677
      %v764 = vunpack.c.l.b16 %v678
      %v765 = vunpack.c.h.b16 %v678
      %v766 = vunpack.c.l.b16 %v679
      %v767 = vunpack.c.h.b16 %v679
      %v768 = vunpack.c.l.b16 %v680
      %v769 = vunpack.c.h.b16 %v680
      %v770 = vunpack.c.l.b16 %v681
      %v771 = vunpack.c.h.b16 %v681
      %v772 = vunpack.c.l.b16 %v682
      %v773 = vunpack.c.h.b16 %v682
      %v774 = vunpack.c.l.b16 %v683
      %v775 = vunpack.c.h.b16 %v683
      %v776 = vunpack.c.l.b16 %v684
      %v777 = vunpack.c.h.b16 %v684
      %v778 = vunpack.c.l.b16 %v685
      %v779 = vunpack.c.h.b16 %v685
      %v780 = vunpack.c.l.b16 %v686
      %v781 = vunpack.c.h.b16 %v686
      %v782 = vunpack.c.l.b16 %v687
      %v783 = vunpack.c.h.b16 %v687
      %v784 = vunpack.c.l.b16 %v688
      %v785 = vunpack.c.h.b16 %v688
      %v786 = vunpack.c.l.b16 %v689
      %v787 = vunpack.c.h.b16 %v689
      %v788 = vunpack.c.l.b16 %v690
      %v789 = vunpack.c.h.b16 %v690
      %v790 = vunpack.c.l.b16 %v691
      %v791 = vunpack.c.h.b16 %v691
      %v792 = vpack.c.b16 %v732, %v728
      %v793 = vpack.c.b16 %v733, %v729
      %v794 = vpack.c.b16 %v734, %v730
      %v795 = vpack.c.b16 %v735, %v731
      %v796 = vpack.c.b16 %v740, %v736
      %v797 = vpack.c.b16 %v741, %v737
      %v798 = vpack.c.b16 %v742, %v738
      %v799 = vpack.c.b16 %v743, %v739
      %v800 = vpack.c.b16 %v748, %v744
      %v801 = vpack.c.b16 %v749, %v745
      %v802 = vpack.c.b16 %v750, %v746
      %v803 = vpack.c.b16 %v751, %v747
      %v804 = vpack.c.b16 %v756, %v752
      %v805 = vpack.c.b16 %v757, %v753
      %v806 = vpack.c.b16 %v758, %v754
      %v807 = vpack.c.b16 %v759, %v755
      %v808 = vpack.c.b16 %v764, %v760
      %v809 = vpack.c.b16 %v765, %v761
      %v810 = vpack.c.b16 %v766, %v762
      %v811 = vpack.c.b16 %v767, %v763
      %v812 = vpack.c.b16 %v772, %v768
      %v813 = vpack.c.b16 %v773, %v769
      %v814 = vpack.c.b16 %v774, %v770
      %v815 = vpack.c.b16 %v775, %v771
      %v816 = vpack.c.b16 %v780, %v776
      %v817 = vpack.c.b16 %v781, %v777
      %v818 = vpack.c.b16 %v782, %v778
      %v819 = vpack.c.b16 %v783, %v779
      %v820 = vpack.c.b16 %v788, %v784
      %v821 = vpack.c.b16 %v789, %v785
      %v822 = vpack.c.b16 %v790, %v786
      %v823 = vpack.c.b16 %v791, %v787
      %856 = vmatprep.subr.bf16.mxu0 %v793
      %857 = vmatpush1.bf16.msra.mxu0 %v792
      %858 = vmatprep.subr.bf16.mxu0 %v797
      %859 = vmatpush1.bf16.msra.mxu0 %v796
      %860 = vmatprep.subr.bf16.mxu0 %v801
      %861 = vmatpush1.bf16.msra.mxu0 %v800
      %862 = vmatprep.subr.bf16.mxu0 %v805
      %863 = vmatpush1.bf16.msra.mxu0 %v804
      %864 = vmatprep.subr.bf16.mxu0 %v809
      %865 = vmatpush1.bf16.msra.mxu0 %v808
      %866 = vmatprep.subr.bf16.mxu0 %v813
      %867 = vmatpush1.bf16.msra.mxu0 %v812
      %868 = vmatprep.subr.bf16.mxu0 %v817
      %869 = vmatpush1.bf16.msra.mxu0 %v816
      %870 = vmatprep.subr.bf16.mxu0 %v821
      %871 = vmatpush1.bf16.msra.mxu0 %v820
      %872 = vmatprep.subr.bf16.mxu0 0
      %873 = vmatpush1.bf16.msra.mxu0 0
      %874 = vmatprep.subr.bf16.mxu0 0
      %875 = vmatpush1.bf16.msra.mxu0 0
      %876 = vmatprep.subr.bf16.mxu0 0
      %877 = vmatpush1.bf16.msra.mxu0 0
      %878 = vmatprep.subr.bf16.mxu0 0
      %879 = vmatpush1.bf16.msra.mxu0 0
      %880 = vmatprep.subr.bf16.mxu0 0
      %881 = vmatpush1.bf16.msra.mxu0 0
      %882 = vmatprep.subr.bf16.mxu0 0
      %883 = vmatpush1.bf16.msra.mxu0 0
      %884 = vmatprep.subr.bf16.mxu0 0
      %885 = vmatpush1.bf16.msra.mxu0 0
      %886 = vmatprep.subr.bf16.mxu0 0
      %887 = vmatpush1.bf16.msra.mxu0 0
      %888 = vmatprep.mubr.bf16.mxu0 0
      %889 = vmatmul.mubr.bf16.gmra.mrb[0].mxu0 %v695
      %v890 = vpop.f32.mrb[0].mxu0
      %v891 = vadd.f32 0.0, %v890
      %v892 = vpop.f32.mrb[0].mxu0
      %v893 = vadd.f32 0.0, %v892
      %v894 = vpop.f32.mrb[0].mxu0
      %v895 = vpop.f32.mrb[0].mxu0
      %896 = vdwg.mxu0
      %897 = vmatprep.subr.bf16.mxu0 %v795
      %898 = vmatpush1.bf16.msra.mxu0 %v794
      %899 = vmatprep.subr.bf16.mxu0 %v799
      %900 = vmatpush1.bf16.msra.mxu0 %v798
      %901 = vmatprep.subr.bf16.mxu0 %v803
      %902 = vmatpush1.bf16.msra.mxu0 %v802
      %903 = vmatprep.subr.bf16.mxu0 %v807
      %904 = vmatpush1.bf16.msra.mxu0 %v806
      %905 = vmatprep.subr.bf16.mxu0 %v811
      %906 = vmatpush1.bf16.msra.mxu0 %v810
      %907 = vmatprep.subr.bf16.mxu0 %v815
      %908 = vmatpush1.bf16.msra.mxu0 %v814
      %909 = vmatprep.subr.bf16.mxu0 %v819
      %910 = vmatpush1.bf16.msra.mxu0 %v818
      %911 = vmatprep.subr.bf16.mxu0 %v823
      %912 = vmatpush1.bf16.msra.mxu0 %v822
      %913 = vmatprep.subr.bf16.mxu0 0
      %914 = vmatpush1.bf16.msra.mxu0 0
      %915 = vmatprep.subr.bf16.mxu0 0
      %916 = vmatpush1.bf16.msra.mxu0 0
      %917 = vmatprep.subr.bf16.mxu0 0
      %918 = vmatpush1.bf16.msra.mxu0 0
      %919 = vmatprep.subr.bf16.mxu0 0
      %920 = vmatpush1.bf16.msra.mxu0 0
      %921 = vmatprep.subr.bf16.mxu0 0
      %922 = vmatpush1.bf16.msra.mxu0 0
      %923 = vmatprep.subr.bf16.mxu0 0
      %924 = vmatpush1.bf16.msra.mxu0 0
      %925 = vmatprep.subr.bf16.mxu0 0
      %926 = vmatpush1.bf16.msra.mxu0 0
      %927 = vmatprep.subr.bf16.mxu0 0
      %928 = vmatpush1.bf16.msra.mxu0 0
      %929 = vmatprep.mubr.bf16.mxu0 0
      %930 = vmatmul.mubr.bf16.gmra.mrb[0].mxu0 %v695
      %v931 = vpop.f32.mrb[0].mxu0
      %v932 = vadd.f32 0.0, %v931
      %v933 = vpop.f32.mrb[0].mxu0
      %v934 = vadd.f32 0.0, %v933
      %v935 = vpop.f32.mrb[0].mxu0
      %v936 = vpop.f32.mrb[0].mxu0
      %937 = vdwg.mxu0
      %v938 = vld [vmem:[#allocation2] sm:$0xff]
      %v939 = vld [vmem:[#allocation2 + $0x8] sm:$0xff]
      %v940 = vadd.f32 %v938, %v891
      %v941 = vadd.f32 %v939, %v893
      %s942 = scalar_lea.vmem [#allocation2], 224
      %v943 = vld [vmem:[%s942 + $0x10] sm:$0xff]
      %v944 = vld [vmem:[%s942 + $0x18] sm:$0xff]
      %v945 = vadd.f32 %v943, %v932
      %v946 = vadd.f32 %v944, %v934
      %v947 = vxor.u32 %v940, 2147483648
      %v948 = vxor.u32 %v941, 2147483648
      %v949 = vmul.f32 %v947, 1.442695
      %v950 = vpow.pop %v949
      %v951 = vmul.f32 %v948, 1.442695
      %v952 = vpow.pop %v951
      %v953 = vadd.f32 %v950, 1.0
      %v954 = vadd.f32 %v952, 1.0
      %v955 = vrcp.pop %v953
      %v956 = vmul.f32 1.0, %v955
      %v957 = vrcp.pop %v954
      %v958 = vmul.f32 1.0, %v957
      %v959 = vtanh.pop %v941
      %v960 = vxor.u32 %v945, 2147483648
      %v961 = vxor.u32 %v946, 2147483648
      %v962 = vmul.f32 %v960, 1.442695
      %v963 = vpow.pop %v962
      %v964 = vmul.f32 %v961, 1.442695
      %v965 = vpow.pop %v964
      %v966 = vadd.f32 %v963, 1.0
      %v967 = vadd.f32 %v965, 1.0
      %v968 = vrcp.pop %v966
      %v969 = vmul.f32 1.0, %v968
      %v970 = vrcp.pop %v967
      %v971 = vmul.f32 1.0, %v970
      %v972 = vtanh.pop %v946
      %v973 = vld [vmem:[#allocation4] sm:$0xff]
      %975 = vrot.lane.b32.xlu0 %v973, 64
      %v976 = vpop.permute.xlu0 %975
      %v978 = vmul.f32 %v956, %v976
      %980 = vrot.lane.b32.xlu0 %v959, 64
      %v981 = vpop.permute.xlu0 %980
      %v983 = vmul.f32 %v956, %v981
      %985 = vrot.lane.b32.xlu0 %v983, 64
      %v986 = vpop.permute.xlu0 %985
      %v988 = vadd.f32 %v978, %v986
      %v989 = vmul.f32 %v969, %v973
      %991 = vrot.lane.b32.xlu0 %v972, 64
      %v992 = vpop.permute.xlu0 %991
      %v994 = vmul.f32 %v969, %v992
      %996 = vrot.lane.b32.xlu0 %v994, 64
      %v997 = vpop.permute.xlu0 %996
      %v999 = vadd.f32 %v989, %v997
      %v1000 = vtanh.pop %v988
      %1002 = vrot.lane.b32.xlu0 %v1000, 64
      %v1003 = vpop.permute.xlu0 %1002
      %v1005 = vmul.f32 %v958, %v1003
      %v1006 = vtanh.pop %v999
      %1008 = vrot.lane.b32.xlu0 %v1006, 64
      %v1009 = vpop.permute.xlu0 %1008
      %v1011 = vmul.f32 %v971, %v1009
      %1013 = vrot.lane.b32.xlu0 %v988, 64
      %v1014 = vpop.permute.xlu0 %1013
      %vm1016 = vcmask 523264
      %1017 = vst.msk [vmem:[#allocation4] sm:$0xff] %vm1016, %v1014
      %vm1018 = vcmask 1048064
      %1019 = vst.msk [vmem:[#allocation4] sm:$0xff] %vm1018, %v999
      %1020 = vst.msk [vmem:[#allocation3] sm:$0xff] %vm1016, %v1005
      %1022 = vrot.lane.b32.xlu0 %v1011, 64
      %v1023 = vpop.permute.xlu0 %1022
      %1025 = vst.msk [vmem:[#allocation3] sm:$0xff] %vm1018, %v1023
      %1026 = vst.msk [vmem:[%s254] sm:$0xff] %vm1016, %v1005
      %s1027 = scalar_lea.vmem %s254, 56
      %1028 = vst.msk [vmem:[%s1027] sm:$0xff] %vm1018, %v1023
      %v1029 = vld [vmem:[#allocation3] sm:$0xff]
      %v1030 = vpack.c.bf16 %v1029, %v1029
      %1031 = vmatprep.subr.bf16.mxu0 %v793
      %1032 = vmatpush1.bf16.msra.mxu0 %v792
      %1033 = vmatprep.subr.bf16.mxu0 %v797
      %1034 = vmatpush1.bf16.msra.mxu0 %v796
      %1035 = vmatprep.subr.bf16.mxu0 %v801
      %1036 = vmatpush1.bf16.msra.mxu0 %v800
      %1037 = vmatprep.subr.bf16.mxu0 %v805
      %1038 = vmatpush1.bf16.msra.mxu0 %v804
      %1039 = vmatprep.subr.bf16.mxu0 %v809
      %1040 = vmatpush1.bf16.msra.mxu0 %v808
      %1041 = vmatprep.subr.bf16.mxu0 %v813
      %1042 = vmatpush1.bf16.msra.mxu0 %v812
      %1043 = vmatprep.subr.bf16.mxu0 %v817
      %1044 = vmatpush1.bf16.msra.mxu0 %v816
      %1045 = vmatprep.subr.bf16.mxu0 %v821
      %1046 = vmatpush1.bf16.msra.mxu0 %v820
      %1047 = vmatprep.subr.bf16.mxu0 0
      %1048 = vmatpush1.bf16.msra.mxu0 0
      %1049 = vmatprep.subr.bf16.mxu0 0
      %1050 = vmatpush1.bf16.msra.mxu0 0
      %1051 = vmatprep.subr.bf16.mxu0 0
      %1052 = vmatpush1.bf16.msra.mxu0 0
      %1053 = vmatprep.subr.bf16.mxu0 0
      %1054 = vmatpush1.bf16.msra.mxu0 0
      %1055 = vmatprep.subr.bf16.mxu0 0
      %1056 = vmatpush1.bf16.msra.mxu0 0
      %1057 = vmatprep.subr.bf16.mxu0 0
      %1058 = vmatpush1.bf16.msra.mxu0 0
      %1059 = vmatprep.subr.bf16.mxu0 0
      %1060 = vmatpush1.bf16.msra.mxu0 0
      %1061 = vmatprep.subr.bf16.mxu0 0
      %1062 = vmatpush1.bf16.msra.mxu0 0
      %1063 = vmatprep.mubr.bf16.mxu0 0
      %1064 = vmatmul.mubr.bf16.gmra.mrb[0].mxu0 %v1030
      %v1065 = vpop.f32.mrb[0].mxu0
      %v1066 = vadd.f32 0.0, %v1065
      %v1067 = vpop.f32.mrb[0].mxu0
      %v1068 = vadd.f32 0.0, %v1067
      %v1069 = vpop.f32.mrb[0].mxu0
      %v1070 = vpop.f32.mrb[0].mxu0
      %1071 = vdwg.mxu0
      %1072 = vmatprep.subr.bf16.mxu0 %v795
      %1073 = vmatpush1.bf16.msra.mxu0 %v794
      %1074 = vmatprep.subr.bf16.mxu0 %v799
      %1075 = vmatpush1.bf16.msra.mxu0 %v798
      %1076 = vmatprep.subr.bf16.mxu0 %v803
      %1077 = vmatpush1.bf16.msra.mxu0 %v802
      %1078 = vmatprep.subr.bf16.mxu0 %v807
      %1079 = vmatpush1.bf16.msra.mxu0 %v806
      %1080 = vmatprep.subr.bf16.mxu0 %v811
      %1081 = vmatpush1.bf16.msra.mxu0 %v810
      %1082 = vmatprep.subr.bf16.mxu0 %v815
      %1083 = vmatpush1.bf16.msra.mxu0 %v814
      %1084 = vmatprep.subr.bf16.mxu0 %v819
      %1085 = vmatpush1.bf16.msra.mxu0 %v818
      %1086 = vmatprep.subr.bf16.mxu0 %v823
      %1087 = vmatpush1.bf16.msra.mxu0 %v822
      %1088 = vmatprep.subr.bf16.mxu0 0
      %1089 = vmatpush1.bf16.msra.mxu0 0
      %1090 = vmatprep.subr.bf16.mxu0 0
      %1091 = vmatpush1.bf16.msra.mxu0 0
      %1092 = vmatprep.subr.bf16.mxu0 0
      %1093 = vmatpush1.bf16.msra.mxu0 0
      %1094 = vmatprep.subr.bf16.mxu0 0
      %1095 = vmatpush1.bf16.msra.mxu0 0
      %1096 = vmatprep.subr.bf16.mxu0 0
      %1097 = vmatpush1.bf16.msra.mxu0 0
      %1098 = vmatprep.subr.bf16.mxu0 0
      %1099 = vmatpush1.bf16.msra.mxu0 0
      %1100 = vmatprep.subr.bf16.mxu0 0
      %1101 = vmatpush1.bf16.msra.mxu0 0
      %1102 = vmatprep.subr.bf16.mxu0 0
      %1103 = vmatpush1.bf16.msra.mxu0 0
      %1104 = vmatprep.mubr.bf16.mxu0 0
      %1105 = vmatmul.mubr.bf16.gmra.mrb[0].mxu0 %v1030
      %v1106 = vpop.f32.mrb[0].mxu0
      %v1107 = vadd.f32 0.0, %v1106
      %v1108 = vpop.f32.mrb[0].mxu0
      %v1109 = vadd.f32 0.0, %v1108
      %v1110 = vpop.f32.mrb[0].mxu0
      %v1111 = vpop.f32.mrb[0].mxu0
      %1112 = vdwg.mxu0
      %s1113 = scalar_lea.vmem [#allocation2], 32
      %v1114 = vld [vmem:[%s1113] sm:$0xff]
      %v1115 = vld [vmem:[%s1113 + $0x8] sm:$0xff]
      %v1116 = vadd.f32 %v1114, %v1066
      %v1117 = vadd.f32 %v1115, %v1068
      %s1118 = scalar_lea.vmem [#allocation2], 192
      %v1119 = vld [vmem:[%s1118 + $0x10] sm:$0xff]
      %v1120 = vld [vmem:[%s1118 + $0x18] sm:$0xff]
      %v1121 = vadd.f32 %v1119, %v1107
      %v1122 = vadd.f32 %v1120, %v1109
      %v1123 = vxor.u32 %v1116, 2147483648
      %v1124 = vxor.u32 %v1117, 2147483648
      %v1125 = vmul.f32 %v1123, 1.442695
      %v1126 = vpow.pop %v1125
      %v1127 = vmul.f32 %v1124, 1.442695
      %v1128 = vpow.pop %v1127
      %v1129 = vadd.f32 %v1126, 1.0
      %v1130 = vadd.f32 %v1128, 1.0
      %v1131 = vrcp.pop %v1129
      %v1132 = vmul.f32 1.0, %v1131
      %v1133 = vrcp.pop %v1130
      %v1134 = vmul.f32 1.0, %v1133
      %v1135 = vtanh.pop %v1117
      %v1136 = vxor.u32 %v1121, 2147483648
      %v1137 = vxor.u32 %v1122, 2147483648
      %v1138 = vmul.f32 %v1136, 1.442695
      %v1139 = vpow.pop %v1138
      %v1140 = vmul.f32 %v1137, 1.442695
      %v1141 = vpow.pop %v1140
      %v1142 = vadd.f32 %v1139, 1.0
      %v1143 = vadd.f32 %v1141, 1.0
      %v1144 = vrcp.pop %v1142
      %v1145 = vmul.f32 1.0, %v1144
      %v1146 = vrcp.pop %v1143
      %v1147 = vmul.f32 1.0, %v1146
      %v1148 = vtanh.pop %v1122
      %v1149 = vld [vmem:[#allocation4] sm:$0xff]
      %1151 = vrot.lane.b32.xlu0 %v1149, 64
      %v1152 = vpop.permute.xlu0 %1151
      %v1154 = vmul.f32 %v1132, %v1152
      %1156 = vrot.lane.b32.xlu0 %v1135, 64
      %v1157 = vpop.permute.xlu0 %1156
      %v1159 = vmul.f32 %v1132, %v1157
      %1161 = vrot.lane.b32.xlu0 %v1159, 64
      %v1162 = vpop.permute.xlu0 %1161
      %v1164 = vadd.f32 %v1154, %v1162
      %v1165 = vmul.f32 %v1145, %v1149
      %1167 = vrot.lane.b32.xlu0 %v1148, 64
      %v1168 = vpop.permute.xlu0 %1167
      %v1170 = vmul.f32 %v1145, %v1168
      %1172 = vrot.lane.b32.xlu0 %v1170, 64
      %v1173 = vpop.permute.xlu0 %1172
      %v1175 = vadd.f32 %v1165, %v1173
      %v1176 = vtanh.pop %v1164
      %1178 = vrot.lane.b32.xlu0 %v1176, 64
      %v1179 = vpop.permute.xlu0 %1178
      %v1181 = vmul.f32 %v1134, %v1179
      %v1182 = vtanh.pop %v1175
      %1184 = vrot.lane.b32.xlu0 %v1182, 64
      %v1185 = vpop.permute.xlu0 %1184
      %v1187 = vmul.f32 %v1147, %v1185
      %1189 = vrot.lane.b32.xlu0 %v1164, 64
      %v1190 = vpop.permute.xlu0 %1189
      %1192 = vst.msk [vmem:[#allocation4] sm:$0xff] %vm1016, %v1190
      %1193 = vst.msk [vmem:[#allocation4] sm:$0xff] %vm1018, %v1175
      %1194 = vst.msk [vmem:[#allocation3] sm:$0xff] %vm1016, %v1181
      %1196 = vrot.lane.b32.xlu0 %v1187, 64
      %v1197 = vpop.permute.xlu0 %1196
      %1199 = vst.msk [vmem:[#allocation3] sm:$0xff] %vm1018, %v1197
      %s1200 = scalar_lea.vmem %s254, 8
      %1201 = vst.msk [vmem:[%s1200] sm:$0xff] %vm1016, %v1181
      %s1202 = scalar_lea.vmem %s254, 48
      %1203 = vst.msk [vmem:[%s1202] sm:$0xff] %vm1018, %v1197
      %v1204 = vld [vmem:[#allocation3] sm:$0xff]
      %v1205 = vpack.c.bf16 %v1204, %v1204
      %1206 = vmatprep.subr.bf16.mxu0 %v793
      %1207 = vmatpush1.bf16.msra.mxu0 %v792
      %1208 = vmatprep.subr.bf16.mxu0 %v797
      %1209 = vmatpush1.bf16.msra.mxu0 %v796
      %1210 = vmatprep.subr.bf16.mxu0 %v801
      %1211 = vmatpush1.bf16.msra.mxu0 %v800
      %1212 = vmatprep.subr.bf16.mxu0 %v805
      %1213 = vmatpush1.bf16.msra.mxu0 %v804
      %1214 = vmatprep.subr.bf16.mxu0 %v809
      %1215 = vmatpush1.bf16.msra.mxu0 %v808
      %1216 = vmatprep.subr.bf16.mxu0 %v813
      %1217 = vmatpush1.bf16.msra.mxu0 %v812
      %1218 = vmatprep.subr.bf16.mxu0 %v817
      %1219 = vmatpush1.bf16.msra.mxu0 %v816
      %1220 = vmatprep.subr.bf16.mxu0 %v821
      %1221 = vmatpush1.bf16.msra.mxu0 %v820
      %1222 = vmatprep.subr.bf16.mxu0 0
      %1223 = vmatpush1.bf16.msra.mxu0 0
      %1224 = vmatprep.subr.bf16.mxu0 0
      %1225 = vmatpush1.bf16.msra.mxu0 0
      %1226 = vmatprep.subr.bf16.mxu0 0
      %1227 = vmatpush1.bf16.msra.mxu0 0
      %1228 = vmatprep.subr.bf16.mxu0 0
      %1229 = vmatpush1.bf16.msra.mxu0 0
      %1230 = vmatprep.subr.bf16.mxu0 0
      %1231 = vmatpush1.bf16.msra.mxu0 0
      %1232 = vmatprep.subr.bf16.mxu0 0
      %1233 = vmatpush1.bf16.msra.mxu0 0
      %1234 = vmatprep.subr.bf16.mxu0 0
      %1235 = vmatpush1.bf16.msra.mxu0 0
      %1236 = vmatprep.subr.bf16.mxu0 0
      %1237 = vmatpush1.bf16.msra.mxu0 0
      %1238 = vmatprep.mubr.bf16.mxu0 0
      %1239 = vmatmul.mubr.bf16.gmra.mrb[0].mxu0 %v1205
      %v1240 = vpop.f32.mrb[0].mxu0
      %v1241 = vadd.f32 0.0, %v1240
      %v1242 = vpop.f32.mrb[0].mxu0
      %v1243 = vadd.f32 0.0, %v1242
      %v1244 = vpop.f32.mrb[0].mxu0
      %v1245 = vpop.f32.mrb[0].mxu0
      %1246 = vdwg.mxu0
      %1247 = vmatprep.subr.bf16.mxu0 %v795
      %1248 = vmatpush1.bf16.msra.mxu0 %v794
      %1249 = vmatprep.subr.bf16.mxu0 %v799
      %1250 = vmatpush1.bf16.msra.mxu0 %v798
      %1251 = vmatprep.subr.bf16.mxu0 %v803
      %1252 = vmatpush1.bf16.msra.mxu0 %v802
      %1253 = vmatprep.subr.bf16.mxu0 %v807
      %1254 = vmatpush1.bf16.msra.mxu0 %v806
      %1255 = vmatprep.subr.bf16.mxu0 %v811
      %1256 = vmatpush1.bf16.msra.mxu0 %v810
      %1257 = vmatprep.subr.bf16.mxu0 %v815
      %1258 = vmatpush1.bf16.msra.mxu0 %v814
      %1259 = vmatprep.subr.bf16.mxu0 %v819
      %1260 = vmatpush1.bf16.msra.mxu0 %v818
      %1261 = vmatprep.subr.bf16.mxu0 %v823
      %1262 = vmatpush1.bf16.msra.mxu0 %v822
      %1263 = vmatprep.subr.bf16.mxu0 0
      %1264 = vmatpush1.bf16.msra.mxu0 0
      %1265 = vmatprep.subr.bf16.mxu0 0
      %1266 = vmatpush1.bf16.msra.mxu0 0
      %1267 = vmatprep.subr.bf16.mxu0 0
      %1268 = vmatpush1.bf16.msra.mxu0 0
      %1269 = vmatprep.subr.bf16.mxu0 0
      %1270 = vmatpush1.bf16.msra.mxu0 0
      %1271 = vmatprep.subr.bf16.mxu0 0
      %1272 = vmatpush1.bf16.msra.mxu0 0
      %1273 = vmatprep.subr.bf16.mxu0 0
      %1274 = vmatpush1.bf16.msra.mxu0 0
      %1275 = vmatprep.subr.bf16.mxu0 0
      %1276 = vmatpush1.bf16.msra.mxu0 0
      %1277 = vmatprep.subr.bf16.mxu0 0
      %1278 = vmatpush1.bf16.msra.mxu0 0
      %1279 = vmatprep.mubr.bf16.mxu0 0
      %1280 = vmatmul.mubr.bf16.gmra.mrb[0].mxu0 %v1205
      %v1281 = vpop.f32.mrb[0].mxu0
      %v1282 = vadd.f32 0.0, %v1281
      %v1283 = vpop.f32.mrb[0].mxu0
      %v1284 = vadd.f32 0.0, %v1283
      %v1285 = vpop.f32.mrb[0].mxu0
      %v1286 = vpop.f32.mrb[0].mxu0
      %1287 = vdwg.mxu0
      %s1288 = scalar_lea.vmem [#allocation2], 64
      %v1289 = vld [vmem:[%s1288] sm:$0xff]
      %v1290 = vld [vmem:[%s1288 + $0x8] sm:$0xff]
      %v1291 = vadd.f32 %v1289, %v1241
      %v1292 = vadd.f32 %v1290, %v1243
      %s1293 = scalar_lea.vmem [#allocation2], 160
      %v1294 = vld [vmem:[%s1293 + $0x10] sm:$0xff]
      %v1295 = vld [vmem:[%s1293 + $0x18] sm:$0xff]
      %v1296 = vadd.f32 %v1294, %v1282
      %v1297 = vadd.f32 %v1295, %v1284
      %v1298 = vxor.u32 %v1291, 2147483648
      %v1299 = vxor.u32 %v1292, 2147483648
      %v1300 = vmul.f32 %v1298, 1.442695
      %v1301 = vpow.pop %v1300
      %v1302 = vmul.f32 %v1299, 1.442695
      %v1303 = vpow.pop %v1302
      %v1304 = vadd.f32 %v1301, 1.0
      %v1305 = vadd.f32 %v1303, 1.0
      %v1306 = vrcp.pop %v1304
      %v1307 = vmul.f32 1.0, %v1306
      %v1308 = vrcp.pop %v1305
      %v1309 = vmul.f32 1.0, %v1308
      %v1310 = vtanh.pop %v1292
      %v1311 = vxor.u32 %v1296, 2147483648
      %v1312 = vxor.u32 %v1297, 2147483648
      %v1313 = vmul.f32 %v1311, 1.442695
      %v1314 = vpow.pop %v1313
      %v1315 = vmul.f32 %v1312, 1.442695
      %v1316 = vpow.pop %v1315
      %v1317 = vadd.f32 %v1314, 1.0
      %v1318 = vadd.f32 %v1316, 1.0
      %v1319 = vrcp.pop %v1317
      %v1320 = vmul.f32 1.0, %v1319
      %v1321 = vrcp.pop %v1318
      %v1322 = vmul.f32 1.0, %v1321
      %v1323 = vtanh.pop %v1297
      %v1324 = vld [vmem:[#allocation4] sm:$0xff]
      %1326 = vrot.lane.b32.xlu0 %v1324, 64
      %v1327 = vpop.permute.xlu0 %1326
      %v1329 = vmul.f32 %v1307, %v1327
      %1331 = vrot.lane.b32.xlu0 %v1310, 64
      %v1332 = vpop.permute.xlu0 %1331
      %v1334 = vmul.f32 %v1307, %v1332
      %1336 = vrot.lane.b32.xlu0 %v1334, 64
      %v1337 = vpop.permute.xlu0 %1336
      %v1339 = vadd.f32 %v1329, %v1337
      %v1340 = vmul.f32 %v1320, %v1324
      %1342 = vrot.lane.b32.xlu0 %v1323, 64
      %v1343 = vpop.permute.xlu0 %1342
      %v1345 = vmul.f32 %v1320, %v1343
      %1347 = vrot.lane.b32.xlu0 %v1345, 64
      %v1348 = vpop.permute.xlu0 %1347
      %v1350 = vadd.f32 %v1340, %v1348
      %v1351 = vtanh.pop %v1339
      %1353 = vrot.lane.b32.xlu0 %v1351, 64
      %v1354 = vpop.permute.xlu0 %1353
      %v1356 = vmul.f32 %v1309, %v1354
      %v1357 = vtanh.pop %v1350
      %1359 = vrot.lane.b32.xlu0 %v1357, 64
      %v1360 = vpop.permute.xlu0 %1359
      %v1362 = vmul.f32 %v1322, %v1360
      %1364 = vrot.lane.b32.xlu0 %v1339, 64
      %v1365 = vpop.permute.xlu0 %1364
      %1367 = vst.msk [vmem:[#allocation4] sm:$0xff] %vm1016, %v1365
      %1368 = vst.msk [vmem:[#allocation4] sm:$0xff] %vm1018, %v1350
      %1369 = vst.msk [vmem:[#allocation3] sm:$0xff] %vm1016, %v1356
      %1371 = vrot.lane.b32.xlu0 %v1362, 64
      %v1372 = vpop.permute.xlu0 %1371
      %1374 = vst.msk [vmem:[#allocation3] sm:$0xff] %vm1018, %v1372
      %s1375 = scalar_lea.vmem %s254, 16
      %1376 = vst.msk [vmem:[%s1375] sm:$0xff] %vm1016, %v1356
      %s1377 = scalar_lea.vmem %s254, 40
      %1378 = vst.msk [vmem:[%s1377] sm:$0xff] %vm1018, %v1372
      %v1379 = vld [vmem:[#allocation3] sm:$0xff]
      %v1380 = vpack.c.bf16 %v1379, %v1379
      %1381 = vmatprep.subr.bf16.mxu0 %v793
      %1382 = vmatpush1.bf16.msra.mxu0 %v792
      %1383 = vmatprep.subr.bf16.mxu0 %v797
      %1384 = vmatpush1.bf16.msra.mxu0 %v796
      %1385 = vmatprep.subr.bf16.mxu0 %v801
      %1386 = vmatpush1.bf16.msra.mxu0 %v800
      %1387 = vmatprep.subr.bf16.mxu0 %v805
      %1388 = vmatpush1.bf16.msra.mxu0 %v804
      %1389 = vmatprep.subr.bf16.mxu0 %v809
      %1390 = vmatpush1.bf16.msra.mxu0 %v808
      %1391 = vmatprep.subr.bf16.mxu0 %v813
      %1392 = vmatpush1.bf16.msra.mxu0 %v812
      %1393 = vmatprep.subr.bf16.mxu0 %v817
      %1394 = vmatpush1.bf16.msra.mxu0 %v816
      %1395 = vmatprep.subr.bf16.mxu0 %v821
      %1396 = vmatpush1.bf16.msra.mxu0 %v820
      %1397 = vmatprep.subr.bf16.mxu0 0
      %1398 = vmatpush1.bf16.msra.mxu0 0
      %1399 = vmatprep.subr.bf16.mxu0 0
      %1400 = vmatpush1.bf16.msra.mxu0 0
      %1401 = vmatprep.subr.bf16.mxu0 0
      %1402 = vmatpush1.bf16.msra.mxu0 0
      %1403 = vmatprep.subr.bf16.mxu0 0
      %1404 = vmatpush1.bf16.msra.mxu0 0
      %1405 = vmatprep.subr.bf16.mxu0 0
      %1406 = vmatpush1.bf16.msra.mxu0 0
      %1407 = vmatprep.subr.bf16.mxu0 0
      %1408 = vmatpush1.bf16.msra.mxu0 0
      %1409 = vmatprep.subr.bf16.mxu0 0
      %1410 = vmatpush1.bf16.msra.mxu0 0
      %1411 = vmatprep.subr.bf16.mxu0 0
      %1412 = vmatpush1.bf16.msra.mxu0 0
      %1413 = vmatprep.mubr.bf16.mxu0 0
      %1414 = vmatmul.mubr.bf16.gmra.mrb[0].mxu0 %v1380
      %v1415 = vpop.f32.mrb[0].mxu0
      %v1416 = vadd.f32 0.0, %v1415
      %v1417 = vpop.f32.mrb[0].mxu0
      %v1418 = vadd.f32 0.0, %v1417
      %v1419 = vpop.f32.mrb[0].mxu0
      %v1420 = vpop.f32.mrb[0].mxu0
      %1421 = vdwg.mxu0
      %1422 = vmatprep.subr.bf16.mxu0 %v795
      %1423 = vmatpush1.bf16.msra.mxu0 %v794
      %1424 = vmatprep.subr.bf16.mxu0 %v799
      %1425 = vmatpush1.bf16.msra.mxu0 %v798
      %1426 = vmatprep.subr.bf16.mxu0 %v803
      %1427 = vmatpush1.bf16.msra.mxu0 %v802
      %1428 = vmatprep.subr.bf16.mxu0 %v807
      %1429 = vmatpush1.bf16.msra.mxu0 %v806
      %1430 = vmatprep.subr.bf16.mxu0 %v811
      %1431 = vmatpush1.bf16.msra.mxu0 %v810
      %1432 = vmatprep.subr.bf16.mxu0 %v815
      %1433 = vmatpush1.bf16.msra.mxu0 %v814
      %1434 = vmatprep.subr.bf16.mxu0 %v819
      %1435 = vmatpush1.bf16.msra.mxu0 %v818
      %1436 = vmatprep.subr.bf16.mxu0 %v823
      %1437 = vmatpush1.bf16.msra.mxu0 %v822
      %1438 = vmatprep.subr.bf16.mxu0 0
      %1439 = vmatpush1.bf16.msra.mxu0 0
      %1440 = vmatprep.subr.bf16.mxu0 0
      %1441 = vmatpush1.bf16.msra.mxu0 0
      %1442 = vmatprep.subr.bf16.mxu0 0
      %1443 = vmatpush1.bf16.msra.mxu0 0
      %1444 = vmatprep.subr.bf16.mxu0 0
      %1445 = vmatpush1.bf16.msra.mxu0 0
      %1446 = vmatprep.subr.bf16.mxu0 0
      %1447 = vmatpush1.bf16.msra.mxu0 0
      %1448 = vmatprep.subr.bf16.mxu0 0
      %1449 = vmatpush1.bf16.msra.mxu0 0
      %1450 = vmatprep.subr.bf16.mxu0 0
      %1451 = vmatpush1.bf16.msra.mxu0 0
      %1452 = vmatprep.subr.bf16.mxu0 0
      %1453 = vmatpush1.bf16.msra.mxu0 0
      %1454 = vmatprep.mubr.bf16.mxu0 0
      %1455 = vmatmul.mubr.bf16.gmra.mrb[0].mxu0 %v1380
      %v1456 = vpop.f32.mrb[0].mxu0
      %v1457 = vadd.f32 0.0, %v1456
      %v1458 = vpop.f32.mrb[0].mxu0
      %v1459 = vadd.f32 0.0, %v1458
      %v1460 = vpop.f32.mrb[0].mxu0
      %v1461 = vpop.f32.mrb[0].mxu0
      %1462 = vdwg.mxu0
      %s1463 = scalar_lea.vmem [#allocation2], 96
      %v1464 = vld [vmem:[%s1463] sm:$0xff]
      %v1465 = vld [vmem:[%s1463 + $0x8] sm:$0xff]
      %v1466 = vadd.f32 %v1464, %v1416
      %v1467 = vadd.f32 %v1465, %v1418
      %s1468 = scalar_lea.vmem [#allocation2], 128
      %v1469 = vld [vmem:[%s1468 + $0x10] sm:$0xff]
      %v1470 = vld [vmem:[%s1468 + $0x18] sm:$0xff]
      %v1471 = vadd.f32 %v1469, %v1457
      %v1472 = vadd.f32 %v1470, %v1459
      %v1473 = vxor.u32 %v1466, 2147483648
      %v1474 = vxor.u32 %v1467, 2147483648
      %v1475 = vmul.f32 %v1473, 1.442695
      %v1476 = vpow.pop %v1475
      %v1477 = vmul.f32 %v1474, 1.442695
      %v1478 = vpow.pop %v1477
      %v1479 = vadd.f32 %v1476, 1.0
      %v1480 = vadd.f32 %v1478, 1.0
      %v1481 = vrcp.pop %v1479
      %v1482 = vmul.f32 1.0, %v1481
      %v1483 = vrcp.pop %v1480
      %v1484 = vmul.f32 1.0, %v1483
      %v1485 = vtanh.pop %v1467
      %v1486 = vxor.u32 %v1471, 2147483648
      %v1487 = vxor.u32 %v1472, 2147483648
      %v1488 = vmul.f32 %v1486, 1.442695
      %v1489 = vpow.pop %v1488
      %v1490 = vmul.f32 %v1487, 1.442695
      %v1491 = vpow.pop %v1490
      %v1492 = vadd.f32 %v1489, 1.0
      %v1493 = vadd.f32 %v1491, 1.0
      %v1494 = vrcp.pop %v1492
      %v1495 = vmul.f32 1.0, %v1494
      %v1496 = vrcp.pop %v1493
      %v1497 = vmul.f32 1.0, %v1496
      %v1498 = vtanh.pop %v1472
      %v1499 = vld [vmem:[#allocation4] sm:$0xff]
      %1501 = vrot.lane.b32.xlu0 %v1499, 64
      %v1502 = vpop.permute.xlu0 %1501
      %v1504 = vmul.f32 %v1482, %v1502
      %1506 = vrot.lane.b32.xlu0 %v1485, 64
      %v1507 = vpop.permute.xlu0 %1506
      %v1509 = vmul.f32 %v1482, %v1507
      %1511 = vrot.lane.b32.xlu0 %v1509, 64
      %v1512 = vpop.permute.xlu0 %1511
      %v1514 = vadd.f32 %v1504, %v1512
      %v1515 = vmul.f32 %v1495, %v1499
      %1517 = vrot.lane.b32.xlu0 %v1498, 64
      %v1518 = vpop.permute.xlu0 %1517
      %v1520 = vmul.f32 %v1495, %v1518
      %1522 = vrot.lane.b32.xlu0 %v1520, 64
      %v1523 = vpop.permute.xlu0 %1522
      %v1525 = vadd.f32 %v1515, %v1523
      %v1526 = vtanh.pop %v1514
      %1528 = vrot.lane.b32.xlu0 %v1526, 64
      %v1529 = vpop.permute.xlu0 %1528
      %v1531 = vmul.f32 %v1484, %v1529
      %v1532 = vtanh.pop %v1525
      %1534 = vrot.lane.b32.xlu0 %v1532, 64
      %v1535 = vpop.permute.xlu0 %1534
      %v1537 = vmul.f32 %v1497, %v1535
      %1539 = vrot.lane.b32.xlu0 %v1514, 64
      %v1540 = vpop.permute.xlu0 %1539
      %1542 = vst.msk [vmem:[#allocation4] sm:$0xff] %vm1016, %v1540
      %1543 = vst.msk [vmem:[#allocation4] sm:$0xff] %vm1018, %v1525
      %1544 = vst.msk [vmem:[#allocation3] sm:$0xff] %vm1016, %v1531
      %1546 = vrot.lane.b32.xlu0 %v1537, 64
      %v1547 = vpop.permute.xlu0 %1546
      %1549 = vst.msk [vmem:[#allocation3] sm:$0xff] %vm1018, %v1547
      %s1550 = scalar_lea.vmem %s254, 24
      %1551 = vst.msk [vmem:[%s1550] sm:$0xff] %vm1016, %v1531
      %s1552 = scalar_lea.vmem %s254, 32
      %1553 = vst.msk [vmem:[%s1552] sm:$0xff] %vm1018, %v1547
      %v1554 = vld [vmem:[#allocation3] sm:$0xff]
      %v1555 = vpack.c.bf16 %v1554, %v1554
      %1556 = vmatprep.subr.bf16.mxu0 %v793
      %1557 = vmatpush1.bf16.msra.mxu0 %v792
      %1558 = vmatprep.subr.bf16.mxu0 %v797
      %1559 = vmatpush1.bf16.msra.mxu0 %v796
      %1560 = vmatprep.subr.bf16.mxu0 %v801
      %1561 = vmatpush1.bf16.msra.mxu0 %v800
      %1562 = vmatprep.subr.bf16.mxu0 %v805
      %1563 = vmatpush1.bf16.msra.mxu0 %v804
      %1564 = vmatprep.subr.bf16.mxu0 %v809
      %1565 = vmatpush1.bf16.msra.mxu0 %v808
      %1566 = vmatprep.subr.bf16.mxu0 %v813
      %1567 = vmatpush1.bf16.msra.mxu0 %v812
      %1568 = vmatprep.subr.bf16.mxu0 %v817
      %1569 = vmatpush1.bf16.msra.mxu0 %v816
      %1570 = vmatprep.subr.bf16.mxu0 %v821
      %1571 = vmatpush1.bf16.msra.mxu0 %v820
      %1572 = vmatprep.subr.bf16.mxu0 0
      %1573 = vmatpush1.bf16.msra.mxu0 0
      %1574 = vmatprep.subr.bf16.mxu0 0
      %1575 = vmatpush1.bf16.msra.mxu0 0
      %1576 = vmatprep.subr.bf16.mxu0 0
      %1577 = vmatpush1.bf16.msra.mxu0 0
      %1578 = vmatprep.subr.bf16.mxu0 0
      %1579 = vmatpush1.bf16.msra.mxu0 0
      %1580 = vmatprep.subr.bf16.mxu0 0
      %1581 = vmatpush1.bf16.msra.mxu0 0
      %1582 = vmatprep.subr.bf16.mxu0 0
      %1583 = vmatpush1.bf16.msra.mxu0 0
      %1584 = vmatprep.subr.bf16.mxu0 0
      %1585 = vmatpush1.bf16.msra.mxu0 0
      %1586 = vmatprep.subr.bf16.mxu0 0
      %1587 = vmatpush1.bf16.msra.mxu0 0
      %1588 = vmatprep.mubr.bf16.mxu0 0
      %1589 = vmatmul.mubr.bf16.gmra.mrb[0].mxu0 %v1555
      %v1590 = vpop.f32.mrb[0].mxu0
      %v1591 = vadd.f32 0.0, %v1590
      %v1592 = vpop.f32.mrb[0].mxu0
      %v1593 = vadd.f32 0.0, %v1592
      %v1594 = vpop.f32.mrb[0].mxu0
      %v1595 = vpop.f32.mrb[0].mxu0
      %1596 = vdwg.mxu0
      %1597 = vmatprep.subr.bf16.mxu0 %v795
      %1598 = vmatpush1.bf16.msra.mxu0 %v794
      %1599 = vmatprep.subr.bf16.mxu0 %v799
      %1600 = vmatpush1.bf16.msra.mxu0 %v798
      %1601 = vmatprep.subr.bf16.mxu0 %v803
      %1602 = vmatpush1.bf16.msra.mxu0 %v802
      %1603 = vmatprep.subr.bf16.mxu0 %v807
      %1604 = vmatpush1.bf16.msra.mxu0 %v806
      %1605 = vmatprep.subr.bf16.mxu0 %v811
      %1606 = vmatpush1.bf16.msra.mxu0 %v810
      %1607 = vmatprep.subr.bf16.mxu0 %v815
      %1608 = vmatpush1.bf16.msra.mxu0 %v814
      %1609 = vmatprep.subr.bf16.mxu0 %v819
      %1610 = vmatpush1.bf16.msra.mxu0 %v818
      %1611 = vmatprep.subr.bf16.mxu0 %v823
      %1612 = vmatpush1.bf16.msra.mxu0 %v822
      %1613 = vmatprep.subr.bf16.mxu0 0
      %1614 = vmatpush1.bf16.msra.mxu0 0
      %1615 = vmatprep.subr.bf16.mxu0 0
      %1616 = vmatpush1.bf16.msra.mxu0 0
      %1617 = vmatprep.subr.bf16.mxu0 0
      %1618 = vmatpush1.bf16.msra.mxu0 0
      %1619 = vmatprep.subr.bf16.mxu0 0
      %1620 = vmatpush1.bf16.msra.mxu0 0
      %1621 = vmatprep.subr.bf16.mxu0 0
      %1622 = vmatpush1.bf16.msra.mxu0 0
      %1623 = vmatprep.subr.bf16.mxu0 0
      %1624 = vmatpush1.bf16.msra.mxu0 0
      %1625 = vmatprep.subr.bf16.mxu0 0
      %1626 = vmatpush1.bf16.msra.mxu0 0
      %1627 = vmatprep.subr.bf16.mxu0 0
      %1628 = vmatpush1.bf16.msra.mxu0 0
      %1629 = vmatprep.mubr.bf16.mxu0 0
      %1630 = vmatmul.mubr.bf16.gmra.mrb[0].mxu0 %v1555
      %v1631 = vpop.f32.mrb[0].mxu0
      %v1632 = vadd.f32 0.0, %v1631
      %v1633 = vpop.f32.mrb[0].mxu0
      %v1634 = vadd.f32 0.0, %v1633
      %v1635 = vpop.f32.mrb[0].mxu0
      %v1636 = vpop.f32.mrb[0].mxu0
      %1637 = vdwg.mxu0
      %v1638 = vld [vmem:[%s1468] sm:$0xff]
      %v1639 = vld [vmem:[%s1468 + $0x8] sm:$0xff]
      %v1640 = vadd.f32 %v1638, %v1591
      %v1641 = vadd.f32 %v1639, %v1593
      %v1642 = vld [vmem:[%s1463 + $0x10] sm:$0xff]
      %v1643 = vld [vmem:[%s1463 + $0x18] sm:$0xff]
      %v1644 = vadd.f32 %v1642, %v1632
      %v1645 = vadd.f32 %v1643, %v1634
      %v1646 = vxor.u32 %v1640, 2147483648
      %v1647 = vxor.u32 %v1641, 2147483648
      %v1648 = vmul.f32 %v1646, 1.442695
      %v1649 = vpow.pop %v1648
      %v1650 = vmul.f32 %v1647, 1.442695
      %v1651 = vpow.pop %v1650
      %v1652 = vadd.f32 %v1649, 1.0
      %v1653 = vadd.f32 %v1651, 1.0
      %v1654 = vrcp.pop %v1652
      %v1655 = vmul.f32 1.0, %v1654
      %v1656 = vrcp.pop %v1653
      %v1657 = vmul.f32 1.0, %v1656
      %v1658 = vtanh.pop %v1641
      %v1659 = vxor.u32 %v1644, 2147483648
      %v1660 = vxor.u32 %v1645, 2147483648
      %v1661 = vmul.f32 %v1659, 1.442695
      %v1662 = vpow.pop %v1661
      %v1663 = vmul.f32 %v1660, 1.442695
      %v1664 = vpow.pop %v1663
      %v1665 = vadd.f32 %v1662, 1.0
      %v1666 = vadd.f32 %v1664, 1.0
      %v1667 = vrcp.pop %v1665
      %v1668 = vmul.f32 1.0, %v1667
      %v1669 = vrcp.pop %v1666
      %v1670 = vmul.f32 1.0, %v1669
      %v1671 = vtanh.pop %v1645
      %v1672 = vld [vmem:[#allocation4] sm:$0xff]
      %1674 = vrot.lane.b32.xlu0 %v1672, 64
      %v1675 = vpop.permute.xlu0 %1674
      %v1677 = vmul.f32 %v1655, %v1675
      %1679 = vrot.lane.b32.xlu0 %v1658, 64
      %v1680 = vpop.permute.xlu0 %1679
      %v1682 = vmul.f32 %v1655, %v1680
      %1684 = vrot.lane.b32.xlu0 %v1682, 64
      %v1685 = vpop.permute.xlu0 %1684
      %v1687 = vadd.f32 %v1677, %v1685
      %v1688 = vmul.f32 %v1668, %v1672
      %1690 = vrot.lane.b32.xlu0 %v1671, 64
      %v1691 = vpop.permute.xlu0 %1690
      %v1693 = vmul.f32 %v1668, %v1691
      %1695 = vrot.lane.b32.xlu0 %v1693, 64
      %v1696 = vpop.permute.xlu0 %1695
      %v1698 = vadd.f32 %v1688, %v1696
      %v1699 = vtanh.pop %v1687
      %1701 = vrot.lane.b32.xlu0 %v1699, 64
      %v1702 = vpop.permute.xlu0 %1701
      %v1704 = vmul.f32 %v1657, %v1702
      %v1705 = vtanh.pop %v1698
      %1707 = vrot.lane.b32.xlu0 %v1705, 64
      %v1708 = vpop.permute.xlu0 %1707
      %v1710 = vmul.f32 %v1670, %v1708
      %1712 = vrot.lane.b32.xlu0 %v1687, 64
      %v1713 = vpop.permute.xlu0 %1712
      %1715 = vst.msk [vmem:[#allocation4] sm:$0xff] %vm1016, %v1713
      %1716 = vst.msk [vmem:[#allocation4] sm:$0xff] %vm1018, %v1698
      %1717 = vst.msk [vmem:[#allocation3] sm:$0xff] %vm1016, %v1704
      %1719 = vrot.lane.b32.xlu0 %v1710, 64
      %v1720 = vpop.permute.xlu0 %1719
      %1722 = vst.msk [vmem:[#allocation3] sm:$0xff] %vm1018, %v1720
      %1723 = vst.msk [vmem:[%s1552] sm:$0xff] %vm1016, %v1704
      %1724 = vst.msk [vmem:[%s1550] sm:$0xff] %vm1018, %v1720
      %v1725 = vld [vmem:[#allocation3] sm:$0xff]
      %v1726 = vpack.c.bf16 %v1725, %v1725
      %1727 = vmatprep.subr.bf16.mxu0 %v793
      %1728 = vmatpush1.bf16.msra.mxu0 %v792
      %1729 = vmatprep.subr.bf16.mxu0 %v797
      %1730 = vmatpush1.bf16.msra.mxu0 %v796
      %1731 = vmatprep.subr.bf16.mxu0 %v801
      %1732 = vmatpush1.bf16.msra.mxu0 %v800
      %1733 = vmatprep.subr.bf16.mxu0 %v805
      %1734 = vmatpush1.bf16.msra.mxu0 %v804
      %1735 = vmatprep.subr.bf16.mxu0 %v809
      %1736 = vmatpush1.bf16.msra.mxu0 %v808
      %1737 = vmatprep.subr.bf16.mxu0 %v813
      %1738 = vmatpush1.bf16.msra.mxu0 %v812
      %1739 = vmatprep.subr.bf16.mxu0 %v817
      %1740 = vmatpush1.bf16.msra.mxu0 %v816
      %1741 = vmatprep.subr.bf16.mxu0 %v821
      %1742 = vmatpush1.bf16.msra.mxu0 %v820
      %1743 = vmatprep.subr.bf16.mxu0 0
      %1744 = vmatpush1.bf16.msra.mxu0 0
      %1745 = vmatprep.subr.bf16.mxu0 0
      %1746 = vmatpush1.bf16.msra.mxu0 0
      %1747 = vmatprep.subr.bf16.mxu0 0
      %1748 = vmatpush1.bf16.msra.mxu0 0
      %1749 = vmatprep.subr.bf16.mxu0 0
      %1750 = vmatpush1.bf16.msra.mxu0 0
      %1751 = vmatprep.subr.bf16.mxu0 0
      %1752 = vmatpush1.bf16.msra.mxu0 0
      %1753 = vmatprep.subr.bf16.mxu0 0
      %1754 = vmatpush1.bf16.msra.mxu0 0
      %1755 = vmatprep.subr.bf16.mxu0 0
      %1756 = vmatpush1.bf16.msra.mxu0 0
      %1757 = vmatprep.subr.bf16.mxu0 0
      %1758 = vmatpush1.bf16.msra.mxu0 0
      %1759 = vmatprep.mubr.bf16.mxu0 0
      %1760 = vmatmul.mubr.bf16.gmra.mrb[0].mxu0 %v1726
      %v1761 = vpop.f32.mrb[0].mxu0
      %v1762 = vadd.f32 0.0, %v1761
      %v1763 = vpop.f32.mrb[0].mxu0
      %v1764 = vadd.f32 0.0, %v1763
      %v1765 = vpop.f32.mrb[0].mxu0
      %v1766 = vpop.f32.mrb[0].mxu0
      %1767 = vdwg.mxu0
      %1768 = vmatprep.subr.bf16.mxu0 %v795
      %1769 = vmatpush1.bf16.msra.mxu0 %v794
      %1770 = vmatprep.subr.bf16.mxu0 %v799
      %1771 = vmatpush1.bf16.msra.mxu0 %v798
      %1772 = vmatprep.subr.bf16.mxu0 %v803
      %1773 = vmatpush1.bf16.msra.mxu0 %v802
      %1774 = vmatprep.subr.bf16.mxu0 %v807
      %1775 = vmatpush1.bf16.msra.mxu0 %v806
      %1776 = vmatprep.subr.bf16.mxu0 %v811
      %1777 = vmatpush1.bf16.msra.mxu0 %v810
      %1778 = vmatprep.subr.bf16.mxu0 %v815
      %1779 = vmatpush1.bf16.msra.mxu0 %v814
      %1780 = vmatprep.subr.bf16.mxu0 %v819
      %1781 = vmatpush1.bf16.msra.mxu0 %v818
      %1782 = vmatprep.subr.bf16.mxu0 %v823
      %1783 = vmatpush1.bf16.msra.mxu0 %v822
      %1784 = vmatprep.subr.bf16.mxu0 0
      %1785 = vmatpush1.bf16.msra.mxu0 0
      %1786 = vmatprep.subr.bf16.mxu0 0
      %1787 = vmatpush1.bf16.msra.mxu0 0
      %1788 = vmatprep.subr.bf16.mxu0 0
      %1789 = vmatpush1.bf16.msra.mxu0 0
      %1790 = vmatprep.subr.bf16.mxu0 0
      %1791 = vmatpush1.bf16.msra.mxu0 0
      %1792 = vmatprep.subr.bf16.mxu0 0
      %1793 = vmatpush1.bf16.msra.mxu0 0
      %1794 = vmatprep.subr.bf16.mxu0 0
      %1795 = vmatpush1.bf16.msra.mxu0 0
      %1796 = vmatprep.subr.bf16.mxu0 0
      %1797 = vmatpush1.bf16.msra.mxu0 0
      %1798 = vmatprep.subr.bf16.mxu0 0
      %1799 = vmatpush1.bf16.msra.mxu0 0
      %1800 = vmatprep.mubr.bf16.mxu0 0
      %1801 = vmatmul.mubr.bf16.gmra.mrb[0].mxu0 %v1726
      %v1802 = vpop.f32.mrb[0].mxu0
      %v1803 = vadd.f32 0.0, %v1802
      %v1804 = vpop.f32.mrb[0].mxu0
      %v1805 = vadd.f32 0.0, %v1804
      %v1806 = vpop.f32.mrb[0].mxu0
      %v1807 = vpop.f32.mrb[0].mxu0
      %1808 = vdwg.mxu0
      %v1809 = vld [vmem:[%s1293] sm:$0xff]
      %v1810 = vld [vmem:[%s1293 + $0x8] sm:$0xff]
      %v1811 = vadd.f32 %v1809, %v1762
      %v1812 = vadd.f32 %v1810, %v1764
      %v1813 = vld [vmem:[%s1288 + $0x10] sm:$0xff]
      %v1814 = vld [vmem:[%s1288 + $0x18] sm:$0xff]
      %v1815 = vadd.f32 %v1813, %v1803
      %v1816 = vadd.f32 %v1814, %v1805
      %v1817 = vxor.u32 %v1811, 2147483648
      %v1818 = vxor.u32 %v1812, 2147483648
      %v1819 = vmul.f32 %v1817, 1.442695
      %v1820 = vpow.pop %v1819
      %v1821 = vmul.f32 %v1818, 1.442695
      %v1822 = vpow.pop %v1821
      %v1823 = vadd.f32 %v1820, 1.0
      %v1824 = vadd.f32 %v1822, 1.0
      %v1825 = vrcp.pop %v1823
      %v1826 = vmul.f32 1.0, %v1825
      %v1827 = vrcp.pop %v1824
      %v1828 = vmul.f32 1.0, %v1827
      %v1829 = vtanh.pop %v1812
      %v1830 = vxor.u32 %v1815, 2147483648
      %v1831 = vxor.u32 %v1816, 2147483648
      %v1832 = vmul.f32 %v1830, 1.442695
      %v1833 = vpow.pop %v1832
      %v1834 = vmul.f32 %v1831, 1.442695
      %v1835 = vpow.pop %v1834
      %v1836 = vadd.f32 %v1833, 1.0
      %v1837 = vadd.f32 %v1835, 1.0
      %v1838 = vrcp.pop %v1836
      %v1839 = vmul.f32 1.0, %v1838
      %v1840 = vrcp.pop %v1837
      %v1841 = vmul.f32 1.0, %v1840
      %v1842 = vtanh.pop %v1816
      %v1843 = vld [vmem:[#allocation4] sm:$0xff]
      %1845 = vrot.lane.b32.xlu0 %v1843, 64
      %v1846 = vpop.permute.xlu0 %1845
      %v1848 = vmul.f32 %v1826, %v1846
      %1850 = vrot.lane.b32.xlu0 %v1829, 64
      %v1851 = vpop.permute.xlu0 %1850
      %v1853 = vmul.f32 %v1826, %v1851
      %1855 = vrot.lane.b32.xlu0 %v1853, 64
      %v1856 = vpop.permute.xlu0 %1855
      %v1858 = vadd.f32 %v1848, %v1856
      %v1859 = vmul.f32 %v1839, %v1843
      %1861 = vrot.lane.b32.xlu0 %v1842, 64
      %v1862 = vpop.permute.xlu0 %1861
      %v1864 = vmul.f32 %v1839, %v1862
      %1866 = vrot.lane.b32.xlu0 %v1864, 64
      %v1867 = vpop.permute.xlu0 %1866
      %v1869 = vadd.f32 %v1859, %v1867
      %v1870 = vtanh.pop %v1858
      %1872 = vrot.lane.b32.xlu0 %v1870, 64
      %v1873 = vpop.permute.xlu0 %1872
      %v1875 = vmul.f32 %v1828, %v1873
      %v1876 = vtanh.pop %v1869
      %1878 = vrot.lane.b32.xlu0 %v1876, 64
      %v1879 = vpop.permute.xlu0 %1878
      %v1881 = vmul.f32 %v1841, %v1879
      %1883 = vrot.lane.b32.xlu0 %v1858, 64
      %v1884 = vpop.permute.xlu0 %1883
      %1886 = vst.msk [vmem:[#allocation4] sm:$0xff] %vm1016, %v1884
      %1887 = vst.msk [vmem:[#allocation4] sm:$0xff] %vm1018, %v1869
      %1888 = vst.msk [vmem:[#allocation3] sm:$0xff] %vm1016, %v1875
      %1890 = vrot.lane.b32.xlu0 %v1881, 64
      %v1891 = vpop.permute.xlu0 %1890
      %1893 = vst.msk [vmem:[#allocation3] sm:$0xff] %vm1018, %v1891
      %1894 = vst.msk [vmem:[%s1377] sm:$0xff] %vm1016, %v1875
      %1895 = vst.msk [vmem:[%s1375] sm:$0xff] %vm1018, %v1891
      %v1896 = vld [vmem:[#allocation3] sm:$0xff]
      %v1897 = vpack.c.bf16 %v1896, %v1896
      %1898 = vmatprep.subr.bf16.mxu0 %v793
      %1899 = vmatpush1.bf16.msra.mxu0 %v792
      %1900 = vmatprep.subr.bf16.mxu0 %v797
      %1901 = vmatpush1.bf16.msra.mxu0 %v796
      %1902 = vmatprep.subr.bf16.mxu0 %v801
      %1903 = vmatpush1.bf16.msra.mxu0 %v800
      %1904 = vmatprep.subr.bf16.mxu0 %v805
      %1905 = vmatpush1.bf16.msra.mxu0 %v804
      %1906 = vmatprep.subr.bf16.mxu0 %v809
      %1907 = vmatpush1.bf16.msra.mxu0 %v808
      %1908 = vmatprep.subr.bf16.mxu0 %v813
      %1909 = vmatpush1.bf16.msra.mxu0 %v812
      %1910 = vmatprep.subr.bf16.mxu0 %v817
      %1911 = vmatpush1.bf16.msra.mxu0 %v816
      %1912 = vmatprep.subr.bf16.mxu0 %v821
      %1913 = vmatpush1.bf16.msra.mxu0 %v820
      %1914 = vmatprep.subr.bf16.mxu0 0
      %1915 = vmatpush1.bf16.msra.mxu0 0
      %1916 = vmatprep.subr.bf16.mxu0 0
      %1917 = vmatpush1.bf16.msra.mxu0 0
      %1918 = vmatprep.subr.bf16.mxu0 0
      %1919 = vmatpush1.bf16.msra.mxu0 0
      %1920 = vmatprep.subr.bf16.mxu0 0
      %1921 = vmatpush1.bf16.msra.mxu0 0
      %1922 = vmatprep.subr.bf16.mxu0 0
      %1923 = vmatpush1.bf16.msra.mxu0 0
      %1924 = vmatprep.subr.bf16.mxu0 0
      %1925 = vmatpush1.bf16.msra.mxu0 0
      %1926 = vmatprep.subr.bf16.mxu0 0
      %1927 = vmatpush1.bf16.msra.mxu0 0
      %1928 = vmatprep.subr.bf16.mxu0 0
      %1929 = vmatpush1.bf16.msra.mxu0 0
      %1930 = vmatprep.mubr.bf16.mxu0 0
      %1931 = vmatmul.mubr.bf16.gmra.mrb[0].mxu0 %v1897
      %v1932 = vpop.f32.mrb[0].mxu0
      %v1933 = vadd.f32 0.0, %v1932
      %v1934 = vpop.f32.mrb[0].mxu0
      %v1935 = vadd.f32 0.0, %v1934
      %v1936 = vpop.f32.mrb[0].mxu0
      %v1937 = vpop.f32.mrb[0].mxu0
      %1938 = vdwg.mxu0
      %1939 = vmatprep.subr.bf16.mxu0 %v795
      %1940 = vmatpush1.bf16.msra.mxu0 %v794
      %1941 = vmatprep.subr.bf16.mxu0 %v799
      %1942 = vmatpush1.bf16.msra.mxu0 %v798
      %1943 = vmatprep.subr.bf16.mxu0 %v803
      %1944 = vmatpush1.bf16.msra.mxu0 %v802
      %1945 = vmatprep.subr.bf16.mxu0 %v807
      %1946 = vmatpush1.bf16.msra.mxu0 %v806
      %1947 = vmatprep.subr.bf16.mxu0 %v811
      %1948 = vmatpush1.bf16.msra.mxu0 %v810
      %1949 = vmatprep.subr.bf16.mxu0 %v815
      %1950 = vmatpush1.bf16.msra.mxu0 %v814
      %1951 = vmatprep.subr.bf16.mxu0 %v819
      %1952 = vmatpush1.bf16.msra.mxu0 %v818
      %1953 = vmatprep.subr.bf16.mxu0 %v823
      %1954 = vmatpush1.bf16.msra.mxu0 %v822
      %1955 = vmatprep.subr.bf16.mxu0 0
      %1956 = vmatpush1.bf16.msra.mxu0 0
      %1957 = vmatprep.subr.bf16.mxu0 0
      %1958 = vmatpush1.bf16.msra.mxu0 0
      %1959 = vmatprep.subr.bf16.mxu0 0
      %1960 = vmatpush1.bf16.msra.mxu0 0
      %1961 = vmatprep.subr.bf16.mxu0 0
      %1962 = vmatpush1.bf16.msra.mxu0 0
      %1963 = vmatprep.subr.bf16.mxu0 0
      %1964 = vmatpush1.bf16.msra.mxu0 0
      %1965 = vmatprep.subr.bf16.mxu0 0
      %1966 = vmatpush1.bf16.msra.mxu0 0
      %1967 = vmatprep.subr.bf16.mxu0 0
      %1968 = vmatpush1.bf16.msra.mxu0 0
      %1969 = vmatprep.subr.bf16.mxu0 0
      %1970 = vmatpush1.bf16.msra.mxu0 0
      %1971 = vmatprep.mubr.bf16.mxu0 0
      %1972 = vmatmul.mubr.bf16.gmra.mrb[0].mxu0 %v1897
      %v1973 = vpop.f32.mrb[0].mxu0
      %v1974 = vadd.f32 0.0, %v1973
      %v1975 = vpop.f32.mrb[0].mxu0
      %v1976 = vadd.f32 0.0, %v1975
      %v1977 = vpop.f32.mrb[0].mxu0
      %v1978 = vpop.f32.mrb[0].mxu0
      %1979 = vdwg.mxu0
      %v1980 = vld [vmem:[%s1118] sm:$0xff]
      %v1981 = vld [vmem:[%s1118 + $0x8] sm:$0xff]
      %v1982 = vadd.f32 %v1980, %v1933
      %v1983 = vadd.f32 %v1981, %v1935
      %v1984 = vld [vmem:[%s1113 + $0x10] sm:$0xff]
      %v1985 = vld [vmem:[%s1113 + $0x18] sm:$0xff]
      %v1986 = vadd.f32 %v1984, %v1974
      %v1987 = vadd.f32 %v1985, %v1976
      %v1988 = vxor.u32 %v1982, 2147483648
      %v1989 = vxor.u32 %v1983, 2147483648
      %v1990 = vmul.f32 %v1988, 1.442695
      %v1991 = vpow.pop %v1990
      %v1992 = vmul.f32 %v1989, 1.442695
      %v1993 = vpow.pop %v1992
      %v1994 = vadd.f32 %v1991, 1.0
      %v1995 = vadd.f32 %v1993, 1.0
      %v1996 = vrcp.pop %v1994
      %v1997 = vmul.f32 1.0, %v1996
      %v1998 = vrcp.pop %v1995
      %v1999 = vmul.f32 1.0, %v1998
      %v2000 = vtanh.pop %v1983
      %v2001 = vxor.u32 %v1986, 2147483648
      %v2002 = vxor.u32 %v1987, 2147483648
      %v2003 = vmul.f32 %v2001, 1.442695
      %v2004 = vpow.pop %v2003
      %v2005 = vmul.f32 %v2002, 1.442695
      %v2006 = vpow.pop %v2005
      %v2007 = vadd.f32 %v2004, 1.0
      %v2008 = vadd.f32 %v2006, 1.0
      %v2009 = vrcp.pop %v2007
      %v2010 = vmul.f32 1.0, %v2009
      %v2011 = vrcp.pop %v2008
      %v2012 = vmul.f32 1.0, %v2011
      %v2013 = vtanh.pop %v1987
      %v2014 = vld [vmem:[#allocation4] sm:$0xff]
      %2016 = vrot.lane.b32.xlu0 %v2014, 64
      %v2017 = vpop.permute.xlu0 %2016
      %v2019 = vmul.f32 %v1997, %v2017
      %2021 = vrot.lane.b32.xlu0 %v2000, 64
      %v2022 = vpop.permute.xlu0 %2021
      %v2024 = vmul.f32 %v1997, %v2022
      %2026 = vrot.lane.b32.xlu0 %v2024, 64
      %v2027 = vpop.permute.xlu0 %2026
      %v2029 = vadd.f32 %v2019, %v2027
      %v2030 = vmul.f32 %v2010, %v2014
      %2032 = vrot.lane.b32.xlu0 %v2013, 64
      %v2033 = vpop.permute.xlu0 %2032
      %v2035 = vmul.f32 %v2010, %v2033
      %2037 = vrot.lane.b32.xlu0 %v2035, 64
      %v2038 = vpop.permute.xlu0 %2037
      %v2040 = vadd.f32 %v2030, %v2038
      %v2041 = vtanh.pop %v2029
      %2043 = vrot.lane.b32.xlu0 %v2041, 64
      %v2044 = vpop.permute.xlu0 %2043
      %v2046 = vmul.f32 %v1999, %v2044
      %v2047 = vtanh.pop %v2040
      %2049 = vrot.lane.b32.xlu0 %v2047, 64
      %v2050 = vpop.permute.xlu0 %2049
      %v2052 = vmul.f32 %v2012, %v2050
      %2054 = vrot.lane.b32.xlu0 %v2029, 64
      %v2055 = vpop.permute.xlu0 %2054
      %2057 = vst.msk [vmem:[#allocation4] sm:$0xff] %vm1016, %v2055
      %2058 = vst.msk [vmem:[#allocation4] sm:$0xff] %vm1018, %v2040
      %2059 = vst.msk [vmem:[#allocation3] sm:$0xff] %vm1016, %v2046
      %2061 = vrot.lane.b32.xlu0 %v2052, 64
      %v2062 = vpop.permute.xlu0 %2061
      %2064 = vst.msk [vmem:[#allocation3] sm:$0xff] %vm1018, %v2062
      %2065 = vst.msk [vmem:[%s1202] sm:$0xff] %vm1016, %v2046
      %2066 = vst.msk [vmem:[%s1200] sm:$0xff] %vm1018, %v2062
      %v2067 = vld [vmem:[#allocation3] sm:$0xff]
      %v2068 = vpack.c.bf16 %v2067, %v2067
      %2069 = vmatprep.subr.bf16.mxu0 %v793
      %2070 = vmatpush1.bf16.msra.mxu0 %v792
      %2071 = vmatprep.subr.bf16.mxu0 %v797
      %2072 = vmatpush1.bf16.msra.mxu0 %v796
      %2073 = vmatprep.subr.bf16.mxu0 %v801
      %2074 = vmatpush1.bf16.msra.mxu0 %v800
      %2075 = vmatprep.subr.bf16.mxu0 %v805
      %2076 = vmatpush1.bf16.msra.mxu0 %v804
      %2077 = vmatprep.subr.bf16.mxu0 %v809
      %2078 = vmatpush1.bf16.msra.mxu0 %v808
      %2079 = vmatprep.subr.bf16.mxu0 %v813
      %2080 = vmatpush1.bf16.msra.mxu0 %v812
      %2081 = vmatprep.subr.bf16.mxu0 %v817
      %2082 = vmatpush1.bf16.msra.mxu0 %v816
      %2083 = vmatprep.subr.bf16.mxu0 %v821
      %2084 = vmatpush1.bf16.msra.mxu0 %v820
      %2085 = vmatprep.subr.bf16.mxu0 0
      %2086 = vmatpush1.bf16.msra.mxu0 0
      %2087 = vmatprep.subr.bf16.mxu0 0
      %2088 = vmatpush1.bf16.msra.mxu0 0
      %2089 = vmatprep.subr.bf16.mxu0 0
      %2090 = vmatpush1.bf16.msra.mxu0 0
      %2091 = vmatprep.subr.bf16.mxu0 0
      %2092 = vmatpush1.bf16.msra.mxu0 0
      %2093 = vmatprep.subr.bf16.mxu0 0
      %2094 = vmatpush1.bf16.msra.mxu0 0
      %2095 = vmatprep.subr.bf16.mxu0 0
      %2096 = vmatpush1.bf16.msra.mxu0 0
      %2097 = vmatprep.subr.bf16.mxu0 0
      %2098 = vmatpush1.bf16.msra.mxu0 0
      %2099 = vmatprep.subr.bf16.mxu0 0
      %2100 = vmatpush1.bf16.msra.mxu0 0
      %2101 = vmatprep.mubr.bf16.mxu0 0
      %2102 = vmatmul.mubr.bf16.gmra.mrb[0].mxu0 %v2068
      %v2103 = vpop.f32.mrb[0].mxu0
      %v2104 = vadd.f32 0.0, %v2103
      %v2105 = vpop.f32.mrb[0].mxu0
      %v2106 = vadd.f32 0.0, %v2105
      %v2107 = vpop.f32.mrb[0].mxu0
      %v2108 = vpop.f32.mrb[0].mxu0
      %2109 = vdwg.mxu0
      %2110 = vmatprep.subr.bf16.mxu0 %v795
      %2111 = vmatpush1.bf16.msra.mxu0 %v794
      %2112 = vmatprep.subr.bf16.mxu0 %v799
      %2113 = vmatpush1.bf16.msra.mxu0 %v798
      %2114 = vmatprep.subr.bf16.mxu0 %v803
      %2115 = vmatpush1.bf16.msra.mxu0 %v802
      %2116 = vmatprep.subr.bf16.mxu0 %v807
      %2117 = vmatpush1.bf16.msra.mxu0 %v806
      %2118 = vmatprep.subr.bf16.mxu0 %v811
      %2119 = vmatpush1.bf16.msra.mxu0 %v810
      %2120 = vmatprep.subr.bf16.mxu0 %v815
      %2121 = vmatpush1.bf16.msra.mxu0 %v814
      %2122 = vmatprep.subr.bf16.mxu0 %v819
      %2123 = vmatpush1.bf16.msra.mxu0 %v818
      %2124 = vmatprep.subr.bf16.mxu0 %v823
      %2125 = vmatpush1.bf16.msra.mxu0 %v822
      %2126 = vmatprep.subr.bf16.mxu0 0
      %2127 = vmatpush1.bf16.msra.mxu0 0
      %2128 = vmatprep.subr.bf16.mxu0 0
      %2129 = vmatpush1.bf16.msra.mxu0 0
      %2130 = vmatprep.subr.bf16.mxu0 0
      %2131 = vmatpush1.bf16.msra.mxu0 0
      %2132 = vmatprep.subr.bf16.mxu0 0
      %2133 = vmatpush1.bf16.msra.mxu0 0
      %2134 = vmatprep.subr.bf16.mxu0 0
      %2135 = vmatpush1.bf16.msra.mxu0 0
      %2136 = vmatprep.subr.bf16.mxu0 0
      %2137 = vmatpush1.bf16.msra.mxu0 0
      %2138 = vmatprep.subr.bf16.mxu0 0
      %2139 = vmatpush1.bf16.msra.mxu0 0
      %2140 = vmatprep.subr.bf16.mxu0 0
      %2141 = vmatpush1.bf16.msra.mxu0 0
      %2142 = vmatprep.mubr.bf16.mxu0 0
      %2143 = vmatmul.mubr.bf16.gmra.mrb[0].mxu0 %v2068
      %v2144 = vpop.f32.mrb[0].mxu0
      %v2145 = vadd.f32 0.0, %v2144
      %v2146 = vpop.f32.mrb[0].mxu0
      %v2147 = vadd.f32 0.0, %v2146
      %v2148 = vpop.f32.mrb[0].mxu0
      %v2149 = vpop.f32.mrb[0].mxu0
      %2150 = vdwg.mxu0
      %v2151 = vld [vmem:[%s942] sm:$0xff]
      %v2152 = vld [vmem:[%s942 + $0x8] sm:$0xff]
      %v2153 = vadd.f32 %v2151, %v2104
      %v2154 = vadd.f32 %v2152, %v2106
      %v2155 = vld [vmem:[#allocation2 + $0x10] sm:$0xff]
      %v2156 = vld [vmem:[#allocation2 + $0x18] sm:$0xff]
      %v2157 = vadd.f32 %v2155, %v2145
      %v2158 = vadd.f32 %v2156, %v2147
      %v2159 = vxor.u32 %v2153, 2147483648
      %v2160 = vxor.u32 %v2154, 2147483648
      %v2161 = vmul.f32 %v2159, 1.442695
      %v2162 = vpow.pop %v2161
      %v2163 = vmul.f32 %v2160, 1.442695
      %v2164 = vpow.pop %v2163
      %v2165 = vadd.f32 %v2162, 1.0
      %v2166 = vadd.f32 %v2164, 1.0
      %v2167 = vrcp.pop %v2165
      %v2168 = vmul.f32 1.0, %v2167
      %v2169 = vrcp.pop %v2166
      %v2170 = vmul.f32 1.0, %v2169
      %v2171 = vtanh.pop %v2154
      %v2172 = vxor.u32 %v2157, 2147483648
      %v2173 = vxor.u32 %v2158, 2147483648
      %v2174 = vmul.f32 %v2172, 1.442695
      %v2175 = vpow.pop %v2174
      %v2176 = vmul.f32 %v2173, 1.442695
      %v2177 = vpow.pop %v2176
      %v2178 = vadd.f32 %v2175, 1.0
      %v2179 = vadd.f32 %v2177, 1.0
      %v2180 = vrcp.pop %v2178
      %v2181 = vmul.f32 1.0, %v2180
      %v2182 = vrcp.pop %v2179
      %v2183 = vmul.f32 1.0, %v2182
      %v2184 = vtanh.pop %v2158
      %v2185 = vld [vmem:[#allocation4] sm:$0xff]
      %2187 = vrot.lane.b32.xlu0 %v2185, 64
      %v2188 = vpop.permute.xlu0 %2187
      %v2190 = vmul.f32 %v2168, %v2188
      %2192 = vrot.lane.b32.xlu0 %v2171, 64
      %v2193 = vpop.permute.xlu0 %2192
      %v2195 = vmul.f32 %v2168, %v2193
      %2197 = vrot.lane.b32.xlu0 %v2195, 64
      %v2198 = vpop.permute.xlu0 %2197
      %v2200 = vadd.f32 %v2190, %v2198
      %v2201 = vmul.f32 %v2181, %v2185
      %2203 = vrot.lane.b32.xlu0 %v2184, 64
      %v2204 = vpop.permute.xlu0 %2203
      %v2206 = vmul.f32 %v2181, %v2204
      %2208 = vrot.lane.b32.xlu0 %v2206, 64
      %v2209 = vpop.permute.xlu0 %2208
      %v2211 = vadd.f32 %v2201, %v2209
      %v2212 = vtanh.pop %v2200
      %2214 = vrot.lane.b32.xlu0 %v2212, 64
      %v2215 = vpop.permute.xlu0 %2214
      %v2217 = vmul.f32 %v2170, %v2215
      %v2218 = vtanh.pop %v2211
      %2220 = vrot.lane.b32.xlu0 %v2218, 64
      %v2221 = vpop.permute.xlu0 %2220
      %v2223 = vmul.f32 %v2183, %v2221
      %2225 = vrot.lane.b32.xlu0 %v2200, 64
      %v2226 = vpop.permute.xlu0 %2225
      %2228 = vst.msk [vmem:[#allocation4] sm:$0xff] %vm1016, %v2226
      %2229 = vst.msk [vmem:[#allocation4] sm:$0xff] %vm1018, %v2211
      %2230 = vst.msk [vmem:[#allocation3] sm:$0xff] %vm1016, %v2217
      %2232 = vrot.lane.b32.xlu0 %v2223, 64
      %v2233 = vpop.permute.xlu0 %2232
      %2235 = vst.msk [vmem:[#allocation3] sm:$0xff] %vm1018, %v2233
      %2236 = vst.msk [vmem:[%s1027] sm:$0xff] %vm1016, %v2217
      %2237 = vst.msk [vmem:[%s254] sm:$0xff] %vm1018, %v2233
      %p2238 = scmp.lt.s32.totalorder %s15, 4
      %s2239 = scalar_select %p2238, %s15, 4
      %s2240 = smul.addr %s2239, 8
      %s2241 = smul.addr %s2240, 8
      %s2242 = scalar_lea.vmem %s4, %s2241
      // Predicated region
      $region37: #{autoencoder_forward.3} parent=35 // pred_check
        %p2243 = pneg %p137
      $region38: #{autoencoder_forward.3} parent=35 // pred_check_branch
        %2245 = sbr.rel (%p2243) target = $region40
      $region39: #{autoencoder_forward.3} parent=35 // pred_region
        _
      $region40: #{autoencoder_forward.3} parent=35 // pred_fallthru
        _
    $region36: #{autoencoder_forward.3} parent=5 // pred_fallthru
      _
    %p2246 = scmp.le.s32.totalorder 2, %s10
    // Predicated region
    $region41: #{autoencoder_forward.3} parent=5 // pred_check
      %p2247 = pneg %p2246
    $region42: #{autoencoder_forward.3} parent=5 // pred_check_branch
      %2249 = sbr.rel (%p2247) target = $region44
    $region43: #{autoencoder_forward.3} parent=5 // pred_region
      %s2250 = ssub.s32 %s10, 2
      // Predicated region
      $region45: #{autoencoder_forward.3} parent=43 // pred_check
        %p2251 = pneg %p143
      $region46: #{autoencoder_forward.3} parent=43 // pred_check_branch
        %2253 = sbr.rel (%p2251) target = $region48
      $region47: #{autoencoder_forward.3} parent=43 // pred_region
        %p2254 = scmp.lt.s32.totalorder %s16, 4
        %s2255 = scalar_select %p2254, %s16, 4
        %s2256 = smul.addr %s2255, 8
        %s2257 = smul.addr %s2256, 8
        %s2258 = scalar_lea.vmem %s4, %s2257
      $region48: #{autoencoder_forward.3} parent=43 // pred_fallthru
        _
    $region44: #{autoencoder_forward.3} parent=5 // pred_fallthru
      _
  $region6: #{autoencoder_forward.3} parent=0 // loop_footer
    %s14 = sadd.s32 1, %s10
  $region7: #{autoencoder_forward.3} parent=0 // loop_footer_branch
    %9 = sbr.rel target = $region3
  $region8: #{autoencoder_forward.3} parent=0 // loop_exit
    _

// kernel: autoencoder_forward.2
$region0: #{autoencoder_forward.2}
  #allocation0 [shape = 'u32[]', space=smem, size = 0x4, offset = 0x4, fixed_abs, tag = 'smem constant byte address 0x4 - core index']
  #allocation1 [shape = 'u32[144,128]{1,0:T(1,128)}', space=vmem, size = 0x12000, scoped, tag = 'internal scratch']
  #allocation2 [shape = 'f32[8,8,512]{2,1,0:T(8,128)}', space=vmem, size = 0x20000, scoped, tag = 'scratch operand']
  #allocation3 [shape = 'f32[8,128]{1,0:T(8,128)}', space=vmem, size = 0x1000, scoped, tag = 'scratch operand']
  #allocation4 [shape = 'f32[8,128]{1,0:T(8,128)}', space=vmem, size = 0x1000, scoped, tag = 'scratch operand']
  %s0 = inlined_call_operand.vmem [shape: f32[8,8,128], index: 0, kind: input, shape index: {}]
  %s1 = inlined_call_operand.hbm [shape: bf16[5,128,512], index: 1, kind: input, shape index: {}]
  %s2 = inlined_call_operand.hbm [shape: bf16[5,128,512], index: 2, kind: input, shape index: {}]
  %s3 = inlined_call_operand.vmem [shape: f32[5,1,512], index: 3, kind: input, shape index: {}]
  %s4 = inlined_call_operand.vmem [shape: f32[5,8,8,128], index: 4, kind: output, shape index: {}]
  %s5 = sld [smem:[#allocation0]]
  $region57: #{autoencoder_forward.2} parent=0
    _
  %s7 = ssub.s32 1, %s5
  %s8 = scalar_select 0, %s7, %s5
  $region1: #{autoencoder_forward.2} parent=0
    #allocation5 [shape = 'u8[262144]{0}', space=vmem, size = 0x40000, scoped, tag = 'input window, operand 1']
    #allocation6 [shape = 's32[2]{0}', space=sflag, size = 0x8, scoped, tag = 'scoped memory for autoencoder_forward.2']
    #allocation7 [shape = 'u8[262144]{0}', space=vmem, size = 0x40000, scoped, tag = 'input window, operand 2']
    #allocation8 [shape = 's32[2]{0}', space=sflag, size = 0x8, scoped, tag = 'scoped memory for autoencoder_forward.2']
    %9 = vsyncpa [#allocation6], 0
    %s10 = scalar_lea.sflag [#allocation6], 1
    %11 = vsyncpa %s10, 0
    %12 = vsyncpa [#allocation8], 0
    %s13 = scalar_lea.sflag [#allocation8], 1
    %14 = vsyncpa %s13, 0
    loop: start=0, step=1, limit=7
    $region2: #{autoencoder_forward.2} parent=1 // loop_pre_header
      _
    $region3: #{autoencoder_forward.2} parent=1 // loop_header
      %s16 = sphi 0, %s20
      %p17 = scmp.ge.s32.totalorder %s16, 7
      %s24 = sphi 0, %s24
      %s26 = sphi 0, %s24
      %s27 = sphi 0, %s26
      %s41 = sphi 0, %s27
      %s47 = sphi 0, %s49
      %s50 = sphi 0, %s47
      %s51 = sphi 0, %s50
      %s67 = sphi 0, %s51
      %s73 = sphi 0, %s75
      %s76 = sphi 0, %s73
      %s77 = sphi 0, %s76
      %s93 = sphi 0, %s77
      %s99 = sphi 0, %s101
      %s102 = sphi 0, %s99
      %s103 = sphi 0, %s102
      %s119 = sphi 0, %s103
      %s125 = sphi 0, %s127
      %s128 = sphi 0, %s125
      %s129 = sphi 0, %s128
      %s145 = sphi 0, %s129
    $region4: #{autoencoder_forward.2} parent=1 // loop_header_branch
      %19 = sbr.rel (%p17) target = $region8
    $region5: #{autoencoder_forward.2} parent=1 // loop_body
      %s21 = ssub.s32 %s16, 1
      %s22 = ssub.s32 %s16, 2
      %s23 = sadd.s32 %s16, 1
      %s25 = sadd.s32 %s24, 1
      %p28 = scmp.eq.s32.totalorder %s16, 4
      %p29 = scmp.ne.s32.totalorder %s24, %s26
      %p30 = scmp.eq.s32.totalorder %s16, 0
      %p31 = por %p29, %p30
      %p32 = scmp.ne.s32.totalorder %s24, %s26
      %p33 = scmp.eq.s32.totalorder %s21, 4
      %p34 = por %p32, %p33
      %p35 = scmp.ne.s32.totalorder %s26, %s27
      %p36 = scmp.eq.s32.totalorder %s21, 0
      %p37 = por %p35, %p36
      %p38 = scmp.ne.s32.totalorder %s26, %s27
      %p39 = scmp.eq.s32.totalorder %s22, 4
      %p40 = por %p38, %p39
      %p42 = scmp.ne.s32.totalorder %s27, %s41
      %p43 = scmp.eq.s32.totalorder %s22, 0
      %p44 = por %p42, %p43
      %s45 = ssub.s32 %s16, %s23
      %p46 = scmp.eq.s32.totalorder %s45, 0
      %s48 = sadd.s32 %s47, 1
      %s49 = scalar_select %p46, %s47, %s48
      %p52 = pneg %p46
      %p53 = scmp.eq.s32.totalorder %s16, 4
      %p54 = por %p52, %p53
      %p55 = scmp.ne.s32.totalorder %s47, %s50
      %p56 = scmp.eq.s32.totalorder %s16, 0
      %p57 = por %p55, %p56
      %p58 = scmp.ne.s32.totalorder %s47, %s50
      %p59 = scmp.eq.s32.totalorder %s21, 4
      %p60 = por %p58, %p59
      %p61 = scmp.ne.s32.totalorder %s50, %s51
      %p62 = scmp.eq.s32.totalorder %s21, 0
      %p63 = por %p61, %p62
      %p64 = scmp.ne.s32.totalorder %s50, %s51
      %p65 = scmp.eq.s32.totalorder %s22, 4
      %p66 = por %p64, %p65
      %p68 = scmp.ne.s32.totalorder %s51, %s67
      %p69 = scmp.eq.s32.totalorder %s22, 0
      %p70 = por %p68, %p69
      %s71 = ssub.s32 %s16, %s23
      %p72 = scmp.eq.s32.totalorder %s71, 0
      %s74 = sadd.s32 %s73, 1
      %s75 = scalar_select %p72, %s73, %s74
      %p78 = pneg %p72
      %p79 = scmp.eq.s32.totalorder %s16, 4
      %p80 = por %p78, %p79
      %p81 = scmp.ne.s32.totalorder %s73, %s76
      %p82 = scmp.eq.s32.totalorder %s16, 0
      %p83 = por %p81, %p82
      %p84 = scmp.ne.s32.totalorder %s73, %s76
      %p85 = scmp.eq.s32.totalorder %s21, 4
      %p86 = por %p84, %p85
      %p87 = scmp.ne.s32.totalorder %s76, %s77
      %p88 = scmp.eq.s32.totalorder %s21, 0
      %p89 = por %p87, %p88
      %p90 = scmp.ne.s32.totalorder %s76, %s77
      %p91 = scmp.eq.s32.totalorder %s22, 4
      %p92 = por %p90, %p91
      %p94 = scmp.ne.s32.totalorder %s77, %s93
      %p95 = scmp.eq.s32.totalorder %s22, 0
      %p96 = por %p94, %p95
      %s97 = ssub.s32 %s16, %s23
      %p98 = scmp.eq.s32.totalorder %s97, 0
      %s100 = sadd.s32 %s99, 1
      %s101 = scalar_select %p98, %s99, %s100
      %p104 = pneg %p98
      %p105 = scmp.eq.s32.totalorder %s16, 4
      %p106 = por %p104, %p105
      %p107 = scmp.ne.s32.totalorder %s99, %s102
      %p108 = scmp.eq.s32.totalorder %s16, 0
      %p109 = por %p107, %p108
      %p110 = scmp.ne.s32.totalorder %s99, %s102
      %p111 = scmp.eq.s32.totalorder %s21, 4
      %p112 = por %p110, %p111
      %p113 = scmp.ne.s32.totalorder %s102, %s103
      %p114 = scmp.eq.s32.totalorder %s21, 0
      %p115 = por %p113, %p114
      %p116 = scmp.ne.s32.totalorder %s102, %s103
      %p117 = scmp.eq.s32.totalorder %s22, 4
      %p118 = por %p116, %p117
      %p120 = scmp.ne.s32.totalorder %s103, %s119
      %p121 = scmp.eq.s32.totalorder %s22, 0
      %p122 = por %p120, %p121
      %s123 = ssub.s32 %s16, %s23
      %p124 = scmp.eq.s32.totalorder %s123, 0
      %s126 = sadd.s32 %s125, 1
      %s127 = scalar_select %p124, %s125, %s126
      %p130 = pneg %p124
      %p131 = scmp.eq.s32.totalorder %s16, 4
      %p132 = por %p130, %p131
      %p133 = scmp.ne.s32.totalorder %s125, %s128
      %p134 = scmp.eq.s32.totalorder %s16, 0
      %p135 = por %p133, %p134
      %p136 = scmp.ne.s32.totalorder %s125, %s128
      %p137 = scmp.eq.s32.totalorder %s21, 4
      %p138 = por %p136, %p137
      %p139 = scmp.ne.s32.totalorder %s128, %s129
      %p140 = scmp.eq.s32.totalorder %s21, 0
      %p141 = por %p139, %p140
      %p142 = scmp.ne.s32.totalorder %s128, %s129
      %p143 = scmp.eq.s32.totalorder %s22, 4
      %p144 = por %p142, %p143
      %p146 = scmp.ne.s32.totalorder %s129, %s145
      %p147 = scmp.eq.s32.totalorder %s22, 0
      %p148 = por %p146, %p147
      %p149 = scmp.le.s32.totalorder 1, %s16
      %p150 = scmp.lt.s32.totalorder %s16, 6
      %p151 = pnand %p149, %p150
      %p152 = pneg %p151
      // Predicated region
      $region9: #{autoencoder_forward.2} parent=5 // pred_check
        _
      $region10: #{autoencoder_forward.2} parent=5 // pred_check_branch
        %154 = sbr.rel (%p151) target = $region12
      $region11: #{autoencoder_forward.2} parent=5 // pred_region
        %s155 = ssub.s32 %s16, 1
        // Predicated region
        $region13: #{autoencoder_forward.2} parent=11 // pred_check
          %p156 = pneg %p37
        $region14: #{autoencoder_forward.2} parent=11 // pred_check_branch
          %158 = sbr.rel (%p156) target = $region16
        $region15: #{autoencoder_forward.2} parent=11 // pred_region
          _
        $region16: #{autoencoder_forward.2} parent=11 // pred_fallthru
          _
      $region12: #{autoencoder_forward.2} parent=5 // pred_fallthru
        _
      %p159 = scmp.lt.s32.totalorder %s16, 5
      // Predicated region
      $region17: #{autoencoder_forward.2} parent=5 // pred_check
        %p160 = pneg %p159
      $region18: #{autoencoder_forward.2} parent=5 // pred_check_branch
        %162 = sbr.rel (%p160) target = $region20
      $region19: #{autoencoder_forward.2} parent=5 // pred_region
        // Predicated region
        $region21: #{autoencoder_forward.2} parent=19 // pred_check
          %p163 = pneg %p57
        $region22: #{autoencoder_forward.2} parent=19 // pred_check_branch
          %165 = sbr.rel (%p163) target = $region24
        $region23: #{autoencoder_forward.2} parent=19 // pred_region
          %s166 = sand.u32 %s47, 1
          %s167 = scalar_lea.sflag [#allocation6], %s166
          %s168 = sand.u32 %s47, 1
          %s169 = smul.addr %s168, 256
          %s170 = scalar_lea.vmem [#allocation5], %s169
          %s172 = ssub.s32 4096, 4096
          %173 = vsyncadd %s167, %s172
          %s174 = smul.addr %s16, 64
          %s175 = smul.addr %s174, 64
          %s176 = scalar_lea.hbm %s1, %s175
          %s177 = sshll.u32 %s170, 4
          %s178 = int_to_ptr.vmem [resolvable:$true] %s177
          %183 = dma.hbm_to_vmem [thread:$0]  %s176, 4096, %s178, %s167, 256, 256, 16
        $region24: #{autoencoder_forward.2} parent=19 // pred_fallthru
          _
        // Predicated region
        $region25: #{autoencoder_forward.2} parent=19 // pred_check
          %p184 = pneg %p83
        $region26: #{autoencoder_forward.2} parent=19 // pred_check_branch
          %186 = sbr.rel (%p184) target = $region28
        $region27: #{autoencoder_forward.2} parent=19 // pred_region
          %s187 = sand.u32 %s73, 1
          %s188 = scalar_lea.sflag [#allocation8], %s187
          %s189 = sand.u32 %s73, 1
          %s190 = smul.addr %s189, 256
          %s191 = scalar_lea.vmem [#allocation7], %s190
          %s193 = ssub.s32 4096, 4096
          %194 = vsyncadd %s188, %s193
          %s195 = smul.addr %s16, 64
          %s196 = smul.addr %s195, 64
          %s197 = scalar_lea.hbm %s2, %s196
          %s198 = sshll.u32 %s191, 4
          %s199 = int_to_ptr.vmem [resolvable:$true] %s198
          %204 = dma.hbm_to_vmem [thread:$0]  %s197, 4096, %s199, %s188, 256, 256, 16
        $region28: #{autoencoder_forward.2} parent=19 // pred_fallthru
          _
        // Predicated region
        $region29: #{autoencoder_forward.2} parent=19 // pred_check
          %p205 = pneg %p109
        $region30: #{autoencoder_forward.2} parent=19 // pred_check_branch
          %207 = sbr.rel (%p205) target = $region32
        $region31: #{autoencoder_forward.2} parent=19 // pred_region
          %p208 = scmp.lt.s32.totalorder %s16, 4
          %s209 = scalar_select %p208, %s16, 4
          %s210 = smul.addr %s209, 4
          %s211 = scalar_lea.vmem %s3, %s210
        $region32: #{autoencoder_forward.2} parent=19 // pred_fallthru
          _
      $region20: #{autoencoder_forward.2} parent=5 // pred_fallthru
        _
      %p212 = scmp.le.s32.totalorder 1, %s16
      %p213 = scmp.lt.s32.totalorder %s16, 6
      %p214 = pnand %p212, %p213
      %p215 = pneg %p214
      // Predicated region
      $region33: #{autoencoder_forward.2} parent=5 // pred_check
        _
      $region34: #{autoencoder_forward.2} parent=5 // pred_check_branch
        %217 = sbr.rel (%p214) target = $region36
      $region35: #{autoencoder_forward.2} parent=5 // pred_region
        %s218 = ssub.s32 %s16, 1
        %s219 = sand.u32 %s50, 1
        %s220 = scalar_lea.sflag [#allocation6], %s219
        %s221 = sand.u32 %s50, 1
        %s222 = smul.addr %s221, 256
        %s223 = scalar_lea.vmem [#allocation5], %s222
        // Predicated region
        $region37: #{autoencoder_forward.2} parent=35 // pred_check
          %p224 = pneg %p63
        $region38: #{autoencoder_forward.2} parent=35 // pred_check_branch
          %226 = sbr.rel (%p224) target = $region40
        $region39: #{autoencoder_forward.2} parent=35 // pred_region
          %227 = dma.done %s220, 4096
        $region40: #{autoencoder_forward.2} parent=35 // pred_fallthru
          _
        %s228 = sand.u32 %s76, 1
        %s229 = scalar_lea.sflag [#allocation8], %s228
        %s230 = sand.u32 %s76, 1
        %s231 = smul.addr %s230, 256
        %s232 = scalar_lea.vmem [#allocation7], %s231
        // Predicated region
        $region41: #{autoencoder_forward.2} parent=35 // pred_check
          %p233 = pneg %p89
        $region42: #{autoencoder_forward.2} parent=35 // pred_check_branch
          %235 = sbr.rel (%p233) target = $region44
        $region43: #{autoencoder_forward.2} parent=35 // pred_region
          %236 = dma.done %s229, 4096
        $region44: #{autoencoder_forward.2} parent=35 // pred_fallthru
          _
        %p237 = pneg %p37
        %p238 = pneg %p34
        %s239 = sand.u32 %s50, 1
        %s240 = scalar_lea.sflag [#allocation6], %s239
        %s241 = sand.u32 %s50, 1
        %s242 = smul.addr %s241, 256
        %s243 = scalar_lea.vmem [#allocation5], %s242
        %p244 = pneg %p63
        %p245 = pneg %p60
        %s246 = sand.u32 %s76, 1
        %s247 = scalar_lea.sflag [#allocation8], %s246
        %s248 = sand.u32 %s76, 1
        %s249 = smul.addr %s248, 256
        %s250 = scalar_lea.vmem [#allocation7], %s249
        %p251 = pneg %p89
        %p252 = pneg %p86
        %p253 = scmp.lt.s32.totalorder %s21, 4
        %s254 = scalar_select %p253, %s21, 4
        %s255 = smul.addr %s254, 4
        %s256 = scalar_lea.vmem %s3, %s255
        %p257 = pneg %p115
        %p258 = pneg %p112
        %p259 = pneg %p141
        %p260 = pneg %p138
        %p261 = scmp.lt.s32.totalorder %s21, 4
        %s262 = scalar_select %p261, %s21, 4
        %s263 = smul.addr %s262, 8
        %s264 = smul.addr %s263, 8
        %s265 = scalar_lea.vmem %s4, %s264
        %p266 = scmp.lt.s32.totalorder %s21, 4
        %s267 = scalar_select %p266, %s21, 4
        %s268 = smul.addr %s267, 4
        %s269 = scalar_lea.vmem %s3, %s268
        %p270 = scmp.lt.s32.totalorder %s21, 4
        %s271 = scalar_select %p270, %s21, 4
        %s272 = smul.addr %s271, 8
        %s273 = smul.addr %s272, 8
        %s274 = scalar_lea.vmem %s4, %s273
        %v276 = vld [vmem:[%s0] sm:$0xff]
        %v277 = vld [vmem:[%s0 + $0x8] sm:$0xff]
        %v278 = vld [vmem:[%s0 + $0x10] sm:$0xff]
        %v279 = vld [vmem:[%s0 + $0x18] sm:$0xff]
        %v280 = vld [vmem:[%s0 + $0x20] sm:$0xff]
        %v281 = vld [vmem:[%s0 + $0x28] sm:$0xff]
        %v282 = vld [vmem:[%s0 + $0x30] sm:$0xff]
        %v283 = vld [vmem:[%s0 + $0x38] sm:$0xff]
        %v284 = vpack.c.bf16 %v277, %v276
        %v285 = vpack.c.bf16 %v279, %v278
        %v286 = vpack.c.bf16 %v281, %v280
        %v287 = vpack.c.bf16 %v283, %v282
        %v288 = vld [vmem:[%s223] sm:$0xff]
        %v289 = vld [vmem:[%s223 + $0x8] sm:$0xff]
        %v290 = vld [vmem:[%s223 + $0x10] sm:$0xff]
        %v291 = vld [vmem:[%s223 + $0x18] sm:$0xff]
        %v292 = vld [vmem:[%s223 + $0x20] sm:$0xff]
        %v293 = vld [vmem:[%s223 + $0x28] sm:$0xff]
        %v294 = vld [vmem:[%s223 + $0x30] sm:$0xff]
        %v295 = vld [vmem:[%s223 + $0x38] sm:$0xff]
        %v296 = vld [vmem:[%s223 + $0x40] sm:$0xff]
        %v297 = vld [vmem:[%s223 + $0x48] sm:$0xff]
        %v298 = vld [vmem:[%s223 + $0x50] sm:$0xff]
        %v299 = vld [vmem:[%s223 + $0x58] sm:$0xff]
        %v300 = vld [vmem:[%s223 + $0x60] sm:$0xff]
        %v301 = vld [vmem:[%s223 + $0x68] sm:$0xff]
        %v302 = vld [vmem:[%s223 + $0x70] sm:$0xff]
        %v303 = vld [vmem:[%s223 + $0x78] sm:$0xff]
        %v304 = vld [vmem:[%s223 + $0x80] sm:$0xff]
        %v305 = vld [vmem:[%s223 + $0x88] sm:$0xff]
        %v306 = vld [vmem:[%s223 + $0x90] sm:$0xff]
        %v307 = vld [vmem:[%s223 + $0x98] sm:$0xff]
        %v308 = vld [vmem:[%s223 + $0xa0] sm:$0xff]
        %v309 = vld [vmem:[%s223 + $0xa8] sm:$0xff]
        %v310 = vld [vmem:[%s223 + $0xb0] sm:$0xff]
        %v311 = vld [vmem:[%s223 + $0xb8] sm:$0xff]
        %v312 = vld [vmem:[%s223 + $0xc0] sm:$0xff]
        %v313 = vld [vmem:[%s223 + $0xc8] sm:$0xff]
        %v314 = vld [vmem:[%s223 + $0xd0] sm:$0xff]
        %v315 = vld [vmem:[%s223 + $0xd8] sm:$0xff]
        %v316 = vld [vmem:[%s223 + $0xe0] sm:$0xff]
        %v317 = vld [vmem:[%s223 + $0xe8] sm:$0xff]
        %v318 = vld [vmem:[%s223 + $0xf0] sm:$0xff]
        %v319 = vld [vmem:[%s223 + $0xf8] sm:$0xff]
        %v320 = vld [vmem:[%s269] sm:$0xf]
        %v322 = vlaneseq
        %v323 = vshrl.u32 %v322, 7
        %v324 = vsub.s32 0, %v323
        %v325 = vrot.slane %v320, %v324
        %v326 = vlaneseq
        %v327 = vshrl.u32 %v326, 7
        %v328 = vsub.s32 1, %v327
        %v329 = vrot.slane %v320, %v328
        %v330 = vlaneseq
        %v331 = vshrl.u32 %v330, 7
        %v332 = vsub.s32 2, %v331
        %v333 = vrot.slane %v320, %v332
        %v334 = vlaneseq
        %v335 = vshrl.u32 %v334, 7
        %v336 = vsub.s32 3, %v335
        %v337 = vrot.slane %v320, %v336
        %v374 = vunpack.c.l.b16 %v288
        %v375 = vunpack.c.h.b16 %v288
        %v376 = vunpack.c.l.b16 %v289
        %v377 = vunpack.c.h.b16 %v289
        %v378 = vunpack.c.l.b16 %v290
        %v379 = vunpack.c.h.b16 %v290
        %v380 = vunpack.c.l.b16 %v291
        %v381 = vunpack.c.h.b16 %v291
        %v382 = vunpack.c.l.b16 %v292
        %v383 = vunpack.c.h.b16 %v292
        %v384 = vunpack.c.l.b16 %v293
        %v385 = vunpack.c.h.b16 %v293
        %v386 = vunpack.c.l.b16 %v294
        %v387 = vunpack.c.h.b16 %v294
        %v388 = vunpack.c.l.b16 %v295
        %v389 = vunpack.c.h.b16 %v295
        %v390 = vunpack.c.l.b16 %v296
        %v391 = vunpack.c.h.b16 %v296
        %v392 = vunpack.c.l.b16 %v297
        %v393 = vunpack.c.h.b16 %v297
        %v394 = vunpack.c.l.b16 %v298
        %v395 = vunpack.c.h.b16 %v298
        %v396 = vunpack.c.l.b16 %v299
        %v397 = vunpack.c.h.b16 %v299
        %v398 = vunpack.c.l.b16 %v300
        %v399 = vunpack.c.h.b16 %v300
        %v400 = vunpack.c.l.b16 %v301
        %v401 = vunpack.c.h.b16 %v301
        %v402 = vunpack.c.l.b16 %v302
        %v403 = vunpack.c.h.b16 %v302
        %v404 = vunpack.c.l.b16 %v303
        %v405 = vunpack.c.h.b16 %v303
        %v406 = vunpack.c.l.b16 %v304
        %v407 = vunpack.c.h.b16 %v304
        %v408 = vunpack.c.l.b16 %v305
        %v409 = vunpack.c.h.b16 %v305
        %v410 = vunpack.c.l.b16 %v306
        %v411 = vunpack.c.h.b16 %v306
        %v412 = vunpack.c.l.b16 %v307
        %v413 = vunpack.c.h.b16 %v307
        %v414 = vunpack.c.l.b16 %v308
        %v415 = vunpack.c.h.b16 %v308
        %v416 = vunpack.c.l.b16 %v309
        %v417 = vunpack.c.h.b16 %v309
        %v418 = vunpack.c.l.b16 %v310
        %v419 = vunpack.c.h.b16 %v310
        %v420 = vunpack.c.l.b16 %v311
        %v421 = vunpack.c.h.b16 %v311
        %v422 = vunpack.c.l.b16 %v312
        %v423 = vunpack.c.h.b16 %v312
        %v424 = vunpack.c.l.b16 %v313
        %v425 = vunpack.c.h.b16 %v313
        %v426 = vunpack.c.l.b16 %v314
        %v427 = vunpack.c.h.b16 %v314
        %v428 = vunpack.c.l.b16 %v315
        %v429 = vunpack.c.h.b16 %v315
        %v430 = vunpack.c.l.b16 %v316
        %v431 = vunpack.c.h.b16 %v316
        %v432 = vunpack.c.l.b16 %v317
        %v433 = vunpack.c.h.b16 %v317
        %v434 = vunpack.c.l.b16 %v318
        %v435 = vunpack.c.h.b16 %v318
        %v436 = vunpack.c.l.b16 %v319
        %v437 = vunpack.c.h.b16 %v319
        %v438 = vpack.c.b16 %v378, %v374
        %v439 = vpack.c.b16 %v379, %v375
        %v440 = vpack.c.b16 %v380, %v376
        %v441 = vpack.c.b16 %v381, %v377
        %v442 = vpack.c.b16 %v386, %v382
        %v443 = vpack.c.b16 %v387, %v383
        %v444 = vpack.c.b16 %v388, %v384
        %v445 = vpack.c.b16 %v389, %v385
        %v446 = vpack.c.b16 %v394, %v390
        %v447 = vpack.c.b16 %v395, %v391
        %v448 = vpack.c.b16 %v396, %v392
        %v449 = vpack.c.b16 %v397, %v393
        %v450 = vpack.c.b16 %v402, %v398
        %v451 = vpack.c.b16 %v403, %v399
        %v452 = vpack.c.b16 %v404, %v400
        %v453 = vpack.c.b16 %v405, %v401
        %v454 = vpack.c.b16 %v410, %v406
        %v455 = vpack.c.b16 %v411, %v407
        %v456 = vpack.c.b16 %v412, %v408
        %v457 = vpack.c.b16 %v413, %v409
        %v458 = vpack.c.b16 %v418, %v414
        %v459 = vpack.c.b16 %v419, %v415
        %v460 = vpack.c.b16 %v420, %v416
        %v461 = vpack.c.b16 %v421, %v417
        %v462 = vpack.c.b16 %v426, %v422
        %v463 = vpack.c.b16 %v427, %v423
        %v464 = vpack.c.b16 %v428, %v424
        %v465 = vpack.c.b16 %v429, %v425
        %v466 = vpack.c.b16 %v434, %v430
        %v467 = vpack.c.b16 %v435, %v431
        %v468 = vpack.c.b16 %v436, %v432
        %v469 = vpack.c.b16 %v437, %v433
        %502 = vmatprep.subr.bf16.mxu0 %v439
        %503 = vmatpush1.bf16.msra.mxu0 %v438
        %504 = vmatprep.subr.bf16.mxu0 %v443
        %505 = vmatpush1.bf16.msra.mxu0 %v442
        %506 = vmatprep.subr.bf16.mxu0 %v447
        %507 = vmatpush1.bf16.msra.mxu0 %v446
        %508 = vmatprep.subr.bf16.mxu0 %v451
        %509 = vmatpush1.bf16.msra.mxu0 %v450
        %510 = vmatprep.subr.bf16.mxu0 %v455
        %511 = vmatpush1.bf16.msra.mxu0 %v454
        %512 = vmatprep.subr.bf16.mxu0 %v459
        %513 = vmatpush1.bf16.msra.mxu0 %v458
        %514 = vmatprep.subr.bf16.mxu0 %v463
        %515 = vmatpush1.bf16.msra.mxu0 %v462
        %516 = vmatprep.subr.bf16.mxu0 %v467
        %517 = vmatpush1.bf16.msra.mxu0 %v466
        %518 = vmatprep.subr.bf16.mxu0 0
        %519 = vmatpush1.bf16.msra.mxu0 0
        %520 = vmatprep.subr.bf16.mxu0 0
        %521 = vmatpush1.bf16.msra.mxu0 0
        %522 = vmatprep.subr.bf16.mxu0 0
        %523 = vmatpush1.bf16.msra.mxu0 0
        %524 = vmatprep.subr.bf16.mxu0 0
        %525 = vmatpush1.bf16.msra.mxu0 0
        %526 = vmatprep.subr.bf16.mxu0 0
        %527 = vmatpush1.bf16.msra.mxu0 0
        %528 = vmatprep.subr.bf16.mxu0 0
        %529 = vmatpush1.bf16.msra.mxu0 0
        %530 = vmatprep.subr.bf16.mxu0 0
        %531 = vmatpush1.bf16.msra.mxu0 0
        %532 = vmatprep.subr.bf16.mxu0 0
        %533 = vmatpush1.bf16.msra.mxu0 0
        %534 = vmatprep.mubr.bf16.mxu0 0
        %535 = vmatmul.mubr.bf16.gmra.mrb[0].mxu0 %v284
        %v536 = vpop.f32.mrb[0].mxu0
        %v537 = vadd.f32 %v325, %v536
        %v538 = vpop.f32.mrb[0].mxu0
        %v539 = vadd.f32 %v329, %v538
        %v540 = vpop.f32.mrb[0].mxu0
        %v541 = vadd.f32 %v325, %v540
        %v542 = vpop.f32.mrb[0].mxu0
        %v543 = vadd.f32 %v329, %v542
        %544 = vmatprep.mubr.bf16.mxu0 0
        %545 = vmatmul.mubr.bf16.gmra.mrb[0].mxu0 %v285
        %v546 = vpop.f32.mrb[0].mxu0
        %v547 = vadd.f32 %v325, %v546
        %v548 = vpop.f32.mrb[0].mxu0
        %v549 = vadd.f32 %v329, %v548
        %v550 = vpop.f32.mrb[0].mxu0
        %v551 = vadd.f32 %v325, %v550
        %v552 = vpop.f32.mrb[0].mxu0
        %v553 = vadd.f32 %v329, %v552
        %554 = vmatprep.mubr.bf16.mxu0 0
        %555 = vmatmul.mubr.bf16.gmra.mrb[0].mxu0 %v286
        %v556 = vpop.f32.mrb[0].mxu0
        %v557 = vadd.f32 %v325, %v556
        %v558 = vpop.f32.mrb[0].mxu0
        %v559 = vadd.f32 %v329, %v558
        %v560 = vpop.f32.mrb[0].mxu0
        %v561 = vadd.f32 %v325, %v560
        %v562 = vpop.f32.mrb[0].mxu0
        %v563 = vadd.f32 %v329, %v562
        %564 = vmatprep.mubr.bf16.mxu0 0
        %565 = vmatmul.mubr.bf16.gmra.mrb[0].mxu0 %v287
        %v566 = vpop.f32.mrb[0].mxu0
        %v567 = vadd.f32 %v325, %v566
        %v568 = vpop.f32.mrb[0].mxu0
        %v569 = vadd.f32 %v329, %v568
        %v570 = vpop.f32.mrb[0].mxu0
        %v571 = vadd.f32 %v325, %v570
        %v572 = vpop.f32.mrb[0].mxu0
        %v573 = vadd.f32 %v329, %v572
        %574 = vdwg.mxu0
        %575 = vmatprep.subr.bf16.mxu0 %v441
        %576 = vmatpush1.bf16.msra.mxu0 %v440
        %577 = vmatprep.subr.bf16.mxu0 %v445
        %578 = vmatpush1.bf16.msra.mxu0 %v444
        %579 = vmatprep.subr.bf16.mxu0 %v449
        %580 = vmatpush1.bf16.msra.mxu0 %v448
        %581 = vmatprep.subr.bf16.mxu0 %v453
        %582 = vmatpush1.bf16.msra.mxu0 %v452
        %583 = vmatprep.subr.bf16.mxu0 %v457
        %584 = vmatpush1.bf16.msra.mxu0 %v456
        %585 = vmatprep.subr.bf16.mxu0 %v461
        %586 = vmatpush1.bf16.msra.mxu0 %v460
        %587 = vmatprep.subr.bf16.mxu0 %v465
        %588 = vmatpush1.bf16.msra.mxu0 %v464
        %589 = vmatprep.subr.bf16.mxu0 %v469
        %590 = vmatpush1.bf16.msra.mxu0 %v468
        %591 = vmatprep.subr.bf16.mxu0 0
        %592 = vmatpush1.bf16.msra.mxu0 0
        %593 = vmatprep.subr.bf16.mxu0 0
        %594 = vmatpush1.bf16.msra.mxu0 0
        %595 = vmatprep.subr.bf16.mxu0 0
        %596 = vmatpush1.bf16.msra.mxu0 0
        %597 = vmatprep.subr.bf16.mxu0 0
        %598 = vmatpush1.bf16.msra.mxu0 0
        %599 = vmatprep.subr.bf16.mxu0 0
        %600 = vmatpush1.bf16.msra.mxu0 0
        %601 = vmatprep.subr.bf16.mxu0 0
        %602 = vmatpush1.bf16.msra.mxu0 0
        %603 = vmatprep.subr.bf16.mxu0 0
        %604 = vmatpush1.bf16.msra.mxu0 0
        %605 = vmatprep.subr.bf16.mxu0 0
        %606 = vmatpush1.bf16.msra.mxu0 0
        %607 = vmatprep.mubr.bf16.mxu0 0
        %608 = vmatmul.mubr.bf16.gmra.mrb[0].mxu0 %v284
        %v609 = vpop.f32.mrb[0].mxu0
        %v610 = vadd.f32 %v333, %v609
        %v611 = vpop.f32.mrb[0].mxu0
        %v612 = vadd.f32 %v337, %v611
        %v613 = vpop.f32.mrb[0].mxu0
        %v614 = vadd.f32 %v333, %v613
        %v615 = vpop.f32.mrb[0].mxu0
        %v616 = vadd.f32 %v337, %v615
        %617 = vmatprep.mubr.bf16.mxu0 0
        %618 = vmatmul.mubr.bf16.gmra.mrb[0].mxu0 %v285
        %v619 = vpop.f32.mrb[0].mxu0
        %v620 = vadd.f32 %v333, %v619
        %v621 = vpop.f32.mrb[0].mxu0
        %v622 = vadd.f32 %v337, %v621
        %v623 = vpop.f32.mrb[0].mxu0
        %v624 = vadd.f32 %v333, %v623
        %v625 = vpop.f32.mrb[0].mxu0
        %v626 = vadd.f32 %v337, %v625
        %627 = vmatprep.mubr.bf16.mxu0 0
        %628 = vmatmul.mubr.bf16.gmra.mrb[0].mxu0 %v286
        %v629 = vpop.f32.mrb[0].mxu0
        %v630 = vadd.f32 %v333, %v629
        %v631 = vpop.f32.mrb[0].mxu0
        %v632 = vadd.f32 %v337, %v631
        %v633 = vpop.f32.mrb[0].mxu0
        %v634 = vadd.f32 %v333, %v633
        %v635 = vpop.f32.mrb[0].mxu0
        %v636 = vadd.f32 %v337, %v635
        %637 = vmatprep.mubr.bf16.mxu0 0
        %638 = vmatmul.mubr.bf16.gmra.mrb[0].mxu0 %v287
        %v639 = vpop.f32.mrb[0].mxu0
        %v640 = vadd.f32 %v333, %v639
        %v641 = vpop.f32.mrb[0].mxu0
        %v642 = vadd.f32 %v337, %v641
        %v643 = vpop.f32.mrb[0].mxu0
        %v644 = vadd.f32 %v333, %v643
        %v645 = vpop.f32.mrb[0].mxu0
        %v646 = vadd.f32 %v337, %v645
        %647 = vdwg.mxu0
        %648 = vst [vmem:[#allocation2] sm:$0xff] %v537
        %649 = vst [vmem:[#allocation2 + $0x8] sm:$0xff] %v539
        %650 = vst [vmem:[#allocation2 + $0x10] sm:$0xff] %v610
        %651 = vst [vmem:[#allocation2 + $0x18] sm:$0xff] %v612
        %652 = vst [vmem:[#allocation2 + $0x20] sm:$0xff] %v541
        %653 = vst [vmem:[#allocation2 + $0x28] sm:$0xff] %v543
        %654 = vst [vmem:[#allocation2 + $0x30] sm:$0xff] %v614
        %655 = vst [vmem:[#allocation2 + $0x38] sm:$0xff] %v616
        %656 = vst [vmem:[#allocation2 + $0x40] sm:$0xff] %v547
        %657 = vst [vmem:[#allocation2 + $0x48] sm:$0xff] %v549
        %658 = vst [vmem:[#allocation2 + $0x50] sm:$0xff] %v620
        %659 = vst [vmem:[#allocation2 + $0x58] sm:$0xff] %v622
        %660 = vst [vmem:[#allocation2 + $0x60] sm:$0xff] %v551
        %661 = vst [vmem:[#allocation2 + $0x68] sm:$0xff] %v553
        %662 = vst [vmem:[#allocation2 + $0x70] sm:$0xff] %v624
        %663 = vst [vmem:[#allocation2 + $0x78] sm:$0xff] %v626
        %664 = vst [vmem:[#allocation2 + $0x80] sm:$0xff] %v557
        %665 = vst [vmem:[#allocation2 + $0x88] sm:$0xff] %v559
        %666 = vst [vmem:[#allocation2 + $0x90] sm:$0xff] %v630
        %667 = vst [vmem:[#allocation2 + $0x98] sm:$0xff] %v632
        %668 = vst [vmem:[#allocation2 + $0xa0] sm:$0xff] %v561
        %669 = vst [vmem:[#allocation2 + $0xa8] sm:$0xff] %v563
        %670 = vst [vmem:[#allocation2 + $0xb0] sm:$0xff] %v634
        %671 = vst [vmem:[#allocation2 + $0xb8] sm:$0xff] %v636
        %672 = vst [vmem:[#allocation2 + $0xc0] sm:$0xff] %v567
        %673 = vst [vmem:[#allocation2 + $0xc8] sm:$0xff] %v569
        %674 = vst [vmem:[#allocation2 + $0xd0] sm:$0xff] %v640
        %675 = vst [vmem:[#allocation2 + $0xd8] sm:$0xff] %v642
        %676 = vst [vmem:[#allocation2 + $0xe0] sm:$0xff] %v571
        %677 = vst [vmem:[#allocation2 + $0xe8] sm:$0xff] %v573
        %678 = vst [vmem:[#allocation2 + $0xf0] sm:$0xff] %v644
        %679 = vst [vmem:[#allocation2 + $0xf8] sm:$0xff] %v646
        %v680 = vld [vmem:[%s232] sm:$0xff]
        %v681 = vld [vmem:[%s232 + $0x8] sm:$0xff]
        %v682 = vld [vmem:[%s232 + $0x10] sm:$0xff]
        %v683 = vld [vmem:[%s232 + $0x18] sm:$0xff]
        %v684 = vld [vmem:[%s232 + $0x20] sm:$0xff]
        %v685 = vld [vmem:[%s232 + $0x28] sm:$0xff]
        %v686 = vld [vmem:[%s232 + $0x30] sm:$0xff]
        %v687 = vld [vmem:[%s232 + $0x38] sm:$0xff]
        %v688 = vld [vmem:[%s232 + $0x40] sm:$0xff]
        %v689 = vld [vmem:[%s232 + $0x48] sm:$0xff]
        %v690 = vld [vmem:[%s232 + $0x50] sm:$0xff]
        %v691 = vld [vmem:[%s232 + $0x58] sm:$0xff]
        %v692 = vld [vmem:[%s232 + $0x60] sm:$0xff]
        %v693 = vld [vmem:[%s232 + $0x68] sm:$0xff]
        %v694 = vld [vmem:[%s232 + $0x70] sm:$0xff]
        %v695 = vld [vmem:[%s232 + $0x78] sm:$0xff]
        %v696 = vld [vmem:[%s232 + $0x80] sm:$0xff]
        %v697 = vld [vmem:[%s232 + $0x88] sm:$0xff]
        %v698 = vld [vmem:[%s232 + $0x90] sm:$0xff]
        %v699 = vld [vmem:[%s232 + $0x98] sm:$0xff]
        %v700 = vld [vmem:[%s232 + $0xa0] sm:$0xff]
        %v701 = vld [vmem:[%s232 + $0xa8] sm:$0xff]
        %v702 = vld [vmem:[%s232 + $0xb0] sm:$0xff]
        %v703 = vld [vmem:[%s232 + $0xb8] sm:$0xff]
        %v704 = vld [vmem:[%s232 + $0xc0] sm:$0xff]
        %v705 = vld [vmem:[%s232 + $0xc8] sm:$0xff]
        %v706 = vld [vmem:[%s232 + $0xd0] sm:$0xff]
        %v707 = vld [vmem:[%s232 + $0xd8] sm:$0xff]
        %v708 = vld [vmem:[%s232 + $0xe0] sm:$0xff]
        %v709 = vld [vmem:[%s232 + $0xe8] sm:$0xff]
        %v710 = vld [vmem:[%s232 + $0xf0] sm:$0xff]
        %v711 = vld [vmem:[%s232 + $0xf8] sm:$0xff]
        %712 = vst [vmem:[#allocation3] sm:$0xff] 0.0
        %713 = vst [vmem:[#allocation4] sm:$0xff] 0.0
        %v714 = vld [vmem:[#allocation3] sm:$0xff]
        %v715 = vpack.c.bf16 %v714, %v714
        %v748 = vunpack.c.l.b16 %v680
        %v749 = vunpack.c.h.b16 %v680
        %v750 = vunpack.c.l.b16 %v681
        %v751 = vunpack.c.h.b16 %v681
        %v752 = vunpack.c.l.b16 %v682
        %v753 = vunpack.c.h.b16 %v682
        %v754 = vunpack.c.l.b16 %v683
        %v755 = vunpack.c.h.b16 %v683
        %v756 = vunpack.c.l.b16 %v684
        %v757 = vunpack.c.h.b16 %v684
        %v758 = vunpack.c.l.b16 %v685
        %v759 = vunpack.c.h.b16 %v685
        %v760 = vunpack.c.l.b16 %v686
        %v761 = vunpack.c.h.b16 %v686
        %v762 = vunpack.c.l.b16 %v687
        %v763 = vunpack.c.h.b16 %v687
        %v764 = vunpack.c.l.b16 %v688
        %v765 = vunpack.c.h.b16 %v688
        %v766 = vunpack.c.l.b16 %v689
        %v767 = vunpack.c.h.b16 %v689
        %v768 = vunpack.c.l.b16 %v690
        %v769 = vunpack.c.h.b16 %v690
        %v770 = vunpack.c.l.b16 %v691
        %v771 = vunpack.c.h.b16 %v691
        %v772 = vunpack.c.l.b16 %v692
        %v773 = vunpack.c.h.b16 %v692
        %v774 = vunpack.c.l.b16 %v693
        %v775 = vunpack.c.h.b16 %v693
        %v776 = vunpack.c.l.b16 %v694
        %v777 = vunpack.c.h.b16 %v694
        %v778 = vunpack.c.l.b16 %v695
        %v779 = vunpack.c.h.b16 %v695
        %v780 = vunpack.c.l.b16 %v696
        %v781 = vunpack.c.h.b16 %v696
        %v782 = vunpack.c.l.b16 %v697
        %v783 = vunpack.c.h.b16 %v697
        %v784 = vunpack.c.l.b16 %v698
        %v785 = vunpack.c.h.b16 %v698
        %v786 = vunpack.c.l.b16 %v699
        %v787 = vunpack.c.h.b16 %v699
        %v788 = vunpack.c.l.b16 %v700
        %v789 = vunpack.c.h.b16 %v700
        %v790 = vunpack.c.l.b16 %v701
        %v791 = vunpack.c.h.b16 %v701
        %v792 = vunpack.c.l.b16 %v702
        %v793 = vunpack.c.h.b16 %v702
        %v794 = vunpack.c.l.b16 %v703
        %v795 = vunpack.c.h.b16 %v703
        %v796 = vunpack.c.l.b16 %v704
        %v797 = vunpack.c.h.b16 %v704
        %v798 = vunpack.c.l.b16 %v705
        %v799 = vunpack.c.h.b16 %v705
        %v800 = vunpack.c.l.b16 %v706
        %v801 = vunpack.c.h.b16 %v706
        %v802 = vunpack.c.l.b16 %v707
        %v803 = vunpack.c.h.b16 %v707
        %v804 = vunpack.c.l.b16 %v708
        %v805 = vunpack.c.h.b16 %v708
        %v806 = vunpack.c.l.b16 %v709
        %v807 = vunpack.c.h.b16 %v709
        %v808 = vunpack.c.l.b16 %v710
        %v809 = vunpack.c.h.b16 %v710
        %v810 = vunpack.c.l.b16 %v711
        %v811 = vunpack.c.h.b16 %v711
        %v812 = vpack.c.b16 %v752, %v748
        %v813 = vpack.c.b16 %v753, %v749
        %v814 = vpack.c.b16 %v754, %v750
        %v815 = vpack.c.b16 %v755, %v751
        %v816 = vpack.c.b16 %v760, %v756
        %v817 = vpack.c.b16 %v761, %v757
        %v818 = vpack.c.b16 %v762, %v758
        %v819 = vpack.c.b16 %v763, %v759
        %v820 = vpack.c.b16 %v768, %v764
        %v821 = vpack.c.b16 %v769, %v765
        %v822 = vpack.c.b16 %v770, %v766
        %v823 = vpack.c.b16 %v771, %v767
        %v824 = vpack.c.b16 %v776, %v772
        %v825 = vpack.c.b16 %v777, %v773
        %v826 = vpack.c.b16 %v778, %v774
        %v827 = vpack.c.b16 %v779, %v775
        %v828 = vpack.c.b16 %v784, %v780
        %v829 = vpack.c.b16 %v785, %v781
        %v830 = vpack.c.b16 %v786, %v782
        %v831 = vpack.c.b16 %v787, %v783
        %v832 = vpack.c.b16 %v792, %v788
        %v833 = vpack.c.b16 %v793, %v789
        %v834 = vpack.c.b16 %v794, %v790
        %v835 = vpack.c.b16 %v795, %v791
        %v836 = vpack.c.b16 %v800, %v796
        %v837 = vpack.c.b16 %v801, %v797
        %v838 = vpack.c.b16 %v802, %v798
        %v839 = vpack.c.b16 %v803, %v799
        %v840 = vpack.c.b16 %v808, %v804
        %v841 = vpack.c.b16 %v809, %v805
        %v842 = vpack.c.b16 %v810, %v806
        %v843 = vpack.c.b16 %v811, %v807
        %876 = vmatprep.subr.bf16.mxu0 %v813
        %877 = vmatpush1.bf16.msra.mxu0 %v812
        %878 = vmatprep.subr.bf16.mxu0 %v817
        %879 = vmatpush1.bf16.msra.mxu0 %v816
        %880 = vmatprep.subr.bf16.mxu0 %v821
        %881 = vmatpush1.bf16.msra.mxu0 %v820
        %882 = vmatprep.subr.bf16.mxu0 %v825
        %883 = vmatpush1.bf16.msra.mxu0 %v824
        %884 = vmatprep.subr.bf16.mxu0 %v829
        %885 = vmatpush1.bf16.msra.mxu0 %v828
        %886 = vmatprep.subr.bf16.mxu0 %v833
        %887 = vmatpush1.bf16.msra.mxu0 %v832
        %888 = vmatprep.subr.bf16.mxu0 %v837
        %889 = vmatpush1.bf16.msra.mxu0 %v836
        %890 = vmatprep.subr.bf16.mxu0 %v841
        %891 = vmatpush1.bf16.msra.mxu0 %v840
        %892 = vmatprep.subr.bf16.mxu0 0
        %893 = vmatpush1.bf16.msra.mxu0 0
        %894 = vmatprep.subr.bf16.mxu0 0
        %895 = vmatpush1.bf16.msra.mxu0 0
        %896 = vmatprep.subr.bf16.mxu0 0
        %897 = vmatpush1.bf16.msra.mxu0 0
        %898 = vmatprep.subr.bf16.mxu0 0
        %899 = vmatpush1.bf16.msra.mxu0 0
        %900 = vmatprep.subr.bf16.mxu0 0
        %901 = vmatpush1.bf16.msra.mxu0 0
        %902 = vmatprep.subr.bf16.mxu0 0
        %903 = vmatpush1.bf16.msra.mxu0 0
        %904 = vmatprep.subr.bf16.mxu0 0
        %905 = vmatpush1.bf16.msra.mxu0 0
        %906 = vmatprep.subr.bf16.mxu0 0
        %907 = vmatpush1.bf16.msra.mxu0 0
        %908 = vmatprep.mubr.bf16.mxu0 0
        %909 = vmatmul.mubr.bf16.gmra.mrb[0].mxu0 %v715
        %v910 = vpop.f32.mrb[0].mxu0
        %v911 = vadd.f32 0.0, %v910
        %v912 = vpop.f32.mrb[0].mxu0
        %v913 = vadd.f32 0.0, %v912
        %v914 = vpop.f32.mrb[0].mxu0
        %v915 = vpop.f32.mrb[0].mxu0
        %916 = vdwg.mxu0
        %917 = vmatprep.subr.bf16.mxu0 %v815
        %918 = vmatpush1.bf16.msra.mxu0 %v814
        %919 = vmatprep.subr.bf16.mxu0 %v819
        %920 = vmatpush1.bf16.msra.mxu0 %v818
        %921 = vmatprep.subr.bf16.mxu0 %v823
        %922 = vmatpush1.bf16.msra.mxu0 %v822
        %923 = vmatprep.subr.bf16.mxu0 %v827
        %924 = vmatpush1.bf16.msra.mxu0 %v826
        %925 = vmatprep.subr.bf16.mxu0 %v831
        %926 = vmatpush1.bf16.msra.mxu0 %v830
        %927 = vmatprep.subr.bf16.mxu0 %v835
        %928 = vmatpush1.bf16.msra.mxu0 %v834
        %929 = vmatprep.subr.bf16.mxu0 %v839
        %930 = vmatpush1.bf16.msra.mxu0 %v838
        %931 = vmatprep.subr.bf16.mxu0 %v843
        %932 = vmatpush1.bf16.msra.mxu0 %v842
        %933 = vmatprep.subr.bf16.mxu0 0
        %934 = vmatpush1.bf16.msra.mxu0 0
        %935 = vmatprep.subr.bf16.mxu0 0
        %936 = vmatpush1.bf16.msra.mxu0 0
        %937 = vmatprep.subr.bf16.mxu0 0
        %938 = vmatpush1.bf16.msra.mxu0 0
        %939 = vmatprep.subr.bf16.mxu0 0
        %940 = vmatpush1.bf16.msra.mxu0 0
        %941 = vmatprep.subr.bf16.mxu0 0
        %942 = vmatpush1.bf16.msra.mxu0 0
        %943 = vmatprep.subr.bf16.mxu0 0
        %944 = vmatpush1.bf16.msra.mxu0 0
        %945 = vmatprep.subr.bf16.mxu0 0
        %946 = vmatpush1.bf16.msra.mxu0 0
        %947 = vmatprep.subr.bf16.mxu0 0
        %948 = vmatpush1.bf16.msra.mxu0 0
        %949 = vmatprep.mubr.bf16.mxu0 0
        %950 = vmatmul.mubr.bf16.gmra.mrb[0].mxu0 %v715
        %v951 = vpop.f32.mrb[0].mxu0
        %v952 = vadd.f32 0.0, %v951
        %v953 = vpop.f32.mrb[0].mxu0
        %v954 = vadd.f32 0.0, %v953
        %v955 = vpop.f32.mrb[0].mxu0
        %v956 = vpop.f32.mrb[0].mxu0
        %957 = vdwg.mxu0
        %v958 = vld [vmem:[#allocation2] sm:$0xff]
        %v959 = vld [vmem:[#allocation2 + $0x8] sm:$0xff]
        %v960 = vadd.f32 %v958, %v911
        %v961 = vadd.f32 %v959, %v913
        %s962 = scalar_lea.vmem [#allocation2], 224
        %v963 = vld [vmem:[%s962 + $0x10] sm:$0xff]
        %v964 = vld [vmem:[%s962 + $0x18] sm:$0xff]
        %v965 = vadd.f32 %v963, %v952
        %v966 = vadd.f32 %v964, %v954
        %v967 = vxor.u32 %v960, 2147483648
        %v968 = vxor.u32 %v961, 2147483648
        %v969 = vmul.f32 %v967, 1.442695
        %v970 = vpow.pop %v969
        %v971 = vmul.f32 %v968, 1.442695
        %v972 = vpow.pop %v971
        %v973 = vadd.f32 %v970, 1.0
        %v974 = vadd.f32 %v972, 1.0
        %v975 = vrcp.pop %v973
        %v976 = vmul.f32 1.0, %v975
        %v977 = vrcp.pop %v974
        %v978 = vmul.f32 1.0, %v977
        %v979 = vtanh.pop %v961
        %v980 = vxor.u32 %v965, 2147483648
        %v981 = vxor.u32 %v966, 2147483648
        %v982 = vmul.f32 %v980, 1.442695
        %v983 = vpow.pop %v982
        %v984 = vmul.f32 %v981, 1.442695
        %v985 = vpow.pop %v984
        %v986 = vadd.f32 %v983, 1.0
        %v987 = vadd.f32 %v985, 1.0
        %v988 = vrcp.pop %v986
        %v989 = vmul.f32 1.0, %v988
        %v990 = vrcp.pop %v987
        %v991 = vmul.f32 1.0, %v990
        %v992 = vtanh.pop %v966
        %v993 = vld [vmem:[#allocation4] sm:$0xff]
        %995 = vrot.lane.b32.xlu0 %v993, 64
        %v996 = vpop.permute.xlu0 %995
        %v998 = vmul.f32 %v976, %v996
        %1000 = vrot.lane.b32.xlu0 %v979, 64
        %v1001 = vpop.permute.xlu0 %1000
        %v1003 = vmul.f32 %v976, %v1001
        %1005 = vrot.lane.b32.xlu0 %v1003, 64
        %v1006 = vpop.permute.xlu0 %1005
        %v1008 = vadd.f32 %v998, %v1006
        %v1009 = vmul.f32 %v989, %v993
        %1011 = vrot.lane.b32.xlu0 %v992, 64
        %v1012 = vpop.permute.xlu0 %1011
        %v1014 = vmul.f32 %v989, %v1012
        %1016 = vrot.lane.b32.xlu0 %v1014, 64
        %v1017 = vpop.permute.xlu0 %1016
        %v1019 = vadd.f32 %v1009, %v1017
        %v1020 = vtanh.pop %v1008
        %1022 = vrot.lane.b32.xlu0 %v1020, 64
        %v1023 = vpop.permute.xlu0 %1022
        %v1025 = vmul.f32 %v978, %v1023
        %v1026 = vtanh.pop %v1019
        %1028 = vrot.lane.b32.xlu0 %v1026, 64
        %v1029 = vpop.permute.xlu0 %1028
        %v1031 = vmul.f32 %v991, %v1029
        %1033 = vrot.lane.b32.xlu0 %v1008, 64
        %v1034 = vpop.permute.xlu0 %1033
        %vm1036 = vcmask 523264
        %1037 = vst.msk [vmem:[#allocation4] sm:$0xff] %vm1036, %v1034
        %vm1038 = vcmask 1048064
        %1039 = vst.msk [vmem:[#allocation4] sm:$0xff] %vm1038, %v1019
        %1040 = vst.msk [vmem:[#allocation3] sm:$0xff] %vm1036, %v1025
        %1042 = vrot.lane.b32.xlu0 %v1031, 64
        %v1043 = vpop.permute.xlu0 %1042
        %1045 = vst.msk [vmem:[#allocation3] sm:$0xff] %vm1038, %v1043
        %1046 = vst.msk [vmem:[%s274] sm:$0xff] %vm1036, %v1025
        %s1047 = scalar_lea.vmem %s274, 56
        %1048 = vst.msk [vmem:[%s1047] sm:$0xff] %vm1038, %v1043
        %v1049 = vld [vmem:[#allocation3] sm:$0xff]
        %v1050 = vpack.c.bf16 %v1049, %v1049
        %1051 = vmatprep.subr.bf16.mxu0 %v813
        %1052 = vmatpush1.bf16.msra.mxu0 %v812
        %1053 = vmatprep.subr.bf16.mxu0 %v817
        %1054 = vmatpush1.bf16.msra.mxu0 %v816
        %1055 = vmatprep.subr.bf16.mxu0 %v821
        %1056 = vmatpush1.bf16.msra.mxu0 %v820
        %1057 = vmatprep.subr.bf16.mxu0 %v825
        %1058 = vmatpush1.bf16.msra.mxu0 %v824
        %1059 = vmatprep.subr.bf16.mxu0 %v829
        %1060 = vmatpush1.bf16.msra.mxu0 %v828
        %1061 = vmatprep.subr.bf16.mxu0 %v833
        %1062 = vmatpush1.bf16.msra.mxu0 %v832
        %1063 = vmatprep.subr.bf16.mxu0 %v837
        %1064 = vmatpush1.bf16.msra.mxu0 %v836
        %1065 = vmatprep.subr.bf16.mxu0 %v841
        %1066 = vmatpush1.bf16.msra.mxu0 %v840
        %1067 = vmatprep.subr.bf16.mxu0 0
        %1068 = vmatpush1.bf16.msra.mxu0 0
        %1069 = vmatprep.subr.bf16.mxu0 0
        %1070 = vmatpush1.bf16.msra.mxu0 0
        %1071 = vmatprep.subr.bf16.mxu0 0
        %1072 = vmatpush1.bf16.msra.mxu0 0
        %1073 = vmatprep.subr.bf16.mxu0 0
        %1074 = vmatpush1.bf16.msra.mxu0 0
        %1075 = vmatprep.subr.bf16.mxu0 0
        %1076 = vmatpush1.bf16.msra.mxu0 0
        %1077 = vmatprep.subr.bf16.mxu0 0
        %1078 = vmatpush1.bf16.msra.mxu0 0
        %1079 = vmatprep.subr.bf16.mxu0 0
        %1080 = vmatpush1.bf16.msra.mxu0 0
        %1081 = vmatprep.subr.bf16.mxu0 0
        %1082 = vmatpush1.bf16.msra.mxu0 0
        %1083 = vmatprep.mubr.bf16.mxu0 0
        %1084 = vmatmul.mubr.bf16.gmra.mrb[0].mxu0 %v1050
        %v1085 = vpop.f32.mrb[0].mxu0
        %v1086 = vadd.f32 0.0, %v1085
        %v1087 = vpop.f32.mrb[0].mxu0
        %v1088 = vadd.f32 0.0, %v1087
        %v1089 = vpop.f32.mrb[0].mxu0
        %v1090 = vpop.f32.mrb[0].mxu0
        %1091 = vdwg.mxu0
        %1092 = vmatprep.subr.bf16.mxu0 %v815
        %1093 = vmatpush1.bf16.msra.mxu0 %v814
        %1094 = vmatprep.subr.bf16.mxu0 %v819
        %1095 = vmatpush1.bf16.msra.mxu0 %v818
        %1096 = vmatprep.subr.bf16.mxu0 %v823
        %1097 = vmatpush1.bf16.msra.mxu0 %v822
        %1098 = vmatprep.subr.bf16.mxu0 %v827
        %1099 = vmatpush1.bf16.msra.mxu0 %v826
        %1100 = vmatprep.subr.bf16.mxu0 %v831
        %1101 = vmatpush1.bf16.msra.mxu0 %v830
        %1102 = vmatprep.subr.bf16.mxu0 %v835
        %1103 = vmatpush1.bf16.msra.mxu0 %v834
        %1104 = vmatprep.subr.bf16.mxu0 %v839
        %1105 = vmatpush1.bf16.msra.mxu0 %v838
        %1106 = vmatprep.subr.bf16.mxu0 %v843
        %1107 = vmatpush1.bf16.msra.mxu0 %v842
        %1108 = vmatprep.subr.bf16.mxu0 0
        %1109 = vmatpush1.bf16.msra.mxu0 0
        %1110 = vmatprep.subr.bf16.mxu0 0
        %1111 = vmatpush1.bf16.msra.mxu0 0
        %1112 = vmatprep.subr.bf16.mxu0 0
        %1113 = vmatpush1.bf16.msra.mxu0 0
        %1114 = vmatprep.subr.bf16.mxu0 0
        %1115 = vmatpush1.bf16.msra.mxu0 0
        %1116 = vmatprep.subr.bf16.mxu0 0
        %1117 = vmatpush1.bf16.msra.mxu0 0
        %1118 = vmatprep.subr.bf16.mxu0 0
        %1119 = vmatpush1.bf16.msra.mxu0 0
        %1120 = vmatprep.subr.bf16.mxu0 0
        %1121 = vmatpush1.bf16.msra.mxu0 0
        %1122 = vmatprep.subr.bf16.mxu0 0
        %1123 = vmatpush1.bf16.msra.mxu0 0
        %1124 = vmatprep.mubr.bf16.mxu0 0
        %1125 = vmatmul.mubr.bf16.gmra.mrb[0].mxu0 %v1050
        %v1126 = vpop.f32.mrb[0].mxu0
        %v1127 = vadd.f32 0.0, %v1126
        %v1128 = vpop.f32.mrb[0].mxu0
        %v1129 = vadd.f32 0.0, %v1128
        %v1130 = vpop.f32.mrb[0].mxu0
        %v1131 = vpop.f32.mrb[0].mxu0
        %1132 = vdwg.mxu0
        %s1133 = scalar_lea.vmem [#allocation2], 32
        %v1134 = vld [vmem:[%s1133] sm:$0xff]
        %v1135 = vld [vmem:[%s1133 + $0x8] sm:$0xff]
        %v1136 = vadd.f32 %v1134, %v1086
        %v1137 = vadd.f32 %v1135, %v1088
        %s1138 = scalar_lea.vmem [#allocation2], 192
        %v1139 = vld [vmem:[%s1138 + $0x10] sm:$0xff]
        %v1140 = vld [vmem:[%s1138 + $0x18] sm:$0xff]
        %v1141 = vadd.f32 %v1139, %v1127
        %v1142 = vadd.f32 %v1140, %v1129
        %v1143 = vxor.u32 %v1136, 2147483648
        %v1144 = vxor.u32 %v1137, 2147483648
        %v1145 = vmul.f32 %v1143, 1.442695
        %v1146 = vpow.pop %v1145
        %v1147 = vmul.f32 %v1144, 1.442695
        %v1148 = vpow.pop %v1147
        %v1149 = vadd.f32 %v1146, 1.0
        %v1150 = vadd.f32 %v1148, 1.0
        %v1151 = vrcp.pop %v1149
        %v1152 = vmul.f32 1.0, %v1151
        %v1153 = vrcp.pop %v1150
        %v1154 = vmul.f32 1.0, %v1153
        %v1155 = vtanh.pop %v1137
        %v1156 = vxor.u32 %v1141, 2147483648
        %v1157 = vxor.u32 %v1142, 2147483648
        %v1158 = vmul.f32 %v1156, 1.442695
        %v1159 = vpow.pop %v1158
        %v1160 = vmul.f32 %v1157, 1.442695
        %v1161 = vpow.pop %v1160
        %v1162 = vadd.f32 %v1159, 1.0
        %v1163 = vadd.f32 %v1161, 1.0
        %v1164 = vrcp.pop %v1162
        %v1165 = vmul.f32 1.0, %v1164
        %v1166 = vrcp.pop %v1163
        %v1167 = vmul.f32 1.0, %v1166
        %v1168 = vtanh.pop %v1142
        %v1169 = vld [vmem:[#allocation4] sm:$0xff]
        %1171 = vrot.lane.b32.xlu0 %v1169, 64
        %v1172 = vpop.permute.xlu0 %1171
        %v1174 = vmul.f32 %v1152, %v1172
        %1176 = vrot.lane.b32.xlu0 %v1155, 64
        %v1177 = vpop.permute.xlu0 %1176
        %v1179 = vmul.f32 %v1152, %v1177
        %1181 = vrot.lane.b32.xlu0 %v1179, 64
        %v1182 = vpop.permute.xlu0 %1181
        %v1184 = vadd.f32 %v1174, %v1182
        %v1185 = vmul.f32 %v1165, %v1169
        %1187 = vrot.lane.b32.xlu0 %v1168, 64
        %v1188 = vpop.permute.xlu0 %1187
        %v1190 = vmul.f32 %v1165, %v1188
        %1192 = vrot.lane.b32.xlu0 %v1190, 64
        %v1193 = vpop.permute.xlu0 %1192
        %v1195 = vadd.f32 %v1185, %v1193
        %v1196 = vtanh.pop %v1184
        %1198 = vrot.lane.b32.xlu0 %v1196, 64
        %v1199 = vpop.permute.xlu0 %1198
        %v1201 = vmul.f32 %v1154, %v1199
        %v1202 = vtanh.pop %v1195
        %1204 = vrot.lane.b32.xlu0 %v1202, 64
        %v1205 = vpop.permute.xlu0 %1204
        %v1207 = vmul.f32 %v1167, %v1205
        %1209 = vrot.lane.b32.xlu0 %v1184, 64
        %v1210 = vpop.permute.xlu0 %1209
        %1212 = vst.msk [vmem:[#allocation4] sm:$0xff] %vm1036, %v1210
        %1213 = vst.msk [vmem:[#allocation4] sm:$0xff] %vm1038, %v1195
        %1214 = vst.msk [vmem:[#allocation3] sm:$0xff] %vm1036, %v1201
        %1216 = vrot.lane.b32.xlu0 %v1207, 64
        %v1217 = vpop.permute.xlu0 %1216
        %1219 = vst.msk [vmem:[#allocation3] sm:$0xff] %vm1038, %v1217
        %s1220 = scalar_lea.vmem %s274, 8
        %1221 = vst.msk [vmem:[%s1220] sm:$0xff] %vm1036, %v1201
        %s1222 = scalar_lea.vmem %s274, 48
        %1223 = vst.msk [vmem:[%s1222] sm:$0xff] %vm1038, %v1217
        %v1224 = vld [vmem:[#allocation3] sm:$0xff]
        %v1225 = vpack.c.bf16 %v1224, %v1224
        %1226 = vmatprep.subr.bf16.mxu0 %v813
        %1227 = vmatpush1.bf16.msra.mxu0 %v812
        %1228 = vmatprep.subr.bf16.mxu0 %v817
        %1229 = vmatpush1.bf16.msra.mxu0 %v816
        %1230 = vmatprep.subr.bf16.mxu0 %v821
        %1231 = vmatpush1.bf16.msra.mxu0 %v820
        %1232 = vmatprep.subr.bf16.mxu0 %v825
        %1233 = vmatpush1.bf16.msra.mxu0 %v824
        %1234 = vmatprep.subr.bf16.mxu0 %v829
        %1235 = vmatpush1.bf16.msra.mxu0 %v828
        %1236 = vmatprep.subr.bf16.mxu0 %v833
        %1237 = vmatpush1.bf16.msra.mxu0 %v832
        %1238 = vmatprep.subr.bf16.mxu0 %v837
        %1239 = vmatpush1.bf16.msra.mxu0 %v836
        %1240 = vmatprep.subr.bf16.mxu0 %v841
        %1241 = vmatpush1.bf16.msra.mxu0 %v840
        %1242 = vmatprep.subr.bf16.mxu0 0
        %1243 = vmatpush1.bf16.msra.mxu0 0
        %1244 = vmatprep.subr.bf16.mxu0 0
        %1245 = vmatpush1.bf16.msra.mxu0 0
        %1246 = vmatprep.subr.bf16.mxu0 0
        %1247 = vmatpush1.bf16.msra.mxu0 0
        %1248 = vmatprep.subr.bf16.mxu0 0
        %1249 = vmatpush1.bf16.msra.mxu0 0
        %1250 = vmatprep.subr.bf16.mxu0 0
        %1251 = vmatpush1.bf16.msra.mxu0 0
        %1252 = vmatprep.subr.bf16.mxu0 0
        %1253 = vmatpush1.bf16.msra.mxu0 0
        %1254 = vmatprep.subr.bf16.mxu0 0
        %1255 = vmatpush1.bf16.msra.mxu0 0
        %1256 = vmatprep.subr.bf16.mxu0 0
        %1257 = vmatpush1.bf16.msra.mxu0 0
        %1258 = vmatprep.mubr.bf16.mxu0 0
        %1259 = vmatmul.mubr.bf16.gmra.mrb[0].mxu0 %v1225
        %v1260 = vpop.f32.mrb[0].mxu0
        %v1261 = vadd.f32 0.0, %v1260
        %v1262 = vpop.f32.mrb[0].mxu0
        %v1263 = vadd.f32 0.0, %v1262
        %v1264 = vpop.f32.mrb[0].mxu0
        %v1265 = vpop.f32.mrb[0].mxu0
        %1266 = vdwg.mxu0
        %1267 = vmatprep.subr.bf16.mxu0 %v815
        %1268 = vmatpush1.bf16.msra.mxu0 %v814
        %1269 = vmatprep.subr.bf16.mxu0 %v819
        %1270 = vmatpush1.bf16.msra.mxu0 %v818
        %1271 = vmatprep.subr.bf16.mxu0 %v823
        %1272 = vmatpush1.bf16.msra.mxu0 %v822
        %1273 = vmatprep.subr.bf16.mxu0 %v827
        %1274 = vmatpush1.bf16.msra.mxu0 %v826
        %1275 = vmatprep.subr.bf16.mxu0 %v831
        %1276 = vmatpush1.bf16.msra.mxu0 %v830
        %1277 = vmatprep.subr.bf16.mxu0 %v835
        %1278 = vmatpush1.bf16.msra.mxu0 %v834
        %1279 = vmatprep.subr.bf16.mxu0 %v839
        %1280 = vmatpush1.bf16.msra.mxu0 %v838
        %1281 = vmatprep.subr.bf16.mxu0 %v843
        %1282 = vmatpush1.bf16.msra.mxu0 %v842
        %1283 = vmatprep.subr.bf16.mxu0 0
        %1284 = vmatpush1.bf16.msra.mxu0 0
        %1285 = vmatprep.subr.bf16.mxu0 0
        %1286 = vmatpush1.bf16.msra.mxu0 0
        %1287 = vmatprep.subr.bf16.mxu0 0
        %1288 = vmatpush1.bf16.msra.mxu0 0
        %1289 = vmatprep.subr.bf16.mxu0 0
        %1290 = vmatpush1.bf16.msra.mxu0 0
        %1291 = vmatprep.subr.bf16.mxu0 0
        %1292 = vmatpush1.bf16.msra.mxu0 0
        %1293 = vmatprep.subr.bf16.mxu0 0
        %1294 = vmatpush1.bf16.msra.mxu0 0
        %1295 = vmatprep.subr.bf16.mxu0 0
        %1296 = vmatpush1.bf16.msra.mxu0 0
        %1297 = vmatprep.subr.bf16.mxu0 0
        %1298 = vmatpush1.bf16.msra.mxu0 0
        %1299 = vmatprep.mubr.bf16.mxu0 0
        %1300 = vmatmul.mubr.bf16.gmra.mrb[0].mxu0 %v1225
        %v1301 = vpop.f32.mrb[0].mxu0
        %v1302 = vadd.f32 0.0, %v1301
        %v1303 = vpop.f32.mrb[0].mxu0
        %v1304 = vadd.f32 0.0, %v1303
        %v1305 = vpop.f32.mrb[0].mxu0
        %v1306 = vpop.f32.mrb[0].mxu0
        %1307 = vdwg.mxu0
        %s1308 = scalar_lea.vmem [#allocation2], 64
        %v1309 = vld [vmem:[%s1308] sm:$0xff]
        %v1310 = vld [vmem:[%s1308 + $0x8] sm:$0xff]
        %v1311 = vadd.f32 %v1309, %v1261
        %v1312 = vadd.f32 %v1310, %v1263
        %s1313 = scalar_lea.vmem [#allocation2], 160
        %v1314 = vld [vmem:[%s1313 + $0x10] sm:$0xff]
        %v1315 = vld [vmem:[%s1313 + $0x18] sm:$0xff]
        %v1316 = vadd.f32 %v1314, %v1302
        %v1317 = vadd.f32 %v1315, %v1304
        %v1318 = vxor.u32 %v1311, 2147483648
        %v1319 = vxor.u32 %v1312, 2147483648
        %v1320 = vmul.f32 %v1318, 1.442695
        %v1321 = vpow.pop %v1320
        %v1322 = vmul.f32 %v1319, 1.442695
        %v1323 = vpow.pop %v1322
        %v1324 = vadd.f32 %v1321, 1.0
        %v1325 = vadd.f32 %v1323, 1.0
        %v1326 = vrcp.pop %v1324
        %v1327 = vmul.f32 1.0, %v1326
        %v1328 = vrcp.pop %v1325
        %v1329 = vmul.f32 1.0, %v1328
        %v1330 = vtanh.pop %v1312
        %v1331 = vxor.u32 %v1316, 2147483648
        %v1332 = vxor.u32 %v1317, 2147483648
        %v1333 = vmul.f32 %v1331, 1.442695
        %v1334 = vpow.pop %v1333
        %v1335 = vmul.f32 %v1332, 1.442695
        %v1336 = vpow.pop %v1335
        %v1337 = vadd.f32 %v1334, 1.0
        %v1338 = vadd.f32 %v1336, 1.0
        %v1339 = vrcp.pop %v1337
        %v1340 = vmul.f32 1.0, %v1339
        %v1341 = vrcp.pop %v1338
        %v1342 = vmul.f32 1.0, %v1341
        %v1343 = vtanh.pop %v1317
        %v1344 = vld [vmem:[#allocation4] sm:$0xff]
        %1346 = vrot.lane.b32.xlu0 %v1344, 64
        %v1347 = vpop.permute.xlu0 %1346
        %v1349 = vmul.f32 %v1327, %v1347
        %1351 = vrot.lane.b32.xlu0 %v1330, 64
        %v1352 = vpop.permute.xlu0 %1351
        %v1354 = vmul.f32 %v1327, %v1352
        %1356 = vrot.lane.b32.xlu0 %v1354, 64
        %v1357 = vpop.permute.xlu0 %1356
        %v1359 = vadd.f32 %v1349, %v1357
        %v1360 = vmul.f32 %v1340, %v1344
        %1362 = vrot.lane.b32.xlu0 %v1343, 64
        %v1363 = vpop.permute.xlu0 %1362
        %v1365 = vmul.f32 %v1340, %v1363
        %1367 = vrot.lane.b32.xlu0 %v1365, 64
        %v1368 = vpop.permute.xlu0 %1367
        %v1370 = vadd.f32 %v1360, %v1368
        %v1371 = vtanh.pop %v1359
        %1373 = vrot.lane.b32.xlu0 %v1371, 64
        %v1374 = vpop.permute.xlu0 %1373
        %v1376 = vmul.f32 %v1329, %v1374
        %v1377 = vtanh.pop %v1370
        %1379 = vrot.lane.b32.xlu0 %v1377, 64
        %v1380 = vpop.permute.xlu0 %1379
        %v1382 = vmul.f32 %v1342, %v1380
        %1384 = vrot.lane.b32.xlu0 %v1359, 64
        %v1385 = vpop.permute.xlu0 %1384
        %1387 = vst.msk [vmem:[#allocation4] sm:$0xff] %vm1036, %v1385
        %1388 = vst.msk [vmem:[#allocation4] sm:$0xff] %vm1038, %v1370
        %1389 = vst.msk [vmem:[#allocation3] sm:$0xff] %vm1036, %v1376
        %1391 = vrot.lane.b32.xlu0 %v1382, 64
        %v1392 = vpop.permute.xlu0 %1391
        %1394 = vst.msk [vmem:[#allocation3] sm:$0xff] %vm1038, %v1392
        %s1395 = scalar_lea.vmem %s274, 16
        %1396 = vst.msk [vmem:[%s1395] sm:$0xff] %vm1036, %v1376
        %s1397 = scalar_lea.vmem %s274, 40
        %1398 = vst.msk [vmem:[%s1397] sm:$0xff] %vm1038, %v1392
        %v1399 = vld [vmem:[#allocation3] sm:$0xff]
        %v1400 = vpack.c.bf16 %v1399, %v1399
        %1401 = vmatprep.subr.bf16.mxu0 %v813
        %1402 = vmatpush1.bf16.msra.mxu0 %v812
        %1403 = vmatprep.subr.bf16.mxu0 %v817
        %1404 = vmatpush1.bf16.msra.mxu0 %v816
        %1405 = vmatprep.subr.bf16.mxu0 %v821
        %1406 = vmatpush1.bf16.msra.mxu0 %v820
        %1407 = vmatprep.subr.bf16.mxu0 %v825
        %1408 = vmatpush1.bf16.msra.mxu0 %v824
        %1409 = vmatprep.subr.bf16.mxu0 %v829
        %1410 = vmatpush1.bf16.msra.mxu0 %v828
        %1411 = vmatprep.subr.bf16.mxu0 %v833
        %1412 = vmatpush1.bf16.msra.mxu0 %v832
        %1413 = vmatprep.subr.bf16.mxu0 %v837
        %1414 = vmatpush1.bf16.msra.mxu0 %v836
        %1415 = vmatprep.subr.bf16.mxu0 %v841
        %1416 = vmatpush1.bf16.msra.mxu0 %v840
        %1417 = vmatprep.subr.bf16.mxu0 0
        %1418 = vmatpush1.bf16.msra.mxu0 0
        %1419 = vmatprep.subr.bf16.mxu0 0
        %1420 = vmatpush1.bf16.msra.mxu0 0
        %1421 = vmatprep.subr.bf16.mxu0 0
        %1422 = vmatpush1.bf16.msra.mxu0 0
        %1423 = vmatprep.subr.bf16.mxu0 0
        %1424 = vmatpush1.bf16.msra.mxu0 0
        %1425 = vmatprep.subr.bf16.mxu0 0
        %1426 = vmatpush1.bf16.msra.mxu0 0
        %1427 = vmatprep.subr.bf16.mxu0 0
        %1428 = vmatpush1.bf16.msra.mxu0 0
        %1429 = vmatprep.subr.bf16.mxu0 0
        %1430 = vmatpush1.bf16.msra.mxu0 0
        %1431 = vmatprep.subr.bf16.mxu0 0
        %1432 = vmatpush1.bf16.msra.mxu0 0
        %1433 = vmatprep.mubr.bf16.mxu0 0
        %1434 = vmatmul.mubr.bf16.gmra.mrb[0].mxu0 %v1400
        %v1435 = vpop.f32.mrb[0].mxu0
        %v1436 = vadd.f32 0.0, %v1435
        %v1437 = vpop.f32.mrb[0].mxu0
        %v1438 = vadd.f32 0.0, %v1437
        %v1439 = vpop.f32.mrb[0].mxu0
        %v1440 = vpop.f32.mrb[0].mxu0
        %1441 = vdwg.mxu0
        %1442 = vmatprep.subr.bf16.mxu0 %v815
        %1443 = vmatpush1.bf16.msra.mxu0 %v814
        %1444 = vmatprep.subr.bf16.mxu0 %v819
        %1445 = vmatpush1.bf16.msra.mxu0 %v818
        %1446 = vmatprep.subr.bf16.mxu0 %v823
        %1447 = vmatpush1.bf16.msra.mxu0 %v822
        %1448 = vmatprep.subr.bf16.mxu0 %v827
        %1449 = vmatpush1.bf16.msra.mxu0 %v826
        %1450 = vmatprep.subr.bf16.mxu0 %v831
        %1451 = vmatpush1.bf16.msra.mxu0 %v830
        %1452 = vmatprep.subr.bf16.mxu0 %v835
        %1453 = vmatpush1.bf16.msra.mxu0 %v834
        %1454 = vmatprep.subr.bf16.mxu0 %v839
        %1455 = vmatpush1.bf16.msra.mxu0 %v838
        %1456 = vmatprep.subr.bf16.mxu0 %v843
        %1457 = vmatpush1.bf16.msra.mxu0 %v842
        %1458 = vmatprep.subr.bf16.mxu0 0
        %1459 = vmatpush1.bf16.msra.mxu0 0
        %1460 = vmatprep.subr.bf16.mxu0 0
        %1461 = vmatpush1.bf16.msra.mxu0 0
        %1462 = vmatprep.subr.bf16.mxu0 0
        %1463 = vmatpush1.bf16.msra.mxu0 0
        %1464 = vmatprep.subr.bf16.mxu0 0
        %1465 = vmatpush1.bf16.msra.mxu0 0
        %1466 = vmatprep.subr.bf16.mxu0 0
        %1467 = vmatpush1.bf16.msra.mxu0 0
        %1468 = vmatprep.subr.bf16.mxu0 0
        %1469 = vmatpush1.bf16.msra.mxu0 0
        %1470 = vmatprep.subr.bf16.mxu0 0
        %1471 = vmatpush1.bf16.msra.mxu0 0
        %1472 = vmatprep.subr.bf16.mxu0 0
        %1473 = vmatpush1.bf16.msra.mxu0 0
        %1474 = vmatprep.mubr.bf16.mxu0 0
        %1475 = vmatmul.mubr.bf16.gmra.mrb[0].mxu0 %v1400
        %v1476 = vpop.f32.mrb[0].mxu0
        %v1477 = vadd.f32 0.0, %v1476
        %v1478 = vpop.f32.mrb[0].mxu0
        %v1479 = vadd.f32 0.0, %v1478
        %v1480 = vpop.f32.mrb[0].mxu0
        %v1481 = vpop.f32.mrb[0].mxu0
        %1482 = vdwg.mxu0
        %s1483 = scalar_lea.vmem [#allocation2], 96
        %v1484 = vld [vmem:[%s1483] sm:$0xff]
        %v1485 = vld [vmem:[%s1483 + $0x8] sm:$0xff]
        %v1486 = vadd.f32 %v1484, %v1436
        %v1487 = vadd.f32 %v1485, %v1438
        %s1488 = scalar_lea.vmem [#allocation2], 128
        %v1489 = vld [vmem:[%s1488 + $0x10] sm:$0xff]
        %v1490 = vld [vmem:[%s1488 + $0x18] sm:$0xff]
        %v1491 = vadd.f32 %v1489, %v1477
        %v1492 = vadd.f32 %v1490, %v1479
        %v1493 = vxor.u32 %v1486, 2147483648
        %v1494 = vxor.u32 %v1487, 2147483648
        %v1495 = vmul.f32 %v1493, 1.442695
        %v1496 = vpow.pop %v1495
        %v1497 = vmul.f32 %v1494, 1.442695
        %v1498 = vpow.pop %v1497
        %v1499 = vadd.f32 %v1496, 1.0
        %v1500 = vadd.f32 %v1498, 1.0
        %v1501 = vrcp.pop %v1499
        %v1502 = vmul.f32 1.0, %v1501
        %v1503 = vrcp.pop %v1500
        %v1504 = vmul.f32 1.0, %v1503
        %v1505 = vtanh.pop %v1487
        %v1506 = vxor.u32 %v1491, 2147483648
        %v1507 = vxor.u32 %v1492, 2147483648
        %v1508 = vmul.f32 %v1506, 1.442695
        %v1509 = vpow.pop %v1508
        %v1510 = vmul.f32 %v1507, 1.442695
        %v1511 = vpow.pop %v1510
        %v1512 = vadd.f32 %v1509, 1.0
        %v1513 = vadd.f32 %v1511, 1.0
        %v1514 = vrcp.pop %v1512
        %v1515 = vmul.f32 1.0, %v1514
        %v1516 = vrcp.pop %v1513
        %v1517 = vmul.f32 1.0, %v1516
        %v1518 = vtanh.pop %v1492
        %v1519 = vld [vmem:[#allocation4] sm:$0xff]
        %1521 = vrot.lane.b32.xlu0 %v1519, 64
        %v1522 = vpop.permute.xlu0 %1521
        %v1524 = vmul.f32 %v1502, %v1522
        %1526 = vrot.lane.b32.xlu0 %v1505, 64
        %v1527 = vpop.permute.xlu0 %1526
        %v1529 = vmul.f32 %v1502, %v1527
        %1531 = vrot.lane.b32.xlu0 %v1529, 64
        %v1532 = vpop.permute.xlu0 %1531
        %v1534 = vadd.f32 %v1524, %v1532
        %v1535 = vmul.f32 %v1515, %v1519
        %1537 = vrot.lane.b32.xlu0 %v1518, 64
        %v1538 = vpop.permute.xlu0 %1537
        %v1540 = vmul.f32 %v1515, %v1538
        %1542 = vrot.lane.b32.xlu0 %v1540, 64
        %v1543 = vpop.permute.xlu0 %1542
        %v1545 = vadd.f32 %v1535, %v1543
        %v1546 = vtanh.pop %v1534
        %1548 = vrot.lane.b32.xlu0 %v1546, 64
        %v1549 = vpop.permute.xlu0 %1548
        %v1551 = vmul.f32 %v1504, %v1549
        %v1552 = vtanh.pop %v1545
        %1554 = vrot.lane.b32.xlu0 %v1552, 64
        %v1555 = vpop.permute.xlu0 %1554
        %v1557 = vmul.f32 %v1517, %v1555
        %1559 = vrot.lane.b32.xlu0 %v1534, 64
        %v1560 = vpop.permute.xlu0 %1559
        %1562 = vst.msk [vmem:[#allocation4] sm:$0xff] %vm1036, %v1560
        %1563 = vst.msk [vmem:[#allocation4] sm:$0xff] %vm1038, %v1545
        %1564 = vst.msk [vmem:[#allocation3] sm:$0xff] %vm1036, %v1551
        %1566 = vrot.lane.b32.xlu0 %v1557, 64
        %v1567 = vpop.permute.xlu0 %1566
        %1569 = vst.msk [vmem:[#allocation3] sm:$0xff] %vm1038, %v1567
        %s1570 = scalar_lea.vmem %s274, 24
        %1571 = vst.msk [vmem:[%s1570] sm:$0xff] %vm1036, %v1551
        %s1572 = scalar_lea.vmem %s274, 32
        %1573 = vst.msk [vmem:[%s1572] sm:$0xff] %vm1038, %v1567
        %v1574 = vld [vmem:[#allocation3] sm:$0xff]
        %v1575 = vpack.c.bf16 %v1574, %v1574
        %1576 = vmatprep.subr.bf16.mxu0 %v813
        %1577 = vmatpush1.bf16.msra.mxu0 %v812
        %1578 = vmatprep.subr.bf16.mxu0 %v817
        %1579 = vmatpush1.bf16.msra.mxu0 %v816
        %1580 = vmatprep.subr.bf16.mxu0 %v821
        %1581 = vmatpush1.bf16.msra.mxu0 %v820
        %1582 = vmatprep.subr.bf16.mxu0 %v825
        %1583 = vmatpush1.bf16.msra.mxu0 %v824
        %1584 = vmatprep.subr.bf16.mxu0 %v829
        %1585 = vmatpush1.bf16.msra.mxu0 %v828
        %1586 = vmatprep.subr.bf16.mxu0 %v833
        %1587 = vmatpush1.bf16.msra.mxu0 %v832
        %1588 = vmatprep.subr.bf16.mxu0 %v837
        %1589 = vmatpush1.bf16.msra.mxu0 %v836
        %1590 = vmatprep.subr.bf16.mxu0 %v841
        %1591 = vmatpush1.bf16.msra.mxu0 %v840
        %1592 = vmatprep.subr.bf16.mxu0 0
        %1593 = vmatpush1.bf16.msra.mxu0 0
        %1594 = vmatprep.subr.bf16.mxu0 0
        %1595 = vmatpush1.bf16.msra.mxu0 0
        %1596 = vmatprep.subr.bf16.mxu0 0
        %1597 = vmatpush1.bf16.msra.mxu0 0
        %1598 = vmatprep.subr.bf16.mxu0 0
        %1599 = vmatpush1.bf16.msra.mxu0 0
        %1600 = vmatprep.subr.bf16.mxu0 0
        %1601 = vmatpush1.bf16.msra.mxu0 0
        %1602 = vmatprep.subr.bf16.mxu0 0
        %1603 = vmatpush1.bf16.msra.mxu0 0
        %1604 = vmatprep.subr.bf16.mxu0 0
        %1605 = vmatpush1.bf16.msra.mxu0 0
        %1606 = vmatprep.subr.bf16.mxu0 0
        %1607 = vmatpush1.bf16.msra.mxu0 0
        %1608 = vmatprep.mubr.bf16.mxu0 0
        %1609 = vmatmul.mubr.bf16.gmra.mrb[0].mxu0 %v1575
        %v1610 = vpop.f32.mrb[0].mxu0
        %v1611 = vadd.f32 0.0, %v1610
        %v1612 = vpop.f32.mrb[0].mxu0
        %v1613 = vadd.f32 0.0, %v1612
        %v1614 = vpop.f32.mrb[0].mxu0
        %v1615 = vpop.f32.mrb[0].mxu0
        %1616 = vdwg.mxu0
        %1617 = vmatprep.subr.bf16.mxu0 %v815
        %1618 = vmatpush1.bf16.msra.mxu0 %v814
        %1619 = vmatprep.subr.bf16.mxu0 %v819
        %1620 = vmatpush1.bf16.msra.mxu0 %v818
        %1621 = vmatprep.subr.bf16.mxu0 %v823
        %1622 = vmatpush1.bf16.msra.mxu0 %v822
        %1623 = vmatprep.subr.bf16.mxu0 %v827
        %1624 = vmatpush1.bf16.msra.mxu0 %v826
        %1625 = vmatprep.subr.bf16.mxu0 %v831
        %1626 = vmatpush1.bf16.msra.mxu0 %v830
        %1627 = vmatprep.subr.bf16.mxu0 %v835
        %1628 = vmatpush1.bf16.msra.mxu0 %v834
        %1629 = vmatprep.subr.bf16.mxu0 %v839
        %1630 = vmatpush1.bf16.msra.mxu0 %v838
        %1631 = vmatprep.subr.bf16.mxu0 %v843
        %1632 = vmatpush1.bf16.msra.mxu0 %v842
        %1633 = vmatprep.subr.bf16.mxu0 0
        %1634 = vmatpush1.bf16.msra.mxu0 0
        %1635 = vmatprep.subr.bf16.mxu0 0
        %1636 = vmatpush1.bf16.msra.mxu0 0
        %1637 = vmatprep.subr.bf16.mxu0 0
        %1638 = vmatpush1.bf16.msra.mxu0 0
        %1639 = vmatprep.subr.bf16.mxu0 0
        %1640 = vmatpush1.bf16.msra.mxu0 0
        %1641 = vmatprep.subr.bf16.mxu0 0
        %1642 = vmatpush1.bf16.msra.mxu0 0
        %1643 = vmatprep.subr.bf16.mxu0 0
        %1644 = vmatpush1.bf16.msra.mxu0 0
        %1645 = vmatprep.subr.bf16.mxu0 0
        %1646 = vmatpush1.bf16.msra.mxu0 0
        %1647 = vmatprep.subr.bf16.mxu0 0
        %1648 = vmatpush1.bf16.msra.mxu0 0
        %1649 = vmatprep.mubr.bf16.mxu0 0
        %1650 = vmatmul.mubr.bf16.gmra.mrb[0].mxu0 %v1575
        %v1651 = vpop.f32.mrb[0].mxu0
        %v1652 = vadd.f32 0.0, %v1651
        %v1653 = vpop.f32.mrb[0].mxu0
        %v1654 = vadd.f32 0.0, %v1653
        %v1655 = vpop.f32.mrb[0].mxu0
        %v1656 = vpop.f32.mrb[0].mxu0
        %1657 = vdwg.mxu0
        %v1658 = vld [vmem:[%s1488] sm:$0xff]
        %v1659 = vld [vmem:[%s1488 + $0x8] sm:$0xff]
        %v1660 = vadd.f32 %v1658, %v1611
        %v1661 = vadd.f32 %v1659, %v1613
        %v1662 = vld [vmem:[%s1483 + $0x10] sm:$0xff]
        %v1663 = vld [vmem:[%s1483 + $0x18] sm:$0xff]
        %v1664 = vadd.f32 %v1662, %v1652
        %v1665 = vadd.f32 %v1663, %v1654
        %v1666 = vxor.u32 %v1660, 2147483648
        %v1667 = vxor.u32 %v1661, 2147483648
        %v1668 = vmul.f32 %v1666, 1.442695
        %v1669 = vpow.pop %v1668
        %v1670 = vmul.f32 %v1667, 1.442695
        %v1671 = vpow.pop %v1670
        %v1672 = vadd.f32 %v1669, 1.0
        %v1673 = vadd.f32 %v1671, 1.0
        %v1674 = vrcp.pop %v1672
        %v1675 = vmul.f32 1.0, %v1674
        %v1676 = vrcp.pop %v1673
        %v1677 = vmul.f32 1.0, %v1676
        %v1678 = vtanh.pop %v1661
        %v1679 = vxor.u32 %v1664, 2147483648
        %v1680 = vxor.u32 %v1665, 2147483648
        %v1681 = vmul.f32 %v1679, 1.442695
        %v1682 = vpow.pop %v1681
        %v1683 = vmul.f32 %v1680, 1.442695
        %v1684 = vpow.pop %v1683
        %v1685 = vadd.f32 %v1682, 1.0
        %v1686 = vadd.f32 %v1684, 1.0
        %v1687 = vrcp.pop %v1685
        %v1688 = vmul.f32 1.0, %v1687
        %v1689 = vrcp.pop %v1686
        %v1690 = vmul.f32 1.0, %v1689
        %v1691 = vtanh.pop %v1665
        %v1692 = vld [vmem:[#allocation4] sm:$0xff]
        %1694 = vrot.lane.b32.xlu0 %v1692, 64
        %v1695 = vpop.permute.xlu0 %1694
        %v1697 = vmul.f32 %v1675, %v1695
        %1699 = vrot.lane.b32.xlu0 %v1678, 64
        %v1700 = vpop.permute.xlu0 %1699
        %v1702 = vmul.f32 %v1675, %v1700
        %1704 = vrot.lane.b32.xlu0 %v1702, 64
        %v1705 = vpop.permute.xlu0 %1704
        %v1707 = vadd.f32 %v1697, %v1705
        %v1708 = vmul.f32 %v1688, %v1692
        %1710 = vrot.lane.b32.xlu0 %v1691, 64
        %v1711 = vpop.permute.xlu0 %1710
        %v1713 = vmul.f32 %v1688, %v1711
        %1715 = vrot.lane.b32.xlu0 %v1713, 64
        %v1716 = vpop.permute.xlu0 %1715
        %v1718 = vadd.f32 %v1708, %v1716
        %v1719 = vtanh.pop %v1707
        %1721 = vrot.lane.b32.xlu0 %v1719, 64
        %v1722 = vpop.permute.xlu0 %1721
        %v1724 = vmul.f32 %v1677, %v1722
        %v1725 = vtanh.pop %v1718
        %1727 = vrot.lane.b32.xlu0 %v1725, 64
        %v1728 = vpop.permute.xlu0 %1727
        %v1730 = vmul.f32 %v1690, %v1728
        %1732 = vrot.lane.b32.xlu0 %v1707, 64
        %v1733 = vpop.permute.xlu0 %1732
        %1735 = vst.msk [vmem:[#allocation4] sm:$0xff] %vm1036, %v1733
        %1736 = vst.msk [vmem:[#allocation4] sm:$0xff] %vm1038, %v1718
        %1737 = vst.msk [vmem:[#allocation3] sm:$0xff] %vm1036, %v1724
        %1739 = vrot.lane.b32.xlu0 %v1730, 64
        %v1740 = vpop.permute.xlu0 %1739
        %1742 = vst.msk [vmem:[#allocation3] sm:$0xff] %vm1038, %v1740
        %1743 = vst.msk [vmem:[%s1572] sm:$0xff] %vm1036, %v1724
        %1744 = vst.msk [vmem:[%s1570] sm:$0xff] %vm1038, %v1740
        %v1745 = vld [vmem:[#allocation3] sm:$0xff]
        %v1746 = vpack.c.bf16 %v1745, %v1745
        %1747 = vmatprep.subr.bf16.mxu0 %v813
        %1748 = vmatpush1.bf16.msra.mxu0 %v812
        %1749 = vmatprep.subr.bf16.mxu0 %v817
        %1750 = vmatpush1.bf16.msra.mxu0 %v816
        %1751 = vmatprep.subr.bf16.mxu0 %v821
        %1752 = vmatpush1.bf16.msra.mxu0 %v820
        %1753 = vmatprep.subr.bf16.mxu0 %v825
        %1754 = vmatpush1.bf16.msra.mxu0 %v824
        %1755 = vmatprep.subr.bf16.mxu0 %v829
        %1756 = vmatpush1.bf16.msra.mxu0 %v828
        %1757 = vmatprep.subr.bf16.mxu0 %v833
        %1758 = vmatpush1.bf16.msra.mxu0 %v832
        %1759 = vmatprep.subr.bf16.mxu0 %v837
        %1760 = vmatpush1.bf16.msra.mxu0 %v836
        %1761 = vmatprep.subr.bf16.mxu0 %v841
        %1762 = vmatpush1.bf16.msra.mxu0 %v840
        %1763 = vmatprep.subr.bf16.mxu0 0
        %1764 = vmatpush1.bf16.msra.mxu0 0
        %1765 = vmatprep.subr.bf16.mxu0 0
        %1766 = vmatpush1.bf16.msra.mxu0 0
        %1767 = vmatprep.subr.bf16.mxu0 0
        %1768 = vmatpush1.bf16.msra.mxu0 0
        %1769 = vmatprep.subr.bf16.mxu0 0
        %1770 = vmatpush1.bf16.msra.mxu0 0
        %1771 = vmatprep.subr.bf16.mxu0 0
        %1772 = vmatpush1.bf16.msra.mxu0 0
        %1773 = vmatprep.subr.bf16.mxu0 0
        %1774 = vmatpush1.bf16.msra.mxu0 0
        %1775 = vmatprep.subr.bf16.mxu0 0
        %1776 = vmatpush1.bf16.msra.mxu0 0
        %1777 = vmatprep.subr.bf16.mxu0 0
        %1778 = vmatpush1.bf16.msra.mxu0 0
        %1779 = vmatprep.mubr.bf16.mxu0 0
        %1780 = vmatmul.mubr.bf16.gmra.mrb[0].mxu0 %v1746
        %v1781 = vpop.f32.mrb[0].mxu0
        %v1782 = vadd.f32 0.0, %v1781
        %v1783 = vpop.f32.mrb[0].mxu0
        %v1784 = vadd.f32 0.0, %v1783
        %v1785 = vpop.f32.mrb[0].mxu0
        %v1786 = vpop.f32.mrb[0].mxu0
        %1787 = vdwg.mxu0
        %1788 = vmatprep.subr.bf16.mxu0 %v815
        %1789 = vmatpush1.bf16.msra.mxu0 %v814
        %1790 = vmatprep.subr.bf16.mxu0 %v819
        %1791 = vmatpush1.bf16.msra.mxu0 %v818
        %1792 = vmatprep.subr.bf16.mxu0 %v823
        %1793 = vmatpush1.bf16.msra.mxu0 %v822
        %1794 = vmatprep.subr.bf16.mxu0 %v827
        %1795 = vmatpush1.bf16.msra.mxu0 %v826
        %1796 = vmatprep.subr.bf16.mxu0 %v831
        %1797 = vmatpush1.bf16.msra.mxu0 %v830
        %1798 = vmatprep.subr.bf16.mxu0 %v835
        %1799 = vmatpush1.bf16.msra.mxu0 %v834
        %1800 = vmatprep.subr.bf16.mxu0 %v839
        %1801 = vmatpush1.bf16.msra.mxu0 %v838
        %1802 = vmatprep.subr.bf16.mxu0 %v843
        %1803 = vmatpush1.bf16.msra.mxu0 %v842
        %1804 = vmatprep.subr.bf16.mxu0 0
        %1805 = vmatpush1.bf16.msra.mxu0 0
        %1806 = vmatprep.subr.bf16.mxu0 0
        %1807 = vmatpush1.bf16.msra.mxu0 0
        %1808 = vmatprep.subr.bf16.mxu0 0
        %1809 = vmatpush1.bf16.msra.mxu0 0
        %1810 = vmatprep.subr.bf16.mxu0 0
        %1811 = vmatpush1.bf16.msra.mxu0 0
        %1812 = vmatprep.subr.bf16.mxu0 0
        %1813 = vmatpush1.bf16.msra.mxu0 0
        %1814 = vmatprep.subr.bf16.mxu0 0
        %1815 = vmatpush1.bf16.msra.mxu0 0
        %1816 = vmatprep.subr.bf16.mxu0 0
        %1817 = vmatpush1.bf16.msra.mxu0 0
        %1818 = vmatprep.subr.bf16.mxu0 0
        %1819 = vmatpush1.bf16.msra.mxu0 0
        %1820 = vmatprep.mubr.bf16.mxu0 0
        %1821 = vmatmul.mubr.bf16.gmra.mrb[0].mxu0 %v1746
        %v1822 = vpop.f32.mrb[0].mxu0
        %v1823 = vadd.f32 0.0, %v1822
        %v1824 = vpop.f32.mrb[0].mxu0
        %v1825 = vadd.f32 0.0, %v1824
        %v1826 = vpop.f32.mrb[0].mxu0
        %v1827 = vpop.f32.mrb[0].mxu0
        %1828 = vdwg.mxu0
        %v1829 = vld [vmem:[%s1313] sm:$0xff]
        %v1830 = vld [vmem:[%s1313 + $0x8] sm:$0xff]
        %v1831 = vadd.f32 %v1829, %v1782
        %v1832 = vadd.f32 %v1830, %v1784
        %v1833 = vld [vmem:[%s1308 + $0x10] sm:$0xff]
        %v1834 = vld [vmem:[%s1308 + $0x18] sm:$0xff]
        %v1835 = vadd.f32 %v1833, %v1823
        %v1836 = vadd.f32 %v1834, %v1825
        %v1837 = vxor.u32 %v1831, 2147483648
        %v1838 = vxor.u32 %v1832, 2147483648
        %v1839 = vmul.f32 %v1837, 1.442695
        %v1840 = vpow.pop %v1839
        %v1841 = vmul.f32 %v1838, 1.442695
        %v1842 = vpow.pop %v1841
        %v1843 = vadd.f32 %v1840, 1.0
        %v1844 = vadd.f32 %v1842, 1.0
        %v1845 = vrcp.pop %v1843
        %v1846 = vmul.f32 1.0, %v1845
        %v1847 = vrcp.pop %v1844
        %v1848 = vmul.f32 1.0, %v1847
        %v1849 = vtanh.pop %v1832
        %v1850 = vxor.u32 %v1835, 2147483648
        %v1851 = vxor.u32 %v1836, 2147483648
        %v1852 = vmul.f32 %v1850, 1.442695
        %v1853 = vpow.pop %v1852
        %v1854 = vmul.f32 %v1851, 1.442695
        %v1855 = vpow.pop %v1854
        %v1856 = vadd.f32 %v1853, 1.0
        %v1857 = vadd.f32 %v1855, 1.0
        %v1858 = vrcp.pop %v1856
        %v1859 = vmul.f32 1.0, %v1858
        %v1860 = vrcp.pop %v1857
        %v1861 = vmul.f32 1.0, %v1860
        %v1862 = vtanh.pop %v1836
        %v1863 = vld [vmem:[#allocation4] sm:$0xff]
        %1865 = vrot.lane.b32.xlu0 %v1863, 64
        %v1866 = vpop.permute.xlu0 %1865
        %v1868 = vmul.f32 %v1846, %v1866
        %1870 = vrot.lane.b32.xlu0 %v1849, 64
        %v1871 = vpop.permute.xlu0 %1870
        %v1873 = vmul.f32 %v1846, %v1871
        %1875 = vrot.lane.b32.xlu0 %v1873, 64
        %v1876 = vpop.permute.xlu0 %1875
        %v1878 = vadd.f32 %v1868, %v1876
        %v1879 = vmul.f32 %v1859, %v1863
        %1881 = vrot.lane.b32.xlu0 %v1862, 64
        %v1882 = vpop.permute.xlu0 %1881
        %v1884 = vmul.f32 %v1859, %v1882
        %1886 = vrot.lane.b32.xlu0 %v1884, 64
        %v1887 = vpop.permute.xlu0 %1886
        %v1889 = vadd.f32 %v1879, %v1887
        %v1890 = vtanh.pop %v1878
        %1892 = vrot.lane.b32.xlu0 %v1890, 64
        %v1893 = vpop.permute.xlu0 %1892
        %v1895 = vmul.f32 %v1848, %v1893
        %v1896 = vtanh.pop %v1889
        %1898 = vrot.lane.b32.xlu0 %v1896, 64
        %v1899 = vpop.permute.xlu0 %1898
        %v1901 = vmul.f32 %v1861, %v1899
        %1903 = vrot.lane.b32.xlu0 %v1878, 64
        %v1904 = vpop.permute.xlu0 %1903
        %1906 = vst.msk [vmem:[#allocation4] sm:$0xff] %vm1036, %v1904
        %1907 = vst.msk [vmem:[#allocation4] sm:$0xff] %vm1038, %v1889
        %1908 = vst.msk [vmem:[#allocation3] sm:$0xff] %vm1036, %v1895
        %1910 = vrot.lane.b32.xlu0 %v1901, 64
        %v1911 = vpop.permute.xlu0 %1910
        %1913 = vst.msk [vmem:[#allocation3] sm:$0xff] %vm1038, %v1911
        %1914 = vst.msk [vmem:[%s1397] sm:$0xff] %vm1036, %v1895
        %1915 = vst.msk [vmem:[%s1395] sm:$0xff] %vm1038, %v1911
        %v1916 = vld [vmem:[#allocation3] sm:$0xff]
        %v1917 = vpack.c.bf16 %v1916, %v1916
        %1918 = vmatprep.subr.bf16.mxu0 %v813
        %1919 = vmatpush1.bf16.msra.mxu0 %v812
        %1920 = vmatprep.subr.bf16.mxu0 %v817
        %1921 = vmatpush1.bf16.msra.mxu0 %v816
        %1922 = vmatprep.subr.bf16.mxu0 %v821
        %1923 = vmatpush1.bf16.msra.mxu0 %v820
        %1924 = vmatprep.subr.bf16.mxu0 %v825
        %1925 = vmatpush1.bf16.msra.mxu0 %v824
        %1926 = vmatprep.subr.bf16.mxu0 %v829
        %1927 = vmatpush1.bf16.msra.mxu0 %v828
        %1928 = vmatprep.subr.bf16.mxu0 %v833
        %1929 = vmatpush1.bf16.msra.mxu0 %v832
        %1930 = vmatprep.subr.bf16.mxu0 %v837
        %1931 = vmatpush1.bf16.msra.mxu0 %v836
        %1932 = vmatprep.subr.bf16.mxu0 %v841
        %1933 = vmatpush1.bf16.msra.mxu0 %v840
        %1934 = vmatprep.subr.bf16.mxu0 0
        %1935 = vmatpush1.bf16.msra.mxu0 0
        %1936 = vmatprep.subr.bf16.mxu0 0
        %1937 = vmatpush1.bf16.msra.mxu0 0
        %1938 = vmatprep.subr.bf16.mxu0 0
        %1939 = vmatpush1.bf16.msra.mxu0 0
        %1940 = vmatprep.subr.bf16.mxu0 0
        %1941 = vmatpush1.bf16.msra.mxu0 0
        %1942 = vmatprep.subr.bf16.mxu0 0
        %1943 = vmatpush1.bf16.msra.mxu0 0
        %1944 = vmatprep.subr.bf16.mxu0 0
        %1945 = vmatpush1.bf16.msra.mxu0 0
        %1946 = vmatprep.subr.bf16.mxu0 0
        %1947 = vmatpush1.bf16.msra.mxu0 0
        %1948 = vmatprep.subr.bf16.mxu0 0
        %1949 = vmatpush1.bf16.msra.mxu0 0
        %1950 = vmatprep.mubr.bf16.mxu0 0
        %1951 = vmatmul.mubr.bf16.gmra.mrb[0].mxu0 %v1917
        %v1952 = vpop.f32.mrb[0].mxu0
        %v1953 = vadd.f32 0.0, %v1952
        %v1954 = vpop.f32.mrb[0].mxu0
        %v1955 = vadd.f32 0.0, %v1954
        %v1956 = vpop.f32.mrb[0].mxu0
        %v1957 = vpop.f32.mrb[0].mxu0
        %1958 = vdwg.mxu0
        %1959 = vmatprep.subr.bf16.mxu0 %v815
        %1960 = vmatpush1.bf16.msra.mxu0 %v814
        %1961 = vmatprep.subr.bf16.mxu0 %v819
        %1962 = vmatpush1.bf16.msra.mxu0 %v818
        %1963 = vmatprep.subr.bf16.mxu0 %v823
        %1964 = vmatpush1.bf16.msra.mxu0 %v822
        %1965 = vmatprep.subr.bf16.mxu0 %v827
        %1966 = vmatpush1.bf16.msra.mxu0 %v826
        %1967 = vmatprep.subr.bf16.mxu0 %v831
        %1968 = vmatpush1.bf16.msra.mxu0 %v830
        %1969 = vmatprep.subr.bf16.mxu0 %v835
        %1970 = vmatpush1.bf16.msra.mxu0 %v834
        %1971 = vmatprep.subr.bf16.mxu0 %v839
        %1972 = vmatpush1.bf16.msra.mxu0 %v838
        %1973 = vmatprep.subr.bf16.mxu0 %v843
        %1974 = vmatpush1.bf16.msra.mxu0 %v842
        %1975 = vmatprep.subr.bf16.mxu0 0
        %1976 = vmatpush1.bf16.msra.mxu0 0
        %1977 = vmatprep.subr.bf16.mxu0 0
        %1978 = vmatpush1.bf16.msra.mxu0 0
        %1979 = vmatprep.subr.bf16.mxu0 0
        %1980 = vmatpush1.bf16.msra.mxu0 0
        %1981 = vmatprep.subr.bf16.mxu0 0
        %1982 = vmatpush1.bf16.msra.mxu0 0
        %1983 = vmatprep.subr.bf16.mxu0 0
        %1984 = vmatpush1.bf16.msra.mxu0 0
        %1985 = vmatprep.subr.bf16.mxu0 0
        %1986 = vmatpush1.bf16.msra.mxu0 0
        %1987 = vmatprep.subr.bf16.mxu0 0
        %1988 = vmatpush1.bf16.msra.mxu0 0
        %1989 = vmatprep.subr.bf16.mxu0 0
        %1990 = vmatpush1.bf16.msra.mxu0 0
        %1991 = vmatprep.mubr.bf16.mxu0 0
        %1992 = vmatmul.mubr.bf16.gmra.mrb[0].mxu0 %v1917
        %v1993 = vpop.f32.mrb[0].mxu0
        %v1994 = vadd.f32 0.0, %v1993
        %v1995 = vpop.f32.mrb[0].mxu0
        %v1996 = vadd.f32 0.0, %v1995
        %v1997 = vpop.f32.mrb[0].mxu0
        %v1998 = vpop.f32.mrb[0].mxu0
        %1999 = vdwg.mxu0
        %v2000 = vld [vmem:[%s1138] sm:$0xff]
        %v2001 = vld [vmem:[%s1138 + $0x8] sm:$0xff]
        %v2002 = vadd.f32 %v2000, %v1953
        %v2003 = vadd.f32 %v2001, %v1955
        %v2004 = vld [vmem:[%s1133 + $0x10] sm:$0xff]
        %v2005 = vld [vmem:[%s1133 + $0x18] sm:$0xff]
        %v2006 = vadd.f32 %v2004, %v1994
        %v2007 = vadd.f32 %v2005, %v1996
        %v2008 = vxor.u32 %v2002, 2147483648
        %v2009 = vxor.u32 %v2003, 2147483648
        %v2010 = vmul.f32 %v2008, 1.442695
        %v2011 = vpow.pop %v2010
        %v2012 = vmul.f32 %v2009, 1.442695
        %v2013 = vpow.pop %v2012
        %v2014 = vadd.f32 %v2011, 1.0
        %v2015 = vadd.f32 %v2013, 1.0
        %v2016 = vrcp.pop %v2014
        %v2017 = vmul.f32 1.0, %v2016
        %v2018 = vrcp.pop %v2015
        %v2019 = vmul.f32 1.0, %v2018
        %v2020 = vtanh.pop %v2003
        %v2021 = vxor.u32 %v2006, 2147483648
        %v2022 = vxor.u32 %v2007, 2147483648
        %v2023 = vmul.f32 %v2021, 1.442695
        %v2024 = vpow.pop %v2023
        %v2025 = vmul.f32 %v2022, 1.442695
        %v2026 = vpow.pop %v2025
        %v2027 = vadd.f32 %v2024, 1.0
        %v2028 = vadd.f32 %v2026, 1.0
        %v2029 = vrcp.pop %v2027
        %v2030 = vmul.f32 1.0, %v2029
        %v2031 = vrcp.pop %v2028
        %v2032 = vmul.f32 1.0, %v2031
        %v2033 = vtanh.pop %v2007
        %v2034 = vld [vmem:[#allocation4] sm:$0xff]
        %2036 = vrot.lane.b32.xlu0 %v2034, 64
        %v2037 = vpop.permute.xlu0 %2036
        %v2039 = vmul.f32 %v2017, %v2037
        %2041 = vrot.lane.b32.xlu0 %v2020, 64
        %v2042 = vpop.permute.xlu0 %2041
        %v2044 = vmul.f32 %v2017, %v2042
        %2046 = vrot.lane.b32.xlu0 %v2044, 64
        %v2047 = vpop.permute.xlu0 %2046
        %v2049 = vadd.f32 %v2039, %v2047
        %v2050 = vmul.f32 %v2030, %v2034
        %2052 = vrot.lane.b32.xlu0 %v2033, 64
        %v2053 = vpop.permute.xlu0 %2052
        %v2055 = vmul.f32 %v2030, %v2053
        %2057 = vrot.lane.b32.xlu0 %v2055, 64
        %v2058 = vpop.permute.xlu0 %2057
        %v2060 = vadd.f32 %v2050, %v2058
        %v2061 = vtanh.pop %v2049
        %2063 = vrot.lane.b32.xlu0 %v2061, 64
        %v2064 = vpop.permute.xlu0 %2063
        %v2066 = vmul.f32 %v2019, %v2064
        %v2067 = vtanh.pop %v2060
        %2069 = vrot.lane.b32.xlu0 %v2067, 64
        %v2070 = vpop.permute.xlu0 %2069
        %v2072 = vmul.f32 %v2032, %v2070
        %2074 = vrot.lane.b32.xlu0 %v2049, 64
        %v2075 = vpop.permute.xlu0 %2074
        %2077 = vst.msk [vmem:[#allocation4] sm:$0xff] %vm1036, %v2075
        %2078 = vst.msk [vmem:[#allocation4] sm:$0xff] %vm1038, %v2060
        %2079 = vst.msk [vmem:[#allocation3] sm:$0xff] %vm1036, %v2066
        %2081 = vrot.lane.b32.xlu0 %v2072, 64
        %v2082 = vpop.permute.xlu0 %2081
        %2084 = vst.msk [vmem:[#allocation3] sm:$0xff] %vm1038, %v2082
        %2085 = vst.msk [vmem:[%s1222] sm:$0xff] %vm1036, %v2066
        %2086 = vst.msk [vmem:[%s1220] sm:$0xff] %vm1038, %v2082
        %v2087 = vld [vmem:[#allocation3] sm:$0xff]
        %v2088 = vpack.c.bf16 %v2087, %v2087
        %2089 = vmatprep.subr.bf16.mxu0 %v813
        %2090 = vmatpush1.bf16.msra.mxu0 %v812
        %2091 = vmatprep.subr.bf16.mxu0 %v817
        %2092 = vmatpush1.bf16.msra.mxu0 %v816
        %2093 = vmatprep.subr.bf16.mxu0 %v821
        %2094 = vmatpush1.bf16.msra.mxu0 %v820
        %2095 = vmatprep.subr.bf16.mxu0 %v825
        %2096 = vmatpush1.bf16.msra.mxu0 %v824
        %2097 = vmatprep.subr.bf16.mxu0 %v829
        %2098 = vmatpush1.bf16.msra.mxu0 %v828
        %2099 = vmatprep.subr.bf16.mxu0 %v833
        %2100 = vmatpush1.bf16.msra.mxu0 %v832
        %2101 = vmatprep.subr.bf16.mxu0 %v837
        %2102 = vmatpush1.bf16.msra.mxu0 %v836
        %2103 = vmatprep.subr.bf16.mxu0 %v841
        %2104 = vmatpush1.bf16.msra.mxu0 %v840
        %2105 = vmatprep.subr.bf16.mxu0 0
        %2106 = vmatpush1.bf16.msra.mxu0 0
        %2107 = vmatprep.subr.bf16.mxu0 0
        %2108 = vmatpush1.bf16.msra.mxu0 0
        %2109 = vmatprep.subr.bf16.mxu0 0
        %2110 = vmatpush1.bf16.msra.mxu0 0
        %2111 = vmatprep.subr.bf16.mxu0 0
        %2112 = vmatpush1.bf16.msra.mxu0 0
        %2113 = vmatprep.subr.bf16.mxu0 0
        %2114 = vmatpush1.bf16.msra.mxu0 0
        %2115 = vmatprep.subr.bf16.mxu0 0
        %2116 = vmatpush1.bf16.msra.mxu0 0
        %2117 = vmatprep.subr.bf16.mxu0 0
        %2118 = vmatpush1.bf16.msra.mxu0 0
        %2119 = vmatprep.subr.bf16.mxu0 0
        %2120 = vmatpush1.bf16.msra.mxu0 0
        %2121 = vmatprep.mubr.bf16.mxu0 0
        %2122 = vmatmul.mubr.bf16.gmra.mrb[0].mxu0 %v2088
        %v2123 = vpop.f32.mrb[0].mxu0
        %v2124 = vadd.f32 0.0, %v2123
        %v2125 = vpop.f32.mrb[0].mxu0
        %v2126 = vadd.f32 0.0, %v2125
        %v2127 = vpop.f32.mrb[0].mxu0
        %v2128 = vpop.f32.mrb[0].mxu0
        %2129 = vdwg.mxu0
        %2130 = vmatprep.subr.bf16.mxu0 %v815
        %2131 = vmatpush1.bf16.msra.mxu0 %v814
        %2132 = vmatprep.subr.bf16.mxu0 %v819
        %2133 = vmatpush1.bf16.msra.mxu0 %v818
        %2134 = vmatprep.subr.bf16.mxu0 %v823
        %2135 = vmatpush1.bf16.msra.mxu0 %v822
        %2136 = vmatprep.subr.bf16.mxu0 %v827
        %2137 = vmatpush1.bf16.msra.mxu0 %v826
        %2138 = vmatprep.subr.bf16.mxu0 %v831
        %2139 = vmatpush1.bf16.msra.mxu0 %v830
        %2140 = vmatprep.subr.bf16.mxu0 %v835
        %2141 = vmatpush1.bf16.msra.mxu0 %v834
        %2142 = vmatprep.subr.bf16.mxu0 %v839
        %2143 = vmatpush1.bf16.msra.mxu0 %v838
        %2144 = vmatprep.subr.bf16.mxu0 %v843
        %2145 = vmatpush1.bf16.msra.mxu0 %v842
        %2146 = vmatprep.subr.bf16.mxu0 0
        %2147 = vmatpush1.bf16.msra.mxu0 0
        %2148 = vmatprep.subr.bf16.mxu0 0
        %2149 = vmatpush1.bf16.msra.mxu0 0
        %2150 = vmatprep.subr.bf16.mxu0 0
        %2151 = vmatpush1.bf16.msra.mxu0 0
        %2152 = vmatprep.subr.bf16.mxu0 0
        %2153 = vmatpush1.bf16.msra.mxu0 0
        %2154 = vmatprep.subr.bf16.mxu0 0
        %2155 = vmatpush1.bf16.msra.mxu0 0
        %2156 = vmatprep.subr.bf16.mxu0 0
        %2157 = vmatpush1.bf16.msra.mxu0 0
        %2158 = vmatprep.subr.bf16.mxu0 0
        %2159 = vmatpush1.bf16.msra.mxu0 0
        %2160 = vmatprep.subr.bf16.mxu0 0
        %2161 = vmatpush1.bf16.msra.mxu0 0
        %2162 = vmatprep.mubr.bf16.mxu0 0
        %2163 = vmatmul.mubr.bf16.gmra.mrb[0].mxu0 %v2088
        %v2164 = vpop.f32.mrb[0].mxu0
        %v2165 = vadd.f32 0.0, %v2164
        %v2166 = vpop.f32.mrb[0].mxu0
        %v2167 = vadd.f32 0.0, %v2166
        %v2168 = vpop.f32.mrb[0].mxu0
        %v2169 = vpop.f32.mrb[0].mxu0
        %2170 = vdwg.mxu0
        %v2171 = vld [vmem:[%s962] sm:$0xff]
        %v2172 = vld [vmem:[%s962 + $0x8] sm:$0xff]
        %v2173 = vadd.f32 %v2171, %v2124
        %v2174 = vadd.f32 %v2172, %v2126
        %v2175 = vld [vmem:[#allocation2 + $0x10] sm:$0xff]
        %v2176 = vld [vmem:[#allocation2 + $0x18] sm:$0xff]
        %v2177 = vadd.f32 %v2175, %v2165
        %v2178 = vadd.f32 %v2176, %v2167
        %v2179 = vxor.u32 %v2173, 2147483648
        %v2180 = vxor.u32 %v2174, 2147483648
        %v2181 = vmul.f32 %v2179, 1.442695
        %v2182 = vpow.pop %v2181
        %v2183 = vmul.f32 %v2180, 1.442695
        %v2184 = vpow.pop %v2183
        %v2185 = vadd.f32 %v2182, 1.0
        %v2186 = vadd.f32 %v2184, 1.0
        %v2187 = vrcp.pop %v2185
        %v2188 = vmul.f32 1.0, %v2187
        %v2189 = vrcp.pop %v2186
        %v2190 = vmul.f32 1.0, %v2189
        %v2191 = vtanh.pop %v2174
        %v2192 = vxor.u32 %v2177, 2147483648
        %v2193 = vxor.u32 %v2178, 2147483648
        %v2194 = vmul.f32 %v2192, 1.442695
        %v2195 = vpow.pop %v2194
        %v2196 = vmul.f32 %v2193, 1.442695
        %v2197 = vpow.pop %v2196
        %v2198 = vadd.f32 %v2195, 1.0
        %v2199 = vadd.f32 %v2197, 1.0
        %v2200 = vrcp.pop %v2198
        %v2201 = vmul.f32 1.0, %v2200
        %v2202 = vrcp.pop %v2199
        %v2203 = vmul.f32 1.0, %v2202
        %v2204 = vtanh.pop %v2178
        %v2205 = vld [vmem:[#allocation4] sm:$0xff]
        %2207 = vrot.lane.b32.xlu0 %v2205, 64
        %v2208 = vpop.permute.xlu0 %2207
        %v2210 = vmul.f32 %v2188, %v2208
        %2212 = vrot.lane.b32.xlu0 %v2191, 64
        %v2213 = vpop.permute.xlu0 %2212
        %v2215 = vmul.f32 %v2188, %v2213
        %2217 = vrot.lane.b32.xlu0 %v2215, 64
        %v2218 = vpop.permute.xlu0 %2217
        %v2220 = vadd.f32 %v2210, %v2218
        %v2221 = vmul.f32 %v2201, %v2205
        %2223 = vrot.lane.b32.xlu0 %v2204, 64
        %v2224 = vpop.permute.xlu0 %2223
        %v2226 = vmul.f32 %v2201, %v2224
        %2228 = vrot.lane.b32.xlu0 %v2226, 64
        %v2229 = vpop.permute.xlu0 %2228
        %v2231 = vadd.f32 %v2221, %v2229
        %v2232 = vtanh.pop %v2220
        %2234 = vrot.lane.b32.xlu0 %v2232, 64
        %v2235 = vpop.permute.xlu0 %2234
        %v2237 = vmul.f32 %v2190, %v2235
        %v2238 = vtanh.pop %v2231
        %2240 = vrot.lane.b32.xlu0 %v2238, 64
        %v2241 = vpop.permute.xlu0 %2240
        %v2243 = vmul.f32 %v2203, %v2241
        %2245 = vrot.lane.b32.xlu0 %v2220, 64
        %v2246 = vpop.permute.xlu0 %2245
        %2248 = vst.msk [vmem:[#allocation4] sm:$0xff] %vm1036, %v2246
        %2249 = vst.msk [vmem:[#allocation4] sm:$0xff] %vm1038, %v2231
        %2250 = vst.msk [vmem:[#allocation3] sm:$0xff] %vm1036, %v2237
        %2252 = vrot.lane.b32.xlu0 %v2243, 64
        %v2253 = vpop.permute.xlu0 %2252
        %2255 = vst.msk [vmem:[#allocation3] sm:$0xff] %vm1038, %v2253
        %2256 = vst.msk [vmem:[%s1047] sm:$0xff] %vm1036, %v2237
        %2257 = vst.msk [vmem:[%s274] sm:$0xff] %vm1038, %v2253
        %p2258 = scmp.lt.s32.totalorder %s21, 4
        %s2259 = scalar_select %p2258, %s21, 4
        %s2260 = smul.addr %s2259, 8
        %s2261 = smul.addr %s2260, 8
        %s2262 = scalar_lea.vmem %s4, %s2261
        // Predicated region
        $region45: #{autoencoder_forward.2} parent=35 // pred_check
          %p2263 = pneg %p138
        $region46: #{autoencoder_forward.2} parent=35 // pred_check_branch
          %2265 = sbr.rel (%p2263) target = $region48
        $region47: #{autoencoder_forward.2} parent=35 // pred_region
          _
        $region48: #{autoencoder_forward.2} parent=35 // pred_fallthru
          _
      $region36: #{autoencoder_forward.2} parent=5 // pred_fallthru
        _
      %p2266 = scmp.le.s32.totalorder 2, %s16
      // Predicated region
      $region49: #{autoencoder_forward.2} parent=5 // pred_check
        %p2267 = pneg %p2266
      $region50: #{autoencoder_forward.2} parent=5 // pred_check_branch
        %2269 = sbr.rel (%p2267) target = $region52
      $region51: #{autoencoder_forward.2} parent=5 // pred_region
        %s2270 = ssub.s32 %s16, 2
        // Predicated region
        $region53: #{autoencoder_forward.2} parent=51 // pred_check
          %p2271 = pneg %p144
        $region54: #{autoencoder_forward.2} parent=51 // pred_check_branch
          %2273 = sbr.rel (%p2271) target = $region56
        $region55: #{autoencoder_forward.2} parent=51 // pred_region
          %p2274 = scmp.lt.s32.totalorder %s22, 4
          %s2275 = scalar_select %p2274, %s22, 4
          %s2276 = smul.addr %s2275, 8
          %s2277 = smul.addr %s2276, 8
          %s2278 = scalar_lea.vmem %s4, %s2277
        $region56: #{autoencoder_forward.2} parent=51 // pred_fallthru
          _
      $region52: #{autoencoder_forward.2} parent=5 // pred_fallthru
        _
    $region6: #{autoencoder_forward.2} parent=1 // loop_footer
      %s20 = sadd.s32 1, %s16
    $region7: #{autoencoder_forward.2} parent=1 // loop_footer_branch
      %15 = sbr.rel target = $region3
    $region8: #{autoencoder_forward.2} parent=1 // loop_exit
      _
    %2279 = vsyncpa [#allocation6], 1
    %s2280 = scalar_lea.sflag [#allocation6], 1
    %2281 = vsyncpa %s2280, 1
    %2282 = vsyncpa [#allocation8], 1
    %s2283 = scalar_lea.sflag [#allocation8], 1
    %2284 = vsyncpa %s2283, 1

</llo_original>
